<compile_context>
chip_gen: v6e
topology: v6e:2x2x1
jax: 0.10.0
libtpu: 0.0.40
codegen_flags: <defaults>
</compile_context>

<pallas_src>
import numpy as np

import jax
import jax.numpy as jnp
from jax.experimental import pallas as pl

# ------------------------- small, shape-consistent config -------------------------
B = 2            # batch
IN_CHANS = 2     # in_chans
IMG = 16         # img_size (cubic)
PATCH = 8        # patch_size (cubic)
EMBED = 32       # embed_dim
DEPTH = 2        # depth
HEADS = 4        # num_heads
MLP_RATIO = 4.0
NUM_CLASSES = 16

HEAD_DIM = EMBED // HEADS
MLP_HIDDEN = int(EMBED * MLP_RATIO)
PG = IMG // PATCH
NPATCH = PG * PG * PG              # 8 tokens
PATCH_K = IN_CHANS * PATCH ** 3    # 1024
ROWS = B * NPATCH                  # 16 flattened tokens
GROUPS = B * HEADS                 # 8 batched (batch, head) groups
LN_EPS = 1e-5
SCALE = HEAD_DIM ** (-0.5)

# bf16 operands (f32 accumulation) for the patch-embed matmul only (v6e/v7x MXU win,
# harmless on v5e since it is limited to MXU operands).  Set False for strict f32 parity.
PATCH_EMBED_BF16 = True


# ------------------------- reference pos-embed table (host-side) -------------------------
def get_sinusoid_encoding_table(n_position, d_hid):
    pos = np.arange(n_position, dtype=np.float64)[:, None]
    hid = np.arange(d_hid)[None, :]
    table = pos / np.power(10000.0, 2 * (hid // 2) / d_hid)
    table[:, 0::2] = np.sin(table[:, 0::2])
    table[:, 1::2] = np.cos(table[:, 1::2])
    return jnp.asarray(table, dtype=jnp.float32)  # (N, E)


# ------------------------- in-kernel helpers -------------------------
def _erf(x):
    # Abramowitz & Stegun 7.1.26 rational approximation (|err| < 1.5e-7),
    # matches torch's exact-erf GELU to f32 precision using only exp/mul/add.
    a1, a2, a3, a4, a5 = 0.254829592, -0.284496736, 1.421413741, -1.453152027, 1.061405429
    p = 0.3275911
    s = jnp.where(x >= 0.0, 1.0, -1.0)
    ax = jnp.abs(x)
    t = 1.0 / (1.0 + p * ax)
    poly = ((((a5 * t + a4) * t + a3) * t + a2) * t + a1) * t
    return s * (1.0 - poly * jnp.exp(-ax * ax))


def _gelu_exact(x):
    return 0.5 * x * (1.0 + _erf(x * np.float32(1.0 / np.sqrt(2.0))))


def _layernorm(x, g, b):
    mu = jnp.mean(x, axis=-1, keepdims=True)
    var = jnp.mean(jnp.square(x - mu), axis=-1, keepdims=True)
    return (x - mu) * jax.lax.rsqrt(var + LN_EPS) * g + b


# ------------------------- fused Pallas kernel -------------------------
def vit_fused_kernel(patches_ref, wpatch_ref, posbias_ref,
                     ln1g_ref, ln1b_ref, wq_ref, wk_ref, wv_ref, projw_ref, projb_ref,
                     ln2g_ref, ln2b_ref, fc1w_ref, fc1b_ref, fc2w_ref, fc2b_ref,
                     headw_ref, headb_ref,
                     hid_ref, head_ref):
    # --- patch embedding (bf16 operands, f32 acc) + folded (conv bias + pos) table ---
    x0 = jnp.dot(patches_ref[...], wpatch_ref[...],
                 preferred_element_type=jnp.float32) + posbias_ref[...]    # (ROWS, E) f32

    x = x0
    for d in range(DEPTH):                       # DEPTH small -> statically unrolled
        # ----- attention branch: all heads batched, no per-head loop / slicing / concat -----
        xn = _layernorm(x, ln1g_ref[d], ln1b_ref[d])                       # (ROWS, E)
        # broadcast token rows across heads (major-dim broadcast + tile-aligned reshapes)
        xg = jnp.broadcast_to(
            xn.reshape(B, 1, NPATCH, EMBED),
            (B, HEADS, NPATCH, EMBED)).reshape(GROUPS, NPATCH, EMBED)      # (G, N, E)

        q = jnp.einsum('gne,ged->gnd', xg, wq_ref[d],
                       preferred_element_type=jnp.float32)                 # scale folded in
        k = jnp.einsum('gne,ged->gnd', xg, wk_ref[d],
                       preferred_element_type=jnp.float32)
        v = jnp.einsum('gne,ged->gnd', xg, wv_ref[d],
                       preferred_element_type=jnp.float32)                 # (G, N, D)

        s = jnp.einsum('gnd,gmd->gnm', q, k,
                       preferred_element_type=jnp.float32)                 # (G, N, N)
        s = s - jnp.max(s, axis=-1, keepdims=True)
        e = jnp.exp(s)
        p = e * pl.reciprocal(jnp.sum(e, axis=-1, keepdims=True), approx=True)  # EUP slot
        o = jnp.einsum('gnm,gmd->gnd', p, v,
                       preferred_element_type=jnp.float32)                 # (G, N, D)

        # per-head output projection, summed over heads (== concat-heads @ proj_w^T)
        ph = jnp.einsum('gnd,gde->gne', o, projw_ref[d],
                        preferred_element_type=jnp.float32)                # (G, N, E)
        attn = ph.reshape(B, HEADS, NPATCH, EMBED).sum(axis=1).reshape(ROWS, EMBED)
        x = x + attn + projb_ref[d]

        # ----- MLP branch -----
        xn2 = _layernorm(x, ln2g_ref[d], ln2b_ref[d])
        h1 = _gelu_exact(jnp.dot(xn2, fc1w_ref[d],
                                 preferred_element_type=jnp.float32) + fc1b_ref[d])
        x = x + jnp.dot(h1, fc2w_ref[d],
                        preferred_element_type=jnp.float32) + fc2b_ref[d]

        hid_ref[d] = x                           # hidden_states[d]

    # Head applied to the PRE-block tensor x0: reproduces the reference's
    # `x_vis = self.norm(x)` with norm=Identity and `x = patch_embed + pos`.
    head_ref[...] = (jnp.dot(x0, headw_ref[...], preferred_element_type=jnp.float32)
                     + headb_ref[...])


# ------------------------- wrapper (host-side prep + single fused call) -------------------------
def vit_forward(x, params):
    # Patch extraction == Conv3d(stride=kernel) + flatten(2) + transpose(1,2):
    # token order (H//p, W//p, L//p) row-major, per-token features (c, kh, kw, kl).
    xp = x.reshape(B, IN_CHANS, PG, PATCH, PG, PATCH, PG, PATCH)
    xp = xp.transpose(0, 2, 4, 6, 1, 3, 5, 7).reshape(ROWS, PATCH_K)

    mm_dtype = jnp.bfloat16 if PATCH_EMBED_BF16 else jnp.float32
    patches = xp.astype(mm_dtype)
    wpatch = params["patch_w"].reshape(EMBED, PATCH_K).T.astype(mm_dtype)      # (K, E)

    # conv bias + sinusoid pos, pre-tiled over batch -> (B*N, E): no reshape in kernel.
    posbias = jnp.tile(params["pos"] + params["patch_b"].reshape(1, EMBED), (B, 1))

    blk = params["blocks"]
    qkvw = blk["qkvw"]                                           # (DEPTH, E, 3E) = qkv weight^T
    wq_full = qkvw[:, :, 0:EMBED] * np.float32(SCALE)            # fold attention scale into Q
    wk_full = qkvw[:, :, EMBED:2 * EMBED]
    wv_full = qkvw[:, :, 2 * EMBED:3 * EMBED]

    def split_out_heads(w):
        # (DEPTH, E, E) with columns ordered (head, dim) -> (DEPTH, B*HEADS, E, HEAD_DIM)
        w = w.reshape(DEPTH, EMBED, HEADS, HEAD_DIM).transpose(0, 2, 1, 3)   # (DEPTH, H, E, D)
        return jnp.broadcast_to(w[:, None], (DEPTH, B, HEADS, EMBED, HEAD_DIM)
                                ).reshape(DEPTH, GROUPS, EMBED, HEAD_DIM)

    wq = split_out_heads(wq_full)
    wk = split_out_heads(wk_full)
    wv = split_out_heads(wv_full)

    # proj weight^T (DEPTH, E, E) with rows ordered (head, dim) -> (DEPTH, B*HEADS, HEAD_DIM, E)
    pw = blk["projw"].reshape(DEPTH, HEADS, HEAD_DIM, EMBED)
    projw = jnp.broadcast_to(pw[:, None], (DEPTH, B, HEADS, HEAD_DIM, EMBED)
                             ).reshape(DEPTH, GROUPS, HEAD_DIM, EMBED)

    hid, head_out = pl.pallas_call(
        vit_fused_kernel,
        out_shape=(
            jax.ShapeDtypeStruct((DEPTH, ROWS, EMBED), jnp.float32),       # hidden states
            jax.ShapeDtypeStruct((ROWS, NUM_CLASSES), jnp.float32),        # head output
        ),
    )(patches, wpatch, posbias,
      blk["ln1g"], blk["ln1b"], wq, wk, wv, projw, blk["projb"],
      blk["ln2g"], blk["ln2b"], blk["fc1w"], blk["fc1b"], blk["fc2w"], blk["fc2b"],
      params["head_w"].T, params["head_b"].reshape(1, NUM_CLASSES))

    hidden_states = [hid[d].reshape(B, NPATCH, EMBED) for d in range(DEPTH)]
    out = head_out.reshape(B, NPATCH, NUM_CLASSES)
    return out, hidden_states


# ------------------------- deterministic parameter init -------------------------
def init_params(key):
    ks = iter(jax.random.split(key, 32))

    def nrm(shape, scale=0.02):
        return (scale * jax.random.normal(next(ks), shape)).astype(jnp.float32)

    blocks = {
        "ln1g": jnp.ones((DEPTH, 1, EMBED), jnp.float32),
        "ln1b": jnp.zeros((DEPTH, 1, EMBED), jnp.float32),
        "qkvw": nrm((DEPTH, EMBED, 3 * EMBED)),      # qkv weight^T (qkv_bias=False)
        "projw": nrm((DEPTH, EMBED, EMBED)),         # proj weight^T
        "projb": nrm((DEPTH, 1, EMBED)),
        "ln2g": jnp.ones((DEPTH, 1, EMBED), jnp.float32),
        "ln2b": jnp.zeros((DEPTH, 1, EMBED), jnp.float32),
        "fc1w": nrm((DEPTH, EMBED, MLP_HIDDEN)),     # fc1 weight^T
        "fc1b": nrm((DEPTH, 1, MLP_HIDDEN)),
        "fc2w": nrm((DEPTH, MLP_HIDDEN, EMBED)),     # fc2 weight^T
        "fc2b": nrm((DEPTH, 1, EMBED)),
    }
    params = {
        "patch_w": nrm((EMBED, IN_CHANS, PATCH, PATCH, PATCH)),  # Conv3d weight
        "patch_b": nrm((EMBED,)),                                # Conv3d bias
        "pos": get_sinusoid_encoding_table(NPATCH, EMBED),       # (N, E) sinusoid
        "head_w": nrm((NUM_CLASSES, EMBED)),                     # nn.Linear weight
        "head_b": nrm((NUM_CLASSES,)),
        "blocks": blocks,
    }
    return params


# TODO(synk): CNNEncoder (use_hybrid=True path) not implemented; default use_hybrid=False.

# ------------------------- main -------------------------
if __name__ == "__main__":
    key = jax.random.PRNGKey(0)
    k_param, k_x = jax.random.split(key)
    params = init_params(k_param)
    x = jax.random.normal(k_x, (B, IN_CHANS, IMG, IMG, IMG), dtype=jnp.float32)

    fwd = jax.jit(vit_forward)
    out, hidden_states = fwd(x, params)
    jax.block_until_ready((out, hidden_states))

    assert out.shape == (B, NPATCH, NUM_CLASSES)
    assert len(hidden_states) == DEPTH
    assert all(h.shape == (B, NPATCH, EMBED) for h in hidden_states)
    print("KERNEL_OK")
</pallas_src>

<mosaic_0001>
module attributes {stable_mosaic.version = 11 : i64} {
  func.func @vit_fused_kernel(%arg0: memref<16x1024xbf16, #tpu.memory_space<vmem>>, %arg1: memref<1024x32xbf16, #tpu.memory_space<vmem>>, %arg2: memref<16x32xf32, #tpu.memory_space<vmem>>, %arg3: memref<2x1x32xf32, #tpu.memory_space<vmem>>, %arg4: memref<2x1x32xf32, #tpu.memory_space<vmem>>, %arg5: memref<2x8x32x8xf32, #tpu.memory_space<vmem>>, %arg6: memref<2x8x32x8xf32, #tpu.memory_space<vmem>>, %arg7: memref<2x8x32x8xf32, #tpu.memory_space<vmem>>, %arg8: memref<2x8x8x32xf32, #tpu.memory_space<vmem>>, %arg9: memref<2x1x32xf32, #tpu.memory_space<vmem>>, %arg10: memref<2x1x32xf32, #tpu.memory_space<vmem>>, %arg11: memref<2x1x32xf32, #tpu.memory_space<vmem>>, %arg12: memref<2x32x128xf32, #tpu.memory_space<vmem>>, %arg13: memref<2x1x128xf32, #tpu.memory_space<vmem>>, %arg14: memref<2x128x32xf32, #tpu.memory_space<vmem>>, %arg15: memref<2x1x32xf32, #tpu.memory_space<vmem>>, %arg16: memref<32x16xf32, #tpu.memory_space<vmem>>, %arg17: memref<1x16xf32, #tpu.memory_space<vmem>>, %arg18: memref<2x16x32xf32, #tpu.memory_space<vmem>>, %arg19: memref<16x16xf32, #tpu.memory_space<vmem>>) attributes {dimension_semantics = [], scalar_prefetch = 0 : i64, scratch_operands = 0 : i64, tpu.core_type = #tpu.core_type<tc>} {
    %c0 = arith.constant 0 : index
    %c0_0 = arith.constant 0 : index
    %0 = vector.load %arg0[%c0, %c0_0] : memref<16x1024xbf16, #tpu.memory_space<vmem>>, vector<16x1024xbf16>
    %c0_1 = arith.constant 0 : index
    %c0_2 = arith.constant 0 : index
    %1 = vector.load %arg1[%c0_1, %c0_2] : memref<1024x32xbf16, #tpu.memory_space<vmem>>, vector<1024x32xbf16>
    %cst = arith.constant dense<0.000000e+00> : vector<16x32xf32>
    %2 = tpu.matmul %0, %1, %cst {dimension_numbers = #tpu.dot_dimension_numbers<[1], [0], [0], [1], [0, 0, 1, 1], [], []>} : vector<16x1024xbf16>, vector<1024x32xbf16>, vector<16x32xf32> -> vector<16x32xf32>
    %c0_3 = arith.constant 0 : index
    %c0_4 = arith.constant 0 : index
    %3 = vector.load %arg2[%c0_3, %c0_4] : memref<16x32xf32, #tpu.memory_space<vmem>>, vector<16x32xf32>
    %4 = arith.addf %2, %3 : vector<16x32xf32>
    %c0_5 = arith.constant 0 : index
    %c0_6 = arith.constant 0 : index
    %c0_7 = arith.constant 0 : index
    %5 = vector.load %arg3[%c0_5, %c0_6, %c0_7] : memref<2x1x32xf32, #tpu.memory_space<vmem>>, vector<1x1x32xf32>
    %6 = vector.shape_cast %5 : vector<1x1x32xf32> to vector<1x32xf32>
    %c0_8 = arith.constant 0 : index
    %c0_9 = arith.constant 0 : index
    %c0_10 = arith.constant 0 : index
    %7 = vector.load %arg4[%c0_8, %c0_9, %c0_10] : memref<2x1x32xf32, #tpu.memory_space<vmem>>, vector<1x1x32xf32>
    %8 = vector.shape_cast %7 : vector<1x1x32xf32> to vector<1x32xf32>
    %cst_11 = arith.constant dense<0.000000e+00> : vector<16xf32>
    %9 = vector.multi_reduction <add>, %4, %cst_11 [1] : vector<16x32xf32> to vector<16xf32>
    %10 = vector.shape_cast %9 : vector<16xf32> to vector<16x1xf32>
    %cst_12 = arith.constant 3.200000e+01 : f32
    %11 = vector.broadcast %cst_12 : f32 to vector<16x1xf32>
    %12 = arith.divf %10, %11 : vector<16x1xf32>
    %13 = vector.broadcast %12 : vector<16x1xf32> to vector<16x32xf32>
    %14 = arith.subf %4, %13 : vector<16x32xf32>
    %15 = arith.mulf %14, %14 : vector<16x32xf32>
    %cst_13 = arith.constant dense<0.000000e+00> : vector<16xf32>
    %16 = vector.multi_reduction <add>, %15, %cst_13 [1] : vector<16x32xf32> to vector<16xf32>
    %17 = vector.shape_cast %16 : vector<16xf32> to vector<16x1xf32>
    %cst_14 = arith.constant 3.200000e+01 : f32
    %18 = vector.broadcast %cst_14 : f32 to vector<16x1xf32>
    %19 = arith.divf %17, %18 : vector<16x1xf32>
    %20 = vector.broadcast %12 : vector<16x1xf32> to vector<16x32xf32>
    %21 = arith.subf %4, %20 : vector<16x32xf32>
    %cst_15 = arith.constant 9.99999974E-6 : f32
    %22 = vector.broadcast %cst_15 : f32 to vector<16x1xf32>
    %23 = arith.addf %19, %22 : vector<16x1xf32>
    %24 = math.rsqrt %23 : vector<16x1xf32>
    %25 = vector.broadcast %24 : vector<16x1xf32> to vector<16x32xf32>
    %26 = arith.mulf %21, %25 : vector<16x32xf32>
    %27 = vector.broadcast %6 : vector<1x32xf32> to vector<16x32xf32>
    %28 = arith.mulf %26, %27 : vector<16x32xf32>
    %29 = vector.broadcast %8 : vector<1x32xf32> to vector<16x32xf32>
    %30 = arith.addf %28, %29 : vector<16x32xf32>
    %31 = vector.shape_cast %30 : vector<16x32xf32> to vector<2x1x8x32xf32>
    %32 = vector.shape_cast %31 : vector<2x1x8x32xf32> to vector<2x1x8x32xf32>
    %33 = vector.broadcast %32 : vector<2x1x8x32xf32> to vector<2x4x8x32xf32>
    %34 = vector.shape_cast %33 : vector<2x4x8x32xf32> to vector<8x8x32xf32>
    %c0_16 = arith.constant 0 : index
    %c0_17 = arith.constant 0 : index
    %c0_18 = arith.constant 0 : index
    %c0_19 = arith.constant 0 : index
    %35 = vector.load %arg5[%c0_16, %c0_17, %c0_18, %c0_19] : memref<2x8x32x8xf32, #tpu.memory_space<vmem>>, vector<1x8x32x8xf32>
    %36 = vector.shape_cast %35 : vector<1x8x32x8xf32> to vector<8x32x8xf32>
    "tpu.trace_start"() <{level = 10 : i32, message = "gne,ged->gnd"}> : () -> ()
    %cst_20 = arith.constant dense<0.000000e+00> : vector<8x8x8xf32>
    %37 = tpu.matmul %34, %36, %cst_20 {dimension_numbers = #tpu.dot_dimension_numbers<[2], [1], [1], [2], [0, 0, 0, 1, 1, 2], [0], [0]>} : vector<8x8x32xf32>, vector<8x32x8xf32>, vector<8x8x8xf32> -> vector<8x8x8xf32>
    "tpu.trace_stop"() : () -> ()
    %c0_21 = arith.constant 0 : index
    %c0_22 = arith.constant 0 : index
    %c0_23 = arith.constant 0 : index
    %c0_24 = arith.constant 0 : index
    %38 = vector.load %arg6[%c0_21, %c0_22, %c0_23, %c0_24] : memref<2x8x32x8xf32, #tpu.memory_space<vmem>>, vector<1x8x32x8xf32>
    %39 = vector.shape_cast %38 : vector<1x8x32x8xf32> to vector<8x32x8xf32>
    "tpu.trace_start"() <{level = 10 : i32, message = "gne,ged->gnd"}> : () -> ()
    %cst_25 = arith.constant dense<0.000000e+00> : vector<8x8x8xf32>
    %40 = tpu.matmul %34, %39, %cst_25 {dimension_numbers = #tpu.dot_dimension_numbers<[2], [1], [1], [2], [0, 0, 0, 1, 1, 2], [0], [0]>} : vector<8x8x32xf32>, vector<8x32x8xf32>, vector<8x8x8xf32> -> vector<8x8x8xf32>
    "tpu.trace_stop"() : () -> ()
    %c0_26 = arith.constant 0 : index
    %c0_27 = arith.constant 0 : index
    %c0_28 = arith.constant 0 : index
    %c0_29 = arith.constant 0 : index
    %41 = vector.load %arg7[%c0_26, %c0_27, %c0_28, %c0_29] : memref<2x8x32x8xf32, #tpu.memory_space<vmem>>, vector<1x8x32x8xf32>
    %42 = vector.shape_cast %41 : vector<1x8x32x8xf32> to vector<8x32x8xf32>
    "tpu.trace_start"() <{level = 10 : i32, message = "gne,ged->gnd"}> : () -> ()
    %cst_30 = arith.constant dense<0.000000e+00> : vector<8x8x8xf32>
    %43 = tpu.matmul %34, %42, %cst_30 {dimension_numbers = #tpu.dot_dimension_numbers<[2], [1], [1], [2], [0, 0, 0, 1, 1, 2], [0], [0]>} : vector<8x8x32xf32>, vector<8x32x8xf32>, vector<8x8x8xf32> -> vector<8x8x8xf32>
    "tpu.trace_stop"() : () -> ()
    "tpu.trace_start"() <{level = 10 : i32, message = "gnd,gmd->gnm"}> : () -> ()
    %cst_31 = arith.constant dense<0.000000e+00> : vector<8x8x8xf32>
    %44 = tpu.matmul %37, %40, %cst_31 {dimension_numbers = #tpu.dot_dimension_numbers<[2], [2], [1], [1], [0, 0, 0, 1, 1, 1], [0], [0]>} : vector<8x8x8xf32>, vector<8x8x8xf32>, vector<8x8x8xf32> -> vector<8x8x8xf32>
    "tpu.trace_stop"() : () -> ()
    %cst_32 = arith.constant dense<0xFF800000> : vector<8x8xf32>
    %45 = vector.multi_reduction <maximumf>, %44, %cst_32 [2] : vector<8x8x8xf32> to vector<8x8xf32>
    %46 = vector.shape_cast %45 : vector<8x8xf32> to vector<8x8x1xf32>
    %47 = vector.broadcast %46 : vector<8x8x1xf32> to vector<8x8x8xf32>
    %48 = arith.subf %44, %47 : vector<8x8x8xf32>
    %49 = math.exp %48 : vector<8x8x8xf32>
    %cst_33 = arith.constant dense<0.000000e+00> : vector<8x8xf32>
    %50 = vector.multi_reduction <add>, %49, %cst_33 [2] : vector<8x8x8xf32> to vector<8x8xf32>
    %51 = vector.shape_cast %50 : vector<8x8xf32> to vector<8x8x1xf32>
    %52 = tpu.reciprocal %51 {approx = true} : vector<8x8x1xf32> -> vector<8x8x1xf32>
    %53 = vector.broadcast %52 : vector<8x8x1xf32> to vector<8x8x8xf32>
    %54 = arith.mulf %49, %53 : vector<8x8x8xf32>
    "tpu.trace_start"() <{level = 10 : i32, message = "gnm,gmd->gnd"}> : () -> ()
    %cst_34 = arith.constant dense<0.000000e+00> : vector<8x8x8xf32>
    %55 = tpu.matmul %54, %43, %cst_34 {dimension_numbers = #tpu.dot_dimension_numbers<[2], [1], [1], [2], [0, 0, 0, 1, 1, 2], [0], [0]>} : vector<8x8x8xf32>, vector<8x8x8xf32>, vector<8x8x8xf32> -> vector<8x8x8xf32>
    "tpu.trace_stop"() : () -> ()
    %c0_35 = arith.constant 0 : index
    %c0_36 = arith.constant 0 : index
    %c0_37 = arith.constant 0 : index
    %c0_38 = arith.constant 0 : index
    %56 = vector.load %arg8[%c0_35, %c0_36, %c0_37, %c0_38] : memref<2x8x8x32xf32, #tpu.memory_space<vmem>>, vector<1x8x8x32xf32>
    %57 = vector.shape_cast %56 : vector<1x8x8x32xf32> to vector<8x8x32xf32>
    "tpu.trace_start"() <{level = 10 : i32, message = "gnd,gde->gne"}> : () -> ()
    %cst_39 = arith.constant dense<0.000000e+00> : vector<8x8x32xf32>
    %58 = tpu.matmul %55, %57, %cst_39 {dimension_numbers = #tpu.dot_dimension_numbers<[2], [1], [1], [2], [0, 0, 0, 1, 1, 2], [0], [0]>} : vector<8x8x8xf32>, vector<8x8x32xf32>, vector<8x8x32xf32> -> vector<8x8x32xf32>
    "tpu.trace_stop"() : () -> ()
    %59 = vector.shape_cast %58 : vector<8x8x32xf32> to vector<2x4x8x32xf32>
    %cst_40 = arith.constant dense<0.000000e+00> : vector<2x8x32xf32>
    %60 = vector.multi_reduction <add>, %59, %cst_40 [1] : vector<2x4x8x32xf32> to vector<2x8x32xf32>
    %61 = vector.shape_cast %60 : vector<2x8x32xf32> to vector<16x32xf32>
    %62 = arith.addf %4, %61 : vector<16x32xf32>
    %c0_41 = arith.constant 0 : index
    %c0_42 = arith.constant 0 : index
    %c0_43 = arith.constant 0 : index
    %63 = vector.load %arg9[%c0_41, %c0_42, %c0_43] : memref<2x1x32xf32, #tpu.memory_space<vmem>>, vector<1x1x32xf32>
    %64 = vector.shape_cast %63 : vector<1x1x32xf32> to vector<1x32xf32>
    %65 = vector.broadcast %64 : vector<1x32xf32> to vector<16x32xf32>
    %66 = arith.addf %62, %65 : vector<16x32xf32>
    %c0_44 = arith.constant 0 : index
    %c0_45 = arith.constant 0 : index
    %c0_46 = arith.constant 0 : index
    %67 = vector.load %arg10[%c0_44, %c0_45, %c0_46] : memref<2x1x32xf32, #tpu.memory_space<vmem>>, vector<1x1x32xf32>
    %68 = vector.shape_cast %67 : vector<1x1x32xf32> to vector<1x32xf32>
    %c0_47 = arith.constant 0 : index
    %c0_48 = arith.constant 0 : index
    %c0_49 = arith.constant 0 : index
    %69 = vector.load %arg11[%c0_47, %c0_48, %c0_49] : memref<2x1x32xf32, #tpu.memory_space<vmem>>, vector<1x1x32xf32>
    %70 = vector.shape_cast %69 : vector<1x1x32xf32> to vector<1x32xf32>
    %cst_50 = arith.constant dense<0.000000e+00> : vector<16xf32>
    %71 = vector.multi_reduction <add>, %66, %cst_50 [1] : vector<16x32xf32> to vector<16xf32>
    %72 = vector.shape_cast %71 : vector<16xf32> to vector<16x1xf32>
    %cst_51 = arith.constant 3.200000e+01 : f32
    %73 = vector.broadcast %cst_51 : f32 to vector<16x1xf32>
    %74 = arith.divf %72, %73 : vector<16x1xf32>
    %75 = vector.broadcast %74 : vector<16x1xf32> to vector<16x32xf32>
    %76 = arith.subf %66, %75 : vector<16x32xf32>
    %77 = arith.mulf %76, %76 : vector<16x32xf32>
    %cst_52 = arith.constant dense<0.000000e+00> : vector<16xf32>
    %78 = vector.multi_reduction <add>, %77, %cst_52 [1] : vector<16x32xf32> to vector<16xf32>
    %79 = vector.shape_cast %78 : vector<16xf32> to vector<16x1xf32>
    %cst_53 = arith.constant 3.200000e+01 : f32
    %80 = vector.broadcast %cst_53 : f32 to vector<16x1xf32>
    %81 = arith.divf %79, %80 : vector<16x1xf32>
    %82 = vector.broadcast %74 : vector<16x1xf32> to vector<16x32xf32>
    %83 = arith.subf %66, %82 : vector<16x32xf32>
    %cst_54 = arith.constant 9.99999974E-6 : f32
    %84 = vector.broadcast %cst_54 : f32 to vector<16x1xf32>
    %85 = arith.addf %81, %84 : vector<16x1xf32>
    %86 = math.rsqrt %85 : vector<16x1xf32>
    %87 = vector.broadcast %86 : vector<16x1xf32> to vector<16x32xf32>
    %88 = arith.mulf %83, %87 : vector<16x32xf32>
    %89 = vector.broadcast %68 : vector<1x32xf32> to vector<16x32xf32>
    %90 = arith.mulf %88, %89 : vector<16x32xf32>
    %91 = vector.broadcast %70 : vector<1x32xf32> to vector<16x32xf32>
    %92 = arith.addf %90, %91 : vector<16x32xf32>
    %c0_55 = arith.constant 0 : index
    %c0_56 = arith.constant 0 : index
    %c0_57 = arith.constant 0 : index
    %93 = vector.load %arg12[%c0_55, %c0_56, %c0_57] : memref<2x32x128xf32, #tpu.memory_space<vmem>>, vector<1x32x128xf32>
    %94 = vector.shape_cast %93 : vector<1x32x128xf32> to vector<32x128xf32>
    %cst_58 = arith.constant dense<0.000000e+00> : vector<16x128xf32>
    %95 = tpu.matmul %92, %94, %cst_58 {dimension_numbers = #tpu.dot_dimension_numbers<[1], [0], [0], [1], [0, 0, 1, 1], [], []>} : vector<16x32xf32>, vector<32x128xf32>, vector<16x128xf32> -> vector<16x128xf32>
    %c0_59 = arith.constant 0 : index
    %c0_60 = arith.constant 0 : index
    %c0_61 = arith.constant 0 : index
    %96 = vector.load %arg13[%c0_59, %c0_60, %c0_61] : memref<2x1x128xf32, #tpu.memory_space<vmem>>, vector<1x1x128xf32>
    %97 = vector.shape_cast %96 : vector<1x1x128xf32> to vector<1x128xf32>
    %98 = vector.broadcast %97 : vector<1x128xf32> to vector<16x128xf32>
    %99 = arith.addf %95, %98 : vector<16x128xf32>
    %cst_62 = arith.constant 5.000000e-01 : f32
    %100 = vector.broadcast %cst_62 : f32 to vector<16x128xf32>
    %101 = arith.mulf %100, %99 : vector<16x128xf32>
    %cst_63 = arith.constant 0.707106769 : f32
    %102 = vector.broadcast %cst_63 : f32 to vector<16x128xf32>
    %103 = arith.mulf %99, %102 : vector<16x128xf32>
    %cst_64 = arith.constant 0.000000e+00 : f32
    %104 = vector.broadcast %cst_64 : f32 to vector<16x128xf32>
    %105 = arith.cmpf oge, %103, %104 : vector<16x128xf32>
    %cst_65 = arith.constant 1.000000e+00 : f32
    %cst_66 = arith.constant -1.000000e+00 : f32
    %106 = vector.broadcast %cst_65 : f32 to vector<16x128xf32>
    %107 = vector.broadcast %cst_66 : f32 to vector<16x128xf32>
    %108 = arith.select %105, %106, %107 : vector<16x128xi1>, vector<16x128xf32>
    %109 = math.absf %103 : vector<16x128xf32>
    %cst_67 = arith.constant 0.327591091 : f32
    %110 = vector.broadcast %cst_67 : f32 to vector<16x128xf32>
    %111 = arith.mulf %110, %109 : vector<16x128xf32>
    %cst_68 = arith.constant 1.000000e+00 : f32
    %112 = vector.broadcast %cst_68 : f32 to vector<16x128xf32>
    %113 = arith.addf %112, %111 : vector<16x128xf32>
    %cst_69 = arith.constant 1.000000e+00 : f32
    %114 = vector.broadcast %cst_69 : f32 to vector<16x128xf32>
    %115 = arith.divf %114, %113 : vector<16x128xf32>
    %cst_70 = arith.constant 1.06140542 : f32
    %116 = vector.broadcast %cst_70 : f32 to vector<16x128xf32>
    %117 = arith.mulf %116, %115 : vector<16x128xf32>
    %cst_71 = arith.constant -1.45315206 : f32
    %118 = vector.broadcast %cst_71 : f32 to vector<16x128xf32>
    %119 = arith.addf %117, %118 : vector<16x128xf32>
    %120 = arith.mulf %119, %115 : vector<16x128xf32>
    %cst_72 = arith.constant 1.42141378 : f32
    %121 = vector.broadcast %cst_72 : f32 to vector<16x128xf32>
    %122 = arith.addf %120, %121 : vector<16x128xf32>
    %123 = arith.mulf %122, %115 : vector<16x128xf32>
    %cst_73 = arith.constant -0.284496725 : f32
    %124 = vector.broadcast %cst_73 : f32 to vector<16x128xf32>
    %125 = arith.addf %123, %124 : vector<16x128xf32>
    %126 = arith.mulf %125, %115 : vector<16x128xf32>
    %cst_74 = arith.constant 0.254829586 : f32
    %127 = vector.broadcast %cst_74 : f32 to vector<16x128xf32>
    %128 = arith.addf %126, %127 : vector<16x128xf32>
    %129 = arith.mulf %128, %115 : vector<16x128xf32>
    %cst_75 = arith.constant 0.000000e+00 : f32
    %130 = vector.broadcast %cst_75 : f32 to vector<16x128xf32>
    %131 = arith.subf %130, %109 : vector<16x128xf32>
    %132 = arith.mulf %131, %109 : vector<16x128xf32>
    %133 = math.exp %132 : vector<16x128xf32>
    %134 = arith.mulf %129, %133 : vector<16x128xf32>
    %cst_76 = arith.constant 1.000000e+00 : f32
    %135 = vector.broadcast %cst_76 : f32 to vector<16x128xf32>
    %136 = arith.subf %135, %134 : vector<16x128xf32>
    %137 = arith.mulf %108, %136 : vector<16x128xf32>
    %cst_77 = arith.constant 1.000000e+00 : f32
    %138 = vector.broadcast %cst_77 : f32 to vector<16x128xf32>
    %139 = arith.addf %138, %137 : vector<16x128xf32>
    %140 = arith.mulf %101, %139 : vector<16x128xf32>
    %c0_78 = arith.constant 0 : index
    %c0_79 = arith.constant 0 : index
    %c0_80 = arith.constant 0 : index
    %141 = vector.load %arg14[%c0_78, %c0_79, %c0_80] : memref<2x128x32xf32, #tpu.memory_space<vmem>>, vector<1x128x32xf32>
    %142 = vector.shape_cast %141 : vector<1x128x32xf32> to vector<128x32xf32>
    %cst_81 = arith.constant dense<0.000000e+00> : vector<16x32xf32>
    %143 = tpu.matmul %140, %142, %cst_81 {dimension_numbers = #tpu.dot_dimension_numbers<[1], [0], [0], [1], [0, 0, 1, 1], [], []>} : vector<16x128xf32>, vector<128x32xf32>, vector<16x32xf32> -> vector<16x32xf32>
    %144 = arith.addf %66, %143 : vector<16x32xf32>
    %c0_82 = arith.constant 0 : index
    %c0_83 = arith.constant 0 : index
    %c0_84 = arith.constant 0 : index
    %145 = vector.load %arg15[%c0_82, %c0_83, %c0_84] : memref<2x1x32xf32, #tpu.memory_space<vmem>>, vector<1x1x32xf32>
    %146 = vector.shape_cast %145 : vector<1x1x32xf32> to vector<1x32xf32>
    %147 = vector.broadcast %146 : vector<1x32xf32> to vector<16x32xf32>
    %148 = arith.addf %144, %147 : vector<16x32xf32>
    %c0_85 = arith.constant 0 : index
    %c0_86 = arith.constant 0 : index
    %c0_87 = arith.constant 0 : index
    %149 = vector.load %arg18[%c0_85, %c0_86, %c0_87] : memref<2x16x32xf32, #tpu.memory_space<vmem>>, vector<1x16x32xf32>
    %150 = vector.shape_cast %149 : vector<1x16x32xf32> to vector<16x32xf32>
    %151 = vector.shape_cast %148 : vector<16x32xf32> to vector<1x16x32xf32>
    tpu.vector_store %arg18[%c0_85, %c0_86, %c0_87], %151 {strides = array<i32>} : memref<2x16x32xf32, #tpu.memory_space<vmem>>, vector<1x16x32xf32>,
    %c1 = arith.constant 1 : index
    %c0_88 = arith.constant 0 : index
    %c0_89 = arith.constant 0 : index
    %152 = vector.load %arg3[%c1, %c0_88, %c0_89] : memref<2x1x32xf32, #tpu.memory_space<vmem>>, vector<1x1x32xf32>
    %153 = vector.shape_cast %152 : vector<1x1x32xf32> to vector<1x32xf32>
    %c1_90 = arith.constant 1 : index
    %c0_91 = arith.constant 0 : index
    %c0_92 = arith.constant 0 : index
    %154 = vector.load %arg4[%c1_90, %c0_91, %c0_92] : memref<2x1x32xf32, #tpu.memory_space<vmem>>, vector<1x1x32xf32>
    %155 = vector.shape_cast %154 : vector<1x1x32xf32> to vector<1x32xf32>
    %cst_93 = arith.constant dense<0.000000e+00> : vector<16xf32>
    %156 = vector.multi_reduction <add>, %148, %cst_93 [1] : vector<16x32xf32> to vector<16xf32>
    %157 = vector.shape_cast %156 : vector<16xf32> to vector<16x1xf32>
    %cst_94 = arith.constant 3.200000e+01 : f32
    %158 = vector.broadcast %cst_94 : f32 to vector<16x1xf32>
    %159 = arith.divf %157, %158 : vector<16x1xf32>
    %160 = vector.broadcast %159 : vector<16x1xf32> to vector<16x32xf32>
    %161 = arith.subf %148, %160 : vector<16x32xf32>
    %162 = arith.mulf %161, %161 : vector<16x32xf32>
    %cst_95 = arith.constant dense<0.000000e+00> : vector<16xf32>
    %163 = vector.multi_reduction <add>, %162, %cst_95 [1] : vector<16x32xf32> to vector<16xf32>
    %164 = vector.shape_cast %163 : vector<16xf32> to vector<16x1xf32>
    %cst_96 = arith.constant 3.200000e+01 : f32
    %165 = vector.broadcast %cst_96 : f32 to vector<16x1xf32>
    %166 = arith.divf %164, %165 : vector<16x1xf32>
    %167 = vector.broadcast %159 : vector<16x1xf32> to vector<16x32xf32>
    %168 = arith.subf %148, %167 : vector<16x32xf32>
    %cst_97 = arith.constant 9.99999974E-6 : f32
    %169 = vector.broadcast %cst_97 : f32 to vector<16x1xf32>
    %170 = arith.addf %166, %169 : vector<16x1xf32>
    %171 = math.rsqrt %170 : vector<16x1xf32>
    %172 = vector.broadcast %171 : vector<16x1xf32> to vector<16x32xf32>
    %173 = arith.mulf %168, %172 : vector<16x32xf32>
    %174 = vector.broadcast %153 : vector<1x32xf32> to vector<16x32xf32>
    %175 = arith.mulf %173, %174 : vector<16x32xf32>
    %176 = vector.broadcast %155 : vector<1x32xf32> to vector<16x32xf32>
    %177 = arith.addf %175, %176 : vector<16x32xf32>
    %178 = vector.shape_cast %177 : vector<16x32xf32> to vector<2x1x8x32xf32>
    %179 = vector.shape_cast %178 : vector<2x1x8x32xf32> to vector<2x1x8x32xf32>
    %180 = vector.broadcast %179 : vector<2x1x8x32xf32> to vector<2x4x8x32xf32>
    %181 = vector.shape_cast %180 : vector<2x4x8x32xf32> to vector<8x8x32xf32>
    %c1_98 = arith.constant 1 : index
    %c0_99 = arith.constant 0 : index
    %c0_100 = arith.constant 0 : index
    %c0_101 = arith.constant 0 : index
    %182 = vector.load %arg5[%c1_98, %c0_99, %c0_100, %c0_101] : memref<2x8x32x8xf32, #tpu.memory_space<vmem>>, vector<1x8x32x8xf32>
    %183 = vector.shape_cast %182 : vector<1x8x32x8xf32> to vector<8x32x8xf32>
    "tpu.trace_start"() <{level = 10 : i32, message = "gne,ged->gnd"}> : () -> ()
    %cst_102 = arith.constant dense<0.000000e+00> : vector<8x8x8xf32>
    %184 = tpu.matmul %181, %183, %cst_102 {dimension_numbers = #tpu.dot_dimension_numbers<[2], [1], [1], [2], [0, 0, 0, 1, 1, 2], [0], [0]>} : vector<8x8x32xf32>, vector<8x32x8xf32>, vector<8x8x8xf32> -> vector<8x8x8xf32>
    "tpu.trace_stop"() : () -> ()
    %c1_103 = arith.constant 1 : index
    %c0_104 = arith.constant 0 : index
    %c0_105 = arith.constant 0 : index
    %c0_106 = arith.constant 0 : index
    %185 = vector.load %arg6[%c1_103, %c0_104, %c0_105, %c0_106] : memref<2x8x32x8xf32, #tpu.memory_space<vmem>>, vector<1x8x32x8xf32>
    %186 = vector.shape_cast %185 : vector<1x8x32x8xf32> to vector<8x32x8xf32>
    "tpu.trace_start"() <{level = 10 : i32, message = "gne,ged->gnd"}> : () -> ()
    %cst_107 = arith.constant dense<0.000000e+00> : vector<8x8x8xf32>
    %187 = tpu.matmul %181, %186, %cst_107 {dimension_numbers = #tpu.dot_dimension_numbers<[2], [1], [1], [2], [0, 0, 0, 1, 1, 2], [0], [0]>} : vector<8x8x32xf32>, vector<8x32x8xf32>, vector<8x8x8xf32> -> vector<8x8x8xf32>
    "tpu.trace_stop"() : () -> ()
    %c1_108 = arith.constant 1 : index
    %c0_109 = arith.constant 0 : index
    %c0_110 = arith.constant 0 : index
    %c0_111 = arith.constant 0 : index
    %188 = vector.load %arg7[%c1_108, %c0_109, %c0_110, %c0_111] : memref<2x8x32x8xf32, #tpu.memory_space<vmem>>, vector<1x8x32x8xf32>
    %189 = vector.shape_cast %188 : vector<1x8x32x8xf32> to vector<8x32x8xf32>
    "tpu.trace_start"() <{level = 10 : i32, message = "gne,ged->gnd"}> : () -> ()
    %cst_112 = arith.constant dense<0.000000e+00> : vector<8x8x8xf32>
    %190 = tpu.matmul %181, %189, %cst_112 {dimension_numbers = #tpu.dot_dimension_numbers<[2], [1], [1], [2], [0, 0, 0, 1, 1, 2], [0], [0]>} : vector<8x8x32xf32>, vector<8x32x8xf32>, vector<8x8x8xf32> -> vector<8x8x8xf32>
    "tpu.trace_stop"() : () -> ()
    "tpu.trace_start"() <{level = 10 : i32, message = "gnd,gmd->gnm"}> : () -> ()
    %cst_113 = arith.constant dense<0.000000e+00> : vector<8x8x8xf32>
    %191 = tpu.matmul %184, %187, %cst_113 {dimension_numbers = #tpu.dot_dimension_numbers<[2], [2], [1], [1], [0, 0, 0, 1, 1, 1], [0], [0]>} : vector<8x8x8xf32>, vector<8x8x8xf32>, vector<8x8x8xf32> -> vector<8x8x8xf32>
    "tpu.trace_stop"() : () -> ()
    %cst_114 = arith.constant dense<0xFF800000> : vector<8x8xf32>
    %192 = vector.multi_reduction <maximumf>, %191, %cst_114 [2] : vector<8x8x8xf32> to vector<8x8xf32>
    %193 = vector.shape_cast %192 : vector<8x8xf32> to vector<8x8x1xf32>
    %194 = vector.broadcast %193 : vector<8x8x1xf32> to vector<8x8x8xf32>
    %195 = arith.subf %191, %194 : vector<8x8x8xf32>
    %196 = math.exp %195 : vector<8x8x8xf32>
    %cst_115 = arith.constant dense<0.000000e+00> : vector<8x8xf32>
    %197 = vector.multi_reduction <add>, %196, %cst_115 [2] : vector<8x8x8xf32> to vector<8x8xf32>
    %198 = vector.shape_cast %197 : vector<8x8xf32> to vector<8x8x1xf32>
    %199 = tpu.reciprocal %198 {approx = true} : vector<8x8x1xf32> -> vector<8x8x1xf32>
    %200 = vector.broadcast %199 : vector<8x8x1xf32> to vector<8x8x8xf32>
    %201 = arith.mulf %196, %200 : vector<8x8x8xf32>
    "tpu.trace_start"() <{level = 10 : i32, message = "gnm,gmd->gnd"}> : () -> ()
    %cst_116 = arith.constant dense<0.000000e+00> : vector<8x8x8xf32>
    %202 = tpu.matmul %201, %190, %cst_116 {dimension_numbers = #tpu.dot_dimension_numbers<[2], [1], [1], [2], [0, 0, 0, 1, 1, 2], [0], [0]>} : vector<8x8x8xf32>, vector<8x8x8xf32>, vector<8x8x8xf32> -> vector<8x8x8xf32>
    "tpu.trace_stop"() : () -> ()
    %c1_117 = arith.constant 1 : index
    %c0_118 = arith.constant 0 : index
    %c0_119 = arith.constant 0 : index
    %c0_120 = arith.constant 0 : index
    %203 = vector.load %arg8[%c1_117, %c0_118, %c0_119, %c0_120] : memref<2x8x8x32xf32, #tpu.memory_space<vmem>>, vector<1x8x8x32xf32>
    %204 = vector.shape_cast %203 : vector<1x8x8x32xf32> to vector<8x8x32xf32>
    "tpu.trace_start"() <{level = 10 : i32, message = "gnd,gde->gne"}> : () -> ()
    %cst_121 = arith.constant dense<0.000000e+00> : vector<8x8x32xf32>
    %205 = tpu.matmul %202, %204, %cst_121 {dimension_numbers = #tpu.dot_dimension_numbers<[2], [1], [1], [2], [0, 0, 0, 1, 1, 2], [0], [0]>} : vector<8x8x8xf32>, vector<8x8x32xf32>, vector<8x8x32xf32> -> vector<8x8x32xf32>
    "tpu.trace_stop"() : () -> ()
    %206 = vector.shape_cast %205 : vector<8x8x32xf32> to vector<2x4x8x32xf32>
    %cst_122 = arith.constant dense<0.000000e+00> : vector<2x8x32xf32>
    %207 = vector.multi_reduction <add>, %206, %cst_122 [1] : vector<2x4x8x32xf32> to vector<2x8x32xf32>
    %208 = vector.shape_cast %207 : vector<2x8x32xf32> to vector<16x32xf32>
    %209 = arith.addf %148, %208 : vector<16x32xf32>
    %c1_123 = arith.constant 1 : index
    %c0_124 = arith.constant 0 : index
    %c0_125 = arith.constant 0 : index
    %210 = vector.load %arg9[%c1_123, %c0_124, %c0_125] : memref<2x1x32xf32, #tpu.memory_space<vmem>>, vector<1x1x32xf32>
    %211 = vector.shape_cast %210 : vector<1x1x32xf32> to vector<1x32xf32>
    %212 = vector.broadcast %211 : vector<1x32xf32> to vector<16x32xf32>
    %213 = arith.addf %209, %212 : vector<16x32xf32>
    %c1_126 = arith.constant 1 : index
    %c0_127 = arith.constant 0 : index
    %c0_128 = arith.constant 0 : index
    %214 = vector.load %arg10[%c1_126, %c0_127, %c0_128] : memref<2x1x32xf32, #tpu.memory_space<vmem>>, vector<1x1x32xf32>
    %215 = vector.shape_cast %214 : vector<1x1x32xf32> to vector<1x32xf32>
    %c1_129 = arith.constant 1 : index
    %c0_130 = arith.constant 0 : index
    %c0_131 = arith.constant 0 : index
    %216 = vector.load %arg11[%c1_129, %c0_130, %c0_131] : memref<2x1x32xf32, #tpu.memory_space<vmem>>, vector<1x1x32xf32>
    %217 = vector.shape_cast %216 : vector<1x1x32xf32> to vector<1x32xf32>
    %cst_132 = arith.constant dense<0.000000e+00> : vector<16xf32>
    %218 = vector.multi_reduction <add>, %213, %cst_132 [1] : vector<16x32xf32> to vector<16xf32>
    %219 = vector.shape_cast %218 : vector<16xf32> to vector<16x1xf32>
    %cst_133 = arith.constant 3.200000e+01 : f32
    %220 = vector.broadcast %cst_133 : f32 to vector<16x1xf32>
    %221 = arith.divf %219, %220 : vector<16x1xf32>
    %222 = vector.broadcast %221 : vector<16x1xf32> to vector<16x32xf32>
    %223 = arith.subf %213, %222 : vector<16x32xf32>
    %224 = arith.mulf %223, %223 : vector<16x32xf32>
    %cst_134 = arith.constant dense<0.000000e+00> : vector<16xf32>
    %225 = vector.multi_reduction <add>, %224, %cst_134 [1] : vector<16x32xf32> to vector<16xf32>
    %226 = vector.shape_cast %225 : vector<16xf32> to vector<16x1xf32>
    %cst_135 = arith.constant 3.200000e+01 : f32
    %227 = vector.broadcast %cst_135 : f32 to vector<16x1xf32>
    %228 = arith.divf %226, %227 : vector<16x1xf32>
    %229 = vector.broadcast %221 : vector<16x1xf32> to vector<16x32xf32>
    %230 = arith.subf %213, %229 : vector<16x32xf32>
    %cst_136 = arith.constant 9.99999974E-6 : f32
    %231 = vector.broadcast %cst_136 : f32 to vector<16x1xf32>
    %232 = arith.addf %228, %231 : vector<16x1xf32>
    %233 = math.rsqrt %232 : vector<16x1xf32>
    %234 = vector.broadcast %233 : vector<16x1xf32> to vector<16x32xf32>
    %235 = arith.mulf %230, %234 : vector<16x32xf32>
    %236 = vector.broadcast %215 : vector<1x32xf32> to vector<16x32xf32>
    %237 = arith.mulf %235, %236 : vector<16x32xf32>
    %238 = vector.broadcast %217 : vector<1x32xf32> to vector<16x32xf32>
    %239 = arith.addf %237, %238 : vector<16x32xf32>
    %c1_137 = arith.constant 1 : index
    %c0_138 = arith.constant 0 : index
    %c0_139 = arith.constant 0 : index
    %240 = vector.load %arg12[%c1_137, %c0_138, %c0_139] : memref<2x32x128xf32, #tpu.memory_space<vmem>>, vector<1x32x128xf32>
    %241 = vector.shape_cast %240 : vector<1x32x128xf32> to vector<32x128xf32>
    %cst_140 = arith.constant dense<0.000000e+00> : vector<16x128xf32>
    %242 = tpu.matmul %239, %241, %cst_140 {dimension_numbers = #tpu.dot_dimension_numbers<[1], [0], [0], [1], [0, 0, 1, 1], [], []>} : vector<16x32xf32>, vector<32x128xf32>, vector<16x128xf32> -> vector<16x128xf32>
    %c1_141 = arith.constant 1 : index
    %c0_142 = arith.constant 0 : index
    %c0_143 = arith.constant 0 : index
    %243 = vector.load %arg13[%c1_141, %c0_142, %c0_143] : memref<2x1x128xf32, #tpu.memory_space<vmem>>, vector<1x1x128xf32>
    %244 = vector.shape_cast %243 : vector<1x1x128xf32> to vector<1x128xf32>
    %245 = vector.broadcast %244 : vector<1x128xf32> to vector<16x128xf32>
    %246 = arith.addf %242, %245 : vector<16x128xf32>
    %cst_144 = arith.constant 5.000000e-01 : f32
    %247 = vector.broadcast %cst_144 : f32 to vector<16x128xf32>
    %248 = arith.mulf %247, %246 : vector<16x128xf32>
    %cst_145 = arith.constant 0.707106769 : f32
    %249 = vector.broadcast %cst_145 : f32 to vector<16x128xf32>
    %250 = arith.mulf %246, %249 : vector<16x128xf32>
    %cst_146 = arith.constant 0.000000e+00 : f32
    %251 = vector.broadcast %cst_146 : f32 to vector<16x128xf32>
    %252 = arith.cmpf oge, %250, %251 : vector<16x128xf32>
    %cst_147 = arith.constant 1.000000e+00 : f32
    %cst_148 = arith.constant -1.000000e+00 : f32
    %253 = vector.broadcast %cst_147 : f32 to vector<16x128xf32>
    %254 = vector.broadcast %cst_148 : f32 to vector<16x128xf32>
    %255 = arith.select %252, %253, %254 : vector<16x128xi1>, vector<16x128xf32>
    %256 = math.absf %250 : vector<16x128xf32>
    %cst_149 = arith.constant 0.327591091 : f32
    %257 = vector.broadcast %cst_149 : f32 to vector<16x128xf32>
    %258 = arith.mulf %257, %256 : vector<16x128xf32>
    %cst_150 = arith.constant 1.000000e+00 : f32
    %259 = vector.broadcast %cst_150 : f32 to vector<16x128xf32>
    %260 = arith.addf %259, %258 : vector<16x128xf32>
    %cst_151 = arith.constant 1.000000e+00 : f32
    %261 = vector.broadcast %cst_151 : f32 to vector<16x128xf32>
    %262 = arith.divf %261, %260 : vector<16x128xf32>
    %cst_152 = arith.constant 1.06140542 : f32
    %263 = vector.broadcast %cst_152 : f32 to vector<16x128xf32>
    %264 = arith.mulf %263, %262 : vector<16x128xf32>
    %cst_153 = arith.constant -1.45315206 : f32
    %265 = vector.broadcast %cst_153 : f32 to vector<16x128xf32>
    %266 = arith.addf %264, %265 : vector<16x128xf32>
    %267 = arith.mulf %266, %262 : vector<16x128xf32>
    %cst_154 = arith.constant 1.42141378 : f32
    %268 = vector.broadcast %cst_154 : f32 to vector<16x128xf32>
    %269 = arith.addf %267, %268 : vector<16x128xf32>
    %270 = arith.mulf %269, %262 : vector<16x128xf32>
    %cst_155 = arith.constant -0.284496725 : f32
    %271 = vector.broadcast %cst_155 : f32 to vector<16x128xf32>
    %272 = arith.addf %270, %271 : vector<16x128xf32>
    %273 = arith.mulf %272, %262 : vector<16x128xf32>
    %cst_156 = arith.constant 0.254829586 : f32
    %274 = vector.broadcast %cst_156 : f32 to vector<16x128xf32>
    %275 = arith.addf %273, %274 : vector<16x128xf32>
    %276 = arith.mulf %275, %262 : vector<16x128xf32>
    %cst_157 = arith.constant 0.000000e+00 : f32
    %277 = vector.broadcast %cst_157 : f32 to vector<16x128xf32>
    %278 = arith.subf %277, %256 : vector<16x128xf32>
    %279 = arith.mulf %278, %256 : vector<16x128xf32>
    %280 = math.exp %279 : vector<16x128xf32>
    %281 = arith.mulf %276, %280 : vector<16x128xf32>
    %cst_158 = arith.constant 1.000000e+00 : f32
    %282 = vector.broadcast %cst_158 : f32 to vector<16x128xf32>
    %283 = arith.subf %282, %281 : vector<16x128xf32>
    %284 = arith.mulf %255, %283 : vector<16x128xf32>
    %cst_159 = arith.constant 1.000000e+00 : f32
    %285 = vector.broadcast %cst_159 : f32 to vector<16x128xf32>
    %286 = arith.addf %285, %284 : vector<16x128xf32>
    %287 = arith.mulf %248, %286 : vector<16x128xf32>
    %c1_160 = arith.constant 1 : index
    %c0_161 = arith.constant 0 : index
    %c0_162 = arith.constant 0 : index
    %288 = vector.load %arg14[%c1_160, %c0_161, %c0_162] : memref<2x128x32xf32, #tpu.memory_space<vmem>>, vector<1x128x32xf32>
    %289 = vector.shape_cast %288 : vector<1x128x32xf32> to vector<128x32xf32>
    %cst_163 = arith.constant dense<0.000000e+00> : vector<16x32xf32>
    %290 = tpu.matmul %287, %289, %cst_163 {dimension_numbers = #tpu.dot_dimension_numbers<[1], [0], [0], [1], [0, 0, 1, 1], [], []>} : vector<16x128xf32>, vector<128x32xf32>, vector<16x32xf32> -> vector<16x32xf32>
    %291 = arith.addf %213, %290 : vector<16x32xf32>
    %c1_164 = arith.constant 1 : index
    %c0_165 = arith.constant 0 : index
    %c0_166 = arith.constant 0 : index
    %292 = vector.load %arg15[%c1_164, %c0_165, %c0_166] : memref<2x1x32xf32, #tpu.memory_space<vmem>>, vector<1x1x32xf32>
    %293 = vector.shape_cast %292 : vector<1x1x32xf32> to vector<1x32xf32>
    %294 = vector.broadcast %293 : vector<1x32xf32> to vector<16x32xf32>
    %295 = arith.addf %291, %294 : vector<16x32xf32>
    %c1_167 = arith.constant 1 : index
    %c0_168 = arith.constant 0 : index
    %c0_169 = arith.constant 0 : index
    %296 = vector.load %arg18[%c1_167, %c0_168, %c0_169] : memref<2x16x32xf32, #tpu.memory_space<vmem>>, vector<1x16x32xf32>
    %297 = vector.shape_cast %296 : vector<1x16x32xf32> to vector<16x32xf32>
    %298 = vector.shape_cast %295 : vector<16x32xf32> to vector<1x16x32xf32>
    tpu.vector_store %arg18[%c1_167, %c0_168, %c0_169], %298 {strides = array<i32>} : memref<2x16x32xf32, #tpu.memory_space<vmem>>, vector<1x16x32xf32>,
    %c0_170 = arith.constant 0 : index
    %c0_171 = arith.constant 0 : index
    %299 = vector.load %arg16[%c0_170, %c0_171] : memref<32x16xf32, #tpu.memory_space<vmem>>, vector<32x16xf32>
    %cst_172 = arith.constant dense<0.000000e+00> : vector<16x16xf32>
    %300 = tpu.matmul %4, %299, %cst_172 {dimension_numbers = #tpu.dot_dimension_numbers<[1], [0], [0], [1], [0, 0, 1, 1], [], []>} : vector<16x32xf32>, vector<32x16xf32>, vector<16x16xf32> -> vector<16x16xf32>
    %c0_173 = arith.constant 0 : index
    %c0_174 = arith.constant 0 : index
    %301 = vector.load %arg17[%c0_173, %c0_174] : memref<1x16xf32, #tpu.memory_space<vmem>>, vector<1x16xf32>
    %302 = vector.broadcast %301 : vector<1x16xf32> to vector<16x16xf32>
    %303 = arith.addf %300, %302 : vector<16x16xf32>
    %c0_175 = arith.constant 0 : index
    %c0_176 = arith.constant 0 : index
    %304 = vector.load %arg19[%c0_175, %c0_176] : memref<16x16xf32, #tpu.memory_space<vmem>>, vector<16x16xf32>
    tpu.vector_store %arg19[%c0_175, %c0_176], %303 {strides = array<i32>} : memref<16x16xf32, #tpu.memory_space<vmem>>, vector<16x16xf32>,
    return
  }
}

</mosaic_0001>

<llo_original>
// kernel: vit_forward.1
$region0: #{vit_forward.1}
  #allocation0 [shape = 'u32[]', space=smem, size = 0x4, offset = 0x4, fixed_abs, tag = 'smem constant byte address 0x4 - core index']
  #allocation1 [shape = 'u32[144,128]{1,0:T(1,128)}', space=vmem, size = 0x12000, scoped, tag = 'internal scratch']
  %s0 = inlined_call_operand.vmem [shape: bf16[16,1024], index: 0, kind: input, shape index: {}]
  %s1 = inlined_call_operand.vmem [shape: bf16[1024,32], index: 1, kind: input, shape index: {}]
  %s2 = inlined_call_operand.vmem [shape: f32[16,32], index: 2, kind: input, shape index: {}]
  %s3 = inlined_call_operand.vmem [shape: f32[2,1,32], index: 3, kind: input, shape index: {}]
  %s4 = inlined_call_operand.vmem [shape: f32[2,1,32], index: 4, kind: input, shape index: {}]
  %s5 = inlined_call_operand.vmem [shape: f32[2,8,32,8], index: 5, kind: input, shape index: {}]
  %s6 = inlined_call_operand.vmem [shape: f32[2,8,32,8], index: 6, kind: input, shape index: {}]
  %s7 = inlined_call_operand.vmem [shape: f32[2,8,32,8], index: 7, kind: input, shape index: {}]
  %s8 = inlined_call_operand.vmem [shape: f32[2,8,8,32], index: 8, kind: input, shape index: {}]
  %s9 = inlined_call_operand.vmem [shape: f32[2,1,32], index: 9, kind: input, shape index: {}]
  %s10 = inlined_call_operand.vmem [shape: f32[2,1,32], index: 10, kind: input, shape index: {}]
  %s11 = inlined_call_operand.vmem [shape: f32[2,1,32], index: 11, kind: input, shape index: {}]
  %s12 = inlined_call_operand.vmem [shape: f32[2,32,128], index: 12, kind: input, shape index: {}]
  %s13 = inlined_call_operand.vmem [shape: f32[2,1,128], index: 13, kind: input, shape index: {}]
  %s14 = inlined_call_operand.vmem [shape: f32[2,128,32], index: 14, kind: input, shape index: {}]
  %s15 = inlined_call_operand.vmem [shape: f32[2,1,32], index: 15, kind: input, shape index: {}]
  %s16 = inlined_call_operand.vmem [shape: f32[32,16], index: 16, kind: input, shape index: {}]
  %s17 = inlined_call_operand.vmem [shape: f32[1,16], index: 17, kind: input, shape index: {}]
  %s18 = inlined_call_operand.vmem [shape: f32[2,16,32], index: 18, kind: output, shape index: {0}]
  %s19 = inlined_call_operand.hbm [shape: f32[16,16], index: 19, kind: output, shape index: {1}]
  %20 = xla_tuple %s18, %s19
  %s21 = sld [smem:[#allocation0]]
  $region90: #{vit_forward.1} parent=0
    _
  %s23 = ssub.s32 1, %s21
  %s24 = scalar_select 0, %s23, %s21
  $region1: #{vit_forward.1} parent=0
    #allocation2 [shape = 'u8[8192]{0}', space=vmem, size = 0x2000, scoped, tag = 'output window, operand 1, single buffered']
    #allocation3 [shape = 's32[1]{0}', space=sflag, size = 0x4, scoped, tag = 'scoped memory for vit_forward.1']
    %25 = vsyncpa [#allocation3], 0
    // Predicated region
    $region2: #{vit_forward.1} parent=1 // pred_check
      _
    $region3: #{vit_forward.1} parent=1 // pred_check_branch
      %27 = sbr.rel (0) target = $region5
    $region4: #{vit_forward.1} parent=1 // pred_region
      _
    $region5: #{vit_forward.1} parent=1 // pred_fallthru
      _
    // Predicated region
    $region6: #{vit_forward.1} parent=1 // pred_check
      _
    $region7: #{vit_forward.1} parent=1 // pred_check_branch
      %29 = sbr.rel (0) target = $region9
    $region8: #{vit_forward.1} parent=1 // pred_region
      _
    $region9: #{vit_forward.1} parent=1 // pred_fallthru
      _
    // Predicated region
    $region10: #{vit_forward.1} parent=1 // pred_check
      _
    $region11: #{vit_forward.1} parent=1 // pred_check_branch
      %31 = sbr.rel (0) target = $region13
    $region12: #{vit_forward.1} parent=1 // pred_region
      _
    $region13: #{vit_forward.1} parent=1 // pred_fallthru
      _
    // Predicated region
    $region14: #{vit_forward.1} parent=1 // pred_check
      _
    $region15: #{vit_forward.1} parent=1 // pred_check_branch
      %33 = sbr.rel (0) target = $region17
    $region16: #{vit_forward.1} parent=1 // pred_region
      _
    $region17: #{vit_forward.1} parent=1 // pred_fallthru
      _
    // Predicated region
    $region18: #{vit_forward.1} parent=1 // pred_check
      _
    $region19: #{vit_forward.1} parent=1 // pred_check_branch
      %35 = sbr.rel (0) target = $region21
    $region20: #{vit_forward.1} parent=1 // pred_region
      _
    $region21: #{vit_forward.1} parent=1 // pred_fallthru
      _
    // Predicated region
    $region22: #{vit_forward.1} parent=1 // pred_check
      _
    $region23: #{vit_forward.1} parent=1 // pred_check_branch
      %37 = sbr.rel (0) target = $region25
    $region24: #{vit_forward.1} parent=1 // pred_region
      _
    $region25: #{vit_forward.1} parent=1 // pred_fallthru
      _
    // Predicated region
    $region26: #{vit_forward.1} parent=1 // pred_check
      _
    $region27: #{vit_forward.1} parent=1 // pred_check_branch
      %39 = sbr.rel (0) target = $region29
    $region28: #{vit_forward.1} parent=1 // pred_region
      _
    $region29: #{vit_forward.1} parent=1 // pred_fallthru
      _
    // Predicated region
    $region30: #{vit_forward.1} parent=1 // pred_check
      _
    $region31: #{vit_forward.1} parent=1 // pred_check_branch
      %41 = sbr.rel (0) target = $region33
    $region32: #{vit_forward.1} parent=1 // pred_region
      _
    $region33: #{vit_forward.1} parent=1 // pred_fallthru
      _
    // Predicated region
    $region34: #{vit_forward.1} parent=1 // pred_check
      _
    $region35: #{vit_forward.1} parent=1 // pred_check_branch
      %43 = sbr.rel (0) target = $region37
    $region36: #{vit_forward.1} parent=1 // pred_region
      _
    $region37: #{vit_forward.1} parent=1 // pred_fallthru
      _
    // Predicated region
    $region38: #{vit_forward.1} parent=1 // pred_check
      _
    $region39: #{vit_forward.1} parent=1 // pred_check_branch
      %45 = sbr.rel (0) target = $region41
    $region40: #{vit_forward.1} parent=1 // pred_region
      _
    $region41: #{vit_forward.1} parent=1 // pred_fallthru
      _
    // Predicated region
    $region42: #{vit_forward.1} parent=1 // pred_check
      _
    $region43: #{vit_forward.1} parent=1 // pred_check_branch
      %47 = sbr.rel (0) target = $region45
    $region44: #{vit_forward.1} parent=1 // pred_region
      _
    $region45: #{vit_forward.1} parent=1 // pred_fallthru
      _
    // Predicated region
    $region46: #{vit_forward.1} parent=1 // pred_check
      _
    $region47: #{vit_forward.1} parent=1 // pred_check_branch
      %49 = sbr.rel (0) target = $region49
    $region48: #{vit_forward.1} parent=1 // pred_region
      _
    $region49: #{vit_forward.1} parent=1 // pred_fallthru
      _
    // Predicated region
    $region50: #{vit_forward.1} parent=1 // pred_check
      _
    $region51: #{vit_forward.1} parent=1 // pred_check_branch
      %51 = sbr.rel (0) target = $region53
    $region52: #{vit_forward.1} parent=1 // pred_region
      _
    $region53: #{vit_forward.1} parent=1 // pred_fallthru
      _
    // Predicated region
    $region54: #{vit_forward.1} parent=1 // pred_check
      _
    $region55: #{vit_forward.1} parent=1 // pred_check_branch
      %53 = sbr.rel (0) target = $region57
    $region56: #{vit_forward.1} parent=1 // pred_region
      _
    $region57: #{vit_forward.1} parent=1 // pred_fallthru
      _
    // Predicated region
    $region58: #{vit_forward.1} parent=1 // pred_check
      _
    $region59: #{vit_forward.1} parent=1 // pred_check_branch
      %55 = sbr.rel (0) target = $region61
    $region60: #{vit_forward.1} parent=1 // pred_region
      _
    $region61: #{vit_forward.1} parent=1 // pred_fallthru
      _
    // Predicated region
    $region62: #{vit_forward.1} parent=1 // pred_check
      _
    $region63: #{vit_forward.1} parent=1 // pred_check_branch
      %57 = sbr.rel (0) target = $region65
    $region64: #{vit_forward.1} parent=1 // pred_region
      _
    $region65: #{vit_forward.1} parent=1 // pred_fallthru
      _
    // Predicated region
    $region66: #{vit_forward.1} parent=1 // pred_check
      _
    $region67: #{vit_forward.1} parent=1 // pred_check_branch
      %59 = sbr.rel (0) target = $region69
    $region68: #{vit_forward.1} parent=1 // pred_region
      _
    $region69: #{vit_forward.1} parent=1 // pred_fallthru
      _
    // Predicated region
    $region70: #{vit_forward.1} parent=1 // pred_check
      _
    $region71: #{vit_forward.1} parent=1 // pred_check_branch
      %61 = sbr.rel (0) target = $region73
    $region72: #{vit_forward.1} parent=1 // pred_region
      _
    $region73: #{vit_forward.1} parent=1 // pred_fallthru
      _
    %v63 = vld [vmem:[%s0] sm:$0xff]
    %v64 = vld [vmem:[%s0 + $0x8] sm:$0xff]
    %v65 = vld [vmem:[%s0 + $0x10] sm:$0xff]
    %v66 = vld [vmem:[%s0 + $0x18] sm:$0xff]
    %v67 = vld [vmem:[%s0 + $0x20] sm:$0xff]
    %v68 = vld [vmem:[%s0 + $0x28] sm:$0xff]
    %v69 = vld [vmem:[%s0 + $0x30] sm:$0xff]
    %v70 = vld [vmem:[%s0 + $0x38] sm:$0xff]
    %v71 = vld [vmem:[%s1] sm:$0xf]
    %v72 = vld [vmem:[%s1 + $0x4] sm:$0xf]
    %v73 = vld [vmem:[%s1 + $0x8] sm:$0xf]
    %v74 = vld [vmem:[%s1 + $0xc] sm:$0xf]
    %v75 = vld [vmem:[%s1 + $0x10] sm:$0xf]
    %v76 = vld [vmem:[%s1 + $0x14] sm:$0xf]
    %v77 = vld [vmem:[%s1 + $0x18] sm:$0xf]
    %v78 = vld [vmem:[%s1 + $0x1c] sm:$0xf]
    %v79 = vld [vmem:[%s1 + $0x20] sm:$0xf]
    %v80 = vld [vmem:[%s1 + $0x24] sm:$0xf]
    %v81 = vld [vmem:[%s1 + $0x28] sm:$0xf]
    %v82 = vld [vmem:[%s1 + $0x2c] sm:$0xf]
    %v83 = vld [vmem:[%s1 + $0x30] sm:$0xf]
    %v84 = vld [vmem:[%s1 + $0x34] sm:$0xf]
    %v85 = vld [vmem:[%s1 + $0x38] sm:$0xf]
    %v86 = vld [vmem:[%s1 + $0x3c] sm:$0xf]
    %v87 = vld [vmem:[%s1 + $0x40] sm:$0xf]
    %v88 = vld [vmem:[%s1 + $0x44] sm:$0xf]
    %v89 = vld [vmem:[%s1 + $0x48] sm:$0xf]
    %v90 = vld [vmem:[%s1 + $0x4c] sm:$0xf]
    %v91 = vld [vmem:[%s1 + $0x50] sm:$0xf]
    %v92 = vld [vmem:[%s1 + $0x54] sm:$0xf]
    %v93 = vld [vmem:[%s1 + $0x58] sm:$0xf]
    %v94 = vld [vmem:[%s1 + $0x5c] sm:$0xf]
    %v95 = vld [vmem:[%s1 + $0x60] sm:$0xf]
    %v96 = vld [vmem:[%s1 + $0x64] sm:$0xf]
    %v97 = vld [vmem:[%s1 + $0x68] sm:$0xf]
    %v98 = vld [vmem:[%s1 + $0x6c] sm:$0xf]
    %v99 = vld [vmem:[%s1 + $0x70] sm:$0xf]
    %v100 = vld [vmem:[%s1 + $0x74] sm:$0xf]
    %v101 = vld [vmem:[%s1 + $0x78] sm:$0xf]
    %v102 = vld [vmem:[%s1 + $0x7c] sm:$0xf]
    %v103 = vld [vmem:[%s1 + $0x80] sm:$0xf]
    %v104 = vld [vmem:[%s1 + $0x84] sm:$0xf]
    %v105 = vld [vmem:[%s1 + $0x88] sm:$0xf]
    %v106 = vld [vmem:[%s1 + $0x8c] sm:$0xf]
    %v107 = vld [vmem:[%s1 + $0x90] sm:$0xf]
    %v108 = vld [vmem:[%s1 + $0x94] sm:$0xf]
    %v109 = vld [vmem:[%s1 + $0x98] sm:$0xf]
    %v110 = vld [vmem:[%s1 + $0x9c] sm:$0xf]
    %v111 = vld [vmem:[%s1 + $0xa0] sm:$0xf]
    %v112 = vld [vmem:[%s1 + $0xa4] sm:$0xf]
    %v113 = vld [vmem:[%s1 + $0xa8] sm:$0xf]
    %v114 = vld [vmem:[%s1 + $0xac] sm:$0xf]
    %v115 = vld [vmem:[%s1 + $0xb0] sm:$0xf]
    %v116 = vld [vmem:[%s1 + $0xb4] sm:$0xf]
    %v117 = vld [vmem:[%s1 + $0xb8] sm:$0xf]
    %v118 = vld [vmem:[%s1 + $0xbc] sm:$0xf]
    %v119 = vld [vmem:[%s1 + $0xc0] sm:$0xf]
    %v120 = vld [vmem:[%s1 + $0xc4] sm:$0xf]
    %v121 = vld [vmem:[%s1 + $0xc8] sm:$0xf]
    %v122 = vld [vmem:[%s1 + $0xcc] sm:$0xf]
    %v123 = vld [vmem:[%s1 + $0xd0] sm:$0xf]
    %v124 = vld [vmem:[%s1 + $0xd4] sm:$0xf]
    %v125 = vld [vmem:[%s1 + $0xd8] sm:$0xf]
    %v126 = vld [vmem:[%s1 + $0xdc] sm:$0xf]
    %v127 = vld [vmem:[%s1 + $0xe0] sm:$0xf]
    %v128 = vld [vmem:[%s1 + $0xe4] sm:$0xf]
    %v129 = vld [vmem:[%s1 + $0xe8] sm:$0xf]
    %v130 = vld [vmem:[%s1 + $0xec] sm:$0xf]
    %v131 = vld [vmem:[%s1 + $0xf0] sm:$0xf]
    %v132 = vld [vmem:[%s1 + $0xf4] sm:$0xf]
    %v133 = vld [vmem:[%s1 + $0xf8] sm:$0xf]
    %v134 = vld [vmem:[%s1 + $0xfc] sm:$0xf]
    %v135 = vld [vmem:[%s1 + $0x100] sm:$0xf]
    %v136 = vld [vmem:[%s1 + $0x104] sm:$0xf]
    %v137 = vld [vmem:[%s1 + $0x108] sm:$0xf]
    %v138 = vld [vmem:[%s1 + $0x10c] sm:$0xf]
    %v139 = vld [vmem:[%s1 + $0x110] sm:$0xf]
    %v140 = vld [vmem:[%s1 + $0x114] sm:$0xf]
    %v141 = vld [vmem:[%s1 + $0x118] sm:$0xf]
    %v142 = vld [vmem:[%s1 + $0x11c] sm:$0xf]
    %v143 = vld [vmem:[%s1 + $0x120] sm:$0xf]
    %v144 = vld [vmem:[%s1 + $0x124] sm:$0xf]
    %v145 = vld [vmem:[%s1 + $0x128] sm:$0xf]
    %v146 = vld [vmem:[%s1 + $0x12c] sm:$0xf]
    %v147 = vld [vmem:[%s1 + $0x130] sm:$0xf]
    %v148 = vld [vmem:[%s1 + $0x134] sm:$0xf]
    %v149 = vld [vmem:[%s1 + $0x138] sm:$0xf]
    %v150 = vld [vmem:[%s1 + $0x13c] sm:$0xf]
    %v151 = vld [vmem:[%s1 + $0x140] sm:$0xf]
    %v152 = vld [vmem:[%s1 + $0x144] sm:$0xf]
    %v153 = vld [vmem:[%s1 + $0x148] sm:$0xf]
    %v154 = vld [vmem:[%s1 + $0x14c] sm:$0xf]
    %v155 = vld [vmem:[%s1 + $0x150] sm:$0xf]
    %v156 = vld [vmem:[%s1 + $0x154] sm:$0xf]
    %v157 = vld [vmem:[%s1 + $0x158] sm:$0xf]
    %v158 = vld [vmem:[%s1 + $0x15c] sm:$0xf]
    %v159 = vld [vmem:[%s1 + $0x160] sm:$0xf]
    %v160 = vld [vmem:[%s1 + $0x164] sm:$0xf]
    %v161 = vld [vmem:[%s1 + $0x168] sm:$0xf]
    %v162 = vld [vmem:[%s1 + $0x16c] sm:$0xf]
    %v163 = vld [vmem:[%s1 + $0x170] sm:$0xf]
    %v164 = vld [vmem:[%s1 + $0x174] sm:$0xf]
    %v165 = vld [vmem:[%s1 + $0x178] sm:$0xf]
    %v166 = vld [vmem:[%s1 + $0x17c] sm:$0xf]
    %v167 = vld [vmem:[%s1 + $0x180] sm:$0xf]
    %v168 = vld [vmem:[%s1 + $0x184] sm:$0xf]
    %v169 = vld [vmem:[%s1 + $0x188] sm:$0xf]
    %v170 = vld [vmem:[%s1 + $0x18c] sm:$0xf]
    %v171 = vld [vmem:[%s1 + $0x190] sm:$0xf]
    %v172 = vld [vmem:[%s1 + $0x194] sm:$0xf]
    %v173 = vld [vmem:[%s1 + $0x198] sm:$0xf]
    %v174 = vld [vmem:[%s1 + $0x19c] sm:$0xf]
    %v175 = vld [vmem:[%s1 + $0x1a0] sm:$0xf]
    %v176 = vld [vmem:[%s1 + $0x1a4] sm:$0xf]
    %v177 = vld [vmem:[%s1 + $0x1a8] sm:$0xf]
    %v178 = vld [vmem:[%s1 + $0x1ac] sm:$0xf]
    %v179 = vld [vmem:[%s1 + $0x1b0] sm:$0xf]
    %v180 = vld [vmem:[%s1 + $0x1b4] sm:$0xf]
    %v181 = vld [vmem:[%s1 + $0x1b8] sm:$0xf]
    %v182 = vld [vmem:[%s1 + $0x1bc] sm:$0xf]
    %v183 = vld [vmem:[%s1 + $0x1c0] sm:$0xf]
    %v184 = vld [vmem:[%s1 + $0x1c4] sm:$0xf]
    %v185 = vld [vmem:[%s1 + $0x1c8] sm:$0xf]
    %v186 = vld [vmem:[%s1 + $0x1cc] sm:$0xf]
    %v187 = vld [vmem:[%s1 + $0x1d0] sm:$0xf]
    %v188 = vld [vmem:[%s1 + $0x1d4] sm:$0xf]
    %v189 = vld [vmem:[%s1 + $0x1d8] sm:$0xf]
    %v190 = vld [vmem:[%s1 + $0x1dc] sm:$0xf]
    %v191 = vld [vmem:[%s1 + $0x1e0] sm:$0xf]
    %v192 = vld [vmem:[%s1 + $0x1e4] sm:$0xf]
    %v193 = vld [vmem:[%s1 + $0x1e8] sm:$0xf]
    %v194 = vld [vmem:[%s1 + $0x1ec] sm:$0xf]
    %v195 = vld [vmem:[%s1 + $0x1f0] sm:$0xf]
    %v196 = vld [vmem:[%s1 + $0x1f4] sm:$0xf]
    %v197 = vld [vmem:[%s1 + $0x1f8] sm:$0xf]
    %v198 = vld [vmem:[%s1 + $0x1fc] sm:$0xf]
    %v199 = vld [vmem:[%s2] sm:$0xff]
    %v200 = vld [vmem:[%s2 + $0x8] sm:$0xff]
    %v209 = vunpack.c.l.b16 %v63
    %v210 = vunpack.c.h.b16 %v63
    %v211 = vunpack.c.l.b16 %v64
    %v212 = vunpack.c.h.b16 %v64
    %v213 = vunpack.c.l.b16 %v65
    %v214 = vunpack.c.h.b16 %v65
    %v215 = vunpack.c.l.b16 %v66
    %v216 = vunpack.c.h.b16 %v66
    %v217 = vunpack.c.l.b16 %v67
    %v218 = vunpack.c.h.b16 %v67
    %v219 = vunpack.c.l.b16 %v68
    %v220 = vunpack.c.h.b16 %v68
    %v221 = vunpack.c.l.b16 %v69
    %v222 = vunpack.c.h.b16 %v69
    %v223 = vunpack.c.l.b16 %v70
    %v224 = vunpack.c.h.b16 %v70
    %v225 = vpack.c.b16 %v217, %v209
    %v226 = vpack.c.b16 %v218, %v210
    %v227 = vpack.c.b16 %v219, %v211
    %v228 = vpack.c.b16 %v220, %v212
    %v229 = vpack.c.b16 %v221, %v213
    %v230 = vpack.c.b16 %v222, %v214
    %v231 = vpack.c.b16 %v223, %v215
    %v232 = vpack.c.b16 %v224, %v216
    %v369 = vunpack.c.l.b16 %v71
    %v370 = vunpack.c.l.b16 %v72
    %v371 = vunpack.c.l.b16 %v73
    %v372 = vunpack.c.l.b16 %v74
    %v373 = vunpack.c.l.b16 %v75
    %v374 = vunpack.c.l.b16 %v76
    %v375 = vunpack.c.l.b16 %v77
    %v376 = vunpack.c.l.b16 %v78
    %v377 = vunpack.c.l.b16 %v79
    %v378 = vunpack.c.l.b16 %v80
    %v379 = vunpack.c.l.b16 %v81
    %v380 = vunpack.c.l.b16 %v82
    %v381 = vunpack.c.l.b16 %v83
    %v382 = vunpack.c.l.b16 %v84
    %v383 = vunpack.c.l.b16 %v85
    %v384 = vunpack.c.l.b16 %v86
    %v385 = vunpack.c.l.b16 %v87
    %v386 = vunpack.c.l.b16 %v88
    %v387 = vunpack.c.l.b16 %v89
    %v388 = vunpack.c.l.b16 %v90
    %v389 = vunpack.c.l.b16 %v91
    %v390 = vunpack.c.l.b16 %v92
    %v391 = vunpack.c.l.b16 %v93
    %v392 = vunpack.c.l.b16 %v94
    %v393 = vunpack.c.l.b16 %v95
    %v394 = vunpack.c.l.b16 %v96
    %v395 = vunpack.c.l.b16 %v97
    %v396 = vunpack.c.l.b16 %v98
    %v397 = vunpack.c.l.b16 %v99
    %v398 = vunpack.c.l.b16 %v100
    %v399 = vunpack.c.l.b16 %v101
    %v400 = vunpack.c.l.b16 %v102
    %v401 = vunpack.c.l.b16 %v103
    %v402 = vunpack.c.l.b16 %v104
    %v403 = vunpack.c.l.b16 %v105
    %v404 = vunpack.c.l.b16 %v106
    %v405 = vunpack.c.l.b16 %v107
    %v406 = vunpack.c.l.b16 %v108
    %v407 = vunpack.c.l.b16 %v109
    %v408 = vunpack.c.l.b16 %v110
    %v409 = vunpack.c.l.b16 %v111
    %v410 = vunpack.c.l.b16 %v112
    %v411 = vunpack.c.l.b16 %v113
    %v412 = vunpack.c.l.b16 %v114
    %v413 = vunpack.c.l.b16 %v115
    %v414 = vunpack.c.l.b16 %v116
    %v415 = vunpack.c.l.b16 %v117
    %v416 = vunpack.c.l.b16 %v118
    %v417 = vunpack.c.l.b16 %v119
    %v418 = vunpack.c.l.b16 %v120
    %v419 = vunpack.c.l.b16 %v121
    %v420 = vunpack.c.l.b16 %v122
    %v421 = vunpack.c.l.b16 %v123
    %v422 = vunpack.c.l.b16 %v124
    %v423 = vunpack.c.l.b16 %v125
    %v424 = vunpack.c.l.b16 %v126
    %v425 = vunpack.c.l.b16 %v127
    %v426 = vunpack.c.l.b16 %v128
    %v427 = vunpack.c.l.b16 %v129
    %v428 = vunpack.c.l.b16 %v130
    %v429 = vunpack.c.l.b16 %v131
    %v430 = vunpack.c.l.b16 %v132
    %v431 = vunpack.c.l.b16 %v133
    %v432 = vunpack.c.l.b16 %v134
    %v433 = vunpack.c.l.b16 %v135
    %v434 = vunpack.c.l.b16 %v136
    %v435 = vunpack.c.l.b16 %v137
    %v436 = vunpack.c.l.b16 %v138
    %v437 = vunpack.c.l.b16 %v139
    %v438 = vunpack.c.l.b16 %v140
    %v439 = vunpack.c.l.b16 %v141
    %v440 = vunpack.c.l.b16 %v142
    %v441 = vunpack.c.l.b16 %v143
    %v442 = vunpack.c.l.b16 %v144
    %v443 = vunpack.c.l.b16 %v145
    %v444 = vunpack.c.l.b16 %v146
    %v445 = vunpack.c.l.b16 %v147
    %v446 = vunpack.c.l.b16 %v148
    %v447 = vunpack.c.l.b16 %v149
    %v448 = vunpack.c.l.b16 %v150
    %v449 = vunpack.c.l.b16 %v151
    %v450 = vunpack.c.l.b16 %v152
    %v451 = vunpack.c.l.b16 %v153
    %v452 = vunpack.c.l.b16 %v154
    %v453 = vunpack.c.l.b16 %v155
    %v454 = vunpack.c.l.b16 %v156
    %v455 = vunpack.c.l.b16 %v157
    %v456 = vunpack.c.l.b16 %v158
    %v457 = vunpack.c.l.b16 %v159
    %v458 = vunpack.c.l.b16 %v160
    %v459 = vunpack.c.l.b16 %v161
    %v460 = vunpack.c.l.b16 %v162
    %v461 = vunpack.c.l.b16 %v163
    %v462 = vunpack.c.l.b16 %v164
    %v463 = vunpack.c.l.b16 %v165
    %v464 = vunpack.c.l.b16 %v166
    %v465 = vunpack.c.l.b16 %v167
    %v466 = vunpack.c.l.b16 %v168
    %v467 = vunpack.c.l.b16 %v169
    %v468 = vunpack.c.l.b16 %v170
    %v469 = vunpack.c.l.b16 %v171
    %v470 = vunpack.c.l.b16 %v172
    %v471 = vunpack.c.l.b16 %v173
    %v472 = vunpack.c.l.b16 %v174
    %v473 = vunpack.c.l.b16 %v175
    %v474 = vunpack.c.l.b16 %v176
    %v475 = vunpack.c.l.b16 %v177
    %v476 = vunpack.c.l.b16 %v178
    %v477 = vunpack.c.l.b16 %v179
    %v478 = vunpack.c.l.b16 %v180
    %v479 = vunpack.c.l.b16 %v181
    %v480 = vunpack.c.l.b16 %v182
    %v481 = vunpack.c.l.b16 %v183
    %v482 = vunpack.c.l.b16 %v184
    %v483 = vunpack.c.l.b16 %v185
    %v484 = vunpack.c.l.b16 %v186
    %v485 = vunpack.c.l.b16 %v187
    %v486 = vunpack.c.l.b16 %v188
    %v487 = vunpack.c.l.b16 %v189
    %v488 = vunpack.c.l.b16 %v190
    %v489 = vunpack.c.l.b16 %v191
    %v490 = vunpack.c.l.b16 %v192
    %v491 = vunpack.c.l.b16 %v193
    %v492 = vunpack.c.l.b16 %v194
    %v493 = vunpack.c.l.b16 %v195
    %v494 = vunpack.c.l.b16 %v196
    %v495 = vunpack.c.l.b16 %v197
    %v496 = vunpack.c.l.b16 %v198
    %v497 = vpack.c.b16 %v370, %v369
    %v498 = vpack.c.b16 %v372, %v371
    %v499 = vpack.c.b16 %v374, %v373
    %v500 = vpack.c.b16 %v376, %v375
    %v501 = vpack.c.b16 %v378, %v377
    %v502 = vpack.c.b16 %v380, %v379
    %v503 = vpack.c.b16 %v382, %v381
    %v504 = vpack.c.b16 %v384, %v383
    %v505 = vpack.c.b16 %v386, %v385
    %v506 = vpack.c.b16 %v388, %v387
    %v507 = vpack.c.b16 %v390, %v389
    %v508 = vpack.c.b16 %v392, %v391
    %v509 = vpack.c.b16 %v394, %v393
    %v510 = vpack.c.b16 %v396, %v395
    %v511 = vpack.c.b16 %v398, %v397
    %v512 = vpack.c.b16 %v400, %v399
    %v513 = vpack.c.b16 %v402, %v401
    %v514 = vpack.c.b16 %v404, %v403
    %v515 = vpack.c.b16 %v406, %v405
    %v516 = vpack.c.b16 %v408, %v407
    %v517 = vpack.c.b16 %v410, %v409
    %v518 = vpack.c.b16 %v412, %v411
    %v519 = vpack.c.b16 %v414, %v413
    %v520 = vpack.c.b16 %v416, %v415
    %v521 = vpack.c.b16 %v418, %v417
    %v522 = vpack.c.b16 %v420, %v419
    %v523 = vpack.c.b16 %v422, %v421
    %v524 = vpack.c.b16 %v424, %v423
    %v525 = vpack.c.b16 %v426, %v425
    %v526 = vpack.c.b16 %v428, %v427
    %v527 = vpack.c.b16 %v430, %v429
    %v528 = vpack.c.b16 %v432, %v431
    %v529 = vpack.c.b16 %v434, %v433
    %v530 = vpack.c.b16 %v436, %v435
    %v531 = vpack.c.b16 %v438, %v437
    %v532 = vpack.c.b16 %v440, %v439
    %v533 = vpack.c.b16 %v442, %v441
    %v534 = vpack.c.b16 %v444, %v443
    %v535 = vpack.c.b16 %v446, %v445
    %v536 = vpack.c.b16 %v448, %v447
    %v537 = vpack.c.b16 %v450, %v449
    %v538 = vpack.c.b16 %v452, %v451
    %v539 = vpack.c.b16 %v454, %v453
    %v540 = vpack.c.b16 %v456, %v455
    %v541 = vpack.c.b16 %v458, %v457
    %v542 = vpack.c.b16 %v460, %v459
    %v543 = vpack.c.b16 %v462, %v461
    %v544 = vpack.c.b16 %v464, %v463
    %v545 = vpack.c.b16 %v466, %v465
    %v546 = vpack.c.b16 %v468, %v467
    %v547 = vpack.c.b16 %v470, %v469
    %v548 = vpack.c.b16 %v472, %v471
    %v549 = vpack.c.b16 %v474, %v473
    %v550 = vpack.c.b16 %v476, %v475
    %v551 = vpack.c.b16 %v478, %v477
    %v552 = vpack.c.b16 %v480, %v479
    %v553 = vpack.c.b16 %v482, %v481
    %v554 = vpack.c.b16 %v484, %v483
    %v555 = vpack.c.b16 %v486, %v485
    %v556 = vpack.c.b16 %v488, %v487
    %v557 = vpack.c.b16 %v490, %v489
    %v558 = vpack.c.b16 %v492, %v491
    %v559 = vpack.c.b16 %v494, %v493
    %v560 = vpack.c.b16 %v496, %v495
    %625 = vmatprep.subr.bf16.mxu0 0
    %626 = vmatpush1.bf16.msra.mxu0 %v504
    %627 = vmatprep.subr.bf16.mxu0 0
    %628 = vmatpush1.bf16.msra.mxu0 %v503
    %629 = vmatprep.subr.bf16.mxu0 0
    %630 = vmatpush1.bf16.msra.mxu0 %v502
    %631 = vmatprep.subr.bf16.mxu0 0
    %632 = vmatpush1.bf16.msra.mxu0 %v501
    %633 = vmatprep.subr.bf16.mxu0 0
    %634 = vmatpush1.bf16.msra.mxu0 %v500
    %635 = vmatprep.subr.bf16.mxu0 0
    %636 = vmatpush1.bf16.msra.mxu0 %v499
    %637 = vmatprep.subr.bf16.mxu0 0
    %638 = vmatpush1.bf16.msra.mxu0 %v498
    %639 = vmatprep.subr.bf16.mxu0 0
    %640 = vmatpush1.bf16.msra.mxu0 %v497
    %641 = vmatprep.subr.bf16.mxu0 0
    %642 = vmatpush2.bf16.msra.mxu0 %v512
    %643 = vmatprep.subr.bf16.mxu0 0
    %644 = vmatpush2.bf16.msra.mxu0 %v511
    %645 = vmatprep.subr.bf16.mxu0 0
    %646 = vmatpush2.bf16.msra.mxu0 %v510
    %647 = vmatprep.subr.bf16.mxu0 0
    %648 = vmatpush2.bf16.msra.mxu0 %v509
    %649 = vmatprep.subr.bf16.mxu0 0
    %650 = vmatpush2.bf16.msra.mxu0 %v508
    %651 = vmatprep.subr.bf16.mxu0 0
    %652 = vmatpush2.bf16.msra.mxu0 %v507
    %653 = vmatprep.subr.bf16.mxu0 0
    %654 = vmatpush2.bf16.msra.mxu0 %v506
    %655 = vmatprep.subr.bf16.mxu0 0
    %656 = vmatpush2.bf16.msra.mxu0 %v505
    %657 = vmatprep.mubr.bf16.mxu0 %v226
    %658 = vmatmul.mubr.bf16.gmra.mxu0 %v225
    %v659 = vpop.f32.mrf.mxu0
    %v660 = vadd.f32 %v199, %v659
    %v661 = vpop.f32.mrf.mxu0
    %v662 = vpop.f32.mrf.mxu0
    %v663 = vadd.f32 %v200, %v662
    %v664 = vpop.f32.mrf.mxu0
    %665 = vdwg.mxu0
    %666 = vmatprep.subr.bf16.mxu0 0
    %667 = vmatpush1.bf16.msra.mxu0 %v520
    %668 = vmatprep.subr.bf16.mxu0 0
    %669 = vmatpush1.bf16.msra.mxu0 %v519
    %670 = vmatprep.subr.bf16.mxu0 0
    %671 = vmatpush1.bf16.msra.mxu0 %v518
    %672 = vmatprep.subr.bf16.mxu0 0
    %673 = vmatpush1.bf16.msra.mxu0 %v517
    %674 = vmatprep.subr.bf16.mxu0 0
    %675 = vmatpush1.bf16.msra.mxu0 %v516
    %676 = vmatprep.subr.bf16.mxu0 0
    %677 = vmatpush1.bf16.msra.mxu0 %v515
    %678 = vmatprep.subr.bf16.mxu0 0
    %679 = vmatpush1.bf16.msra.mxu0 %v514
    %680 = vmatprep.subr.bf16.mxu0 0
    %681 = vmatpush1.bf16.msra.mxu0 %v513
    %682 = vmatprep.subr.bf16.mxu0 0
    %683 = vmatpush2.bf16.msra.mxu0 %v528
    %684 = vmatprep.subr.bf16.mxu0 0
    %685 = vmatpush2.bf16.msra.mxu0 %v527
    %686 = vmatprep.subr.bf16.mxu0 0
    %687 = vmatpush2.bf16.msra.mxu0 %v526
    %688 = vmatprep.subr.bf16.mxu0 0
    %689 = vmatpush2.bf16.msra.mxu0 %v525
    %690 = vmatprep.subr.bf16.mxu0 0
    %691 = vmatpush2.bf16.msra.mxu0 %v524
    %692 = vmatprep.subr.bf16.mxu0 0
    %693 = vmatpush2.bf16.msra.mxu0 %v523
    %694 = vmatprep.subr.bf16.mxu0 0
    %695 = vmatpush2.bf16.msra.mxu0 %v522
    %696 = vmatprep.subr.bf16.mxu0 0
    %697 = vmatpush2.bf16.msra.mxu0 %v521
    %698 = vmatprep.mubr.bf16.mxu0 %v228
    %699 = vmatmul.mubr.bf16.gmra.mxu0 %v227
    %v700 = vpop.f32.mrf.mxu0
    %v701 = vadd.f32 %v660, %v700
    %v702 = vpop.f32.mrf.mxu0
    %v703 = vpop.f32.mrf.mxu0
    %v704 = vadd.f32 %v663, %v703
    %v705 = vpop.f32.mrf.mxu0
    %706 = vdwg.mxu0
    %707 = vmatprep.subr.bf16.mxu0 0
    %708 = vmatpush1.bf16.msra.mxu0 %v536
    %709 = vmatprep.subr.bf16.mxu0 0
    %710 = vmatpush1.bf16.msra.mxu0 %v535
    %711 = vmatprep.subr.bf16.mxu0 0
    %712 = vmatpush1.bf16.msra.mxu0 %v534
    %713 = vmatprep.subr.bf16.mxu0 0
    %714 = vmatpush1.bf16.msra.mxu0 %v533
    %715 = vmatprep.subr.bf16.mxu0 0
    %716 = vmatpush1.bf16.msra.mxu0 %v532
    %717 = vmatprep.subr.bf16.mxu0 0
    %718 = vmatpush1.bf16.msra.mxu0 %v531
    %719 = vmatprep.subr.bf16.mxu0 0
    %720 = vmatpush1.bf16.msra.mxu0 %v530
    %721 = vmatprep.subr.bf16.mxu0 0
    %722 = vmatpush1.bf16.msra.mxu0 %v529
    %723 = vmatprep.subr.bf16.mxu0 0
    %724 = vmatpush2.bf16.msra.mxu0 %v544
    %725 = vmatprep.subr.bf16.mxu0 0
    %726 = vmatpush2.bf16.msra.mxu0 %v543
    %727 = vmatprep.subr.bf16.mxu0 0
    %728 = vmatpush2.bf16.msra.mxu0 %v542
    %729 = vmatprep.subr.bf16.mxu0 0
    %730 = vmatpush2.bf16.msra.mxu0 %v541
    %731 = vmatprep.subr.bf16.mxu0 0
    %732 = vmatpush2.bf16.msra.mxu0 %v540
    %733 = vmatprep.subr.bf16.mxu0 0
    %734 = vmatpush2.bf16.msra.mxu0 %v539
    %735 = vmatprep.subr.bf16.mxu0 0
    %736 = vmatpush2.bf16.msra.mxu0 %v538
    %737 = vmatprep.subr.bf16.mxu0 0
    %738 = vmatpush2.bf16.msra.mxu0 %v537
    %739 = vmatprep.mubr.bf16.mxu0 %v230
    %740 = vmatmul.mubr.bf16.gmra.mxu0 %v229
    %v741 = vpop.f32.mrf.mxu0
    %v742 = vadd.f32 %v701, %v741
    %v743 = vpop.f32.mrf.mxu0
    %v744 = vpop.f32.mrf.mxu0
    %v745 = vadd.f32 %v704, %v744
    %v746 = vpop.f32.mrf.mxu0
    %747 = vdwg.mxu0
    %748 = vmatprep.subr.bf16.mxu0 0
    %749 = vmatpush1.bf16.msra.mxu0 %v552
    %750 = vmatprep.subr.bf16.mxu0 0
    %751 = vmatpush1.bf16.msra.mxu0 %v551
    %752 = vmatprep.subr.bf16.mxu0 0
    %753 = vmatpush1.bf16.msra.mxu0 %v550
    %754 = vmatprep.subr.bf16.mxu0 0
    %755 = vmatpush1.bf16.msra.mxu0 %v549
    %756 = vmatprep.subr.bf16.mxu0 0
    %757 = vmatpush1.bf16.msra.mxu0 %v548
    %758 = vmatprep.subr.bf16.mxu0 0
    %759 = vmatpush1.bf16.msra.mxu0 %v547
    %760 = vmatprep.subr.bf16.mxu0 0
    %761 = vmatpush1.bf16.msra.mxu0 %v546
    %762 = vmatprep.subr.bf16.mxu0 0
    %763 = vmatpush1.bf16.msra.mxu0 %v545
    %764 = vmatprep.subr.bf16.mxu0 0
    %765 = vmatpush2.bf16.msra.mxu0 %v560
    %766 = vmatprep.subr.bf16.mxu0 0
    %767 = vmatpush2.bf16.msra.mxu0 %v559
    %768 = vmatprep.subr.bf16.mxu0 0
    %769 = vmatpush2.bf16.msra.mxu0 %v558
    %770 = vmatprep.subr.bf16.mxu0 0
    %771 = vmatpush2.bf16.msra.mxu0 %v557
    %772 = vmatprep.subr.bf16.mxu0 0
    %773 = vmatpush2.bf16.msra.mxu0 %v556
    %774 = vmatprep.subr.bf16.mxu0 0
    %775 = vmatpush2.bf16.msra.mxu0 %v555
    %776 = vmatprep.subr.bf16.mxu0 0
    %777 = vmatpush2.bf16.msra.mxu0 %v554
    %778 = vmatprep.subr.bf16.mxu0 0
    %779 = vmatpush2.bf16.msra.mxu0 %v553
    %780 = vmatprep.mubr.bf16.mxu0 %v232
    %781 = vmatmul.mubr.bf16.gmra.mxu0 %v231
    %v782 = vpop.f32.mrf.mxu0
    %v783 = vadd.f32 %v742, %v782
    %v784 = vpop.f32.mrf.mxu0
    %v785 = vpop.f32.mrf.mxu0
    %v786 = vadd.f32 %v745, %v785
    %v787 = vpop.f32.mrf.mxu0
    %788 = vdwg.mxu0
    %v789 = vld [vmem:[%s3] sm:$0x1]
    %v790 = vld [vmem:[%s4] sm:$0x1]
    %vm791 = vcmask 261120
    %v792 = vsel %vm791, %v783, 0.0
    %793 = vadd.xlane.f32.xlu0 %v792
    %v794 = vpop.xlane.xlu0 %793
    %v795 = vsel %vm791, %v786, 0.0
    %796 = vadd.xlane.f32.xlu0 %v795
    %v797 = vpop.xlane.xlu0 %796
    %v798 = vrcp.pop 32.0
    %v799 = vmul.f32 %v794, %v798
    %v800 = vmul.f32 %v797, %v798
    %v801 = vsub.f32 %v783, %v799
    %v802 = vsub.f32 %v786, %v800
    %v803 = vmul.f32 %v801, %v801
    %v804 = vmul.f32 %v802, %v802
    %v805 = vsel %vm791, %v803, 0.0
    %806 = vadd.xlane.f32.xlu0 %v805
    %v807 = vpop.xlane.xlu0 %806
    %v808 = vsel %vm791, %v804, 0.0
    %809 = vadd.xlane.f32.xlu0 %v808
    %v810 = vpop.xlane.xlu0 %809
    %v811 = vmul.f32 %v807, %v798
    %v812 = vmul.f32 %v810, %v798
    %v813 = vadd.f32 %v811, 1e-05
    %v814 = vadd.f32 %v812, 1e-05
    %v815 = vrsqrt.pop %v813
    %v816 = vrsqrt.pop %v814
    %v817 = vmul.f32 %v801, %v815
    %v818 = vmul.f32 %v802, %v816
    %v820 = vlaneseq
    %v821 = vshrl.u32 %v820, 7
    %v822 = vsub.s32 0, %v821
    %v823 = vrot.slane %v789, %v822
    %v825 = vmul.f32 %v817, %v823
    %v826 = vmul.f32 %v818, %v823
    %v828 = vlaneseq
    %v829 = vshrl.u32 %v828, 7
    %v830 = vsub.s32 0, %v829
    %v831 = vrot.slane %v790, %v830
    %v833 = vadd.f32 %v825, %v831
    %v834 = vadd.f32 %v826, %v831
    %v835 = vld [vmem:[%s5] sm:$0xff]
    %v836 = vld [vmem:[%s5 + $0x8] sm:$0xff]
    %v837 = vld [vmem:[%s5 + $0x10] sm:$0xff]
    %v838 = vld [vmem:[%s5 + $0x18] sm:$0xff]
    %v839 = vld [vmem:[%s5 + $0x20] sm:$0xff]
    %v840 = vld [vmem:[%s5 + $0x28] sm:$0xff]
    %v841 = vld [vmem:[%s5 + $0x30] sm:$0xff]
    %v842 = vld [vmem:[%s5 + $0x38] sm:$0xff]
    %v843 = vld [vmem:[%s5 + $0x40] sm:$0xff]
    %v844 = vld [vmem:[%s5 + $0x48] sm:$0xff]
    %v845 = vld [vmem:[%s5 + $0x50] sm:$0xff]
    %v846 = vld [vmem:[%s5 + $0x58] sm:$0xff]
    %v847 = vld [vmem:[%s5 + $0x60] sm:$0xff]
    %v848 = vld [vmem:[%s5 + $0x68] sm:$0xff]
    %v849 = vld [vmem:[%s5 + $0x70] sm:$0xff]
    %v850 = vld [vmem:[%s5 + $0x78] sm:$0xff]
    %v851 = vld [vmem:[%s5 + $0x80] sm:$0xff]
    %v852 = vld [vmem:[%s5 + $0x88] sm:$0xff]
    %v853 = vld [vmem:[%s5 + $0x90] sm:$0xff]
    %v854 = vld [vmem:[%s5 + $0x98] sm:$0xff]
    %v855 = vld [vmem:[%s5 + $0xa0] sm:$0xff]
    %v856 = vld [vmem:[%s5 + $0xa8] sm:$0xff]
    %v857 = vld [vmem:[%s5 + $0xb0] sm:$0xff]
    %v858 = vld [vmem:[%s5 + $0xb8] sm:$0xff]
    %v859 = vld [vmem:[%s5 + $0xc0] sm:$0xff]
    %v860 = vld [vmem:[%s5 + $0xc8] sm:$0xff]
    %v861 = vld [vmem:[%s5 + $0xd0] sm:$0xff]
    %v862 = vld [vmem:[%s5 + $0xd8] sm:$0xff]
    %v863 = vld [vmem:[%s5 + $0xe0] sm:$0xff]
    %v864 = vld [vmem:[%s5 + $0xe8] sm:$0xff]
    %v865 = vld [vmem:[%s5 + $0xf0] sm:$0xff]
    %v866 = vld [vmem:[%s5 + $0xf8] sm:$0xff]
    %v868 = vsel %vm791, %v833, 0
    %870 = vmatprep.subr.mxu0 0.0
    %871 = vmatpush1.msra.mxu0 0.0
    %872 = vmatprep.subr.mxu0 0.0
    %873 = vmatpush1.msra.mxu0 0.0
    %874 = vmatprep.subr.mxu0 0.0
    %875 = vmatpush1.msra.mxu0 0.0
    %876 = vmatprep.subr.mxu0 0.0
    %877 = vmatpush1.msra.mxu0 0.0
    %878 = vmatprep.subr.mxu0 0.0
    %879 = vmatpush1.msra.mxu0 0.0
    %880 = vmatprep.subr.mxu0 0.0
    %881 = vmatpush1.msra.mxu0 0.0
    %882 = vmatprep.subr.mxu0 0.0
    %883 = vmatpush1.msra.mxu0 0.0
    %884 = vmatprep.subr.mxu0 0.0
    %885 = vmatpush1.msra.mxu0 0.0
    %886 = vmatprep.subr.mxu0 0.0
    %887 = vmatpush1.msra.mxu0 0.0
    %888 = vmatprep.subr.mxu0 0.0
    %889 = vmatpush1.msra.mxu0 0.0
    %890 = vmatprep.subr.mxu0 0.0
    %891 = vmatpush1.msra.mxu0 0.0
    %892 = vmatprep.subr.mxu0 0.0
    %893 = vmatpush1.msra.mxu0 0.0
    %894 = vmatprep.subr.mxu0 0.0
    %895 = vmatpush1.msra.mxu0 %v838
    %896 = vmatprep.subr.mxu0 0.0
    %897 = vmatpush1.msra.mxu0 %v837
    %898 = vmatprep.subr.mxu0 0.0
    %899 = vmatpush1.msra.mxu0 %v836
    %900 = vmatprep.subr.mxu0 0.0
    %901 = vmatpush1.msra.mxu0 %v835
    %902 = vmatprep.subr.mxu0 0.0
    %903 = vmatpush2.msra.mxu0 0.0
    %904 = vmatprep.subr.mxu0 0.0
    %905 = vmatpush2.msra.mxu0 0.0
    %906 = vmatprep.subr.mxu0 0.0
    %907 = vmatpush2.msra.mxu0 0.0
    %908 = vmatprep.subr.mxu0 0.0
    %909 = vmatpush2.msra.mxu0 0.0
    %910 = vmatprep.subr.mxu0 0.0
    %911 = vmatpush2.msra.mxu0 0.0
    %912 = vmatprep.subr.mxu0 0.0
    %913 = vmatpush2.msra.mxu0 0.0
    %914 = vmatprep.subr.mxu0 0.0
    %915 = vmatpush2.msra.mxu0 0.0
    %916 = vmatprep.subr.mxu0 0.0
    %917 = vmatpush2.msra.mxu0 0.0
    %918 = vmatprep.subr.mxu0 0.0
    %919 = vmatpush2.msra.mxu0 0.0
    %920 = vmatprep.subr.mxu0 0.0
    %921 = vmatpush2.msra.mxu0 0.0
    %922 = vmatprep.subr.mxu0 0.0
    %923 = vmatpush2.msra.mxu0 0.0
    %924 = vmatprep.subr.mxu0 0.0
    %925 = vmatpush2.msra.mxu0 0.0
    %926 = vmatprep.subr.mxu0 0.0
    %927 = vmatpush2.msra.mxu0 0.0
    %928 = vmatprep.subr.mxu0 0.0
    %929 = vmatpush2.msra.mxu0 0.0
    %930 = vmatprep.subr.mxu0 0.0
    %931 = vmatpush2.msra.mxu0 0.0
    %932 = vmatprep.subr.mxu0 0.0
    %933 = vmatpush2.msra.mxu0 0.0
    %934 = vmatprep.mubr.f32.mxu0 0.0
    %935 = vmatmul.mubr.f32.gmra.mxu0 %v868
    %v936 = vpop.f32.mrf.mxu0
    %v937 = vadd.f32 0.0, %v936
    %v938 = vpop.f32.mrf.mxu0
    %939 = vdwg.mxu0
    %940 = vmatprep.subr.mxu0 0.0
    %941 = vmatpush1.msra.mxu0 0.0
    %942 = vmatprep.subr.mxu0 0.0
    %943 = vmatpush1.msra.mxu0 0.0
    %944 = vmatprep.subr.mxu0 0.0
    %945 = vmatpush1.msra.mxu0 0.0
    %946 = vmatprep.subr.mxu0 0.0
    %947 = vmatpush1.msra.mxu0 0.0
    %948 = vmatprep.subr.mxu0 0.0
    %949 = vmatpush1.msra.mxu0 0.0
    %950 = vmatprep.subr.mxu0 0.0
    %951 = vmatpush1.msra.mxu0 0.0
    %952 = vmatprep.subr.mxu0 0.0
    %953 = vmatpush1.msra.mxu0 0.0
    %954 = vmatprep.subr.mxu0 0.0
    %955 = vmatpush1.msra.mxu0 0.0
    %956 = vmatprep.subr.mxu0 0.0
    %957 = vmatpush1.msra.mxu0 0.0
    %958 = vmatprep.subr.mxu0 0.0
    %959 = vmatpush1.msra.mxu0 0.0
    %960 = vmatprep.subr.mxu0 0.0
    %961 = vmatpush1.msra.mxu0 0.0
    %962 = vmatprep.subr.mxu0 0.0
    %963 = vmatpush1.msra.mxu0 0.0
    %964 = vmatprep.subr.mxu0 0.0
    %965 = vmatpush1.msra.mxu0 %v842
    %966 = vmatprep.subr.mxu0 0.0
    %967 = vmatpush1.msra.mxu0 %v841
    %968 = vmatprep.subr.mxu0 0.0
    %969 = vmatpush1.msra.mxu0 %v840
    %970 = vmatprep.subr.mxu0 0.0
    %971 = vmatpush1.msra.mxu0 %v839
    %972 = vmatprep.subr.mxu0 0.0
    %973 = vmatpush2.msra.mxu0 0.0
    %974 = vmatprep.subr.mxu0 0.0
    %975 = vmatpush2.msra.mxu0 0.0
    %976 = vmatprep.subr.mxu0 0.0
    %977 = vmatpush2.msra.mxu0 0.0
    %978 = vmatprep.subr.mxu0 0.0
    %979 = vmatpush2.msra.mxu0 0.0
    %980 = vmatprep.subr.mxu0 0.0
    %981 = vmatpush2.msra.mxu0 0.0
    %982 = vmatprep.subr.mxu0 0.0
    %983 = vmatpush2.msra.mxu0 0.0
    %984 = vmatprep.subr.mxu0 0.0
    %985 = vmatpush2.msra.mxu0 0.0
    %986 = vmatprep.subr.mxu0 0.0
    %987 = vmatpush2.msra.mxu0 0.0
    %988 = vmatprep.subr.mxu0 0.0
    %989 = vmatpush2.msra.mxu0 0.0
    %990 = vmatprep.subr.mxu0 0.0
    %991 = vmatpush2.msra.mxu0 0.0
    %992 = vmatprep.subr.mxu0 0.0
    %993 = vmatpush2.msra.mxu0 0.0
    %994 = vmatprep.subr.mxu0 0.0
    %995 = vmatpush2.msra.mxu0 0.0
    %996 = vmatprep.subr.mxu0 0.0
    %997 = vmatpush2.msra.mxu0 0.0
    %998 = vmatprep.subr.mxu0 0.0
    %999 = vmatpush2.msra.mxu0 0.0
    %1000 = vmatprep.subr.mxu0 0.0
    %1001 = vmatpush2.msra.mxu0 0.0
    %1002 = vmatprep.subr.mxu0 0.0
    %1003 = vmatpush2.msra.mxu0 0.0
    %1004 = vmatprep.mubr.f32.mxu0 0.0
    %1005 = vmatmul.mubr.f32.gmra.mxu0 %v868
    %v1006 = vpop.f32.mrf.mxu0
    %v1007 = vadd.f32 0.0, %v1006
    %v1008 = vpop.f32.mrf.mxu0
    %1009 = vdwg.mxu0
    %1010 = vmatprep.subr.mxu0 0.0
    %1011 = vmatpush1.msra.mxu0 0.0
    %1012 = vmatprep.subr.mxu0 0.0
    %1013 = vmatpush1.msra.mxu0 0.0
    %1014 = vmatprep.subr.mxu0 0.0
    %1015 = vmatpush1.msra.mxu0 0.0
    %1016 = vmatprep.subr.mxu0 0.0
    %1017 = vmatpush1.msra.mxu0 0.0
    %1018 = vmatprep.subr.mxu0 0.0
    %1019 = vmatpush1.msra.mxu0 0.0
    %1020 = vmatprep.subr.mxu0 0.0
    %1021 = vmatpush1.msra.mxu0 0.0
    %1022 = vmatprep.subr.mxu0 0.0
    %1023 = vmatpush1.msra.mxu0 0.0
    %1024 = vmatprep.subr.mxu0 0.0
    %1025 = vmatpush1.msra.mxu0 0.0
    %1026 = vmatprep.subr.mxu0 0.0
    %1027 = vmatpush1.msra.mxu0 0.0
    %1028 = vmatprep.subr.mxu0 0.0
    %1029 = vmatpush1.msra.mxu0 0.0
    %1030 = vmatprep.subr.mxu0 0.0
    %1031 = vmatpush1.msra.mxu0 0.0
    %1032 = vmatprep.subr.mxu0 0.0
    %1033 = vmatpush1.msra.mxu0 0.0
    %1034 = vmatprep.subr.mxu0 0.0
    %1035 = vmatpush1.msra.mxu0 %v846
    %1036 = vmatprep.subr.mxu0 0.0
    %1037 = vmatpush1.msra.mxu0 %v845
    %1038 = vmatprep.subr.mxu0 0.0
    %1039 = vmatpush1.msra.mxu0 %v844
    %1040 = vmatprep.subr.mxu0 0.0
    %1041 = vmatpush1.msra.mxu0 %v843
    %1042 = vmatprep.subr.mxu0 0.0
    %1043 = vmatpush2.msra.mxu0 0.0
    %1044 = vmatprep.subr.mxu0 0.0
    %1045 = vmatpush2.msra.mxu0 0.0
    %1046 = vmatprep.subr.mxu0 0.0
    %1047 = vmatpush2.msra.mxu0 0.0
    %1048 = vmatprep.subr.mxu0 0.0
    %1049 = vmatpush2.msra.mxu0 0.0
    %1050 = vmatprep.subr.mxu0 0.0
    %1051 = vmatpush2.msra.mxu0 0.0
    %1052 = vmatprep.subr.mxu0 0.0
    %1053 = vmatpush2.msra.mxu0 0.0
    %1054 = vmatprep.subr.mxu0 0.0
    %1055 = vmatpush2.msra.mxu0 0.0
    %1056 = vmatprep.subr.mxu0 0.0
    %1057 = vmatpush2.msra.mxu0 0.0
    %1058 = vmatprep.subr.mxu0 0.0
    %1059 = vmatpush2.msra.mxu0 0.0
    %1060 = vmatprep.subr.mxu0 0.0
    %1061 = vmatpush2.msra.mxu0 0.0
    %1062 = vmatprep.subr.mxu0 0.0
    %1063 = vmatpush2.msra.mxu0 0.0
    %1064 = vmatprep.subr.mxu0 0.0
    %1065 = vmatpush2.msra.mxu0 0.0
    %1066 = vmatprep.subr.mxu0 0.0
    %1067 = vmatpush2.msra.mxu0 0.0
    %1068 = vmatprep.subr.mxu0 0.0
    %1069 = vmatpush2.msra.mxu0 0.0
    %1070 = vmatprep.subr.mxu0 0.0
    %1071 = vmatpush2.msra.mxu0 0.0
    %1072 = vmatprep.subr.mxu0 0.0
    %1073 = vmatpush2.msra.mxu0 0.0
    %1074 = vmatprep.mubr.f32.mxu0 0.0
    %1075 = vmatmul.mubr.f32.gmra.mxu0 %v868
    %v1076 = vpop.f32.mrf.mxu0
    %v1077 = vadd.f32 0.0, %v1076
    %v1078 = vpop.f32.mrf.mxu0
    %1079 = vdwg.mxu0
    %1080 = vmatprep.subr.mxu0 0.0
    %1081 = vmatpush1.msra.mxu0 0.0
    %1082 = vmatprep.subr.mxu0 0.0
    %1083 = vmatpush1.msra.mxu0 0.0
    %1084 = vmatprep.subr.mxu0 0.0
    %1085 = vmatpush1.msra.mxu0 0.0
    %1086 = vmatprep.subr.mxu0 0.0
    %1087 = vmatpush1.msra.mxu0 0.0
    %1088 = vmatprep.subr.mxu0 0.0
    %1089 = vmatpush1.msra.mxu0 0.0
    %1090 = vmatprep.subr.mxu0 0.0
    %1091 = vmatpush1.msra.mxu0 0.0
    %1092 = vmatprep.subr.mxu0 0.0
    %1093 = vmatpush1.msra.mxu0 0.0
    %1094 = vmatprep.subr.mxu0 0.0
    %1095 = vmatpush1.msra.mxu0 0.0
    %1096 = vmatprep.subr.mxu0 0.0
    %1097 = vmatpush1.msra.mxu0 0.0
    %1098 = vmatprep.subr.mxu0 0.0
    %1099 = vmatpush1.msra.mxu0 0.0
    %1100 = vmatprep.subr.mxu0 0.0
    %1101 = vmatpush1.msra.mxu0 0.0
    %1102 = vmatprep.subr.mxu0 0.0
    %1103 = vmatpush1.msra.mxu0 0.0
    %1104 = vmatprep.subr.mxu0 0.0
    %1105 = vmatpush1.msra.mxu0 %v850
    %1106 = vmatprep.subr.mxu0 0.0
    %1107 = vmatpush1.msra.mxu0 %v849
    %1108 = vmatprep.subr.mxu0 0.0
    %1109 = vmatpush1.msra.mxu0 %v848
    %1110 = vmatprep.subr.mxu0 0.0
    %1111 = vmatpush1.msra.mxu0 %v847
    %1112 = vmatprep.subr.mxu0 0.0
    %1113 = vmatpush2.msra.mxu0 0.0
    %1114 = vmatprep.subr.mxu0 0.0
    %1115 = vmatpush2.msra.mxu0 0.0
    %1116 = vmatprep.subr.mxu0 0.0
    %1117 = vmatpush2.msra.mxu0 0.0
    %1118 = vmatprep.subr.mxu0 0.0
    %1119 = vmatpush2.msra.mxu0 0.0
    %1120 = vmatprep.subr.mxu0 0.0
    %1121 = vmatpush2.msra.mxu0 0.0
    %1122 = vmatprep.subr.mxu0 0.0
    %1123 = vmatpush2.msra.mxu0 0.0
    %1124 = vmatprep.subr.mxu0 0.0
    %1125 = vmatpush2.msra.mxu0 0.0
    %1126 = vmatprep.subr.mxu0 0.0
    %1127 = vmatpush2.msra.mxu0 0.0
    %1128 = vmatprep.subr.mxu0 0.0
    %1129 = vmatpush2.msra.mxu0 0.0
    %1130 = vmatprep.subr.mxu0 0.0
    %1131 = vmatpush2.msra.mxu0 0.0
    %1132 = vmatprep.subr.mxu0 0.0
    %1133 = vmatpush2.msra.mxu0 0.0
    %1134 = vmatprep.subr.mxu0 0.0
    %1135 = vmatpush2.msra.mxu0 0.0
    %1136 = vmatprep.subr.mxu0 0.0
    %1137 = vmatpush2.msra.mxu0 0.0
    %1138 = vmatprep.subr.mxu0 0.0
    %1139 = vmatpush2.msra.mxu0 0.0
    %1140 = vmatprep.subr.mxu0 0.0
    %1141 = vmatpush2.msra.mxu0 0.0
    %1142 = vmatprep.subr.mxu0 0.0
    %1143 = vmatpush2.msra.mxu0 0.0
    %1144 = vmatprep.mubr.f32.mxu0 0.0
    %1145 = vmatmul.mubr.f32.gmra.mxu0 %v868
    %v1146 = vpop.f32.mrf.mxu0
    %v1147 = vadd.f32 0.0, %v1146
    %v1148 = vpop.f32.mrf.mxu0
    %1149 = vdwg.mxu0
    %v1151 = vsel %vm791, %v834, 0
    %1153 = vmatprep.subr.mxu0 0.0
    %1154 = vmatpush1.msra.mxu0 0.0
    %1155 = vmatprep.subr.mxu0 0.0
    %1156 = vmatpush1.msra.mxu0 0.0
    %1157 = vmatprep.subr.mxu0 0.0
    %1158 = vmatpush1.msra.mxu0 0.0
    %1159 = vmatprep.subr.mxu0 0.0
    %1160 = vmatpush1.msra.mxu0 0.0
    %1161 = vmatprep.subr.mxu0 0.0
    %1162 = vmatpush1.msra.mxu0 0.0
    %1163 = vmatprep.subr.mxu0 0.0
    %1164 = vmatpush1.msra.mxu0 0.0
    %1165 = vmatprep.subr.mxu0 0.0
    %1166 = vmatpush1.msra.mxu0 0.0
    %1167 = vmatprep.subr.mxu0 0.0
    %1168 = vmatpush1.msra.mxu0 0.0
    %1169 = vmatprep.subr.mxu0 0.0
    %1170 = vmatpush1.msra.mxu0 0.0
    %1171 = vmatprep.subr.mxu0 0.0
    %1172 = vmatpush1.msra.mxu0 0.0
    %1173 = vmatprep.subr.mxu0 0.0
    %1174 = vmatpush1.msra.mxu0 0.0
    %1175 = vmatprep.subr.mxu0 0.0
    %1176 = vmatpush1.msra.mxu0 0.0
    %1177 = vmatprep.subr.mxu0 0.0
    %1178 = vmatpush1.msra.mxu0 %v854
    %1179 = vmatprep.subr.mxu0 0.0
    %1180 = vmatpush1.msra.mxu0 %v853
    %1181 = vmatprep.subr.mxu0 0.0
    %1182 = vmatpush1.msra.mxu0 %v852
    %1183 = vmatprep.subr.mxu0 0.0
    %1184 = vmatpush1.msra.mxu0 %v851
    %1185 = vmatprep.subr.mxu0 0.0
    %1186 = vmatpush2.msra.mxu0 0.0
    %1187 = vmatprep.subr.mxu0 0.0
    %1188 = vmatpush2.msra.mxu0 0.0
    %1189 = vmatprep.subr.mxu0 0.0
    %1190 = vmatpush2.msra.mxu0 0.0
    %1191 = vmatprep.subr.mxu0 0.0
    %1192 = vmatpush2.msra.mxu0 0.0
    %1193 = vmatprep.subr.mxu0 0.0
    %1194 = vmatpush2.msra.mxu0 0.0
    %1195 = vmatprep.subr.mxu0 0.0
    %1196 = vmatpush2.msra.mxu0 0.0
    %1197 = vmatprep.subr.mxu0 0.0
    %1198 = vmatpush2.msra.mxu0 0.0
    %1199 = vmatprep.subr.mxu0 0.0
    %1200 = vmatpush2.msra.mxu0 0.0
    %1201 = vmatprep.subr.mxu0 0.0
    %1202 = vmatpush2.msra.mxu0 0.0
    %1203 = vmatprep.subr.mxu0 0.0
    %1204 = vmatpush2.msra.mxu0 0.0
    %1205 = vmatprep.subr.mxu0 0.0
    %1206 = vmatpush2.msra.mxu0 0.0
    %1207 = vmatprep.subr.mxu0 0.0
    %1208 = vmatpush2.msra.mxu0 0.0
    %1209 = vmatprep.subr.mxu0 0.0
    %1210 = vmatpush2.msra.mxu0 0.0
    %1211 = vmatprep.subr.mxu0 0.0
    %1212 = vmatpush2.msra.mxu0 0.0
    %1213 = vmatprep.subr.mxu0 0.0
    %1214 = vmatpush2.msra.mxu0 0.0
    %1215 = vmatprep.subr.mxu0 0.0
    %1216 = vmatpush2.msra.mxu0 0.0
    %1217 = vmatprep.mubr.f32.mxu0 0.0
    %1218 = vmatmul.mubr.f32.gmra.mxu0 %v1151
    %v1219 = vpop.f32.mrf.mxu0
    %v1220 = vadd.f32 0.0, %v1219
    %v1221 = vpop.f32.mrf.mxu0
    %1222 = vdwg.mxu0
    %1223 = vmatprep.subr.mxu0 0.0
    %1224 = vmatpush1.msra.mxu0 0.0
    %1225 = vmatprep.subr.mxu0 0.0
    %1226 = vmatpush1.msra.mxu0 0.0
    %1227 = vmatprep.subr.mxu0 0.0
    %1228 = vmatpush1.msra.mxu0 0.0
    %1229 = vmatprep.subr.mxu0 0.0
    %1230 = vmatpush1.msra.mxu0 0.0
    %1231 = vmatprep.subr.mxu0 0.0
    %1232 = vmatpush1.msra.mxu0 0.0
    %1233 = vmatprep.subr.mxu0 0.0
    %1234 = vmatpush1.msra.mxu0 0.0
    %1235 = vmatprep.subr.mxu0 0.0
    %1236 = vmatpush1.msra.mxu0 0.0
    %1237 = vmatprep.subr.mxu0 0.0
    %1238 = vmatpush1.msra.mxu0 0.0
    %1239 = vmatprep.subr.mxu0 0.0
    %1240 = vmatpush1.msra.mxu0 0.0
    %1241 = vmatprep.subr.mxu0 0.0
    %1242 = vmatpush1.msra.mxu0 0.0
    %1243 = vmatprep.subr.mxu0 0.0
    %1244 = vmatpush1.msra.mxu0 0.0
    %1245 = vmatprep.subr.mxu0 0.0
    %1246 = vmatpush1.msra.mxu0 0.0
    %1247 = vmatprep.subr.mxu0 0.0
    %1248 = vmatpush1.msra.mxu0 %v858
    %1249 = vmatprep.subr.mxu0 0.0
    %1250 = vmatpush1.msra.mxu0 %v857
    %1251 = vmatprep.subr.mxu0 0.0
    %1252 = vmatpush1.msra.mxu0 %v856
    %1253 = vmatprep.subr.mxu0 0.0
    %1254 = vmatpush1.msra.mxu0 %v855
    %1255 = vmatprep.subr.mxu0 0.0
    %1256 = vmatpush2.msra.mxu0 0.0
    %1257 = vmatprep.subr.mxu0 0.0
    %1258 = vmatpush2.msra.mxu0 0.0
    %1259 = vmatprep.subr.mxu0 0.0
    %1260 = vmatpush2.msra.mxu0 0.0
    %1261 = vmatprep.subr.mxu0 0.0
    %1262 = vmatpush2.msra.mxu0 0.0
    %1263 = vmatprep.subr.mxu0 0.0
    %1264 = vmatpush2.msra.mxu0 0.0
    %1265 = vmatprep.subr.mxu0 0.0
    %1266 = vmatpush2.msra.mxu0 0.0
    %1267 = vmatprep.subr.mxu0 0.0
    %1268 = vmatpush2.msra.mxu0 0.0
    %1269 = vmatprep.subr.mxu0 0.0
    %1270 = vmatpush2.msra.mxu0 0.0
    %1271 = vmatprep.subr.mxu0 0.0
    %1272 = vmatpush2.msra.mxu0 0.0
    %1273 = vmatprep.subr.mxu0 0.0
    %1274 = vmatpush2.msra.mxu0 0.0
    %1275 = vmatprep.subr.mxu0 0.0
    %1276 = vmatpush2.msra.mxu0 0.0
    %1277 = vmatprep.subr.mxu0 0.0
    %1278 = vmatpush2.msra.mxu0 0.0
    %1279 = vmatprep.subr.mxu0 0.0
    %1280 = vmatpush2.msra.mxu0 0.0
    %1281 = vmatprep.subr.mxu0 0.0
    %1282 = vmatpush2.msra.mxu0 0.0
    %1283 = vmatprep.subr.mxu0 0.0
    %1284 = vmatpush2.msra.mxu0 0.0
    %1285 = vmatprep.subr.mxu0 0.0
    %1286 = vmatpush2.msra.mxu0 0.0
    %1287 = vmatprep.mubr.f32.mxu0 0.0
    %1288 = vmatmul.mubr.f32.gmra.mxu0 %v1151
    %v1289 = vpop.f32.mrf.mxu0
    %v1290 = vadd.f32 0.0, %v1289
    %v1291 = vpop.f32.mrf.mxu0
    %1292 = vdwg.mxu0
    %1293 = vmatprep.subr.mxu0 0.0
    %1294 = vmatpush1.msra.mxu0 0.0
    %1295 = vmatprep.subr.mxu0 0.0
    %1296 = vmatpush1.msra.mxu0 0.0
    %1297 = vmatprep.subr.mxu0 0.0
    %1298 = vmatpush1.msra.mxu0 0.0
    %1299 = vmatprep.subr.mxu0 0.0
    %1300 = vmatpush1.msra.mxu0 0.0
    %1301 = vmatprep.subr.mxu0 0.0
    %1302 = vmatpush1.msra.mxu0 0.0
    %1303 = vmatprep.subr.mxu0 0.0
    %1304 = vmatpush1.msra.mxu0 0.0
    %1305 = vmatprep.subr.mxu0 0.0
    %1306 = vmatpush1.msra.mxu0 0.0
    %1307 = vmatprep.subr.mxu0 0.0
    %1308 = vmatpush1.msra.mxu0 0.0
    %1309 = vmatprep.subr.mxu0 0.0
    %1310 = vmatpush1.msra.mxu0 0.0
    %1311 = vmatprep.subr.mxu0 0.0
    %1312 = vmatpush1.msra.mxu0 0.0
    %1313 = vmatprep.subr.mxu0 0.0
    %1314 = vmatpush1.msra.mxu0 0.0
    %1315 = vmatprep.subr.mxu0 0.0
    %1316 = vmatpush1.msra.mxu0 0.0
    %1317 = vmatprep.subr.mxu0 0.0
    %1318 = vmatpush1.msra.mxu0 %v862
    %1319 = vmatprep.subr.mxu0 0.0
    %1320 = vmatpush1.msra.mxu0 %v861
    %1321 = vmatprep.subr.mxu0 0.0
    %1322 = vmatpush1.msra.mxu0 %v860
    %1323 = vmatprep.subr.mxu0 0.0
    %1324 = vmatpush1.msra.mxu0 %v859
    %1325 = vmatprep.subr.mxu0 0.0
    %1326 = vmatpush2.msra.mxu0 0.0
    %1327 = vmatprep.subr.mxu0 0.0
    %1328 = vmatpush2.msra.mxu0 0.0
    %1329 = vmatprep.subr.mxu0 0.0
    %1330 = vmatpush2.msra.mxu0 0.0
    %1331 = vmatprep.subr.mxu0 0.0
    %1332 = vmatpush2.msra.mxu0 0.0
    %1333 = vmatprep.subr.mxu0 0.0
    %1334 = vmatpush2.msra.mxu0 0.0
    %1335 = vmatprep.subr.mxu0 0.0
    %1336 = vmatpush2.msra.mxu0 0.0
    %1337 = vmatprep.subr.mxu0 0.0
    %1338 = vmatpush2.msra.mxu0 0.0
    %1339 = vmatprep.subr.mxu0 0.0
    %1340 = vmatpush2.msra.mxu0 0.0
    %1341 = vmatprep.subr.mxu0 0.0
    %1342 = vmatpush2.msra.mxu0 0.0
    %1343 = vmatprep.subr.mxu0 0.0
    %1344 = vmatpush2.msra.mxu0 0.0
    %1345 = vmatprep.subr.mxu0 0.0
    %1346 = vmatpush2.msra.mxu0 0.0
    %1347 = vmatprep.subr.mxu0 0.0
    %1348 = vmatpush2.msra.mxu0 0.0
    %1349 = vmatprep.subr.mxu0 0.0
    %1350 = vmatpush2.msra.mxu0 0.0
    %1351 = vmatprep.subr.mxu0 0.0
    %1352 = vmatpush2.msra.mxu0 0.0
    %1353 = vmatprep.subr.mxu0 0.0
    %1354 = vmatpush2.msra.mxu0 0.0
    %1355 = vmatprep.subr.mxu0 0.0
    %1356 = vmatpush2.msra.mxu0 0.0
    %1357 = vmatprep.mubr.f32.mxu0 0.0
    %1358 = vmatmul.mubr.f32.gmra.mxu0 %v1151
    %v1359 = vpop.f32.mrf.mxu0
    %v1360 = vadd.f32 0.0, %v1359
    %v1361 = vpop.f32.mrf.mxu0
    %1362 = vdwg.mxu0
    %1363 = vmatprep.subr.mxu0 0.0
    %1364 = vmatpush1.msra.mxu0 0.0
    %1365 = vmatprep.subr.mxu0 0.0
    %1366 = vmatpush1.msra.mxu0 0.0
    %1367 = vmatprep.subr.mxu0 0.0
    %1368 = vmatpush1.msra.mxu0 0.0
    %1369 = vmatprep.subr.mxu0 0.0
    %1370 = vmatpush1.msra.mxu0 0.0
    %1371 = vmatprep.subr.mxu0 0.0
    %1372 = vmatpush1.msra.mxu0 0.0
    %1373 = vmatprep.subr.mxu0 0.0
    %1374 = vmatpush1.msra.mxu0 0.0
    %1375 = vmatprep.subr.mxu0 0.0
    %1376 = vmatpush1.msra.mxu0 0.0
    %1377 = vmatprep.subr.mxu0 0.0
    %1378 = vmatpush1.msra.mxu0 0.0
    %1379 = vmatprep.subr.mxu0 0.0
    %1380 = vmatpush1.msra.mxu0 0.0
    %1381 = vmatprep.subr.mxu0 0.0
    %1382 = vmatpush1.msra.mxu0 0.0
    %1383 = vmatprep.subr.mxu0 0.0
    %1384 = vmatpush1.msra.mxu0 0.0
    %1385 = vmatprep.subr.mxu0 0.0
    %1386 = vmatpush1.msra.mxu0 0.0
    %1387 = vmatprep.subr.mxu0 0.0
    %1388 = vmatpush1.msra.mxu0 %v866
    %1389 = vmatprep.subr.mxu0 0.0
    %1390 = vmatpush1.msra.mxu0 %v865
    %1391 = vmatprep.subr.mxu0 0.0
    %1392 = vmatpush1.msra.mxu0 %v864
    %1393 = vmatprep.subr.mxu0 0.0
    %1394 = vmatpush1.msra.mxu0 %v863
    %1395 = vmatprep.subr.mxu0 0.0
    %1396 = vmatpush2.msra.mxu0 0.0
    %1397 = vmatprep.subr.mxu0 0.0
    %1398 = vmatpush2.msra.mxu0 0.0
    %1399 = vmatprep.subr.mxu0 0.0
    %1400 = vmatpush2.msra.mxu0 0.0
    %1401 = vmatprep.subr.mxu0 0.0
    %1402 = vmatpush2.msra.mxu0 0.0
    %1403 = vmatprep.subr.mxu0 0.0
    %1404 = vmatpush2.msra.mxu0 0.0
    %1405 = vmatprep.subr.mxu0 0.0
    %1406 = vmatpush2.msra.mxu0 0.0
    %1407 = vmatprep.subr.mxu0 0.0
    %1408 = vmatpush2.msra.mxu0 0.0
    %1409 = vmatprep.subr.mxu0 0.0
    %1410 = vmatpush2.msra.mxu0 0.0
    %1411 = vmatprep.subr.mxu0 0.0
    %1412 = vmatpush2.msra.mxu0 0.0
    %1413 = vmatprep.subr.mxu0 0.0
    %1414 = vmatpush2.msra.mxu0 0.0
    %1415 = vmatprep.subr.mxu0 0.0
    %1416 = vmatpush2.msra.mxu0 0.0
    %1417 = vmatprep.subr.mxu0 0.0
    %1418 = vmatpush2.msra.mxu0 0.0
    %1419 = vmatprep.subr.mxu0 0.0
    %1420 = vmatpush2.msra.mxu0 0.0
    %1421 = vmatprep.subr.mxu0 0.0
    %1422 = vmatpush2.msra.mxu0 0.0
    %1423 = vmatprep.subr.mxu0 0.0
    %1424 = vmatpush2.msra.mxu0 0.0
    %1425 = vmatprep.subr.mxu0 0.0
    %1426 = vmatpush2.msra.mxu0 0.0
    %1427 = vmatprep.mubr.f32.mxu0 0.0
    %1428 = vmatmul.mubr.f32.gmra.mxu0 %v1151
    %v1429 = vpop.f32.mrf.mxu0
    %v1430 = vadd.f32 0.0, %v1429
    %v1431 = vpop.f32.mrf.mxu0
    %1432 = vdwg.mxu0
    %v1433 = vld [vmem:[%s6] sm:$0xff]
    %v1434 = vld [vmem:[%s6 + $0x8] sm:$0xff]
    %v1435 = vld [vmem:[%s6 + $0x10] sm:$0xff]
    %v1436 = vld [vmem:[%s6 + $0x18] sm:$0xff]
    %v1437 = vld [vmem:[%s6 + $0x20] sm:$0xff]
    %v1438 = vld [vmem:[%s6 + $0x28] sm:$0xff]
    %v1439 = vld [vmem:[%s6 + $0x30] sm:$0xff]
    %v1440 = vld [vmem:[%s6 + $0x38] sm:$0xff]
    %v1441 = vld [vmem:[%s6 + $0x40] sm:$0xff]
    %v1442 = vld [vmem:[%s6 + $0x48] sm:$0xff]
    %v1443 = vld [vmem:[%s6 + $0x50] sm:$0xff]
    %v1444 = vld [vmem:[%s6 + $0x58] sm:$0xff]
    %v1445 = vld [vmem:[%s6 + $0x60] sm:$0xff]
    %v1446 = vld [vmem:[%s6 + $0x68] sm:$0xff]
    %v1447 = vld [vmem:[%s6 + $0x70] sm:$0xff]
    %v1448 = vld [vmem:[%s6 + $0x78] sm:$0xff]
    %v1449 = vld [vmem:[%s6 + $0x80] sm:$0xff]
    %v1450 = vld [vmem:[%s6 + $0x88] sm:$0xff]
    %v1451 = vld [vmem:[%s6 + $0x90] sm:$0xff]
    %v1452 = vld [vmem:[%s6 + $0x98] sm:$0xff]
    %v1453 = vld [vmem:[%s6 + $0xa0] sm:$0xff]
    %v1454 = vld [vmem:[%s6 + $0xa8] sm:$0xff]
    %v1455 = vld [vmem:[%s6 + $0xb0] sm:$0xff]
    %v1456 = vld [vmem:[%s6 + $0xb8] sm:$0xff]
    %v1457 = vld [vmem:[%s6 + $0xc0] sm:$0xff]
    %v1458 = vld [vmem:[%s6 + $0xc8] sm:$0xff]
    %v1459 = vld [vmem:[%s6 + $0xd0] sm:$0xff]
    %v1460 = vld [vmem:[%s6 + $0xd8] sm:$0xff]
    %v1461 = vld [vmem:[%s6 + $0xe0] sm:$0xff]
    %v1462 = vld [vmem:[%s6 + $0xe8] sm:$0xff]
    %v1463 = vld [vmem:[%s6 + $0xf0] sm:$0xff]
    %v1464 = vld [vmem:[%s6 + $0xf8] sm:$0xff]
    %1465 = vmatprep.subr.mxu0 0.0
    %1466 = vmatpush1.msra.mxu0 0.0
    %1467 = vmatprep.subr.mxu0 0.0
    %1468 = vmatpush1.msra.mxu0 0.0
    %1469 = vmatprep.subr.mxu0 0.0
    %1470 = vmatpush1.msra.mxu0 0.0
    %1471 = vmatprep.subr.mxu0 0.0
    %1472 = vmatpush1.msra.mxu0 0.0
    %1473 = vmatprep.subr.mxu0 0.0
    %1474 = vmatpush1.msra.mxu0 0.0
    %1475 = vmatprep.subr.mxu0 0.0
    %1476 = vmatpush1.msra.mxu0 0.0
    %1477 = vmatprep.subr.mxu0 0.0
    %1478 = vmatpush1.msra.mxu0 0.0
    %1479 = vmatprep.subr.mxu0 0.0
    %1480 = vmatpush1.msra.mxu0 0.0
    %1481 = vmatprep.subr.mxu0 0.0
    %1482 = vmatpush1.msra.mxu0 0.0
    %1483 = vmatprep.subr.mxu0 0.0
    %1484 = vmatpush1.msra.mxu0 0.0
    %1485 = vmatprep.subr.mxu0 0.0
    %1486 = vmatpush1.msra.mxu0 0.0
    %1487 = vmatprep.subr.mxu0 0.0
    %1488 = vmatpush1.msra.mxu0 0.0
    %1489 = vmatprep.subr.mxu0 0.0
    %1490 = vmatpush1.msra.mxu0 %v1436
    %1491 = vmatprep.subr.mxu0 0.0
    %1492 = vmatpush1.msra.mxu0 %v1435
    %1493 = vmatprep.subr.mxu0 0.0
    %1494 = vmatpush1.msra.mxu0 %v1434
    %1495 = vmatprep.subr.mxu0 0.0
    %1496 = vmatpush1.msra.mxu0 %v1433
    %1497 = vmatprep.subr.mxu0 0.0
    %1498 = vmatpush2.msra.mxu0 0.0
    %1499 = vmatprep.subr.mxu0 0.0
    %1500 = vmatpush2.msra.mxu0 0.0
    %1501 = vmatprep.subr.mxu0 0.0
    %1502 = vmatpush2.msra.mxu0 0.0
    %1503 = vmatprep.subr.mxu0 0.0
    %1504 = vmatpush2.msra.mxu0 0.0
    %1505 = vmatprep.subr.mxu0 0.0
    %1506 = vmatpush2.msra.mxu0 0.0
    %1507 = vmatprep.subr.mxu0 0.0
    %1508 = vmatpush2.msra.mxu0 0.0
    %1509 = vmatprep.subr.mxu0 0.0
    %1510 = vmatpush2.msra.mxu0 0.0
    %1511 = vmatprep.subr.mxu0 0.0
    %1512 = vmatpush2.msra.mxu0 0.0
    %1513 = vmatprep.subr.mxu0 0.0
    %1514 = vmatpush2.msra.mxu0 0.0
    %1515 = vmatprep.subr.mxu0 0.0
    %1516 = vmatpush2.msra.mxu0 0.0
    %1517 = vmatprep.subr.mxu0 0.0
    %1518 = vmatpush2.msra.mxu0 0.0
    %1519 = vmatprep.subr.mxu0 0.0
    %1520 = vmatpush2.msra.mxu0 0.0
    %1521 = vmatprep.subr.mxu0 0.0
    %1522 = vmatpush2.msra.mxu0 0.0
    %1523 = vmatprep.subr.mxu0 0.0
    %1524 = vmatpush2.msra.mxu0 0.0
    %1525 = vmatprep.subr.mxu0 0.0
    %1526 = vmatpush2.msra.mxu0 0.0
    %1527 = vmatprep.subr.mxu0 0.0
    %1528 = vmatpush2.msra.mxu0 0.0
    %1529 = vmatprep.mubr.f32.mxu0 0.0
    %1530 = vmatmul.mubr.f32.gmra.mxu0 %v868
    %v1531 = vpop.f32.mrf.mxu0
    %v1532 = vadd.f32 0.0, %v1531
    %v1533 = vpop.f32.mrf.mxu0
    %1534 = vdwg.mxu0
    %1535 = vmatprep.subr.mxu0 0.0
    %1536 = vmatpush1.msra.mxu0 0.0
    %1537 = vmatprep.subr.mxu0 0.0
    %1538 = vmatpush1.msra.mxu0 0.0
    %1539 = vmatprep.subr.mxu0 0.0
    %1540 = vmatpush1.msra.mxu0 0.0
    %1541 = vmatprep.subr.mxu0 0.0
    %1542 = vmatpush1.msra.mxu0 0.0
    %1543 = vmatprep.subr.mxu0 0.0
    %1544 = vmatpush1.msra.mxu0 0.0
    %1545 = vmatprep.subr.mxu0 0.0
    %1546 = vmatpush1.msra.mxu0 0.0
    %1547 = vmatprep.subr.mxu0 0.0
    %1548 = vmatpush1.msra.mxu0 0.0
    %1549 = vmatprep.subr.mxu0 0.0
    %1550 = vmatpush1.msra.mxu0 0.0
    %1551 = vmatprep.subr.mxu0 0.0
    %1552 = vmatpush1.msra.mxu0 0.0
    %1553 = vmatprep.subr.mxu0 0.0
    %1554 = vmatpush1.msra.mxu0 0.0
    %1555 = vmatprep.subr.mxu0 0.0
    %1556 = vmatpush1.msra.mxu0 0.0
    %1557 = vmatprep.subr.mxu0 0.0
    %1558 = vmatpush1.msra.mxu0 0.0
    %1559 = vmatprep.subr.mxu0 0.0
    %1560 = vmatpush1.msra.mxu0 %v1440
    %1561 = vmatprep.subr.mxu0 0.0
    %1562 = vmatpush1.msra.mxu0 %v1439
    %1563 = vmatprep.subr.mxu0 0.0
    %1564 = vmatpush1.msra.mxu0 %v1438
    %1565 = vmatprep.subr.mxu0 0.0
    %1566 = vmatpush1.msra.mxu0 %v1437
    %1567 = vmatprep.subr.mxu0 0.0
    %1568 = vmatpush2.msra.mxu0 0.0
    %1569 = vmatprep.subr.mxu0 0.0
    %1570 = vmatpush2.msra.mxu0 0.0
    %1571 = vmatprep.subr.mxu0 0.0
    %1572 = vmatpush2.msra.mxu0 0.0
    %1573 = vmatprep.subr.mxu0 0.0
    %1574 = vmatpush2.msra.mxu0 0.0
    %1575 = vmatprep.subr.mxu0 0.0
    %1576 = vmatpush2.msra.mxu0 0.0
    %1577 = vmatprep.subr.mxu0 0.0
    %1578 = vmatpush2.msra.mxu0 0.0
    %1579 = vmatprep.subr.mxu0 0.0
    %1580 = vmatpush2.msra.mxu0 0.0
    %1581 = vmatprep.subr.mxu0 0.0
    %1582 = vmatpush2.msra.mxu0 0.0
    %1583 = vmatprep.subr.mxu0 0.0
    %1584 = vmatpush2.msra.mxu0 0.0
    %1585 = vmatprep.subr.mxu0 0.0
    %1586 = vmatpush2.msra.mxu0 0.0
    %1587 = vmatprep.subr.mxu0 0.0
    %1588 = vmatpush2.msra.mxu0 0.0
    %1589 = vmatprep.subr.mxu0 0.0
    %1590 = vmatpush2.msra.mxu0 0.0
    %1591 = vmatprep.subr.mxu0 0.0
    %1592 = vmatpush2.msra.mxu0 0.0
    %1593 = vmatprep.subr.mxu0 0.0
    %1594 = vmatpush2.msra.mxu0 0.0
    %1595 = vmatprep.subr.mxu0 0.0
    %1596 = vmatpush2.msra.mxu0 0.0
    %1597 = vmatprep.subr.mxu0 0.0
    %1598 = vmatpush2.msra.mxu0 0.0
    %1599 = vmatprep.mubr.f32.mxu0 0.0
    %1600 = vmatmul.mubr.f32.gmra.mxu0 %v868
    %v1601 = vpop.f32.mrf.mxu0
    %v1602 = vadd.f32 0.0, %v1601
    %v1603 = vpop.f32.mrf.mxu0
    %1604 = vdwg.mxu0
    %1605 = vmatprep.subr.mxu0 0.0
    %1606 = vmatpush1.msra.mxu0 0.0
    %1607 = vmatprep.subr.mxu0 0.0
    %1608 = vmatpush1.msra.mxu0 0.0
    %1609 = vmatprep.subr.mxu0 0.0
    %1610 = vmatpush1.msra.mxu0 0.0
    %1611 = vmatprep.subr.mxu0 0.0
    %1612 = vmatpush1.msra.mxu0 0.0
    %1613 = vmatprep.subr.mxu0 0.0
    %1614 = vmatpush1.msra.mxu0 0.0
    %1615 = vmatprep.subr.mxu0 0.0
    %1616 = vmatpush1.msra.mxu0 0.0
    %1617 = vmatprep.subr.mxu0 0.0
    %1618 = vmatpush1.msra.mxu0 0.0
    %1619 = vmatprep.subr.mxu0 0.0
    %1620 = vmatpush1.msra.mxu0 0.0
    %1621 = vmatprep.subr.mxu0 0.0
    %1622 = vmatpush1.msra.mxu0 0.0
    %1623 = vmatprep.subr.mxu0 0.0
    %1624 = vmatpush1.msra.mxu0 0.0
    %1625 = vmatprep.subr.mxu0 0.0
    %1626 = vmatpush1.msra.mxu0 0.0
    %1627 = vmatprep.subr.mxu0 0.0
    %1628 = vmatpush1.msra.mxu0 0.0
    %1629 = vmatprep.subr.mxu0 0.0
    %1630 = vmatpush1.msra.mxu0 %v1444
    %1631 = vmatprep.subr.mxu0 0.0
    %1632 = vmatpush1.msra.mxu0 %v1443
    %1633 = vmatprep.subr.mxu0 0.0
    %1634 = vmatpush1.msra.mxu0 %v1442
    %1635 = vmatprep.subr.mxu0 0.0
    %1636 = vmatpush1.msra.mxu0 %v1441
    %1637 = vmatprep.subr.mxu0 0.0
    %1638 = vmatpush2.msra.mxu0 0.0
    %1639 = vmatprep.subr.mxu0 0.0
    %1640 = vmatpush2.msra.mxu0 0.0
    %1641 = vmatprep.subr.mxu0 0.0
    %1642 = vmatpush2.msra.mxu0 0.0
    %1643 = vmatprep.subr.mxu0 0.0
    %1644 = vmatpush2.msra.mxu0 0.0
    %1645 = vmatprep.subr.mxu0 0.0
    %1646 = vmatpush2.msra.mxu0 0.0
    %1647 = vmatprep.subr.mxu0 0.0
    %1648 = vmatpush2.msra.mxu0 0.0
    %1649 = vmatprep.subr.mxu0 0.0
    %1650 = vmatpush2.msra.mxu0 0.0
    %1651 = vmatprep.subr.mxu0 0.0
    %1652 = vmatpush2.msra.mxu0 0.0
    %1653 = vmatprep.subr.mxu0 0.0
    %1654 = vmatpush2.msra.mxu0 0.0
    %1655 = vmatprep.subr.mxu0 0.0
    %1656 = vmatpush2.msra.mxu0 0.0
    %1657 = vmatprep.subr.mxu0 0.0
    %1658 = vmatpush2.msra.mxu0 0.0
    %1659 = vmatprep.subr.mxu0 0.0
    %1660 = vmatpush2.msra.mxu0 0.0
    %1661 = vmatprep.subr.mxu0 0.0
    %1662 = vmatpush2.msra.mxu0 0.0
    %1663 = vmatprep.subr.mxu0 0.0
    %1664 = vmatpush2.msra.mxu0 0.0
    %1665 = vmatprep.subr.mxu0 0.0
    %1666 = vmatpush2.msra.mxu0 0.0
    %1667 = vmatprep.subr.mxu0 0.0
    %1668 = vmatpush2.msra.mxu0 0.0
    %1669 = vmatprep.mubr.f32.mxu0 0.0
    %1670 = vmatmul.mubr.f32.gmra.mxu0 %v868
    %v1671 = vpop.f32.mrf.mxu0
    %v1672 = vadd.f32 0.0, %v1671
    %v1673 = vpop.f32.mrf.mxu0
    %1674 = vdwg.mxu0
    %1675 = vmatprep.subr.mxu0 0.0
    %1676 = vmatpush1.msra.mxu0 0.0
    %1677 = vmatprep.subr.mxu0 0.0
    %1678 = vmatpush1.msra.mxu0 0.0
    %1679 = vmatprep.subr.mxu0 0.0
    %1680 = vmatpush1.msra.mxu0 0.0
    %1681 = vmatprep.subr.mxu0 0.0
    %1682 = vmatpush1.msra.mxu0 0.0
    %1683 = vmatprep.subr.mxu0 0.0
    %1684 = vmatpush1.msra.mxu0 0.0
    %1685 = vmatprep.subr.mxu0 0.0
    %1686 = vmatpush1.msra.mxu0 0.0
    %1687 = vmatprep.subr.mxu0 0.0
    %1688 = vmatpush1.msra.mxu0 0.0
    %1689 = vmatprep.subr.mxu0 0.0
    %1690 = vmatpush1.msra.mxu0 0.0
    %1691 = vmatprep.subr.mxu0 0.0
    %1692 = vmatpush1.msra.mxu0 0.0
    %1693 = vmatprep.subr.mxu0 0.0
    %1694 = vmatpush1.msra.mxu0 0.0
    %1695 = vmatprep.subr.mxu0 0.0
    %1696 = vmatpush1.msra.mxu0 0.0
    %1697 = vmatprep.subr.mxu0 0.0
    %1698 = vmatpush1.msra.mxu0 0.0
    %1699 = vmatprep.subr.mxu0 0.0
    %1700 = vmatpush1.msra.mxu0 %v1448
    %1701 = vmatprep.subr.mxu0 0.0
    %1702 = vmatpush1.msra.mxu0 %v1447
    %1703 = vmatprep.subr.mxu0 0.0
    %1704 = vmatpush1.msra.mxu0 %v1446
    %1705 = vmatprep.subr.mxu0 0.0
    %1706 = vmatpush1.msra.mxu0 %v1445
    %1707 = vmatprep.subr.mxu0 0.0
    %1708 = vmatpush2.msra.mxu0 0.0
    %1709 = vmatprep.subr.mxu0 0.0
    %1710 = vmatpush2.msra.mxu0 0.0
    %1711 = vmatprep.subr.mxu0 0.0
    %1712 = vmatpush2.msra.mxu0 0.0
    %1713 = vmatprep.subr.mxu0 0.0
    %1714 = vmatpush2.msra.mxu0 0.0
    %1715 = vmatprep.subr.mxu0 0.0
    %1716 = vmatpush2.msra.mxu0 0.0
    %1717 = vmatprep.subr.mxu0 0.0
    %1718 = vmatpush2.msra.mxu0 0.0
    %1719 = vmatprep.subr.mxu0 0.0
    %1720 = vmatpush2.msra.mxu0 0.0
    %1721 = vmatprep.subr.mxu0 0.0
    %1722 = vmatpush2.msra.mxu0 0.0
    %1723 = vmatprep.subr.mxu0 0.0
    %1724 = vmatpush2.msra.mxu0 0.0
    %1725 = vmatprep.subr.mxu0 0.0
    %1726 = vmatpush2.msra.mxu0 0.0
    %1727 = vmatprep.subr.mxu0 0.0
    %1728 = vmatpush2.msra.mxu0 0.0
    %1729 = vmatprep.subr.mxu0 0.0
    %1730 = vmatpush2.msra.mxu0 0.0
    %1731 = vmatprep.subr.mxu0 0.0
    %1732 = vmatpush2.msra.mxu0 0.0
    %1733 = vmatprep.subr.mxu0 0.0
    %1734 = vmatpush2.msra.mxu0 0.0
    %1735 = vmatprep.subr.mxu0 0.0
    %1736 = vmatpush2.msra.mxu0 0.0
    %1737 = vmatprep.subr.mxu0 0.0
    %1738 = vmatpush2.msra.mxu0 0.0
    %1739 = vmatprep.mubr.f32.mxu0 0.0
    %1740 = vmatmul.mubr.f32.gmra.mxu0 %v868
    %v1741 = vpop.f32.mrf.mxu0
    %v1742 = vadd.f32 0.0, %v1741
    %v1743 = vpop.f32.mrf.mxu0
    %1744 = vdwg.mxu0
    %1745 = vmatprep.subr.mxu0 0.0
    %1746 = vmatpush1.msra.mxu0 0.0
    %1747 = vmatprep.subr.mxu0 0.0
    %1748 = vmatpush1.msra.mxu0 0.0
    %1749 = vmatprep.subr.mxu0 0.0
    %1750 = vmatpush1.msra.mxu0 0.0
    %1751 = vmatprep.subr.mxu0 0.0
    %1752 = vmatpush1.msra.mxu0 0.0
    %1753 = vmatprep.subr.mxu0 0.0
    %1754 = vmatpush1.msra.mxu0 0.0
    %1755 = vmatprep.subr.mxu0 0.0
    %1756 = vmatpush1.msra.mxu0 0.0
    %1757 = vmatprep.subr.mxu0 0.0
    %1758 = vmatpush1.msra.mxu0 0.0
    %1759 = vmatprep.subr.mxu0 0.0
    %1760 = vmatpush1.msra.mxu0 0.0
    %1761 = vmatprep.subr.mxu0 0.0
    %1762 = vmatpush1.msra.mxu0 0.0
    %1763 = vmatprep.subr.mxu0 0.0
    %1764 = vmatpush1.msra.mxu0 0.0
    %1765 = vmatprep.subr.mxu0 0.0
    %1766 = vmatpush1.msra.mxu0 0.0
    %1767 = vmatprep.subr.mxu0 0.0
    %1768 = vmatpush1.msra.mxu0 0.0
    %1769 = vmatprep.subr.mxu0 0.0
    %1770 = vmatpush1.msra.mxu0 %v1452
    %1771 = vmatprep.subr.mxu0 0.0
    %1772 = vmatpush1.msra.mxu0 %v1451
    %1773 = vmatprep.subr.mxu0 0.0
    %1774 = vmatpush1.msra.mxu0 %v1450
    %1775 = vmatprep.subr.mxu0 0.0
    %1776 = vmatpush1.msra.mxu0 %v1449
    %1777 = vmatprep.subr.mxu0 0.0
    %1778 = vmatpush2.msra.mxu0 0.0
    %1779 = vmatprep.subr.mxu0 0.0
    %1780 = vmatpush2.msra.mxu0 0.0
    %1781 = vmatprep.subr.mxu0 0.0
    %1782 = vmatpush2.msra.mxu0 0.0
    %1783 = vmatprep.subr.mxu0 0.0
    %1784 = vmatpush2.msra.mxu0 0.0
    %1785 = vmatprep.subr.mxu0 0.0
    %1786 = vmatpush2.msra.mxu0 0.0
    %1787 = vmatprep.subr.mxu0 0.0
    %1788 = vmatpush2.msra.mxu0 0.0
    %1789 = vmatprep.subr.mxu0 0.0
    %1790 = vmatpush2.msra.mxu0 0.0
    %1791 = vmatprep.subr.mxu0 0.0
    %1792 = vmatpush2.msra.mxu0 0.0
    %1793 = vmatprep.subr.mxu0 0.0
    %1794 = vmatpush2.msra.mxu0 0.0
    %1795 = vmatprep.subr.mxu0 0.0
    %1796 = vmatpush2.msra.mxu0 0.0
    %1797 = vmatprep.subr.mxu0 0.0
    %1798 = vmatpush2.msra.mxu0 0.0
    %1799 = vmatprep.subr.mxu0 0.0
    %1800 = vmatpush2.msra.mxu0 0.0
    %1801 = vmatprep.subr.mxu0 0.0
    %1802 = vmatpush2.msra.mxu0 0.0
    %1803 = vmatprep.subr.mxu0 0.0
    %1804 = vmatpush2.msra.mxu0 0.0
    %1805 = vmatprep.subr.mxu0 0.0
    %1806 = vmatpush2.msra.mxu0 0.0
    %1807 = vmatprep.subr.mxu0 0.0
    %1808 = vmatpush2.msra.mxu0 0.0
    %1809 = vmatprep.mubr.f32.mxu0 0.0
    %1810 = vmatmul.mubr.f32.gmra.mxu0 %v1151
    %v1811 = vpop.f32.mrf.mxu0
    %v1812 = vadd.f32 0.0, %v1811
    %v1813 = vpop.f32.mrf.mxu0
    %1814 = vdwg.mxu0
    %1815 = vmatprep.subr.mxu0 0.0
    %1816 = vmatpush1.msra.mxu0 0.0
    %1817 = vmatprep.subr.mxu0 0.0
    %1818 = vmatpush1.msra.mxu0 0.0
    %1819 = vmatprep.subr.mxu0 0.0
    %1820 = vmatpush1.msra.mxu0 0.0
    %1821 = vmatprep.subr.mxu0 0.0
    %1822 = vmatpush1.msra.mxu0 0.0
    %1823 = vmatprep.subr.mxu0 0.0
    %1824 = vmatpush1.msra.mxu0 0.0
    %1825 = vmatprep.subr.mxu0 0.0
    %1826 = vmatpush1.msra.mxu0 0.0
    %1827 = vmatprep.subr.mxu0 0.0
    %1828 = vmatpush1.msra.mxu0 0.0
    %1829 = vmatprep.subr.mxu0 0.0
    %1830 = vmatpush1.msra.mxu0 0.0
    %1831 = vmatprep.subr.mxu0 0.0
    %1832 = vmatpush1.msra.mxu0 0.0
    %1833 = vmatprep.subr.mxu0 0.0
    %1834 = vmatpush1.msra.mxu0 0.0
    %1835 = vmatprep.subr.mxu0 0.0
    %1836 = vmatpush1.msra.mxu0 0.0
    %1837 = vmatprep.subr.mxu0 0.0
    %1838 = vmatpush1.msra.mxu0 0.0
    %1839 = vmatprep.subr.mxu0 0.0
    %1840 = vmatpush1.msra.mxu0 %v1456
    %1841 = vmatprep.subr.mxu0 0.0
    %1842 = vmatpush1.msra.mxu0 %v1455
    %1843 = vmatprep.subr.mxu0 0.0
    %1844 = vmatpush1.msra.mxu0 %v1454
    %1845 = vmatprep.subr.mxu0 0.0
    %1846 = vmatpush1.msra.mxu0 %v1453
    %1847 = vmatprep.subr.mxu0 0.0
    %1848 = vmatpush2.msra.mxu0 0.0
    %1849 = vmatprep.subr.mxu0 0.0
    %1850 = vmatpush2.msra.mxu0 0.0
    %1851 = vmatprep.subr.mxu0 0.0
    %1852 = vmatpush2.msra.mxu0 0.0
    %1853 = vmatprep.subr.mxu0 0.0
    %1854 = vmatpush2.msra.mxu0 0.0
    %1855 = vmatprep.subr.mxu0 0.0
    %1856 = vmatpush2.msra.mxu0 0.0
    %1857 = vmatprep.subr.mxu0 0.0
    %1858 = vmatpush2.msra.mxu0 0.0
    %1859 = vmatprep.subr.mxu0 0.0
    %1860 = vmatpush2.msra.mxu0 0.0
    %1861 = vmatprep.subr.mxu0 0.0
    %1862 = vmatpush2.msra.mxu0 0.0
    %1863 = vmatprep.subr.mxu0 0.0
    %1864 = vmatpush2.msra.mxu0 0.0
    %1865 = vmatprep.subr.mxu0 0.0
    %1866 = vmatpush2.msra.mxu0 0.0
    %1867 = vmatprep.subr.mxu0 0.0
    %1868 = vmatpush2.msra.mxu0 0.0
    %1869 = vmatprep.subr.mxu0 0.0
    %1870 = vmatpush2.msra.mxu0 0.0
    %1871 = vmatprep.subr.mxu0 0.0
    %1872 = vmatpush2.msra.mxu0 0.0
    %1873 = vmatprep.subr.mxu0 0.0
    %1874 = vmatpush2.msra.mxu0 0.0
    %1875 = vmatprep.subr.mxu0 0.0
    %1876 = vmatpush2.msra.mxu0 0.0
    %1877 = vmatprep.subr.mxu0 0.0
    %1878 = vmatpush2.msra.mxu0 0.0
    %1879 = vmatprep.mubr.f32.mxu0 0.0
    %1880 = vmatmul.mubr.f32.gmra.mxu0 %v1151
    %v1881 = vpop.f32.mrf.mxu0
    %v1882 = vadd.f32 0.0, %v1881
    %v1883 = vpop.f32.mrf.mxu0
    %1884 = vdwg.mxu0
    %1885 = vmatprep.subr.mxu0 0.0
    %1886 = vmatpush1.msra.mxu0 0.0
    %1887 = vmatprep.subr.mxu0 0.0
    %1888 = vmatpush1.msra.mxu0 0.0
    %1889 = vmatprep.subr.mxu0 0.0
    %1890 = vmatpush1.msra.mxu0 0.0
    %1891 = vmatprep.subr.mxu0 0.0
    %1892 = vmatpush1.msra.mxu0 0.0
    %1893 = vmatprep.subr.mxu0 0.0
    %1894 = vmatpush1.msra.mxu0 0.0
    %1895 = vmatprep.subr.mxu0 0.0
    %1896 = vmatpush1.msra.mxu0 0.0
    %1897 = vmatprep.subr.mxu0 0.0
    %1898 = vmatpush1.msra.mxu0 0.0
    %1899 = vmatprep.subr.mxu0 0.0
    %1900 = vmatpush1.msra.mxu0 0.0
    %1901 = vmatprep.subr.mxu0 0.0
    %1902 = vmatpush1.msra.mxu0 0.0
    %1903 = vmatprep.subr.mxu0 0.0
    %1904 = vmatpush1.msra.mxu0 0.0
    %1905 = vmatprep.subr.mxu0 0.0
    %1906 = vmatpush1.msra.mxu0 0.0
    %1907 = vmatprep.subr.mxu0 0.0
    %1908 = vmatpush1.msra.mxu0 0.0
    %1909 = vmatprep.subr.mxu0 0.0
    %1910 = vmatpush1.msra.mxu0 %v1460
    %1911 = vmatprep.subr.mxu0 0.0
    %1912 = vmatpush1.msra.mxu0 %v1459
    %1913 = vmatprep.subr.mxu0 0.0
    %1914 = vmatpush1.msra.mxu0 %v1458
    %1915 = vmatprep.subr.mxu0 0.0
    %1916 = vmatpush1.msra.mxu0 %v1457
    %1917 = vmatprep.subr.mxu0 0.0
    %1918 = vmatpush2.msra.mxu0 0.0
    %1919 = vmatprep.subr.mxu0 0.0
    %1920 = vmatpush2.msra.mxu0 0.0
    %1921 = vmatprep.subr.mxu0 0.0
    %1922 = vmatpush2.msra.mxu0 0.0
    %1923 = vmatprep.subr.mxu0 0.0
    %1924 = vmatpush2.msra.mxu0 0.0
    %1925 = vmatprep.subr.mxu0 0.0
    %1926 = vmatpush2.msra.mxu0 0.0
    %1927 = vmatprep.subr.mxu0 0.0
    %1928 = vmatpush2.msra.mxu0 0.0
    %1929 = vmatprep.subr.mxu0 0.0
    %1930 = vmatpush2.msra.mxu0 0.0
    %1931 = vmatprep.subr.mxu0 0.0
    %1932 = vmatpush2.msra.mxu0 0.0
    %1933 = vmatprep.subr.mxu0 0.0
    %1934 = vmatpush2.msra.mxu0 0.0
    %1935 = vmatprep.subr.mxu0 0.0
    %1936 = vmatpush2.msra.mxu0 0.0
    %1937 = vmatprep.subr.mxu0 0.0
    %1938 = vmatpush2.msra.mxu0 0.0
    %1939 = vmatprep.subr.mxu0 0.0
    %1940 = vmatpush2.msra.mxu0 0.0
    %1941 = vmatprep.subr.mxu0 0.0
    %1942 = vmatpush2.msra.mxu0 0.0
    %1943 = vmatprep.subr.mxu0 0.0
    %1944 = vmatpush2.msra.mxu0 0.0
    %1945 = vmatprep.subr.mxu0 0.0
    %1946 = vmatpush2.msra.mxu0 0.0
    %1947 = vmatprep.subr.mxu0 0.0
    %1948 = vmatpush2.msra.mxu0 0.0
    %1949 = vmatprep.mubr.f32.mxu0 0.0
    %1950 = vmatmul.mubr.f32.gmra.mxu0 %v1151
    %v1951 = vpop.f32.mrf.mxu0
    %v1952 = vadd.f32 0.0, %v1951
    %v1953 = vpop.f32.mrf.mxu0
    %1954 = vdwg.mxu0
    %1955 = vmatprep.subr.mxu0 0.0
    %1956 = vmatpush1.msra.mxu0 0.0
    %1957 = vmatprep.subr.mxu0 0.0
    %1958 = vmatpush1.msra.mxu0 0.0
    %1959 = vmatprep.subr.mxu0 0.0
    %1960 = vmatpush1.msra.mxu0 0.0
    %1961 = vmatprep.subr.mxu0 0.0
    %1962 = vmatpush1.msra.mxu0 0.0
    %1963 = vmatprep.subr.mxu0 0.0
    %1964 = vmatpush1.msra.mxu0 0.0
    %1965 = vmatprep.subr.mxu0 0.0
    %1966 = vmatpush1.msra.mxu0 0.0
    %1967 = vmatprep.subr.mxu0 0.0
    %1968 = vmatpush1.msra.mxu0 0.0
    %1969 = vmatprep.subr.mxu0 0.0
    %1970 = vmatpush1.msra.mxu0 0.0
    %1971 = vmatprep.subr.mxu0 0.0
    %1972 = vmatpush1.msra.mxu0 0.0
    %1973 = vmatprep.subr.mxu0 0.0
    %1974 = vmatpush1.msra.mxu0 0.0
    %1975 = vmatprep.subr.mxu0 0.0
    %1976 = vmatpush1.msra.mxu0 0.0
    %1977 = vmatprep.subr.mxu0 0.0
    %1978 = vmatpush1.msra.mxu0 0.0
    %1979 = vmatprep.subr.mxu0 0.0
    %1980 = vmatpush1.msra.mxu0 %v1464
    %1981 = vmatprep.subr.mxu0 0.0
    %1982 = vmatpush1.msra.mxu0 %v1463
    %1983 = vmatprep.subr.mxu0 0.0
    %1984 = vmatpush1.msra.mxu0 %v1462
    %1985 = vmatprep.subr.mxu0 0.0
    %1986 = vmatpush1.msra.mxu0 %v1461
    %1987 = vmatprep.subr.mxu0 0.0
    %1988 = vmatpush2.msra.mxu0 0.0
    %1989 = vmatprep.subr.mxu0 0.0
    %1990 = vmatpush2.msra.mxu0 0.0
    %1991 = vmatprep.subr.mxu0 0.0
    %1992 = vmatpush2.msra.mxu0 0.0
    %1993 = vmatprep.subr.mxu0 0.0
    %1994 = vmatpush2.msra.mxu0 0.0
    %1995 = vmatprep.subr.mxu0 0.0
    %1996 = vmatpush2.msra.mxu0 0.0
    %1997 = vmatprep.subr.mxu0 0.0
    %1998 = vmatpush2.msra.mxu0 0.0
    %1999 = vmatprep.subr.mxu0 0.0
    %2000 = vmatpush2.msra.mxu0 0.0
    %2001 = vmatprep.subr.mxu0 0.0
    %2002 = vmatpush2.msra.mxu0 0.0
    %2003 = vmatprep.subr.mxu0 0.0
    %2004 = vmatpush2.msra.mxu0 0.0
    %2005 = vmatprep.subr.mxu0 0.0
    %2006 = vmatpush2.msra.mxu0 0.0
    %2007 = vmatprep.subr.mxu0 0.0
    %2008 = vmatpush2.msra.mxu0 0.0
    %2009 = vmatprep.subr.mxu0 0.0
    %2010 = vmatpush2.msra.mxu0 0.0
    %2011 = vmatprep.subr.mxu0 0.0
    %2012 = vmatpush2.msra.mxu0 0.0
    %2013 = vmatprep.subr.mxu0 0.0
    %2014 = vmatpush2.msra.mxu0 0.0
    %2015 = vmatprep.subr.mxu0 0.0
    %2016 = vmatpush2.msra.mxu0 0.0
    %2017 = vmatprep.subr.mxu0 0.0
    %2018 = vmatpush2.msra.mxu0 0.0
    %2019 = vmatprep.mubr.f32.mxu0 0.0
    %2020 = vmatmul.mubr.f32.gmra.mxu0 %v1151
    %v2021 = vpop.f32.mrf.mxu0
    %v2022 = vadd.f32 0.0, %v2021
    %v2023 = vpop.f32.mrf.mxu0
    %2024 = vdwg.mxu0
    %v2025 = vld [vmem:[%s7] sm:$0xff]
    %v2026 = vld [vmem:[%s7 + $0x8] sm:$0xff]
    %v2027 = vld [vmem:[%s7 + $0x10] sm:$0xff]
    %v2028 = vld [vmem:[%s7 + $0x18] sm:$0xff]
    %v2029 = vld [vmem:[%s7 + $0x20] sm:$0xff]
    %v2030 = vld [vmem:[%s7 + $0x28] sm:$0xff]
    %v2031 = vld [vmem:[%s7 + $0x30] sm:$0xff]
    %v2032 = vld [vmem:[%s7 + $0x38] sm:$0xff]
    %v2033 = vld [vmem:[%s7 + $0x40] sm:$0xff]
    %v2034 = vld [vmem:[%s7 + $0x48] sm:$0xff]
    %v2035 = vld [vmem:[%s7 + $0x50] sm:$0xff]
    %v2036 = vld [vmem:[%s7 + $0x58] sm:$0xff]
    %v2037 = vld [vmem:[%s7 + $0x60] sm:$0xff]
    %v2038 = vld [vmem:[%s7 + $0x68] sm:$0xff]
    %v2039 = vld [vmem:[%s7 + $0x70] sm:$0xff]
    %v2040 = vld [vmem:[%s7 + $0x78] sm:$0xff]
    %v2041 = vld [vmem:[%s7 + $0x80] sm:$0xff]
    %v2042 = vld [vmem:[%s7 + $0x88] sm:$0xff]
    %v2043 = vld [vmem:[%s7 + $0x90] sm:$0xff]
    %v2044 = vld [vmem:[%s7 + $0x98] sm:$0xff]
    %v2045 = vld [vmem:[%s7 + $0xa0] sm:$0xff]
    %v2046 = vld [vmem:[%s7 + $0xa8] sm:$0xff]
    %v2047 = vld [vmem:[%s7 + $0xb0] sm:$0xff]
    %v2048 = vld [vmem:[%s7 + $0xb8] sm:$0xff]
    %v2049 = vld [vmem:[%s7 + $0xc0] sm:$0xff]
    %v2050 = vld [vmem:[%s7 + $0xc8] sm:$0xff]
    %v2051 = vld [vmem:[%s7 + $0xd0] sm:$0xff]
    %v2052 = vld [vmem:[%s7 + $0xd8] sm:$0xff]
    %v2053 = vld [vmem:[%s7 + $0xe0] sm:$0xff]
    %v2054 = vld [vmem:[%s7 + $0xe8] sm:$0xff]
    %v2055 = vld [vmem:[%s7 + $0xf0] sm:$0xff]
    %v2056 = vld [vmem:[%s7 + $0xf8] sm:$0xff]
    %2057 = vmatprep.subr.mxu0 0.0
    %2058 = vmatpush1.msra.mxu0 0.0
    %2059 = vmatprep.subr.mxu0 0.0
    %2060 = vmatpush1.msra.mxu0 0.0
    %2061 = vmatprep.subr.mxu0 0.0
    %2062 = vmatpush1.msra.mxu0 0.0
    %2063 = vmatprep.subr.mxu0 0.0
    %2064 = vmatpush1.msra.mxu0 0.0
    %2065 = vmatprep.subr.mxu0 0.0
    %2066 = vmatpush1.msra.mxu0 0.0
    %2067 = vmatprep.subr.mxu0 0.0
    %2068 = vmatpush1.msra.mxu0 0.0
    %2069 = vmatprep.subr.mxu0 0.0
    %2070 = vmatpush1.msra.mxu0 0.0
    %2071 = vmatprep.subr.mxu0 0.0
    %2072 = vmatpush1.msra.mxu0 0.0
    %2073 = vmatprep.subr.mxu0 0.0
    %2074 = vmatpush1.msra.mxu0 0.0
    %2075 = vmatprep.subr.mxu0 0.0
    %2076 = vmatpush1.msra.mxu0 0.0
    %2077 = vmatprep.subr.mxu0 0.0
    %2078 = vmatpush1.msra.mxu0 0.0
    %2079 = vmatprep.subr.mxu0 0.0
    %2080 = vmatpush1.msra.mxu0 0.0
    %2081 = vmatprep.subr.mxu0 0.0
    %2082 = vmatpush1.msra.mxu0 %v2028
    %2083 = vmatprep.subr.mxu0 0.0
    %2084 = vmatpush1.msra.mxu0 %v2027
    %2085 = vmatprep.subr.mxu0 0.0
    %2086 = vmatpush1.msra.mxu0 %v2026
    %2087 = vmatprep.subr.mxu0 0.0
    %2088 = vmatpush1.msra.mxu0 %v2025
    %2089 = vmatprep.subr.mxu0 0.0
    %2090 = vmatpush2.msra.mxu0 0.0
    %2091 = vmatprep.subr.mxu0 0.0
    %2092 = vmatpush2.msra.mxu0 0.0
    %2093 = vmatprep.subr.mxu0 0.0
    %2094 = vmatpush2.msra.mxu0 0.0
    %2095 = vmatprep.subr.mxu0 0.0
    %2096 = vmatpush2.msra.mxu0 0.0
    %2097 = vmatprep.subr.mxu0 0.0
    %2098 = vmatpush2.msra.mxu0 0.0
    %2099 = vmatprep.subr.mxu0 0.0
    %2100 = vmatpush2.msra.mxu0 0.0
    %2101 = vmatprep.subr.mxu0 0.0
    %2102 = vmatpush2.msra.mxu0 0.0
    %2103 = vmatprep.subr.mxu0 0.0
    %2104 = vmatpush2.msra.mxu0 0.0
    %2105 = vmatprep.subr.mxu0 0.0
    %2106 = vmatpush2.msra.mxu0 0.0
    %2107 = vmatprep.subr.mxu0 0.0
    %2108 = vmatpush2.msra.mxu0 0.0
    %2109 = vmatprep.subr.mxu0 0.0
    %2110 = vmatpush2.msra.mxu0 0.0
    %2111 = vmatprep.subr.mxu0 0.0
    %2112 = vmatpush2.msra.mxu0 0.0
    %2113 = vmatprep.subr.mxu0 0.0
    %2114 = vmatpush2.msra.mxu0 0.0
    %2115 = vmatprep.subr.mxu0 0.0
    %2116 = vmatpush2.msra.mxu0 0.0
    %2117 = vmatprep.subr.mxu0 0.0
    %2118 = vmatpush2.msra.mxu0 0.0
    %2119 = vmatprep.subr.mxu0 0.0
    %2120 = vmatpush2.msra.mxu0 0.0
    %2121 = vmatprep.mubr.f32.mxu0 0.0
    %2122 = vmatmul.mubr.f32.gmra.mxu0 %v868
    %v2123 = vpop.f32.mrf.mxu0
    %v2124 = vadd.f32 0.0, %v2123
    %v2125 = vpop.f32.mrf.mxu0
    %2126 = vdwg.mxu0
    %2127 = vmatprep.subr.mxu0 0.0
    %2128 = vmatpush1.msra.mxu0 0.0
    %2129 = vmatprep.subr.mxu0 0.0
    %2130 = vmatpush1.msra.mxu0 0.0
    %2131 = vmatprep.subr.mxu0 0.0
    %2132 = vmatpush1.msra.mxu0 0.0
    %2133 = vmatprep.subr.mxu0 0.0
    %2134 = vmatpush1.msra.mxu0 0.0
    %2135 = vmatprep.subr.mxu0 0.0
    %2136 = vmatpush1.msra.mxu0 0.0
    %2137 = vmatprep.subr.mxu0 0.0
    %2138 = vmatpush1.msra.mxu0 0.0
    %2139 = vmatprep.subr.mxu0 0.0
    %2140 = vmatpush1.msra.mxu0 0.0
    %2141 = vmatprep.subr.mxu0 0.0
    %2142 = vmatpush1.msra.mxu0 0.0
    %2143 = vmatprep.subr.mxu0 0.0
    %2144 = vmatpush1.msra.mxu0 0.0
    %2145 = vmatprep.subr.mxu0 0.0
    %2146 = vmatpush1.msra.mxu0 0.0
    %2147 = vmatprep.subr.mxu0 0.0
    %2148 = vmatpush1.msra.mxu0 0.0
    %2149 = vmatprep.subr.mxu0 0.0
    %2150 = vmatpush1.msra.mxu0 0.0
    %2151 = vmatprep.subr.mxu0 0.0
    %2152 = vmatpush1.msra.mxu0 %v2032
    %2153 = vmatprep.subr.mxu0 0.0
    %2154 = vmatpush1.msra.mxu0 %v2031
    %2155 = vmatprep.subr.mxu0 0.0
    %2156 = vmatpush1.msra.mxu0 %v2030
    %2157 = vmatprep.subr.mxu0 0.0
    %2158 = vmatpush1.msra.mxu0 %v2029
    %2159 = vmatprep.subr.mxu0 0.0
    %2160 = vmatpush2.msra.mxu0 0.0
    %2161 = vmatprep.subr.mxu0 0.0
    %2162 = vmatpush2.msra.mxu0 0.0
    %2163 = vmatprep.subr.mxu0 0.0
    %2164 = vmatpush2.msra.mxu0 0.0
    %2165 = vmatprep.subr.mxu0 0.0
    %2166 = vmatpush2.msra.mxu0 0.0
    %2167 = vmatprep.subr.mxu0 0.0
    %2168 = vmatpush2.msra.mxu0 0.0
    %2169 = vmatprep.subr.mxu0 0.0
    %2170 = vmatpush2.msra.mxu0 0.0
    %2171 = vmatprep.subr.mxu0 0.0
    %2172 = vmatpush2.msra.mxu0 0.0
    %2173 = vmatprep.subr.mxu0 0.0
    %2174 = vmatpush2.msra.mxu0 0.0
    %2175 = vmatprep.subr.mxu0 0.0
    %2176 = vmatpush2.msra.mxu0 0.0
    %2177 = vmatprep.subr.mxu0 0.0
    %2178 = vmatpush2.msra.mxu0 0.0
    %2179 = vmatprep.subr.mxu0 0.0
    %2180 = vmatpush2.msra.mxu0 0.0
    %2181 = vmatprep.subr.mxu0 0.0
    %2182 = vmatpush2.msra.mxu0 0.0
    %2183 = vmatprep.subr.mxu0 0.0
    %2184 = vmatpush2.msra.mxu0 0.0
    %2185 = vmatprep.subr.mxu0 0.0
    %2186 = vmatpush2.msra.mxu0 0.0
    %2187 = vmatprep.subr.mxu0 0.0
    %2188 = vmatpush2.msra.mxu0 0.0
    %2189 = vmatprep.subr.mxu0 0.0
    %2190 = vmatpush2.msra.mxu0 0.0
    %2191 = vmatprep.mubr.f32.mxu0 0.0
    %2192 = vmatmul.mubr.f32.gmra.mxu0 %v868
    %v2193 = vpop.f32.mrf.mxu0
    %v2194 = vadd.f32 0.0, %v2193
    %v2195 = vpop.f32.mrf.mxu0
    %2196 = vdwg.mxu0
    %2197 = vmatprep.subr.mxu0 0.0
    %2198 = vmatpush1.msra.mxu0 0.0
    %2199 = vmatprep.subr.mxu0 0.0
    %2200 = vmatpush1.msra.mxu0 0.0
    %2201 = vmatprep.subr.mxu0 0.0
    %2202 = vmatpush1.msra.mxu0 0.0
    %2203 = vmatprep.subr.mxu0 0.0
    %2204 = vmatpush1.msra.mxu0 0.0
    %2205 = vmatprep.subr.mxu0 0.0
    %2206 = vmatpush1.msra.mxu0 0.0
    %2207 = vmatprep.subr.mxu0 0.0
    %2208 = vmatpush1.msra.mxu0 0.0
    %2209 = vmatprep.subr.mxu0 0.0
    %2210 = vmatpush1.msra.mxu0 0.0
    %2211 = vmatprep.subr.mxu0 0.0
    %2212 = vmatpush1.msra.mxu0 0.0
    %2213 = vmatprep.subr.mxu0 0.0
    %2214 = vmatpush1.msra.mxu0 0.0
    %2215 = vmatprep.subr.mxu0 0.0
    %2216 = vmatpush1.msra.mxu0 0.0
    %2217 = vmatprep.subr.mxu0 0.0
    %2218 = vmatpush1.msra.mxu0 0.0
    %2219 = vmatprep.subr.mxu0 0.0
    %2220 = vmatpush1.msra.mxu0 0.0
    %2221 = vmatprep.subr.mxu0 0.0
    %2222 = vmatpush1.msra.mxu0 %v2036
    %2223 = vmatprep.subr.mxu0 0.0
    %2224 = vmatpush1.msra.mxu0 %v2035
    %2225 = vmatprep.subr.mxu0 0.0
    %2226 = vmatpush1.msra.mxu0 %v2034
    %2227 = vmatprep.subr.mxu0 0.0
    %2228 = vmatpush1.msra.mxu0 %v2033
    %2229 = vmatprep.subr.mxu0 0.0
    %2230 = vmatpush2.msra.mxu0 0.0
    %2231 = vmatprep.subr.mxu0 0.0
    %2232 = vmatpush2.msra.mxu0 0.0
    %2233 = vmatprep.subr.mxu0 0.0
    %2234 = vmatpush2.msra.mxu0 0.0
    %2235 = vmatprep.subr.mxu0 0.0
    %2236 = vmatpush2.msra.mxu0 0.0
    %2237 = vmatprep.subr.mxu0 0.0
    %2238 = vmatpush2.msra.mxu0 0.0
    %2239 = vmatprep.subr.mxu0 0.0
    %2240 = vmatpush2.msra.mxu0 0.0
    %2241 = vmatprep.subr.mxu0 0.0
    %2242 = vmatpush2.msra.mxu0 0.0
    %2243 = vmatprep.subr.mxu0 0.0
    %2244 = vmatpush2.msra.mxu0 0.0
    %2245 = vmatprep.subr.mxu0 0.0
    %2246 = vmatpush2.msra.mxu0 0.0
    %2247 = vmatprep.subr.mxu0 0.0
    %2248 = vmatpush2.msra.mxu0 0.0
    %2249 = vmatprep.subr.mxu0 0.0
    %2250 = vmatpush2.msra.mxu0 0.0
    %2251 = vmatprep.subr.mxu0 0.0
    %2252 = vmatpush2.msra.mxu0 0.0
    %2253 = vmatprep.subr.mxu0 0.0
    %2254 = vmatpush2.msra.mxu0 0.0
    %2255 = vmatprep.subr.mxu0 0.0
    %2256 = vmatpush2.msra.mxu0 0.0
    %2257 = vmatprep.subr.mxu0 0.0
    %2258 = vmatpush2.msra.mxu0 0.0
    %2259 = vmatprep.subr.mxu0 0.0
    %2260 = vmatpush2.msra.mxu0 0.0
    %2261 = vmatprep.mubr.f32.mxu0 0.0
    %2262 = vmatmul.mubr.f32.gmra.mxu0 %v868
    %v2263 = vpop.f32.mrf.mxu0
    %v2264 = vadd.f32 0.0, %v2263
    %v2265 = vpop.f32.mrf.mxu0
    %2266 = vdwg.mxu0
    %2267 = vmatprep.subr.mxu0 0.0
    %2268 = vmatpush1.msra.mxu0 0.0
    %2269 = vmatprep.subr.mxu0 0.0
    %2270 = vmatpush1.msra.mxu0 0.0
    %2271 = vmatprep.subr.mxu0 0.0
    %2272 = vmatpush1.msra.mxu0 0.0
    %2273 = vmatprep.subr.mxu0 0.0
    %2274 = vmatpush1.msra.mxu0 0.0
    %2275 = vmatprep.subr.mxu0 0.0
    %2276 = vmatpush1.msra.mxu0 0.0
    %2277 = vmatprep.subr.mxu0 0.0
    %2278 = vmatpush1.msra.mxu0 0.0
    %2279 = vmatprep.subr.mxu0 0.0
    %2280 = vmatpush1.msra.mxu0 0.0
    %2281 = vmatprep.subr.mxu0 0.0
    %2282 = vmatpush1.msra.mxu0 0.0
    %2283 = vmatprep.subr.mxu0 0.0
    %2284 = vmatpush1.msra.mxu0 0.0
    %2285 = vmatprep.subr.mxu0 0.0
    %2286 = vmatpush1.msra.mxu0 0.0
    %2287 = vmatprep.subr.mxu0 0.0
    %2288 = vmatpush1.msra.mxu0 0.0
    %2289 = vmatprep.subr.mxu0 0.0
    %2290 = vmatpush1.msra.mxu0 0.0
    %2291 = vmatprep.subr.mxu0 0.0
    %2292 = vmatpush1.msra.mxu0 %v2040
    %2293 = vmatprep.subr.mxu0 0.0
    %2294 = vmatpush1.msra.mxu0 %v2039
    %2295 = vmatprep.subr.mxu0 0.0
    %2296 = vmatpush1.msra.mxu0 %v2038
    %2297 = vmatprep.subr.mxu0 0.0
    %2298 = vmatpush1.msra.mxu0 %v2037
    %2299 = vmatprep.subr.mxu0 0.0
    %2300 = vmatpush2.msra.mxu0 0.0
    %2301 = vmatprep.subr.mxu0 0.0
    %2302 = vmatpush2.msra.mxu0 0.0
    %2303 = vmatprep.subr.mxu0 0.0
    %2304 = vmatpush2.msra.mxu0 0.0
    %2305 = vmatprep.subr.mxu0 0.0
    %2306 = vmatpush2.msra.mxu0 0.0
    %2307 = vmatprep.subr.mxu0 0.0
    %2308 = vmatpush2.msra.mxu0 0.0
    %2309 = vmatprep.subr.mxu0 0.0
    %2310 = vmatpush2.msra.mxu0 0.0
    %2311 = vmatprep.subr.mxu0 0.0
    %2312 = vmatpush2.msra.mxu0 0.0
    %2313 = vmatprep.subr.mxu0 0.0
    %2314 = vmatpush2.msra.mxu0 0.0
    %2315 = vmatprep.subr.mxu0 0.0
    %2316 = vmatpush2.msra.mxu0 0.0
    %2317 = vmatprep.subr.mxu0 0.0
    %2318 = vmatpush2.msra.mxu0 0.0
    %2319 = vmatprep.subr.mxu0 0.0
    %2320 = vmatpush2.msra.mxu0 0.0
    %2321 = vmatprep.subr.mxu0 0.0
    %2322 = vmatpush2.msra.mxu0 0.0
    %2323 = vmatprep.subr.mxu0 0.0
    %2324 = vmatpush2.msra.mxu0 0.0
    %2325 = vmatprep.subr.mxu0 0.0
    %2326 = vmatpush2.msra.mxu0 0.0
    %2327 = vmatprep.subr.mxu0 0.0
    %2328 = vmatpush2.msra.mxu0 0.0
    %2329 = vmatprep.subr.mxu0 0.0
    %2330 = vmatpush2.msra.mxu0 0.0
    %2331 = vmatprep.mubr.f32.mxu0 0.0
    %2332 = vmatmul.mubr.f32.gmra.mxu0 %v868
    %v2333 = vpop.f32.mrf.mxu0
    %v2334 = vadd.f32 0.0, %v2333
    %v2335 = vpop.f32.mrf.mxu0
    %2336 = vdwg.mxu0
    %2337 = vmatprep.subr.mxu0 0.0
    %2338 = vmatpush1.msra.mxu0 0.0
    %2339 = vmatprep.subr.mxu0 0.0
    %2340 = vmatpush1.msra.mxu0 0.0
    %2341 = vmatprep.subr.mxu0 0.0
    %2342 = vmatpush1.msra.mxu0 0.0
    %2343 = vmatprep.subr.mxu0 0.0
    %2344 = vmatpush1.msra.mxu0 0.0
    %2345 = vmatprep.subr.mxu0 0.0
    %2346 = vmatpush1.msra.mxu0 0.0
    %2347 = vmatprep.subr.mxu0 0.0
    %2348 = vmatpush1.msra.mxu0 0.0
    %2349 = vmatprep.subr.mxu0 0.0
    %2350 = vmatpush1.msra.mxu0 0.0
    %2351 = vmatprep.subr.mxu0 0.0
    %2352 = vmatpush1.msra.mxu0 0.0
    %2353 = vmatprep.subr.mxu0 0.0
    %2354 = vmatpush1.msra.mxu0 0.0
    %2355 = vmatprep.subr.mxu0 0.0
    %2356 = vmatpush1.msra.mxu0 0.0
    %2357 = vmatprep.subr.mxu0 0.0
    %2358 = vmatpush1.msra.mxu0 0.0
    %2359 = vmatprep.subr.mxu0 0.0
    %2360 = vmatpush1.msra.mxu0 0.0
    %2361 = vmatprep.subr.mxu0 0.0
    %2362 = vmatpush1.msra.mxu0 %v2044
    %2363 = vmatprep.subr.mxu0 0.0
    %2364 = vmatpush1.msra.mxu0 %v2043
    %2365 = vmatprep.subr.mxu0 0.0
    %2366 = vmatpush1.msra.mxu0 %v2042
    %2367 = vmatprep.subr.mxu0 0.0
    %2368 = vmatpush1.msra.mxu0 %v2041
    %2369 = vmatprep.subr.mxu0 0.0
    %2370 = vmatpush2.msra.mxu0 0.0
    %2371 = vmatprep.subr.mxu0 0.0
    %2372 = vmatpush2.msra.mxu0 0.0
    %2373 = vmatprep.subr.mxu0 0.0
    %2374 = vmatpush2.msra.mxu0 0.0
    %2375 = vmatprep.subr.mxu0 0.0
    %2376 = vmatpush2.msra.mxu0 0.0
    %2377 = vmatprep.subr.mxu0 0.0
    %2378 = vmatpush2.msra.mxu0 0.0
    %2379 = vmatprep.subr.mxu0 0.0
    %2380 = vmatpush2.msra.mxu0 0.0
    %2381 = vmatprep.subr.mxu0 0.0
    %2382 = vmatpush2.msra.mxu0 0.0
    %2383 = vmatprep.subr.mxu0 0.0
    %2384 = vmatpush2.msra.mxu0 0.0
    %2385 = vmatprep.subr.mxu0 0.0
    %2386 = vmatpush2.msra.mxu0 0.0
    %2387 = vmatprep.subr.mxu0 0.0
    %2388 = vmatpush2.msra.mxu0 0.0
    %2389 = vmatprep.subr.mxu0 0.0
    %2390 = vmatpush2.msra.mxu0 0.0
    %2391 = vmatprep.subr.mxu0 0.0
    %2392 = vmatpush2.msra.mxu0 0.0
    %2393 = vmatprep.subr.mxu0 0.0
    %2394 = vmatpush2.msra.mxu0 0.0
    %2395 = vmatprep.subr.mxu0 0.0
    %2396 = vmatpush2.msra.mxu0 0.0
    %2397 = vmatprep.subr.mxu0 0.0
    %2398 = vmatpush2.msra.mxu0 0.0
    %2399 = vmatprep.subr.mxu0 0.0
    %2400 = vmatpush2.msra.mxu0 0.0
    %2401 = vmatprep.mubr.f32.mxu0 0.0
    %2402 = vmatmul.mubr.f32.gmra.mxu0 %v1151
    %v2403 = vpop.f32.mrf.mxu0
    %v2404 = vadd.f32 0.0, %v2403
    %v2405 = vpop.f32.mrf.mxu0
    %2406 = vdwg.mxu0
    %2407 = vmatprep.subr.mxu0 0.0
    %2408 = vmatpush1.msra.mxu0 0.0
    %2409 = vmatprep.subr.mxu0 0.0
    %2410 = vmatpush1.msra.mxu0 0.0
    %2411 = vmatprep.subr.mxu0 0.0
    %2412 = vmatpush1.msra.mxu0 0.0
    %2413 = vmatprep.subr.mxu0 0.0
    %2414 = vmatpush1.msra.mxu0 0.0
    %2415 = vmatprep.subr.mxu0 0.0
    %2416 = vmatpush1.msra.mxu0 0.0
    %2417 = vmatprep.subr.mxu0 0.0
    %2418 = vmatpush1.msra.mxu0 0.0
    %2419 = vmatprep.subr.mxu0 0.0
    %2420 = vmatpush1.msra.mxu0 0.0
    %2421 = vmatprep.subr.mxu0 0.0
    %2422 = vmatpush1.msra.mxu0 0.0
    %2423 = vmatprep.subr.mxu0 0.0
    %2424 = vmatpush1.msra.mxu0 0.0
    %2425 = vmatprep.subr.mxu0 0.0
    %2426 = vmatpush1.msra.mxu0 0.0
    %2427 = vmatprep.subr.mxu0 0.0
    %2428 = vmatpush1.msra.mxu0 0.0
    %2429 = vmatprep.subr.mxu0 0.0
    %2430 = vmatpush1.msra.mxu0 0.0
    %2431 = vmatprep.subr.mxu0 0.0
    %2432 = vmatpush1.msra.mxu0 %v2048
    %2433 = vmatprep.subr.mxu0 0.0
    %2434 = vmatpush1.msra.mxu0 %v2047
    %2435 = vmatprep.subr.mxu0 0.0
    %2436 = vmatpush1.msra.mxu0 %v2046
    %2437 = vmatprep.subr.mxu0 0.0
    %2438 = vmatpush1.msra.mxu0 %v2045
    %2439 = vmatprep.subr.mxu0 0.0
    %2440 = vmatpush2.msra.mxu0 0.0
    %2441 = vmatprep.subr.mxu0 0.0
    %2442 = vmatpush2.msra.mxu0 0.0
    %2443 = vmatprep.subr.mxu0 0.0
    %2444 = vmatpush2.msra.mxu0 0.0
    %2445 = vmatprep.subr.mxu0 0.0
    %2446 = vmatpush2.msra.mxu0 0.0
    %2447 = vmatprep.subr.mxu0 0.0
    %2448 = vmatpush2.msra.mxu0 0.0
    %2449 = vmatprep.subr.mxu0 0.0
    %2450 = vmatpush2.msra.mxu0 0.0
    %2451 = vmatprep.subr.mxu0 0.0
    %2452 = vmatpush2.msra.mxu0 0.0
    %2453 = vmatprep.subr.mxu0 0.0
    %2454 = vmatpush2.msra.mxu0 0.0
    %2455 = vmatprep.subr.mxu0 0.0
    %2456 = vmatpush2.msra.mxu0 0.0
    %2457 = vmatprep.subr.mxu0 0.0
    %2458 = vmatpush2.msra.mxu0 0.0
    %2459 = vmatprep.subr.mxu0 0.0
    %2460 = vmatpush2.msra.mxu0 0.0
    %2461 = vmatprep.subr.mxu0 0.0
    %2462 = vmatpush2.msra.mxu0 0.0
    %2463 = vmatprep.subr.mxu0 0.0
    %2464 = vmatpush2.msra.mxu0 0.0
    %2465 = vmatprep.subr.mxu0 0.0
    %2466 = vmatpush2.msra.mxu0 0.0
    %2467 = vmatprep.subr.mxu0 0.0
    %2468 = vmatpush2.msra.mxu0 0.0
    %2469 = vmatprep.subr.mxu0 0.0
    %2470 = vmatpush2.msra.mxu0 0.0
    %2471 = vmatprep.mubr.f32.mxu0 0.0
    %2472 = vmatmul.mubr.f32.gmra.mxu0 %v1151
    %v2473 = vpop.f32.mrf.mxu0
    %v2474 = vadd.f32 0.0, %v2473
    %v2475 = vpop.f32.mrf.mxu0
    %2476 = vdwg.mxu0
    %2477 = vmatprep.subr.mxu0 0.0
    %2478 = vmatpush1.msra.mxu0 0.0
    %2479 = vmatprep.subr.mxu0 0.0
    %2480 = vmatpush1.msra.mxu0 0.0
    %2481 = vmatprep.subr.mxu0 0.0
    %2482 = vmatpush1.msra.mxu0 0.0
    %2483 = vmatprep.subr.mxu0 0.0
    %2484 = vmatpush1.msra.mxu0 0.0
    %2485 = vmatprep.subr.mxu0 0.0
    %2486 = vmatpush1.msra.mxu0 0.0
    %2487 = vmatprep.subr.mxu0 0.0
    %2488 = vmatpush1.msra.mxu0 0.0
    %2489 = vmatprep.subr.mxu0 0.0
    %2490 = vmatpush1.msra.mxu0 0.0
    %2491 = vmatprep.subr.mxu0 0.0
    %2492 = vmatpush1.msra.mxu0 0.0
    %2493 = vmatprep.subr.mxu0 0.0
    %2494 = vmatpush1.msra.mxu0 0.0
    %2495 = vmatprep.subr.mxu0 0.0
    %2496 = vmatpush1.msra.mxu0 0.0
    %2497 = vmatprep.subr.mxu0 0.0
    %2498 = vmatpush1.msra.mxu0 0.0
    %2499 = vmatprep.subr.mxu0 0.0
    %2500 = vmatpush1.msra.mxu0 0.0
    %2501 = vmatprep.subr.mxu0 0.0
    %2502 = vmatpush1.msra.mxu0 %v2052
    %2503 = vmatprep.subr.mxu0 0.0
    %2504 = vmatpush1.msra.mxu0 %v2051
    %2505 = vmatprep.subr.mxu0 0.0
    %2506 = vmatpush1.msra.mxu0 %v2050
    %2507 = vmatprep.subr.mxu0 0.0
    %2508 = vmatpush1.msra.mxu0 %v2049
    %2509 = vmatprep.subr.mxu0 0.0
    %2510 = vmatpush2.msra.mxu0 0.0
    %2511 = vmatprep.subr.mxu0 0.0
    %2512 = vmatpush2.msra.mxu0 0.0
    %2513 = vmatprep.subr.mxu0 0.0
    %2514 = vmatpush2.msra.mxu0 0.0
    %2515 = vmatprep.subr.mxu0 0.0
    %2516 = vmatpush2.msra.mxu0 0.0
    %2517 = vmatprep.subr.mxu0 0.0
    %2518 = vmatpush2.msra.mxu0 0.0
    %2519 = vmatprep.subr.mxu0 0.0
    %2520 = vmatpush2.msra.mxu0 0.0
    %2521 = vmatprep.subr.mxu0 0.0
    %2522 = vmatpush2.msra.mxu0 0.0
    %2523 = vmatprep.subr.mxu0 0.0
    %2524 = vmatpush2.msra.mxu0 0.0
    %2525 = vmatprep.subr.mxu0 0.0
    %2526 = vmatpush2.msra.mxu0 0.0
    %2527 = vmatprep.subr.mxu0 0.0
    %2528 = vmatpush2.msra.mxu0 0.0
    %2529 = vmatprep.subr.mxu0 0.0
    %2530 = vmatpush2.msra.mxu0 0.0
    %2531 = vmatprep.subr.mxu0 0.0
    %2532 = vmatpush2.msra.mxu0 0.0
    %2533 = vmatprep.subr.mxu0 0.0
    %2534 = vmatpush2.msra.mxu0 0.0
    %2535 = vmatprep.subr.mxu0 0.0
    %2536 = vmatpush2.msra.mxu0 0.0
    %2537 = vmatprep.subr.mxu0 0.0
    %2538 = vmatpush2.msra.mxu0 0.0
    %2539 = vmatprep.subr.mxu0 0.0
    %2540 = vmatpush2.msra.mxu0 0.0
    %2541 = vmatprep.mubr.f32.mxu0 0.0
    %2542 = vmatmul.mubr.f32.gmra.mxu0 %v1151
    %v2543 = vpop.f32.mrf.mxu0
    %v2544 = vadd.f32 0.0, %v2543
    %v2545 = vpop.f32.mrf.mxu0
    %2546 = vdwg.mxu0
    %2547 = vmatprep.subr.mxu0 0.0
    %2548 = vmatpush1.msra.mxu0 0.0
    %2549 = vmatprep.subr.mxu0 0.0
    %2550 = vmatpush1.msra.mxu0 0.0
    %2551 = vmatprep.subr.mxu0 0.0
    %2552 = vmatpush1.msra.mxu0 0.0
    %2553 = vmatprep.subr.mxu0 0.0
    %2554 = vmatpush1.msra.mxu0 0.0
    %2555 = vmatprep.subr.mxu0 0.0
    %2556 = vmatpush1.msra.mxu0 0.0
    %2557 = vmatprep.subr.mxu0 0.0
    %2558 = vmatpush1.msra.mxu0 0.0
    %2559 = vmatprep.subr.mxu0 0.0
    %2560 = vmatpush1.msra.mxu0 0.0
    %2561 = vmatprep.subr.mxu0 0.0
    %2562 = vmatpush1.msra.mxu0 0.0
    %2563 = vmatprep.subr.mxu0 0.0
    %2564 = vmatpush1.msra.mxu0 0.0
    %2565 = vmatprep.subr.mxu0 0.0
    %2566 = vmatpush1.msra.mxu0 0.0
    %2567 = vmatprep.subr.mxu0 0.0
    %2568 = vmatpush1.msra.mxu0 0.0
    %2569 = vmatprep.subr.mxu0 0.0
    %2570 = vmatpush1.msra.mxu0 0.0
    %2571 = vmatprep.subr.mxu0 0.0
    %2572 = vmatpush1.msra.mxu0 %v2056
    %2573 = vmatprep.subr.mxu0 0.0
    %2574 = vmatpush1.msra.mxu0 %v2055
    %2575 = vmatprep.subr.mxu0 0.0
    %2576 = vmatpush1.msra.mxu0 %v2054
    %2577 = vmatprep.subr.mxu0 0.0
    %2578 = vmatpush1.msra.mxu0 %v2053
    %2579 = vmatprep.subr.mxu0 0.0
    %2580 = vmatpush2.msra.mxu0 0.0
    %2581 = vmatprep.subr.mxu0 0.0
    %2582 = vmatpush2.msra.mxu0 0.0
    %2583 = vmatprep.subr.mxu0 0.0
    %2584 = vmatpush2.msra.mxu0 0.0
    %2585 = vmatprep.subr.mxu0 0.0
    %2586 = vmatpush2.msra.mxu0 0.0
    %2587 = vmatprep.subr.mxu0 0.0
    %2588 = vmatpush2.msra.mxu0 0.0
    %2589 = vmatprep.subr.mxu0 0.0
    %2590 = vmatpush2.msra.mxu0 0.0
    %2591 = vmatprep.subr.mxu0 0.0
    %2592 = vmatpush2.msra.mxu0 0.0
    %2593 = vmatprep.subr.mxu0 0.0
    %2594 = vmatpush2.msra.mxu0 0.0
    %2595 = vmatprep.subr.mxu0 0.0
    %2596 = vmatpush2.msra.mxu0 0.0
    %2597 = vmatprep.subr.mxu0 0.0
    %2598 = vmatpush2.msra.mxu0 0.0
    %2599 = vmatprep.subr.mxu0 0.0
    %2600 = vmatpush2.msra.mxu0 0.0
    %2601 = vmatprep.subr.mxu0 0.0
    %2602 = vmatpush2.msra.mxu0 0.0
    %2603 = vmatprep.subr.mxu0 0.0
    %2604 = vmatpush2.msra.mxu0 0.0
    %2605 = vmatprep.subr.mxu0 0.0
    %2606 = vmatpush2.msra.mxu0 0.0
    %2607 = vmatprep.subr.mxu0 0.0
    %2608 = vmatpush2.msra.mxu0 0.0
    %2609 = vmatprep.subr.mxu0 0.0
    %2610 = vmatpush2.msra.mxu0 0.0
    %2611 = vmatprep.mubr.f32.mxu0 0.0
    %2612 = vmatmul.mubr.f32.gmra.mxu0 %v1151
    %v2613 = vpop.f32.mrf.mxu0
    %v2614 = vadd.f32 0.0, %v2613
    %v2615 = vpop.f32.mrf.mxu0
    %2616 = vdwg.mxu0
    %vm2617 = vcmask 64512
    %v2619 = vsel %vm2617, %v937, 0
    %v2622 = vsel %vm2617, %v1532, 0
    %2624 = vmatprep.subr.mxu0 0.0
    %2625 = vmatpush1.xpose.msra.mxu0 0.0
    %2626 = vmatprep.subr.mxu0 0.0
    %2627 = vmatpush1.xpose.msra.mxu0 0.0
    %2628 = vmatprep.subr.mxu0 0.0
    %2629 = vmatpush1.xpose.msra.mxu0 0.0
    %2630 = vmatprep.subr.mxu0 0.0
    %2631 = vmatpush1.xpose.msra.mxu0 0.0
    %2632 = vmatprep.subr.mxu0 0.0
    %2633 = vmatpush1.xpose.msra.mxu0 0.0
    %2634 = vmatprep.subr.mxu0 0.0
    %2635 = vmatpush1.xpose.msra.mxu0 0.0
    %2636 = vmatprep.subr.mxu0 0.0
    %2637 = vmatpush1.xpose.msra.mxu0 0.0
    %2638 = vmatprep.subr.mxu0 0.0
    %2639 = vmatpush1.xpose.msra.mxu0 0.0
    %2640 = vmatprep.subr.mxu0 0.0
    %2641 = vmatpush1.xpose.msra.mxu0 0.0
    %2642 = vmatprep.subr.mxu0 0.0
    %2643 = vmatpush1.xpose.msra.mxu0 0.0
    %2644 = vmatprep.subr.mxu0 0.0
    %2645 = vmatpush1.xpose.msra.mxu0 0.0
    %2646 = vmatprep.subr.mxu0 0.0
    %2647 = vmatpush1.xpose.msra.mxu0 0.0
    %2648 = vmatprep.subr.mxu0 0.0
    %2649 = vmatpush1.xpose.msra.mxu0 0.0
    %2650 = vmatprep.subr.mxu0 0.0
    %2651 = vmatpush1.xpose.msra.mxu0 0.0
    %2652 = vmatprep.subr.mxu0 0.0
    %2653 = vmatpush1.xpose.msra.mxu0 0.0
    %2654 = vmatprep.subr.mxu0 0.0
    %2655 = vmatpush1.xpose.msra.mxu0 %v2622
    %2656 = vmatprep.subr.mxu0 0.0
    %2657 = vmatpush2.xpose.msra.mxu0 0.0
    %2658 = vmatprep.subr.mxu0 0.0
    %2659 = vmatpush2.xpose.msra.mxu0 0.0
    %2660 = vmatprep.subr.mxu0 0.0
    %2661 = vmatpush2.xpose.msra.mxu0 0.0
    %2662 = vmatprep.subr.mxu0 0.0
    %2663 = vmatpush2.xpose.msra.mxu0 0.0
    %2664 = vmatprep.subr.mxu0 0.0
    %2665 = vmatpush2.xpose.msra.mxu0 0.0
    %2666 = vmatprep.subr.mxu0 0.0
    %2667 = vmatpush2.xpose.msra.mxu0 0.0
    %2668 = vmatprep.subr.mxu0 0.0
    %2669 = vmatpush2.xpose.msra.mxu0 0.0
    %2670 = vmatprep.subr.mxu0 0.0
    %2671 = vmatpush2.xpose.msra.mxu0 0.0
    %2672 = vmatprep.subr.mxu0 0.0
    %2673 = vmatpush2.xpose.msra.mxu0 0.0
    %2674 = vmatprep.subr.mxu0 0.0
    %2675 = vmatpush2.xpose.msra.mxu0 0.0
    %2676 = vmatprep.subr.mxu0 0.0
    %2677 = vmatpush2.xpose.msra.mxu0 0.0
    %2678 = vmatprep.subr.mxu0 0.0
    %2679 = vmatpush2.xpose.msra.mxu0 0.0
    %2680 = vmatprep.subr.mxu0 0.0
    %2681 = vmatpush2.xpose.msra.mxu0 0.0
    %2682 = vmatprep.subr.mxu0 0.0
    %2683 = vmatpush2.xpose.msra.mxu0 0.0
    %2684 = vmatprep.subr.mxu0 0.0
    %2685 = vmatpush2.xpose.msra.mxu0 0.0
    %2686 = vmatprep.subr.mxu0 0.0
    %2687 = vmatpush2.xpose.msra.mxu0 0.0
    %2688 = vmatprep.mubr.f32.mxu0 0.0
    %2689 = vmatmul.mubr.f32.gmra.mxu0 %v2619
    %v2690 = vpop.f32.mrf.mxu0
    %v2691 = vadd.f32 0.0, %v2690
    %v2692 = vpop.f32.mrf.mxu0
    %2693 = vdwg.mxu0
    %v2695 = vsel %vm2617, %v1007, 0
    %v2698 = vsel %vm2617, %v1602, 0
    %2700 = vmatprep.subr.mxu0 0.0
    %2701 = vmatpush1.xpose.msra.mxu0 0.0
    %2702 = vmatprep.subr.mxu0 0.0
    %2703 = vmatpush1.xpose.msra.mxu0 0.0
    %2704 = vmatprep.subr.mxu0 0.0
    %2705 = vmatpush1.xpose.msra.mxu0 0.0
    %2706 = vmatprep.subr.mxu0 0.0
    %2707 = vmatpush1.xpose.msra.mxu0 0.0
    %2708 = vmatprep.subr.mxu0 0.0
    %2709 = vmatpush1.xpose.msra.mxu0 0.0
    %2710 = vmatprep.subr.mxu0 0.0
    %2711 = vmatpush1.xpose.msra.mxu0 0.0
    %2712 = vmatprep.subr.mxu0 0.0
    %2713 = vmatpush1.xpose.msra.mxu0 0.0
    %2714 = vmatprep.subr.mxu0 0.0
    %2715 = vmatpush1.xpose.msra.mxu0 0.0
    %2716 = vmatprep.subr.mxu0 0.0
    %2717 = vmatpush1.xpose.msra.mxu0 0.0
    %2718 = vmatprep.subr.mxu0 0.0
    %2719 = vmatpush1.xpose.msra.mxu0 0.0
    %2720 = vmatprep.subr.mxu0 0.0
    %2721 = vmatpush1.xpose.msra.mxu0 0.0
    %2722 = vmatprep.subr.mxu0 0.0
    %2723 = vmatpush1.xpose.msra.mxu0 0.0
    %2724 = vmatprep.subr.mxu0 0.0
    %2725 = vmatpush1.xpose.msra.mxu0 0.0
    %2726 = vmatprep.subr.mxu0 0.0
    %2727 = vmatpush1.xpose.msra.mxu0 0.0
    %2728 = vmatprep.subr.mxu0 0.0
    %2729 = vmatpush1.xpose.msra.mxu0 0.0
    %2730 = vmatprep.subr.mxu0 0.0
    %2731 = vmatpush1.xpose.msra.mxu0 %v2698
    %2732 = vmatprep.subr.mxu0 0.0
    %2733 = vmatpush2.xpose.msra.mxu0 0.0
    %2734 = vmatprep.subr.mxu0 0.0
    %2735 = vmatpush2.xpose.msra.mxu0 0.0
    %2736 = vmatprep.subr.mxu0 0.0
    %2737 = vmatpush2.xpose.msra.mxu0 0.0
    %2738 = vmatprep.subr.mxu0 0.0
    %2739 = vmatpush2.xpose.msra.mxu0 0.0
    %2740 = vmatprep.subr.mxu0 0.0
    %2741 = vmatpush2.xpose.msra.mxu0 0.0
    %2742 = vmatprep.subr.mxu0 0.0
    %2743 = vmatpush2.xpose.msra.mxu0 0.0
    %2744 = vmatprep.subr.mxu0 0.0
    %2745 = vmatpush2.xpose.msra.mxu0 0.0
    %2746 = vmatprep.subr.mxu0 0.0
    %2747 = vmatpush2.xpose.msra.mxu0 0.0
    %2748 = vmatprep.subr.mxu0 0.0
    %2749 = vmatpush2.xpose.msra.mxu0 0.0
    %2750 = vmatprep.subr.mxu0 0.0
    %2751 = vmatpush2.xpose.msra.mxu0 0.0
    %2752 = vmatprep.subr.mxu0 0.0
    %2753 = vmatpush2.xpose.msra.mxu0 0.0
    %2754 = vmatprep.subr.mxu0 0.0
    %2755 = vmatpush2.xpose.msra.mxu0 0.0
    %2756 = vmatprep.subr.mxu0 0.0
    %2757 = vmatpush2.xpose.msra.mxu0 0.0
    %2758 = vmatprep.subr.mxu0 0.0
    %2759 = vmatpush2.xpose.msra.mxu0 0.0
    %2760 = vmatprep.subr.mxu0 0.0
    %2761 = vmatpush2.xpose.msra.mxu0 0.0
    %2762 = vmatprep.subr.mxu0 0.0
    %2763 = vmatpush2.xpose.msra.mxu0 0.0
    %2764 = vmatprep.mubr.f32.mxu0 0.0
    %2765 = vmatmul.mubr.f32.gmra.mxu0 %v2695
    %v2766 = vpop.f32.mrf.mxu0
    %v2767 = vadd.f32 0.0, %v2766
    %v2768 = vpop.f32.mrf.mxu0
    %2769 = vdwg.mxu0
    %v2771 = vsel %vm2617, %v1077, 0
    %v2774 = vsel %vm2617, %v1672, 0
    %2776 = vmatprep.subr.mxu0 0.0
    %2777 = vmatpush1.xpose.msra.mxu0 0.0
    %2778 = vmatprep.subr.mxu0 0.0
    %2779 = vmatpush1.xpose.msra.mxu0 0.0
    %2780 = vmatprep.subr.mxu0 0.0
    %2781 = vmatpush1.xpose.msra.mxu0 0.0
    %2782 = vmatprep.subr.mxu0 0.0
    %2783 = vmatpush1.xpose.msra.mxu0 0.0
    %2784 = vmatprep.subr.mxu0 0.0
    %2785 = vmatpush1.xpose.msra.mxu0 0.0
    %2786 = vmatprep.subr.mxu0 0.0
    %2787 = vmatpush1.xpose.msra.mxu0 0.0
    %2788 = vmatprep.subr.mxu0 0.0
    %2789 = vmatpush1.xpose.msra.mxu0 0.0
    %2790 = vmatprep.subr.mxu0 0.0
    %2791 = vmatpush1.xpose.msra.mxu0 0.0
    %2792 = vmatprep.subr.mxu0 0.0
    %2793 = vmatpush1.xpose.msra.mxu0 0.0
    %2794 = vmatprep.subr.mxu0 0.0
    %2795 = vmatpush1.xpose.msra.mxu0 0.0
    %2796 = vmatprep.subr.mxu0 0.0
    %2797 = vmatpush1.xpose.msra.mxu0 0.0
    %2798 = vmatprep.subr.mxu0 0.0
    %2799 = vmatpush1.xpose.msra.mxu0 0.0
    %2800 = vmatprep.subr.mxu0 0.0
    %2801 = vmatpush1.xpose.msra.mxu0 0.0
    %2802 = vmatprep.subr.mxu0 0.0
    %2803 = vmatpush1.xpose.msra.mxu0 0.0
    %2804 = vmatprep.subr.mxu0 0.0
    %2805 = vmatpush1.xpose.msra.mxu0 0.0
    %2806 = vmatprep.subr.mxu0 0.0
    %2807 = vmatpush1.xpose.msra.mxu0 %v2774
    %2808 = vmatprep.subr.mxu0 0.0
    %2809 = vmatpush2.xpose.msra.mxu0 0.0
    %2810 = vmatprep.subr.mxu0 0.0
    %2811 = vmatpush2.xpose.msra.mxu0 0.0
    %2812 = vmatprep.subr.mxu0 0.0
    %2813 = vmatpush2.xpose.msra.mxu0 0.0
    %2814 = vmatprep.subr.mxu0 0.0
    %2815 = vmatpush2.xpose.msra.mxu0 0.0
    %2816 = vmatprep.subr.mxu0 0.0
    %2817 = vmatpush2.xpose.msra.mxu0 0.0
    %2818 = vmatprep.subr.mxu0 0.0
    %2819 = vmatpush2.xpose.msra.mxu0 0.0
    %2820 = vmatprep.subr.mxu0 0.0
    %2821 = vmatpush2.xpose.msra.mxu0 0.0
    %2822 = vmatprep.subr.mxu0 0.0
    %2823 = vmatpush2.xpose.msra.mxu0 0.0
    %2824 = vmatprep.subr.mxu0 0.0
    %2825 = vmatpush2.xpose.msra.mxu0 0.0
    %2826 = vmatprep.subr.mxu0 0.0
    %2827 = vmatpush2.xpose.msra.mxu0 0.0
    %2828 = vmatprep.subr.mxu0 0.0
    %2829 = vmatpush2.xpose.msra.mxu0 0.0
    %2830 = vmatprep.subr.mxu0 0.0
    %2831 = vmatpush2.xpose.msra.mxu0 0.0
    %2832 = vmatprep.subr.mxu0 0.0
    %2833 = vmatpush2.xpose.msra.mxu0 0.0
    %2834 = vmatprep.subr.mxu0 0.0
    %2835 = vmatpush2.xpose.msra.mxu0 0.0
    %2836 = vmatprep.subr.mxu0 0.0
    %2837 = vmatpush2.xpose.msra.mxu0 0.0
    %2838 = vmatprep.subr.mxu0 0.0
    %2839 = vmatpush2.xpose.msra.mxu0 0.0
    %2840 = vmatprep.mubr.f32.mxu0 0.0
    %2841 = vmatmul.mubr.f32.gmra.mxu0 %v2771
    %v2842 = vpop.f32.mrf.mxu0
    %v2843 = vadd.f32 0.0, %v2842
    %v2844 = vpop.f32.mrf.mxu0
    %2845 = vdwg.mxu0
    %v2847 = vsel %vm2617, %v1147, 0
    %v2850 = vsel %vm2617, %v1742, 0
    %2852 = vmatprep.subr.mxu0 0.0
    %2853 = vmatpush1.xpose.msra.mxu0 0.0
    %2854 = vmatprep.subr.mxu0 0.0
    %2855 = vmatpush1.xpose.msra.mxu0 0.0
    %2856 = vmatprep.subr.mxu0 0.0
    %2857 = vmatpush1.xpose.msra.mxu0 0.0
    %2858 = vmatprep.subr.mxu0 0.0
    %2859 = vmatpush1.xpose.msra.mxu0 0.0
    %2860 = vmatprep.subr.mxu0 0.0
    %2861 = vmatpush1.xpose.msra.mxu0 0.0
    %2862 = vmatprep.subr.mxu0 0.0
    %2863 = vmatpush1.xpose.msra.mxu0 0.0
    %2864 = vmatprep.subr.mxu0 0.0
    %2865 = vmatpush1.xpose.msra.mxu0 0.0
    %2866 = vmatprep.subr.mxu0 0.0
    %2867 = vmatpush1.xpose.msra.mxu0 0.0
    %2868 = vmatprep.subr.mxu0 0.0
    %2869 = vmatpush1.xpose.msra.mxu0 0.0
    %2870 = vmatprep.subr.mxu0 0.0
    %2871 = vmatpush1.xpose.msra.mxu0 0.0
    %2872 = vmatprep.subr.mxu0 0.0
    %2873 = vmatpush1.xpose.msra.mxu0 0.0
    %2874 = vmatprep.subr.mxu0 0.0
    %2875 = vmatpush1.xpose.msra.mxu0 0.0
    %2876 = vmatprep.subr.mxu0 0.0
    %2877 = vmatpush1.xpose.msra.mxu0 0.0
    %2878 = vmatprep.subr.mxu0 0.0
    %2879 = vmatpush1.xpose.msra.mxu0 0.0
    %2880 = vmatprep.subr.mxu0 0.0
    %2881 = vmatpush1.xpose.msra.mxu0 0.0
    %2882 = vmatprep.subr.mxu0 0.0
    %2883 = vmatpush1.xpose.msra.mxu0 %v2850
    %2884 = vmatprep.subr.mxu0 0.0
    %2885 = vmatpush2.xpose.msra.mxu0 0.0
    %2886 = vmatprep.subr.mxu0 0.0
    %2887 = vmatpush2.xpose.msra.mxu0 0.0
    %2888 = vmatprep.subr.mxu0 0.0
    %2889 = vmatpush2.xpose.msra.mxu0 0.0
    %2890 = vmatprep.subr.mxu0 0.0
    %2891 = vmatpush2.xpose.msra.mxu0 0.0
    %2892 = vmatprep.subr.mxu0 0.0
    %2893 = vmatpush2.xpose.msra.mxu0 0.0
    %2894 = vmatprep.subr.mxu0 0.0
    %2895 = vmatpush2.xpose.msra.mxu0 0.0
    %2896 = vmatprep.subr.mxu0 0.0
    %2897 = vmatpush2.xpose.msra.mxu0 0.0
    %2898 = vmatprep.subr.mxu0 0.0
    %2899 = vmatpush2.xpose.msra.mxu0 0.0
    %2900 = vmatprep.subr.mxu0 0.0
    %2901 = vmatpush2.xpose.msra.mxu0 0.0
    %2902 = vmatprep.subr.mxu0 0.0
    %2903 = vmatpush2.xpose.msra.mxu0 0.0
    %2904 = vmatprep.subr.mxu0 0.0
    %2905 = vmatpush2.xpose.msra.mxu0 0.0
    %2906 = vmatprep.subr.mxu0 0.0
    %2907 = vmatpush2.xpose.msra.mxu0 0.0
    %2908 = vmatprep.subr.mxu0 0.0
    %2909 = vmatpush2.xpose.msra.mxu0 0.0
    %2910 = vmatprep.subr.mxu0 0.0
    %2911 = vmatpush2.xpose.msra.mxu0 0.0
    %2912 = vmatprep.subr.mxu0 0.0
    %2913 = vmatpush2.xpose.msra.mxu0 0.0
    %2914 = vmatprep.subr.mxu0 0.0
    %2915 = vmatpush2.xpose.msra.mxu0 0.0
    %2916 = vmatprep.mubr.f32.mxu0 0.0
    %2917 = vmatmul.mubr.f32.gmra.mxu0 %v2847
    %v2918 = vpop.f32.mrf.mxu0
    %v2919 = vadd.f32 0.0, %v2918
    %v2920 = vpop.f32.mrf.mxu0
    %2921 = vdwg.mxu0
    %v2923 = vsel %vm2617, %v1220, 0
    %v2926 = vsel %vm2617, %v1812, 0
    %2928 = vmatprep.subr.mxu0 0.0
    %2929 = vmatpush1.xpose.msra.mxu0 0.0
    %2930 = vmatprep.subr.mxu0 0.0
    %2931 = vmatpush1.xpose.msra.mxu0 0.0
    %2932 = vmatprep.subr.mxu0 0.0
    %2933 = vmatpush1.xpose.msra.mxu0 0.0
    %2934 = vmatprep.subr.mxu0 0.0
    %2935 = vmatpush1.xpose.msra.mxu0 0.0
    %2936 = vmatprep.subr.mxu0 0.0
    %2937 = vmatpush1.xpose.msra.mxu0 0.0
    %2938 = vmatprep.subr.mxu0 0.0
    %2939 = vmatpush1.xpose.msra.mxu0 0.0
    %2940 = vmatprep.subr.mxu0 0.0
    %2941 = vmatpush1.xpose.msra.mxu0 0.0
    %2942 = vmatprep.subr.mxu0 0.0
    %2943 = vmatpush1.xpose.msra.mxu0 0.0
    %2944 = vmatprep.subr.mxu0 0.0
    %2945 = vmatpush1.xpose.msra.mxu0 0.0
    %2946 = vmatprep.subr.mxu0 0.0
    %2947 = vmatpush1.xpose.msra.mxu0 0.0
    %2948 = vmatprep.subr.mxu0 0.0
    %2949 = vmatpush1.xpose.msra.mxu0 0.0
    %2950 = vmatprep.subr.mxu0 0.0
    %2951 = vmatpush1.xpose.msra.mxu0 0.0
    %2952 = vmatprep.subr.mxu0 0.0
    %2953 = vmatpush1.xpose.msra.mxu0 0.0
    %2954 = vmatprep.subr.mxu0 0.0
    %2955 = vmatpush1.xpose.msra.mxu0 0.0
    %2956 = vmatprep.subr.mxu0 0.0
    %2957 = vmatpush1.xpose.msra.mxu0 0.0
    %2958 = vmatprep.subr.mxu0 0.0
    %2959 = vmatpush1.xpose.msra.mxu0 %v2926
    %2960 = vmatprep.subr.mxu0 0.0
    %2961 = vmatpush2.xpose.msra.mxu0 0.0
    %2962 = vmatprep.subr.mxu0 0.0
    %2963 = vmatpush2.xpose.msra.mxu0 0.0
    %2964 = vmatprep.subr.mxu0 0.0
    %2965 = vmatpush2.xpose.msra.mxu0 0.0
    %2966 = vmatprep.subr.mxu0 0.0
    %2967 = vmatpush2.xpose.msra.mxu0 0.0
    %2968 = vmatprep.subr.mxu0 0.0
    %2969 = vmatpush2.xpose.msra.mxu0 0.0
    %2970 = vmatprep.subr.mxu0 0.0
    %2971 = vmatpush2.xpose.msra.mxu0 0.0
    %2972 = vmatprep.subr.mxu0 0.0
    %2973 = vmatpush2.xpose.msra.mxu0 0.0
    %2974 = vmatprep.subr.mxu0 0.0
    %2975 = vmatpush2.xpose.msra.mxu0 0.0
    %2976 = vmatprep.subr.mxu0 0.0
    %2977 = vmatpush2.xpose.msra.mxu0 0.0
    %2978 = vmatprep.subr.mxu0 0.0
    %2979 = vmatpush2.xpose.msra.mxu0 0.0
    %2980 = vmatprep.subr.mxu0 0.0
    %2981 = vmatpush2.xpose.msra.mxu0 0.0
    %2982 = vmatprep.subr.mxu0 0.0
    %2983 = vmatpush2.xpose.msra.mxu0 0.0
    %2984 = vmatprep.subr.mxu0 0.0
    %2985 = vmatpush2.xpose.msra.mxu0 0.0
    %2986 = vmatprep.subr.mxu0 0.0
    %2987 = vmatpush2.xpose.msra.mxu0 0.0
    %2988 = vmatprep.subr.mxu0 0.0
    %2989 = vmatpush2.xpose.msra.mxu0 0.0
    %2990 = vmatprep.subr.mxu0 0.0
    %2991 = vmatpush2.xpose.msra.mxu0 0.0
    %2992 = vmatprep.mubr.f32.mxu0 0.0
    %2993 = vmatmul.mubr.f32.gmra.mxu0 %v2923
    %v2994 = vpop.f32.mrf.mxu0
    %v2995 = vadd.f32 0.0, %v2994
    %v2996 = vpop.f32.mrf.mxu0
    %2997 = vdwg.mxu0
    %v2999 = vsel %vm2617, %v1290, 0
    %v3002 = vsel %vm2617, %v1882, 0
    %3004 = vmatprep.subr.mxu0 0.0
    %3005 = vmatpush1.xpose.msra.mxu0 0.0
    %3006 = vmatprep.subr.mxu0 0.0
    %3007 = vmatpush1.xpose.msra.mxu0 0.0
    %3008 = vmatprep.subr.mxu0 0.0
    %3009 = vmatpush1.xpose.msra.mxu0 0.0
    %3010 = vmatprep.subr.mxu0 0.0
    %3011 = vmatpush1.xpose.msra.mxu0 0.0
    %3012 = vmatprep.subr.mxu0 0.0
    %3013 = vmatpush1.xpose.msra.mxu0 0.0
    %3014 = vmatprep.subr.mxu0 0.0
    %3015 = vmatpush1.xpose.msra.mxu0 0.0
    %3016 = vmatprep.subr.mxu0 0.0
    %3017 = vmatpush1.xpose.msra.mxu0 0.0
    %3018 = vmatprep.subr.mxu0 0.0
    %3019 = vmatpush1.xpose.msra.mxu0 0.0
    %3020 = vmatprep.subr.mxu0 0.0
    %3021 = vmatpush1.xpose.msra.mxu0 0.0
    %3022 = vmatprep.subr.mxu0 0.0
    %3023 = vmatpush1.xpose.msra.mxu0 0.0
    %3024 = vmatprep.subr.mxu0 0.0
    %3025 = vmatpush1.xpose.msra.mxu0 0.0
    %3026 = vmatprep.subr.mxu0 0.0
    %3027 = vmatpush1.xpose.msra.mxu0 0.0
    %3028 = vmatprep.subr.mxu0 0.0
    %3029 = vmatpush1.xpose.msra.mxu0 0.0
    %3030 = vmatprep.subr.mxu0 0.0
    %3031 = vmatpush1.xpose.msra.mxu0 0.0
    %3032 = vmatprep.subr.mxu0 0.0
    %3033 = vmatpush1.xpose.msra.mxu0 0.0
    %3034 = vmatprep.subr.mxu0 0.0
    %3035 = vmatpush1.xpose.msra.mxu0 %v3002
    %3036 = vmatprep.subr.mxu0 0.0
    %3037 = vmatpush2.xpose.msra.mxu0 0.0
    %3038 = vmatprep.subr.mxu0 0.0
    %3039 = vmatpush2.xpose.msra.mxu0 0.0
    %3040 = vmatprep.subr.mxu0 0.0
    %3041 = vmatpush2.xpose.msra.mxu0 0.0
    %3042 = vmatprep.subr.mxu0 0.0
    %3043 = vmatpush2.xpose.msra.mxu0 0.0
    %3044 = vmatprep.subr.mxu0 0.0
    %3045 = vmatpush2.xpose.msra.mxu0 0.0
    %3046 = vmatprep.subr.mxu0 0.0
    %3047 = vmatpush2.xpose.msra.mxu0 0.0
    %3048 = vmatprep.subr.mxu0 0.0
    %3049 = vmatpush2.xpose.msra.mxu0 0.0
    %3050 = vmatprep.subr.mxu0 0.0
    %3051 = vmatpush2.xpose.msra.mxu0 0.0
    %3052 = vmatprep.subr.mxu0 0.0
    %3053 = vmatpush2.xpose.msra.mxu0 0.0
    %3054 = vmatprep.subr.mxu0 0.0
    %3055 = vmatpush2.xpose.msra.mxu0 0.0
    %3056 = vmatprep.subr.mxu0 0.0
    %3057 = vmatpush2.xpose.msra.mxu0 0.0
    %3058 = vmatprep.subr.mxu0 0.0
    %3059 = vmatpush2.xpose.msra.mxu0 0.0
    %3060 = vmatprep.subr.mxu0 0.0
    %3061 = vmatpush2.xpose.msra.mxu0 0.0
    %3062 = vmatprep.subr.mxu0 0.0
    %3063 = vmatpush2.xpose.msra.mxu0 0.0
    %3064 = vmatprep.subr.mxu0 0.0
    %3065 = vmatpush2.xpose.msra.mxu0 0.0
    %3066 = vmatprep.subr.mxu0 0.0
    %3067 = vmatpush2.xpose.msra.mxu0 0.0
    %3068 = vmatprep.mubr.f32.mxu0 0.0
    %3069 = vmatmul.mubr.f32.gmra.mxu0 %v2999
    %v3070 = vpop.f32.mrf.mxu0
    %v3071 = vadd.f32 0.0, %v3070
    %v3072 = vpop.f32.mrf.mxu0
    %3073 = vdwg.mxu0
    %v3075 = vsel %vm2617, %v1360, 0
    %v3078 = vsel %vm2617, %v1952, 0
    %3080 = vmatprep.subr.mxu0 0.0
    %3081 = vmatpush1.xpose.msra.mxu0 0.0
    %3082 = vmatprep.subr.mxu0 0.0
    %3083 = vmatpush1.xpose.msra.mxu0 0.0
    %3084 = vmatprep.subr.mxu0 0.0
    %3085 = vmatpush1.xpose.msra.mxu0 0.0
    %3086 = vmatprep.subr.mxu0 0.0
    %3087 = vmatpush1.xpose.msra.mxu0 0.0
    %3088 = vmatprep.subr.mxu0 0.0
    %3089 = vmatpush1.xpose.msra.mxu0 0.0
    %3090 = vmatprep.subr.mxu0 0.0
    %3091 = vmatpush1.xpose.msra.mxu0 0.0
    %3092 = vmatprep.subr.mxu0 0.0
    %3093 = vmatpush1.xpose.msra.mxu0 0.0
    %3094 = vmatprep.subr.mxu0 0.0
    %3095 = vmatpush1.xpose.msra.mxu0 0.0
    %3096 = vmatprep.subr.mxu0 0.0
    %3097 = vmatpush1.xpose.msra.mxu0 0.0
    %3098 = vmatprep.subr.mxu0 0.0
    %3099 = vmatpush1.xpose.msra.mxu0 0.0
    %3100 = vmatprep.subr.mxu0 0.0
    %3101 = vmatpush1.xpose.msra.mxu0 0.0
    %3102 = vmatprep.subr.mxu0 0.0
    %3103 = vmatpush1.xpose.msra.mxu0 0.0
    %3104 = vmatprep.subr.mxu0 0.0
    %3105 = vmatpush1.xpose.msra.mxu0 0.0
    %3106 = vmatprep.subr.mxu0 0.0
    %3107 = vmatpush1.xpose.msra.mxu0 0.0
    %3108 = vmatprep.subr.mxu0 0.0
    %3109 = vmatpush1.xpose.msra.mxu0 0.0
    %3110 = vmatprep.subr.mxu0 0.0
    %3111 = vmatpush1.xpose.msra.mxu0 %v3078
    %3112 = vmatprep.subr.mxu0 0.0
    %3113 = vmatpush2.xpose.msra.mxu0 0.0
    %3114 = vmatprep.subr.mxu0 0.0
    %3115 = vmatpush2.xpose.msra.mxu0 0.0
    %3116 = vmatprep.subr.mxu0 0.0
    %3117 = vmatpush2.xpose.msra.mxu0 0.0
    %3118 = vmatprep.subr.mxu0 0.0
    %3119 = vmatpush2.xpose.msra.mxu0 0.0
    %3120 = vmatprep.subr.mxu0 0.0
    %3121 = vmatpush2.xpose.msra.mxu0 0.0
    %3122 = vmatprep.subr.mxu0 0.0
    %3123 = vmatpush2.xpose.msra.mxu0 0.0
    %3124 = vmatprep.subr.mxu0 0.0
    %3125 = vmatpush2.xpose.msra.mxu0 0.0
    %3126 = vmatprep.subr.mxu0 0.0
    %3127 = vmatpush2.xpose.msra.mxu0 0.0
    %3128 = vmatprep.subr.mxu0 0.0
    %3129 = vmatpush2.xpose.msra.mxu0 0.0
    %3130 = vmatprep.subr.mxu0 0.0
    %3131 = vmatpush2.xpose.msra.mxu0 0.0
    %3132 = vmatprep.subr.mxu0 0.0
    %3133 = vmatpush2.xpose.msra.mxu0 0.0
    %3134 = vmatprep.subr.mxu0 0.0
    %3135 = vmatpush2.xpose.msra.mxu0 0.0
    %3136 = vmatprep.subr.mxu0 0.0
    %3137 = vmatpush2.xpose.msra.mxu0 0.0
    %3138 = vmatprep.subr.mxu0 0.0
    %3139 = vmatpush2.xpose.msra.mxu0 0.0
    %3140 = vmatprep.subr.mxu0 0.0
    %3141 = vmatpush2.xpose.msra.mxu0 0.0
    %3142 = vmatprep.subr.mxu0 0.0
    %3143 = vmatpush2.xpose.msra.mxu0 0.0
    %3144 = vmatprep.mubr.f32.mxu0 0.0
    %3145 = vmatmul.mubr.f32.gmra.mxu0 %v3075
    %v3146 = vpop.f32.mrf.mxu0
    %v3147 = vadd.f32 0.0, %v3146
    %v3148 = vpop.f32.mrf.mxu0
    %3149 = vdwg.mxu0
    %v3151 = vsel %vm2617, %v1430, 0
    %v3154 = vsel %vm2617, %v2022, 0
    %3156 = vmatprep.subr.mxu0 0.0
    %3157 = vmatpush1.xpose.msra.mxu0 0.0
    %3158 = vmatprep.subr.mxu0 0.0
    %3159 = vmatpush1.xpose.msra.mxu0 0.0
    %3160 = vmatprep.subr.mxu0 0.0
    %3161 = vmatpush1.xpose.msra.mxu0 0.0
    %3162 = vmatprep.subr.mxu0 0.0
    %3163 = vmatpush1.xpose.msra.mxu0 0.0
    %3164 = vmatprep.subr.mxu0 0.0
    %3165 = vmatpush1.xpose.msra.mxu0 0.0
    %3166 = vmatprep.subr.mxu0 0.0
    %3167 = vmatpush1.xpose.msra.mxu0 0.0
    %3168 = vmatprep.subr.mxu0 0.0
    %3169 = vmatpush1.xpose.msra.mxu0 0.0
    %3170 = vmatprep.subr.mxu0 0.0
    %3171 = vmatpush1.xpose.msra.mxu0 0.0
    %3172 = vmatprep.subr.mxu0 0.0
    %3173 = vmatpush1.xpose.msra.mxu0 0.0
    %3174 = vmatprep.subr.mxu0 0.0
    %3175 = vmatpush1.xpose.msra.mxu0 0.0
    %3176 = vmatprep.subr.mxu0 0.0
    %3177 = vmatpush1.xpose.msra.mxu0 0.0
    %3178 = vmatprep.subr.mxu0 0.0
    %3179 = vmatpush1.xpose.msra.mxu0 0.0
    %3180 = vmatprep.subr.mxu0 0.0
    %3181 = vmatpush1.xpose.msra.mxu0 0.0
    %3182 = vmatprep.subr.mxu0 0.0
    %3183 = vmatpush1.xpose.msra.mxu0 0.0
    %3184 = vmatprep.subr.mxu0 0.0
    %3185 = vmatpush1.xpose.msra.mxu0 0.0
    %3186 = vmatprep.subr.mxu0 0.0
    %3187 = vmatpush1.xpose.msra.mxu0 %v3154
    %3188 = vmatprep.subr.mxu0 0.0
    %3189 = vmatpush2.xpose.msra.mxu0 0.0
    %3190 = vmatprep.subr.mxu0 0.0
    %3191 = vmatpush2.xpose.msra.mxu0 0.0
    %3192 = vmatprep.subr.mxu0 0.0
    %3193 = vmatpush2.xpose.msra.mxu0 0.0
    %3194 = vmatprep.subr.mxu0 0.0
    %3195 = vmatpush2.xpose.msra.mxu0 0.0
    %3196 = vmatprep.subr.mxu0 0.0
    %3197 = vmatpush2.xpose.msra.mxu0 0.0
    %3198 = vmatprep.subr.mxu0 0.0
    %3199 = vmatpush2.xpose.msra.mxu0 0.0
    %3200 = vmatprep.subr.mxu0 0.0
    %3201 = vmatpush2.xpose.msra.mxu0 0.0
    %3202 = vmatprep.subr.mxu0 0.0
    %3203 = vmatpush2.xpose.msra.mxu0 0.0
    %3204 = vmatprep.subr.mxu0 0.0
    %3205 = vmatpush2.xpose.msra.mxu0 0.0
    %3206 = vmatprep.subr.mxu0 0.0
    %3207 = vmatpush2.xpose.msra.mxu0 0.0
    %3208 = vmatprep.subr.mxu0 0.0
    %3209 = vmatpush2.xpose.msra.mxu0 0.0
    %3210 = vmatprep.subr.mxu0 0.0
    %3211 = vmatpush2.xpose.msra.mxu0 0.0
    %3212 = vmatprep.subr.mxu0 0.0
    %3213 = vmatpush2.xpose.msra.mxu0 0.0
    %3214 = vmatprep.subr.mxu0 0.0
    %3215 = vmatpush2.xpose.msra.mxu0 0.0
    %3216 = vmatprep.subr.mxu0 0.0
    %3217 = vmatpush2.xpose.msra.mxu0 0.0
    %3218 = vmatprep.subr.mxu0 0.0
    %3219 = vmatpush2.xpose.msra.mxu0 0.0
    %3220 = vmatprep.mubr.f32.mxu0 0.0
    %3221 = vmatmul.mubr.f32.gmra.mxu0 %v3151
    %v3222 = vpop.f32.mrf.mxu0
    %v3223 = vadd.f32 0.0, %v3222
    %v3224 = vpop.f32.mrf.mxu0
    %3225 = vdwg.mxu0
    %v3226 = vsel %vm2617, %v2691, -inf
    %3227 = vmax.xlane.f32.xlu0 %v3226
    %v3228 = vpop.xlane.xlu0 %3227
    %v3229 = vsel %vm2617, %v2767, -inf
    %3230 = vmax.xlane.f32.xlu0 %v3229
    %v3231 = vpop.xlane.xlu0 %3230
    %v3232 = vsel %vm2617, %v2843, -inf
    %3233 = vmax.xlane.f32.xlu0 %v3232
    %v3234 = vpop.xlane.xlu0 %3233
    %v3235 = vsel %vm2617, %v2919, -inf
    %3236 = vmax.xlane.f32.xlu0 %v3235
    %v3237 = vpop.xlane.xlu0 %3236
    %v3238 = vsel %vm2617, %v2995, -inf
    %3239 = vmax.xlane.f32.xlu0 %v3238
    %v3240 = vpop.xlane.xlu0 %3239
    %v3241 = vsel %vm2617, %v3071, -inf
    %3242 = vmax.xlane.f32.xlu0 %v3241
    %v3243 = vpop.xlane.xlu0 %3242
    %v3244 = vsel %vm2617, %v3147, -inf
    %3245 = vmax.xlane.f32.xlu0 %v3244
    %v3246 = vpop.xlane.xlu0 %3245
    %v3247 = vsel %vm2617, %v3223, -inf
    %3248 = vmax.xlane.f32.xlu0 %v3247
    %v3249 = vpop.xlane.xlu0 %3248
    %v3250 = vsub.f32 %v2691, %v3228
    %v3251 = vsub.f32 %v2767, %v3231
    %v3252 = vsub.f32 %v2843, %v3234
    %v3253 = vsub.f32 %v2919, %v3237
    %v3254 = vsub.f32 %v2995, %v3240
    %v3255 = vsub.f32 %v3071, %v3243
    %v3256 = vsub.f32 %v3147, %v3246
    %v3257 = vsub.f32 %v3223, %v3249
    %v3258 = vmul.f32 %v3250, 1.442695
    %v3259 = vpow.pop %v3258
    %v3260 = vmul.f32 %v3251, 1.442695
    %v3261 = vpow.pop %v3260
    %v3262 = vmul.f32 %v3252, 1.442695
    %v3263 = vpow.pop %v3262
    %v3264 = vmul.f32 %v3253, 1.442695
    %v3265 = vpow.pop %v3264
    %v3266 = vmul.f32 %v3254, 1.442695
    %v3267 = vpow.pop %v3266
    %v3268 = vmul.f32 %v3255, 1.442695
    %v3269 = vpow.pop %v3268
    %v3270 = vmul.f32 %v3256, 1.442695
    %v3271 = vpow.pop %v3270
    %v3272 = vmul.f32 %v3257, 1.442695
    %v3273 = vpow.pop %v3272
    %v3274 = vsel %vm2617, %v3259, 0.0
    %3275 = vadd.xlane.f32.xlu0 %v3274
    %v3276 = vpop.xlane.xlu0 %3275
    %v3277 = vsel %vm2617, %v3261, 0.0
    %3278 = vadd.xlane.f32.xlu0 %v3277
    %v3279 = vpop.xlane.xlu0 %3278
    %v3280 = vsel %vm2617, %v3263, 0.0
    %3281 = vadd.xlane.f32.xlu0 %v3280
    %v3282 = vpop.xlane.xlu0 %3281
    %v3283 = vsel %vm2617, %v3265, 0.0
    %3284 = vadd.xlane.f32.xlu0 %v3283
    %v3285 = vpop.xlane.xlu0 %3284
    %v3286 = vsel %vm2617, %v3267, 0.0
    %3287 = vadd.xlane.f32.xlu0 %v3286
    %v3288 = vpop.xlane.xlu0 %3287
    %v3289 = vsel %vm2617, %v3269, 0.0
    %3290 = vadd.xlane.f32.xlu0 %v3289
    %v3291 = vpop.xlane.xlu0 %3290
    %v3292 = vsel %vm2617, %v3271, 0.0
    %3293 = vadd.xlane.f32.xlu0 %v3292
    %v3294 = vpop.xlane.xlu0 %3293
    %v3295 = vsel %vm2617, %v3273, 0.0
    %3296 = vadd.xlane.f32.xlu0 %v3295
    %v3297 = vpop.xlane.xlu0 %3296
    %v3298 = vrcp.pop %v3276
    %v3299 = vrcp.pop %v3279
    %v3300 = vrcp.pop %v3282
    %v3301 = vrcp.pop %v3285
    %v3302 = vrcp.pop %v3288
    %v3303 = vrcp.pop %v3291
    %v3304 = vrcp.pop %v3294
    %v3305 = vrcp.pop %v3297
    %v3306 = vmul.f32 %v3259, %v3298
    %v3307 = vmul.f32 %v3261, %v3299
    %v3308 = vmul.f32 %v3263, %v3300
    %v3309 = vmul.f32 %v3265, %v3301
    %v3310 = vmul.f32 %v3267, %v3302
    %v3311 = vmul.f32 %v3269, %v3303
    %v3312 = vmul.f32 %v3271, %v3304
    %v3313 = vmul.f32 %v3273, %v3305
    %v3315 = vsel %vm2617, %v3306, 0
    %3317 = vmatprep.subr.mxu0 0.0
    %3318 = vmatpush1.msra.mxu0 0.0
    %3319 = vmatprep.subr.mxu0 0.0
    %3320 = vmatpush1.msra.mxu0 0.0
    %3321 = vmatprep.subr.mxu0 0.0
    %3322 = vmatpush1.msra.mxu0 0.0
    %3323 = vmatprep.subr.mxu0 0.0
    %3324 = vmatpush1.msra.mxu0 0.0
    %3325 = vmatprep.subr.mxu0 0.0
    %3326 = vmatpush1.msra.mxu0 0.0
    %3327 = vmatprep.subr.mxu0 0.0
    %3328 = vmatpush1.msra.mxu0 0.0
    %3329 = vmatprep.subr.mxu0 0.0
    %3330 = vmatpush1.msra.mxu0 0.0
    %3331 = vmatprep.subr.mxu0 0.0
    %3332 = vmatpush1.msra.mxu0 0.0
    %3333 = vmatprep.subr.mxu0 0.0
    %3334 = vmatpush1.msra.mxu0 0.0
    %3335 = vmatprep.subr.mxu0 0.0
    %3336 = vmatpush1.msra.mxu0 0.0
    %3337 = vmatprep.subr.mxu0 0.0
    %3338 = vmatpush1.msra.mxu0 0.0
    %3339 = vmatprep.subr.mxu0 0.0
    %3340 = vmatpush1.msra.mxu0 0.0
    %3341 = vmatprep.subr.mxu0 0.0
    %3342 = vmatpush1.msra.mxu0 0.0
    %3343 = vmatprep.subr.mxu0 0.0
    %3344 = vmatpush1.msra.mxu0 0.0
    %3345 = vmatprep.subr.mxu0 0.0
    %3346 = vmatpush1.msra.mxu0 0.0
    %3347 = vmatprep.subr.mxu0 0.0
    %3348 = vmatpush1.msra.mxu0 %v2124
    %3349 = vmatprep.subr.mxu0 0.0
    %3350 = vmatpush2.msra.mxu0 0.0
    %3351 = vmatprep.subr.mxu0 0.0
    %3352 = vmatpush2.msra.mxu0 0.0
    %3353 = vmatprep.subr.mxu0 0.0
    %3354 = vmatpush2.msra.mxu0 0.0
    %3355 = vmatprep.subr.mxu0 0.0
    %3356 = vmatpush2.msra.mxu0 0.0
    %3357 = vmatprep.subr.mxu0 0.0
    %3358 = vmatpush2.msra.mxu0 0.0
    %3359 = vmatprep.subr.mxu0 0.0
    %3360 = vmatpush2.msra.mxu0 0.0
    %3361 = vmatprep.subr.mxu0 0.0
    %3362 = vmatpush2.msra.mxu0 0.0
    %3363 = vmatprep.subr.mxu0 0.0
    %3364 = vmatpush2.msra.mxu0 0.0
    %3365 = vmatprep.subr.mxu0 0.0
    %3366 = vmatpush2.msra.mxu0 0.0
    %3367 = vmatprep.subr.mxu0 0.0
    %3368 = vmatpush2.msra.mxu0 0.0
    %3369 = vmatprep.subr.mxu0 0.0
    %3370 = vmatpush2.msra.mxu0 0.0
    %3371 = vmatprep.subr.mxu0 0.0
    %3372 = vmatpush2.msra.mxu0 0.0
    %3373 = vmatprep.subr.mxu0 0.0
    %3374 = vmatpush2.msra.mxu0 0.0
    %3375 = vmatprep.subr.mxu0 0.0
    %3376 = vmatpush2.msra.mxu0 0.0
    %3377 = vmatprep.subr.mxu0 0.0
    %3378 = vmatpush2.msra.mxu0 0.0
    %3379 = vmatprep.subr.mxu0 0.0
    %3380 = vmatpush2.msra.mxu0 0.0
    %3381 = vmatprep.mubr.f32.mxu0 0.0
    %3382 = vmatmul.mubr.f32.gmra.mxu0 %v3315
    %v3383 = vpop.f32.mrf.mxu0
    %v3384 = vadd.f32 0.0, %v3383
    %v3385 = vpop.f32.mrf.mxu0
    %3386 = vdwg.mxu0
    %v3388 = vsel %vm2617, %v3307, 0
    %3390 = vmatprep.subr.mxu0 0.0
    %3391 = vmatpush1.msra.mxu0 0.0
    %3392 = vmatprep.subr.mxu0 0.0
    %3393 = vmatpush1.msra.mxu0 0.0
    %3394 = vmatprep.subr.mxu0 0.0
    %3395 = vmatpush1.msra.mxu0 0.0
    %3396 = vmatprep.subr.mxu0 0.0
    %3397 = vmatpush1.msra.mxu0 0.0
    %3398 = vmatprep.subr.mxu0 0.0
    %3399 = vmatpush1.msra.mxu0 0.0
    %3400 = vmatprep.subr.mxu0 0.0
    %3401 = vmatpush1.msra.mxu0 0.0
    %3402 = vmatprep.subr.mxu0 0.0
    %3403 = vmatpush1.msra.mxu0 0.0
    %3404 = vmatprep.subr.mxu0 0.0
    %3405 = vmatpush1.msra.mxu0 0.0
    %3406 = vmatprep.subr.mxu0 0.0
    %3407 = vmatpush1.msra.mxu0 0.0
    %3408 = vmatprep.subr.mxu0 0.0
    %3409 = vmatpush1.msra.mxu0 0.0
    %3410 = vmatprep.subr.mxu0 0.0
    %3411 = vmatpush1.msra.mxu0 0.0
    %3412 = vmatprep.subr.mxu0 0.0
    %3413 = vmatpush1.msra.mxu0 0.0
    %3414 = vmatprep.subr.mxu0 0.0
    %3415 = vmatpush1.msra.mxu0 0.0
    %3416 = vmatprep.subr.mxu0 0.0
    %3417 = vmatpush1.msra.mxu0 0.0
    %3418 = vmatprep.subr.mxu0 0.0
    %3419 = vmatpush1.msra.mxu0 0.0
    %3420 = vmatprep.subr.mxu0 0.0
    %3421 = vmatpush1.msra.mxu0 %v2194
    %3422 = vmatprep.subr.mxu0 0.0
    %3423 = vmatpush2.msra.mxu0 0.0
    %3424 = vmatprep.subr.mxu0 0.0
    %3425 = vmatpush2.msra.mxu0 0.0
    %3426 = vmatprep.subr.mxu0 0.0
    %3427 = vmatpush2.msra.mxu0 0.0
    %3428 = vmatprep.subr.mxu0 0.0
    %3429 = vmatpush2.msra.mxu0 0.0
    %3430 = vmatprep.subr.mxu0 0.0
    %3431 = vmatpush2.msra.mxu0 0.0
    %3432 = vmatprep.subr.mxu0 0.0
    %3433 = vmatpush2.msra.mxu0 0.0
    %3434 = vmatprep.subr.mxu0 0.0
    %3435 = vmatpush2.msra.mxu0 0.0
    %3436 = vmatprep.subr.mxu0 0.0
    %3437 = vmatpush2.msra.mxu0 0.0
    %3438 = vmatprep.subr.mxu0 0.0
    %3439 = vmatpush2.msra.mxu0 0.0
    %3440 = vmatprep.subr.mxu0 0.0
    %3441 = vmatpush2.msra.mxu0 0.0
    %3442 = vmatprep.subr.mxu0 0.0
    %3443 = vmatpush2.msra.mxu0 0.0
    %3444 = vmatprep.subr.mxu0 0.0
    %3445 = vmatpush2.msra.mxu0 0.0
    %3446 = vmatprep.subr.mxu0 0.0
    %3447 = vmatpush2.msra.mxu0 0.0
    %3448 = vmatprep.subr.mxu0 0.0
    %3449 = vmatpush2.msra.mxu0 0.0
    %3450 = vmatprep.subr.mxu0 0.0
    %3451 = vmatpush2.msra.mxu0 0.0
    %3452 = vmatprep.subr.mxu0 0.0
    %3453 = vmatpush2.msra.mxu0 0.0
    %3454 = vmatprep.mubr.f32.mxu0 0.0
    %3455 = vmatmul.mubr.f32.gmra.mxu0 %v3388
    %v3456 = vpop.f32.mrf.mxu0
    %v3457 = vadd.f32 0.0, %v3456
    %v3458 = vpop.f32.mrf.mxu0
    %3459 = vdwg.mxu0
    %v3461 = vsel %vm2617, %v3308, 0
    %3463 = vmatprep.subr.mxu0 0.0
    %3464 = vmatpush1.msra.mxu0 0.0
    %3465 = vmatprep.subr.mxu0 0.0
    %3466 = vmatpush1.msra.mxu0 0.0
    %3467 = vmatprep.subr.mxu0 0.0
    %3468 = vmatpush1.msra.mxu0 0.0
    %3469 = vmatprep.subr.mxu0 0.0
    %3470 = vmatpush1.msra.mxu0 0.0
    %3471 = vmatprep.subr.mxu0 0.0
    %3472 = vmatpush1.msra.mxu0 0.0
    %3473 = vmatprep.subr.mxu0 0.0
    %3474 = vmatpush1.msra.mxu0 0.0
    %3475 = vmatprep.subr.mxu0 0.0
    %3476 = vmatpush1.msra.mxu0 0.0
    %3477 = vmatprep.subr.mxu0 0.0
    %3478 = vmatpush1.msra.mxu0 0.0
    %3479 = vmatprep.subr.mxu0 0.0
    %3480 = vmatpush1.msra.mxu0 0.0
    %3481 = vmatprep.subr.mxu0 0.0
    %3482 = vmatpush1.msra.mxu0 0.0
    %3483 = vmatprep.subr.mxu0 0.0
    %3484 = vmatpush1.msra.mxu0 0.0
    %3485 = vmatprep.subr.mxu0 0.0
    %3486 = vmatpush1.msra.mxu0 0.0
    %3487 = vmatprep.subr.mxu0 0.0
    %3488 = vmatpush1.msra.mxu0 0.0
    %3489 = vmatprep.subr.mxu0 0.0
    %3490 = vmatpush1.msra.mxu0 0.0
    %3491 = vmatprep.subr.mxu0 0.0
    %3492 = vmatpush1.msra.mxu0 0.0
    %3493 = vmatprep.subr.mxu0 0.0
    %3494 = vmatpush1.msra.mxu0 %v2264
    %3495 = vmatprep.subr.mxu0 0.0
    %3496 = vmatpush2.msra.mxu0 0.0
    %3497 = vmatprep.subr.mxu0 0.0
    %3498 = vmatpush2.msra.mxu0 0.0
    %3499 = vmatprep.subr.mxu0 0.0
    %3500 = vmatpush2.msra.mxu0 0.0
    %3501 = vmatprep.subr.mxu0 0.0
    %3502 = vmatpush2.msra.mxu0 0.0
    %3503 = vmatprep.subr.mxu0 0.0
    %3504 = vmatpush2.msra.mxu0 0.0
    %3505 = vmatprep.subr.mxu0 0.0
    %3506 = vmatpush2.msra.mxu0 0.0
    %3507 = vmatprep.subr.mxu0 0.0
    %3508 = vmatpush2.msra.mxu0 0.0
    %3509 = vmatprep.subr.mxu0 0.0
    %3510 = vmatpush2.msra.mxu0 0.0
    %3511 = vmatprep.subr.mxu0 0.0
    %3512 = vmatpush2.msra.mxu0 0.0
    %3513 = vmatprep.subr.mxu0 0.0
    %3514 = vmatpush2.msra.mxu0 0.0
    %3515 = vmatprep.subr.mxu0 0.0
    %3516 = vmatpush2.msra.mxu0 0.0
    %3517 = vmatprep.subr.mxu0 0.0
    %3518 = vmatpush2.msra.mxu0 0.0
    %3519 = vmatprep.subr.mxu0 0.0
    %3520 = vmatpush2.msra.mxu0 0.0
    %3521 = vmatprep.subr.mxu0 0.0
    %3522 = vmatpush2.msra.mxu0 0.0
    %3523 = vmatprep.subr.mxu0 0.0
    %3524 = vmatpush2.msra.mxu0 0.0
    %3525 = vmatprep.subr.mxu0 0.0
    %3526 = vmatpush2.msra.mxu0 0.0
    %3527 = vmatprep.mubr.f32.mxu0 0.0
    %3528 = vmatmul.mubr.f32.gmra.mxu0 %v3461
    %v3529 = vpop.f32.mrf.mxu0
    %v3530 = vadd.f32 0.0, %v3529
    %v3531 = vpop.f32.mrf.mxu0
    %3532 = vdwg.mxu0
    %v3534 = vsel %vm2617, %v3309, 0
    %3536 = vmatprep.subr.mxu0 0.0
    %3537 = vmatpush1.msra.mxu0 0.0
    %3538 = vmatprep.subr.mxu0 0.0
    %3539 = vmatpush1.msra.mxu0 0.0
    %3540 = vmatprep.subr.mxu0 0.0
    %3541 = vmatpush1.msra.mxu0 0.0
    %3542 = vmatprep.subr.mxu0 0.0
    %3543 = vmatpush1.msra.mxu0 0.0
    %3544 = vmatprep.subr.mxu0 0.0
    %3545 = vmatpush1.msra.mxu0 0.0
    %3546 = vmatprep.subr.mxu0 0.0
    %3547 = vmatpush1.msra.mxu0 0.0
    %3548 = vmatprep.subr.mxu0 0.0
    %3549 = vmatpush1.msra.mxu0 0.0
    %3550 = vmatprep.subr.mxu0 0.0
    %3551 = vmatpush1.msra.mxu0 0.0
    %3552 = vmatprep.subr.mxu0 0.0
    %3553 = vmatpush1.msra.mxu0 0.0
    %3554 = vmatprep.subr.mxu0 0.0
    %3555 = vmatpush1.msra.mxu0 0.0
    %3556 = vmatprep.subr.mxu0 0.0
    %3557 = vmatpush1.msra.mxu0 0.0
    %3558 = vmatprep.subr.mxu0 0.0
    %3559 = vmatpush1.msra.mxu0 0.0
    %3560 = vmatprep.subr.mxu0 0.0
    %3561 = vmatpush1.msra.mxu0 0.0
    %3562 = vmatprep.subr.mxu0 0.0
    %3563 = vmatpush1.msra.mxu0 0.0
    %3564 = vmatprep.subr.mxu0 0.0
    %3565 = vmatpush1.msra.mxu0 0.0
    %3566 = vmatprep.subr.mxu0 0.0
    %3567 = vmatpush1.msra.mxu0 %v2334
    %3568 = vmatprep.subr.mxu0 0.0
    %3569 = vmatpush2.msra.mxu0 0.0
    %3570 = vmatprep.subr.mxu0 0.0
    %3571 = vmatpush2.msra.mxu0 0.0
    %3572 = vmatprep.subr.mxu0 0.0
    %3573 = vmatpush2.msra.mxu0 0.0
    %3574 = vmatprep.subr.mxu0 0.0
    %3575 = vmatpush2.msra.mxu0 0.0
    %3576 = vmatprep.subr.mxu0 0.0
    %3577 = vmatpush2.msra.mxu0 0.0
    %3578 = vmatprep.subr.mxu0 0.0
    %3579 = vmatpush2.msra.mxu0 0.0
    %3580 = vmatprep.subr.mxu0 0.0
    %3581 = vmatpush2.msra.mxu0 0.0
    %3582 = vmatprep.subr.mxu0 0.0
    %3583 = vmatpush2.msra.mxu0 0.0
    %3584 = vmatprep.subr.mxu0 0.0
    %3585 = vmatpush2.msra.mxu0 0.0
    %3586 = vmatprep.subr.mxu0 0.0
    %3587 = vmatpush2.msra.mxu0 0.0
    %3588 = vmatprep.subr.mxu0 0.0
    %3589 = vmatpush2.msra.mxu0 0.0
    %3590 = vmatprep.subr.mxu0 0.0
    %3591 = vmatpush2.msra.mxu0 0.0
    %3592 = vmatprep.subr.mxu0 0.0
    %3593 = vmatpush2.msra.mxu0 0.0
    %3594 = vmatprep.subr.mxu0 0.0
    %3595 = vmatpush2.msra.mxu0 0.0
    %3596 = vmatprep.subr.mxu0 0.0
    %3597 = vmatpush2.msra.mxu0 0.0
    %3598 = vmatprep.subr.mxu0 0.0
    %3599 = vmatpush2.msra.mxu0 0.0
    %3600 = vmatprep.mubr.f32.mxu0 0.0
    %3601 = vmatmul.mubr.f32.gmra.mxu0 %v3534
    %v3602 = vpop.f32.mrf.mxu0
    %v3603 = vadd.f32 0.0, %v3602
    %v3604 = vpop.f32.mrf.mxu0
    %3605 = vdwg.mxu0
    %v3607 = vsel %vm2617, %v3310, 0
    %3609 = vmatprep.subr.mxu0 0.0
    %3610 = vmatpush1.msra.mxu0 0.0
    %3611 = vmatprep.subr.mxu0 0.0
    %3612 = vmatpush1.msra.mxu0 0.0
    %3613 = vmatprep.subr.mxu0 0.0
    %3614 = vmatpush1.msra.mxu0 0.0
    %3615 = vmatprep.subr.mxu0 0.0
    %3616 = vmatpush1.msra.mxu0 0.0
    %3617 = vmatprep.subr.mxu0 0.0
    %3618 = vmatpush1.msra.mxu0 0.0
    %3619 = vmatprep.subr.mxu0 0.0
    %3620 = vmatpush1.msra.mxu0 0.0
    %3621 = vmatprep.subr.mxu0 0.0
    %3622 = vmatpush1.msra.mxu0 0.0
    %3623 = vmatprep.subr.mxu0 0.0
    %3624 = vmatpush1.msra.mxu0 0.0
    %3625 = vmatprep.subr.mxu0 0.0
    %3626 = vmatpush1.msra.mxu0 0.0
    %3627 = vmatprep.subr.mxu0 0.0
    %3628 = vmatpush1.msra.mxu0 0.0
    %3629 = vmatprep.subr.mxu0 0.0
    %3630 = vmatpush1.msra.mxu0 0.0
    %3631 = vmatprep.subr.mxu0 0.0
    %3632 = vmatpush1.msra.mxu0 0.0
    %3633 = vmatprep.subr.mxu0 0.0
    %3634 = vmatpush1.msra.mxu0 0.0
    %3635 = vmatprep.subr.mxu0 0.0
    %3636 = vmatpush1.msra.mxu0 0.0
    %3637 = vmatprep.subr.mxu0 0.0
    %3638 = vmatpush1.msra.mxu0 0.0
    %3639 = vmatprep.subr.mxu0 0.0
    %3640 = vmatpush1.msra.mxu0 %v2404
    %3641 = vmatprep.subr.mxu0 0.0
    %3642 = vmatpush2.msra.mxu0 0.0
    %3643 = vmatprep.subr.mxu0 0.0
    %3644 = vmatpush2.msra.mxu0 0.0
    %3645 = vmatprep.subr.mxu0 0.0
    %3646 = vmatpush2.msra.mxu0 0.0
    %3647 = vmatprep.subr.mxu0 0.0
    %3648 = vmatpush2.msra.mxu0 0.0
    %3649 = vmatprep.subr.mxu0 0.0
    %3650 = vmatpush2.msra.mxu0 0.0
    %3651 = vmatprep.subr.mxu0 0.0
    %3652 = vmatpush2.msra.mxu0 0.0
    %3653 = vmatprep.subr.mxu0 0.0
    %3654 = vmatpush2.msra.mxu0 0.0
    %3655 = vmatprep.subr.mxu0 0.0
    %3656 = vmatpush2.msra.mxu0 0.0
    %3657 = vmatprep.subr.mxu0 0.0
    %3658 = vmatpush2.msra.mxu0 0.0
    %3659 = vmatprep.subr.mxu0 0.0
    %3660 = vmatpush2.msra.mxu0 0.0
    %3661 = vmatprep.subr.mxu0 0.0
    %3662 = vmatpush2.msra.mxu0 0.0
    %3663 = vmatprep.subr.mxu0 0.0
    %3664 = vmatpush2.msra.mxu0 0.0
    %3665 = vmatprep.subr.mxu0 0.0
    %3666 = vmatpush2.msra.mxu0 0.0
    %3667 = vmatprep.subr.mxu0 0.0
    %3668 = vmatpush2.msra.mxu0 0.0
    %3669 = vmatprep.subr.mxu0 0.0
    %3670 = vmatpush2.msra.mxu0 0.0
    %3671 = vmatprep.subr.mxu0 0.0
    %3672 = vmatpush2.msra.mxu0 0.0
    %3673 = vmatprep.mubr.f32.mxu0 0.0
    %3674 = vmatmul.mubr.f32.gmra.mxu0 %v3607
    %v3675 = vpop.f32.mrf.mxu0
    %v3676 = vadd.f32 0.0, %v3675
    %v3677 = vpop.f32.mrf.mxu0
    %3678 = vdwg.mxu0
    %v3680 = vsel %vm2617, %v3311, 0
    %3682 = vmatprep.subr.mxu0 0.0
    %3683 = vmatpush1.msra.mxu0 0.0
    %3684 = vmatprep.subr.mxu0 0.0
    %3685 = vmatpush1.msra.mxu0 0.0
    %3686 = vmatprep.subr.mxu0 0.0
    %3687 = vmatpush1.msra.mxu0 0.0
    %3688 = vmatprep.subr.mxu0 0.0
    %3689 = vmatpush1.msra.mxu0 0.0
    %3690 = vmatprep.subr.mxu0 0.0
    %3691 = vmatpush1.msra.mxu0 0.0
    %3692 = vmatprep.subr.mxu0 0.0
    %3693 = vmatpush1.msra.mxu0 0.0
    %3694 = vmatprep.subr.mxu0 0.0
    %3695 = vmatpush1.msra.mxu0 0.0
    %3696 = vmatprep.subr.mxu0 0.0
    %3697 = vmatpush1.msra.mxu0 0.0
    %3698 = vmatprep.subr.mxu0 0.0
    %3699 = vmatpush1.msra.mxu0 0.0
    %3700 = vmatprep.subr.mxu0 0.0
    %3701 = vmatpush1.msra.mxu0 0.0
    %3702 = vmatprep.subr.mxu0 0.0
    %3703 = vmatpush1.msra.mxu0 0.0
    %3704 = vmatprep.subr.mxu0 0.0
    %3705 = vmatpush1.msra.mxu0 0.0
    %3706 = vmatprep.subr.mxu0 0.0
    %3707 = vmatpush1.msra.mxu0 0.0
    %3708 = vmatprep.subr.mxu0 0.0
    %3709 = vmatpush1.msra.mxu0 0.0
    %3710 = vmatprep.subr.mxu0 0.0
    %3711 = vmatpush1.msra.mxu0 0.0
    %3712 = vmatprep.subr.mxu0 0.0
    %3713 = vmatpush1.msra.mxu0 %v2474
    %3714 = vmatprep.subr.mxu0 0.0
    %3715 = vmatpush2.msra.mxu0 0.0
    %3716 = vmatprep.subr.mxu0 0.0
    %3717 = vmatpush2.msra.mxu0 0.0
    %3718 = vmatprep.subr.mxu0 0.0
    %3719 = vmatpush2.msra.mxu0 0.0
    %3720 = vmatprep.subr.mxu0 0.0
    %3721 = vmatpush2.msra.mxu0 0.0
    %3722 = vmatprep.subr.mxu0 0.0
    %3723 = vmatpush2.msra.mxu0 0.0
    %3724 = vmatprep.subr.mxu0 0.0
    %3725 = vmatpush2.msra.mxu0 0.0
    %3726 = vmatprep.subr.mxu0 0.0
    %3727 = vmatpush2.msra.mxu0 0.0
    %3728 = vmatprep.subr.mxu0 0.0
    %3729 = vmatpush2.msra.mxu0 0.0
    %3730 = vmatprep.subr.mxu0 0.0
    %3731 = vmatpush2.msra.mxu0 0.0
    %3732 = vmatprep.subr.mxu0 0.0
    %3733 = vmatpush2.msra.mxu0 0.0
    %3734 = vmatprep.subr.mxu0 0.0
    %3735 = vmatpush2.msra.mxu0 0.0
    %3736 = vmatprep.subr.mxu0 0.0
    %3737 = vmatpush2.msra.mxu0 0.0
    %3738 = vmatprep.subr.mxu0 0.0
    %3739 = vmatpush2.msra.mxu0 0.0
    %3740 = vmatprep.subr.mxu0 0.0
    %3741 = vmatpush2.msra.mxu0 0.0
    %3742 = vmatprep.subr.mxu0 0.0
    %3743 = vmatpush2.msra.mxu0 0.0
    %3744 = vmatprep.subr.mxu0 0.0
    %3745 = vmatpush2.msra.mxu0 0.0
    %3746 = vmatprep.mubr.f32.mxu0 0.0
    %3747 = vmatmul.mubr.f32.gmra.mxu0 %v3680
    %v3748 = vpop.f32.mrf.mxu0
    %v3749 = vadd.f32 0.0, %v3748
    %v3750 = vpop.f32.mrf.mxu0
    %3751 = vdwg.mxu0
    %v3753 = vsel %vm2617, %v3312, 0
    %3755 = vmatprep.subr.mxu0 0.0
    %3756 = vmatpush1.msra.mxu0 0.0
    %3757 = vmatprep.subr.mxu0 0.0
    %3758 = vmatpush1.msra.mxu0 0.0
    %3759 = vmatprep.subr.mxu0 0.0
    %3760 = vmatpush1.msra.mxu0 0.0
    %3761 = vmatprep.subr.mxu0 0.0
    %3762 = vmatpush1.msra.mxu0 0.0
    %3763 = vmatprep.subr.mxu0 0.0
    %3764 = vmatpush1.msra.mxu0 0.0
    %3765 = vmatprep.subr.mxu0 0.0
    %3766 = vmatpush1.msra.mxu0 0.0
    %3767 = vmatprep.subr.mxu0 0.0
    %3768 = vmatpush1.msra.mxu0 0.0
    %3769 = vmatprep.subr.mxu0 0.0
    %3770 = vmatpush1.msra.mxu0 0.0
    %3771 = vmatprep.subr.mxu0 0.0
    %3772 = vmatpush1.msra.mxu0 0.0
    %3773 = vmatprep.subr.mxu0 0.0
    %3774 = vmatpush1.msra.mxu0 0.0
    %3775 = vmatprep.subr.mxu0 0.0
    %3776 = vmatpush1.msra.mxu0 0.0
    %3777 = vmatprep.subr.mxu0 0.0
    %3778 = vmatpush1.msra.mxu0 0.0
    %3779 = vmatprep.subr.mxu0 0.0
    %3780 = vmatpush1.msra.mxu0 0.0
    %3781 = vmatprep.subr.mxu0 0.0
    %3782 = vmatpush1.msra.mxu0 0.0
    %3783 = vmatprep.subr.mxu0 0.0
    %3784 = vmatpush1.msra.mxu0 0.0
    %3785 = vmatprep.subr.mxu0 0.0
    %3786 = vmatpush1.msra.mxu0 %v2544
    %3787 = vmatprep.subr.mxu0 0.0
    %3788 = vmatpush2.msra.mxu0 0.0
    %3789 = vmatprep.subr.mxu0 0.0
    %3790 = vmatpush2.msra.mxu0 0.0
    %3791 = vmatprep.subr.mxu0 0.0
    %3792 = vmatpush2.msra.mxu0 0.0
    %3793 = vmatprep.subr.mxu0 0.0
    %3794 = vmatpush2.msra.mxu0 0.0
    %3795 = vmatprep.subr.mxu0 0.0
    %3796 = vmatpush2.msra.mxu0 0.0
    %3797 = vmatprep.subr.mxu0 0.0
    %3798 = vmatpush2.msra.mxu0 0.0
    %3799 = vmatprep.subr.mxu0 0.0
    %3800 = vmatpush2.msra.mxu0 0.0
    %3801 = vmatprep.subr.mxu0 0.0
    %3802 = vmatpush2.msra.mxu0 0.0
    %3803 = vmatprep.subr.mxu0 0.0
    %3804 = vmatpush2.msra.mxu0 0.0
    %3805 = vmatprep.subr.mxu0 0.0
    %3806 = vmatpush2.msra.mxu0 0.0
    %3807 = vmatprep.subr.mxu0 0.0
    %3808 = vmatpush2.msra.mxu0 0.0
    %3809 = vmatprep.subr.mxu0 0.0
    %3810 = vmatpush2.msra.mxu0 0.0
    %3811 = vmatprep.subr.mxu0 0.0
    %3812 = vmatpush2.msra.mxu0 0.0
    %3813 = vmatprep.subr.mxu0 0.0
    %3814 = vmatpush2.msra.mxu0 0.0
    %3815 = vmatprep.subr.mxu0 0.0
    %3816 = vmatpush2.msra.mxu0 0.0
    %3817 = vmatprep.subr.mxu0 0.0
    %3818 = vmatpush2.msra.mxu0 0.0
    %3819 = vmatprep.mubr.f32.mxu0 0.0
    %3820 = vmatmul.mubr.f32.gmra.mxu0 %v3753
    %v3821 = vpop.f32.mrf.mxu0
    %v3822 = vadd.f32 0.0, %v3821
    %v3823 = vpop.f32.mrf.mxu0
    %3824 = vdwg.mxu0
    %v3826 = vsel %vm2617, %v3313, 0
    %3828 = vmatprep.subr.mxu0 0.0
    %3829 = vmatpush1.msra.mxu0 0.0
    %3830 = vmatprep.subr.mxu0 0.0
    %3831 = vmatpush1.msra.mxu0 0.0
    %3832 = vmatprep.subr.mxu0 0.0
    %3833 = vmatpush1.msra.mxu0 0.0
    %3834 = vmatprep.subr.mxu0 0.0
    %3835 = vmatpush1.msra.mxu0 0.0
    %3836 = vmatprep.subr.mxu0 0.0
    %3837 = vmatpush1.msra.mxu0 0.0
    %3838 = vmatprep.subr.mxu0 0.0
    %3839 = vmatpush1.msra.mxu0 0.0
    %3840 = vmatprep.subr.mxu0 0.0
    %3841 = vmatpush1.msra.mxu0 0.0
    %3842 = vmatprep.subr.mxu0 0.0
    %3843 = vmatpush1.msra.mxu0 0.0
    %3844 = vmatprep.subr.mxu0 0.0
    %3845 = vmatpush1.msra.mxu0 0.0
    %3846 = vmatprep.subr.mxu0 0.0
    %3847 = vmatpush1.msra.mxu0 0.0
    %3848 = vmatprep.subr.mxu0 0.0
    %3849 = vmatpush1.msra.mxu0 0.0
    %3850 = vmatprep.subr.mxu0 0.0
    %3851 = vmatpush1.msra.mxu0 0.0
    %3852 = vmatprep.subr.mxu0 0.0
    %3853 = vmatpush1.msra.mxu0 0.0
    %3854 = vmatprep.subr.mxu0 0.0
    %3855 = vmatpush1.msra.mxu0 0.0
    %3856 = vmatprep.subr.mxu0 0.0
    %3857 = vmatpush1.msra.mxu0 0.0
    %3858 = vmatprep.subr.mxu0 0.0
    %3859 = vmatpush1.msra.mxu0 %v2614
    %3860 = vmatprep.subr.mxu0 0.0
    %3861 = vmatpush2.msra.mxu0 0.0
    %3862 = vmatprep.subr.mxu0 0.0
    %3863 = vmatpush2.msra.mxu0 0.0
    %3864 = vmatprep.subr.mxu0 0.0
    %3865 = vmatpush2.msra.mxu0 0.0
    %3866 = vmatprep.subr.mxu0 0.0
    %3867 = vmatpush2.msra.mxu0 0.0
    %3868 = vmatprep.subr.mxu0 0.0
    %3869 = vmatpush2.msra.mxu0 0.0
    %3870 = vmatprep.subr.mxu0 0.0
    %3871 = vmatpush2.msra.mxu0 0.0
    %3872 = vmatprep.subr.mxu0 0.0
    %3873 = vmatpush2.msra.mxu0 0.0
    %3874 = vmatprep.subr.mxu0 0.0
    %3875 = vmatpush2.msra.mxu0 0.0
    %3876 = vmatprep.subr.mxu0 0.0
    %3877 = vmatpush2.msra.mxu0 0.0
    %3878 = vmatprep.subr.mxu0 0.0
    %3879 = vmatpush2.msra.mxu0 0.0
    %3880 = vmatprep.subr.mxu0 0.0
    %3881 = vmatpush2.msra.mxu0 0.0
    %3882 = vmatprep.subr.mxu0 0.0
    %3883 = vmatpush2.msra.mxu0 0.0
    %3884 = vmatprep.subr.mxu0 0.0
    %3885 = vmatpush2.msra.mxu0 0.0
    %3886 = vmatprep.subr.mxu0 0.0
    %3887 = vmatpush2.msra.mxu0 0.0
    %3888 = vmatprep.subr.mxu0 0.0
    %3889 = vmatpush2.msra.mxu0 0.0
    %3890 = vmatprep.subr.mxu0 0.0
    %3891 = vmatpush2.msra.mxu0 0.0
    %3892 = vmatprep.mubr.f32.mxu0 0.0
    %3893 = vmatmul.mubr.f32.gmra.mxu0 %v3826
    %v3894 = vpop.f32.mrf.mxu0
    %v3895 = vadd.f32 0.0, %v3894
    %v3896 = vpop.f32.mrf.mxu0
    %3897 = vdwg.mxu0
    %v3898 = vld [vmem:[%s8] sm:$0xff]
    %v3899 = vld [vmem:[%s8 + $0x8] sm:$0xff]
    %v3900 = vld [vmem:[%s8 + $0x10] sm:$0xff]
    %v3901 = vld [vmem:[%s8 + $0x18] sm:$0xff]
    %v3902 = vld [vmem:[%s8 + $0x20] sm:$0xff]
    %v3903 = vld [vmem:[%s8 + $0x28] sm:$0xff]
    %v3904 = vld [vmem:[%s8 + $0x30] sm:$0xff]
    %v3905 = vld [vmem:[%s8 + $0x38] sm:$0xff]
    %v3907 = vsel %vm2617, %v3384, 0
    %3909 = vmatprep.subr.mxu0 0.0
    %3910 = vmatpush1.msra.mxu0 0.0
    %3911 = vmatprep.subr.mxu0 0.0
    %3912 = vmatpush1.msra.mxu0 0.0
    %3913 = vmatprep.subr.mxu0 0.0
    %3914 = vmatpush1.msra.mxu0 0.0
    %3915 = vmatprep.subr.mxu0 0.0
    %3916 = vmatpush1.msra.mxu0 0.0
    %3917 = vmatprep.subr.mxu0 0.0
    %3918 = vmatpush1.msra.mxu0 0.0
    %3919 = vmatprep.subr.mxu0 0.0
    %3920 = vmatpush1.msra.mxu0 0.0
    %3921 = vmatprep.subr.mxu0 0.0
    %3922 = vmatpush1.msra.mxu0 0.0
    %3923 = vmatprep.subr.mxu0 0.0
    %3924 = vmatpush1.msra.mxu0 0.0
    %3925 = vmatprep.subr.mxu0 0.0
    %3926 = vmatpush1.msra.mxu0 0.0
    %3927 = vmatprep.subr.mxu0 0.0
    %3928 = vmatpush1.msra.mxu0 0.0
    %3929 = vmatprep.subr.mxu0 0.0
    %3930 = vmatpush1.msra.mxu0 0.0
    %3931 = vmatprep.subr.mxu0 0.0
    %3932 = vmatpush1.msra.mxu0 0.0
    %3933 = vmatprep.subr.mxu0 0.0
    %3934 = vmatpush1.msra.mxu0 0.0
    %3935 = vmatprep.subr.mxu0 0.0
    %3936 = vmatpush1.msra.mxu0 0.0
    %3937 = vmatprep.subr.mxu0 0.0
    %3938 = vmatpush1.msra.mxu0 0.0
    %3939 = vmatprep.subr.mxu0 0.0
    %3940 = vmatpush1.msra.mxu0 %v3898
    %3941 = vmatprep.subr.mxu0 0.0
    %3942 = vmatpush2.msra.mxu0 0.0
    %3943 = vmatprep.subr.mxu0 0.0
    %3944 = vmatpush2.msra.mxu0 0.0
    %3945 = vmatprep.subr.mxu0 0.0
    %3946 = vmatpush2.msra.mxu0 0.0
    %3947 = vmatprep.subr.mxu0 0.0
    %3948 = vmatpush2.msra.mxu0 0.0
    %3949 = vmatprep.subr.mxu0 0.0
    %3950 = vmatpush2.msra.mxu0 0.0
    %3951 = vmatprep.subr.mxu0 0.0
    %3952 = vmatpush2.msra.mxu0 0.0
    %3953 = vmatprep.subr.mxu0 0.0
    %3954 = vmatpush2.msra.mxu0 0.0
    %3955 = vmatprep.subr.mxu0 0.0
    %3956 = vmatpush2.msra.mxu0 0.0
    %3957 = vmatprep.subr.mxu0 0.0
    %3958 = vmatpush2.msra.mxu0 0.0
    %3959 = vmatprep.subr.mxu0 0.0
    %3960 = vmatpush2.msra.mxu0 0.0
    %3961 = vmatprep.subr.mxu0 0.0
    %3962 = vmatpush2.msra.mxu0 0.0
    %3963 = vmatprep.subr.mxu0 0.0
    %3964 = vmatpush2.msra.mxu0 0.0
    %3965 = vmatprep.subr.mxu0 0.0
    %3966 = vmatpush2.msra.mxu0 0.0
    %3967 = vmatprep.subr.mxu0 0.0
    %3968 = vmatpush2.msra.mxu0 0.0
    %3969 = vmatprep.subr.mxu0 0.0
    %3970 = vmatpush2.msra.mxu0 0.0
    %3971 = vmatprep.subr.mxu0 0.0
    %3972 = vmatpush2.msra.mxu0 0.0
    %3973 = vmatprep.mubr.f32.mxu0 0.0
    %3974 = vmatmul.mubr.f32.gmra.mxu0 %v3907
    %v3975 = vpop.f32.mrf.mxu0
    %v3976 = vadd.f32 0.0, %v3975
    %v3977 = vpop.f32.mrf.mxu0
    %3978 = vdwg.mxu0
    %v3980 = vsel %vm2617, %v3457, 0
    %3982 = vmatprep.subr.mxu0 0.0
    %3983 = vmatpush1.msra.mxu0 0.0
    %3984 = vmatprep.subr.mxu0 0.0
    %3985 = vmatpush1.msra.mxu0 0.0
    %3986 = vmatprep.subr.mxu0 0.0
    %3987 = vmatpush1.msra.mxu0 0.0
    %3988 = vmatprep.subr.mxu0 0.0
    %3989 = vmatpush1.msra.mxu0 0.0
    %3990 = vmatprep.subr.mxu0 0.0
    %3991 = vmatpush1.msra.mxu0 0.0
    %3992 = vmatprep.subr.mxu0 0.0
    %3993 = vmatpush1.msra.mxu0 0.0
    %3994 = vmatprep.subr.mxu0 0.0
    %3995 = vmatpush1.msra.mxu0 0.0
    %3996 = vmatprep.subr.mxu0 0.0
    %3997 = vmatpush1.msra.mxu0 0.0
    %3998 = vmatprep.subr.mxu0 0.0
    %3999 = vmatpush1.msra.mxu0 0.0
    %4000 = vmatprep.subr.mxu0 0.0
    %4001 = vmatpush1.msra.mxu0 0.0
    %4002 = vmatprep.subr.mxu0 0.0
    %4003 = vmatpush1.msra.mxu0 0.0
    %4004 = vmatprep.subr.mxu0 0.0
    %4005 = vmatpush1.msra.mxu0 0.0
    %4006 = vmatprep.subr.mxu0 0.0
    %4007 = vmatpush1.msra.mxu0 0.0
    %4008 = vmatprep.subr.mxu0 0.0
    %4009 = vmatpush1.msra.mxu0 0.0
    %4010 = vmatprep.subr.mxu0 0.0
    %4011 = vmatpush1.msra.mxu0 0.0
    %4012 = vmatprep.subr.mxu0 0.0
    %4013 = vmatpush1.msra.mxu0 %v3899
    %4014 = vmatprep.subr.mxu0 0.0
    %4015 = vmatpush2.msra.mxu0 0.0
    %4016 = vmatprep.subr.mxu0 0.0
    %4017 = vmatpush2.msra.mxu0 0.0
    %4018 = vmatprep.subr.mxu0 0.0
    %4019 = vmatpush2.msra.mxu0 0.0
    %4020 = vmatprep.subr.mxu0 0.0
    %4021 = vmatpush2.msra.mxu0 0.0
    %4022 = vmatprep.subr.mxu0 0.0
    %4023 = vmatpush2.msra.mxu0 0.0
    %4024 = vmatprep.subr.mxu0 0.0
    %4025 = vmatpush2.msra.mxu0 0.0
    %4026 = vmatprep.subr.mxu0 0.0
    %4027 = vmatpush2.msra.mxu0 0.0
    %4028 = vmatprep.subr.mxu0 0.0
    %4029 = vmatpush2.msra.mxu0 0.0
    %4030 = vmatprep.subr.mxu0 0.0
    %4031 = vmatpush2.msra.mxu0 0.0
    %4032 = vmatprep.subr.mxu0 0.0
    %4033 = vmatpush2.msra.mxu0 0.0
    %4034 = vmatprep.subr.mxu0 0.0
    %4035 = vmatpush2.msra.mxu0 0.0
    %4036 = vmatprep.subr.mxu0 0.0
    %4037 = vmatpush2.msra.mxu0 0.0
    %4038 = vmatprep.subr.mxu0 0.0
    %4039 = vmatpush2.msra.mxu0 0.0
    %4040 = vmatprep.subr.mxu0 0.0
    %4041 = vmatpush2.msra.mxu0 0.0
    %4042 = vmatprep.subr.mxu0 0.0
    %4043 = vmatpush2.msra.mxu0 0.0
    %4044 = vmatprep.subr.mxu0 0.0
    %4045 = vmatpush2.msra.mxu0 0.0
    %4046 = vmatprep.mubr.f32.mxu0 0.0
    %4047 = vmatmul.mubr.f32.gmra.mxu0 %v3980
    %v4048 = vpop.f32.mrf.mxu0
    %v4049 = vadd.f32 0.0, %v4048
    %v4050 = vpop.f32.mrf.mxu0
    %4051 = vdwg.mxu0
    %v4053 = vsel %vm2617, %v3530, 0
    %4055 = vmatprep.subr.mxu0 0.0
    %4056 = vmatpush1.msra.mxu0 0.0
    %4057 = vmatprep.subr.mxu0 0.0
    %4058 = vmatpush1.msra.mxu0 0.0
    %4059 = vmatprep.subr.mxu0 0.0
    %4060 = vmatpush1.msra.mxu0 0.0
    %4061 = vmatprep.subr.mxu0 0.0
    %4062 = vmatpush1.msra.mxu0 0.0
    %4063 = vmatprep.subr.mxu0 0.0
    %4064 = vmatpush1.msra.mxu0 0.0
    %4065 = vmatprep.subr.mxu0 0.0
    %4066 = vmatpush1.msra.mxu0 0.0
    %4067 = vmatprep.subr.mxu0 0.0
    %4068 = vmatpush1.msra.mxu0 0.0
    %4069 = vmatprep.subr.mxu0 0.0
    %4070 = vmatpush1.msra.mxu0 0.0
    %4071 = vmatprep.subr.mxu0 0.0
    %4072 = vmatpush1.msra.mxu0 0.0
    %4073 = vmatprep.subr.mxu0 0.0
    %4074 = vmatpush1.msra.mxu0 0.0
    %4075 = vmatprep.subr.mxu0 0.0
    %4076 = vmatpush1.msra.mxu0 0.0
    %4077 = vmatprep.subr.mxu0 0.0
    %4078 = vmatpush1.msra.mxu0 0.0
    %4079 = vmatprep.subr.mxu0 0.0
    %4080 = vmatpush1.msra.mxu0 0.0
    %4081 = vmatprep.subr.mxu0 0.0
    %4082 = vmatpush1.msra.mxu0 0.0
    %4083 = vmatprep.subr.mxu0 0.0
    %4084 = vmatpush1.msra.mxu0 0.0
    %4085 = vmatprep.subr.mxu0 0.0
    %4086 = vmatpush1.msra.mxu0 %v3900
    %4087 = vmatprep.subr.mxu0 0.0
    %4088 = vmatpush2.msra.mxu0 0.0
    %4089 = vmatprep.subr.mxu0 0.0
    %4090 = vmatpush2.msra.mxu0 0.0
    %4091 = vmatprep.subr.mxu0 0.0
    %4092 = vmatpush2.msra.mxu0 0.0
    %4093 = vmatprep.subr.mxu0 0.0
    %4094 = vmatpush2.msra.mxu0 0.0
    %4095 = vmatprep.subr.mxu0 0.0
    %4096 = vmatpush2.msra.mxu0 0.0
    %4097 = vmatprep.subr.mxu0 0.0
    %4098 = vmatpush2.msra.mxu0 0.0
    %4099 = vmatprep.subr.mxu0 0.0
    %4100 = vmatpush2.msra.mxu0 0.0
    %4101 = vmatprep.subr.mxu0 0.0
    %4102 = vmatpush2.msra.mxu0 0.0
    %4103 = vmatprep.subr.mxu0 0.0
    %4104 = vmatpush2.msra.mxu0 0.0
    %4105 = vmatprep.subr.mxu0 0.0
    %4106 = vmatpush2.msra.mxu0 0.0
    %4107 = vmatprep.subr.mxu0 0.0
    %4108 = vmatpush2.msra.mxu0 0.0
    %4109 = vmatprep.subr.mxu0 0.0
    %4110 = vmatpush2.msra.mxu0 0.0
    %4111 = vmatprep.subr.mxu0 0.0
    %4112 = vmatpush2.msra.mxu0 0.0
    %4113 = vmatprep.subr.mxu0 0.0
    %4114 = vmatpush2.msra.mxu0 0.0
    %4115 = vmatprep.subr.mxu0 0.0
    %4116 = vmatpush2.msra.mxu0 0.0
    %4117 = vmatprep.subr.mxu0 0.0
    %4118 = vmatpush2.msra.mxu0 0.0
    %4119 = vmatprep.mubr.f32.mxu0 0.0
    %4120 = vmatmul.mubr.f32.gmra.mxu0 %v4053
    %v4121 = vpop.f32.mrf.mxu0
    %v4122 = vadd.f32 0.0, %v4121
    %v4123 = vpop.f32.mrf.mxu0
    %4124 = vdwg.mxu0
    %v4126 = vsel %vm2617, %v3603, 0
    %4128 = vmatprep.subr.mxu0 0.0
    %4129 = vmatpush1.msra.mxu0 0.0
    %4130 = vmatprep.subr.mxu0 0.0
    %4131 = vmatpush1.msra.mxu0 0.0
    %4132 = vmatprep.subr.mxu0 0.0
    %4133 = vmatpush1.msra.mxu0 0.0
    %4134 = vmatprep.subr.mxu0 0.0
    %4135 = vmatpush1.msra.mxu0 0.0
    %4136 = vmatprep.subr.mxu0 0.0
    %4137 = vmatpush1.msra.mxu0 0.0
    %4138 = vmatprep.subr.mxu0 0.0
    %4139 = vmatpush1.msra.mxu0 0.0
    %4140 = vmatprep.subr.mxu0 0.0
    %4141 = vmatpush1.msra.mxu0 0.0
    %4142 = vmatprep.subr.mxu0 0.0
    %4143 = vmatpush1.msra.mxu0 0.0
    %4144 = vmatprep.subr.mxu0 0.0
    %4145 = vmatpush1.msra.mxu0 0.0
    %4146 = vmatprep.subr.mxu0 0.0
    %4147 = vmatpush1.msra.mxu0 0.0
    %4148 = vmatprep.subr.mxu0 0.0
    %4149 = vmatpush1.msra.mxu0 0.0
    %4150 = vmatprep.subr.mxu0 0.0
    %4151 = vmatpush1.msra.mxu0 0.0
    %4152 = vmatprep.subr.mxu0 0.0
    %4153 = vmatpush1.msra.mxu0 0.0
    %4154 = vmatprep.subr.mxu0 0.0
    %4155 = vmatpush1.msra.mxu0 0.0
    %4156 = vmatprep.subr.mxu0 0.0
    %4157 = vmatpush1.msra.mxu0 0.0
    %4158 = vmatprep.subr.mxu0 0.0
    %4159 = vmatpush1.msra.mxu0 %v3901
    %4160 = vmatprep.subr.mxu0 0.0
    %4161 = vmatpush2.msra.mxu0 0.0
    %4162 = vmatprep.subr.mxu0 0.0
    %4163 = vmatpush2.msra.mxu0 0.0
    %4164 = vmatprep.subr.mxu0 0.0
    %4165 = vmatpush2.msra.mxu0 0.0
    %4166 = vmatprep.subr.mxu0 0.0
    %4167 = vmatpush2.msra.mxu0 0.0
    %4168 = vmatprep.subr.mxu0 0.0
    %4169 = vmatpush2.msra.mxu0 0.0
    %4170 = vmatprep.subr.mxu0 0.0
    %4171 = vmatpush2.msra.mxu0 0.0
    %4172 = vmatprep.subr.mxu0 0.0
    %4173 = vmatpush2.msra.mxu0 0.0
    %4174 = vmatprep.subr.mxu0 0.0
    %4175 = vmatpush2.msra.mxu0 0.0
    %4176 = vmatprep.subr.mxu0 0.0
    %4177 = vmatpush2.msra.mxu0 0.0
    %4178 = vmatprep.subr.mxu0 0.0
    %4179 = vmatpush2.msra.mxu0 0.0
    %4180 = vmatprep.subr.mxu0 0.0
    %4181 = vmatpush2.msra.mxu0 0.0
    %4182 = vmatprep.subr.mxu0 0.0
    %4183 = vmatpush2.msra.mxu0 0.0
    %4184 = vmatprep.subr.mxu0 0.0
    %4185 = vmatpush2.msra.mxu0 0.0
    %4186 = vmatprep.subr.mxu0 0.0
    %4187 = vmatpush2.msra.mxu0 0.0
    %4188 = vmatprep.subr.mxu0 0.0
    %4189 = vmatpush2.msra.mxu0 0.0
    %4190 = vmatprep.subr.mxu0 0.0
    %4191 = vmatpush2.msra.mxu0 0.0
    %4192 = vmatprep.mubr.f32.mxu0 0.0
    %4193 = vmatmul.mubr.f32.gmra.mxu0 %v4126
    %v4194 = vpop.f32.mrf.mxu0
    %v4195 = vadd.f32 0.0, %v4194
    %v4196 = vpop.f32.mrf.mxu0
    %4197 = vdwg.mxu0
    %v4199 = vsel %vm2617, %v3676, 0
    %4201 = vmatprep.subr.mxu0 0.0
    %4202 = vmatpush1.msra.mxu0 0.0
    %4203 = vmatprep.subr.mxu0 0.0
    %4204 = vmatpush1.msra.mxu0 0.0
    %4205 = vmatprep.subr.mxu0 0.0
    %4206 = vmatpush1.msra.mxu0 0.0
    %4207 = vmatprep.subr.mxu0 0.0
    %4208 = vmatpush1.msra.mxu0 0.0
    %4209 = vmatprep.subr.mxu0 0.0
    %4210 = vmatpush1.msra.mxu0 0.0
    %4211 = vmatprep.subr.mxu0 0.0
    %4212 = vmatpush1.msra.mxu0 0.0
    %4213 = vmatprep.subr.mxu0 0.0
    %4214 = vmatpush1.msra.mxu0 0.0
    %4215 = vmatprep.subr.mxu0 0.0
    %4216 = vmatpush1.msra.mxu0 0.0
    %4217 = vmatprep.subr.mxu0 0.0
    %4218 = vmatpush1.msra.mxu0 0.0
    %4219 = vmatprep.subr.mxu0 0.0
    %4220 = vmatpush1.msra.mxu0 0.0
    %4221 = vmatprep.subr.mxu0 0.0
    %4222 = vmatpush1.msra.mxu0 0.0
    %4223 = vmatprep.subr.mxu0 0.0
    %4224 = vmatpush1.msra.mxu0 0.0
    %4225 = vmatprep.subr.mxu0 0.0
    %4226 = vmatpush1.msra.mxu0 0.0
    %4227 = vmatprep.subr.mxu0 0.0
    %4228 = vmatpush1.msra.mxu0 0.0
    %4229 = vmatprep.subr.mxu0 0.0
    %4230 = vmatpush1.msra.mxu0 0.0
    %4231 = vmatprep.subr.mxu0 0.0
    %4232 = vmatpush1.msra.mxu0 %v3902
    %4233 = vmatprep.subr.mxu0 0.0
    %4234 = vmatpush2.msra.mxu0 0.0
    %4235 = vmatprep.subr.mxu0 0.0
    %4236 = vmatpush2.msra.mxu0 0.0
    %4237 = vmatprep.subr.mxu0 0.0
    %4238 = vmatpush2.msra.mxu0 0.0
    %4239 = vmatprep.subr.mxu0 0.0
    %4240 = vmatpush2.msra.mxu0 0.0
    %4241 = vmatprep.subr.mxu0 0.0
    %4242 = vmatpush2.msra.mxu0 0.0
    %4243 = vmatprep.subr.mxu0 0.0
    %4244 = vmatpush2.msra.mxu0 0.0
    %4245 = vmatprep.subr.mxu0 0.0
    %4246 = vmatpush2.msra.mxu0 0.0
    %4247 = vmatprep.subr.mxu0 0.0
    %4248 = vmatpush2.msra.mxu0 0.0
    %4249 = vmatprep.subr.mxu0 0.0
    %4250 = vmatpush2.msra.mxu0 0.0
    %4251 = vmatprep.subr.mxu0 0.0
    %4252 = vmatpush2.msra.mxu0 0.0
    %4253 = vmatprep.subr.mxu0 0.0
    %4254 = vmatpush2.msra.mxu0 0.0
    %4255 = vmatprep.subr.mxu0 0.0
    %4256 = vmatpush2.msra.mxu0 0.0
    %4257 = vmatprep.subr.mxu0 0.0
    %4258 = vmatpush2.msra.mxu0 0.0
    %4259 = vmatprep.subr.mxu0 0.0
    %4260 = vmatpush2.msra.mxu0 0.0
    %4261 = vmatprep.subr.mxu0 0.0
    %4262 = vmatpush2.msra.mxu0 0.0
    %4263 = vmatprep.subr.mxu0 0.0
    %4264 = vmatpush2.msra.mxu0 0.0
    %4265 = vmatprep.mubr.f32.mxu0 0.0
    %4266 = vmatmul.mubr.f32.gmra.mxu0 %v4199
    %v4267 = vpop.f32.mrf.mxu0
    %v4268 = vadd.f32 0.0, %v4267
    %v4269 = vpop.f32.mrf.mxu0
    %4270 = vdwg.mxu0
    %v4272 = vsel %vm2617, %v3749, 0
    %4274 = vmatprep.subr.mxu0 0.0
    %4275 = vmatpush1.msra.mxu0 0.0
    %4276 = vmatprep.subr.mxu0 0.0
    %4277 = vmatpush1.msra.mxu0 0.0
    %4278 = vmatprep.subr.mxu0 0.0
    %4279 = vmatpush1.msra.mxu0 0.0
    %4280 = vmatprep.subr.mxu0 0.0
    %4281 = vmatpush1.msra.mxu0 0.0
    %4282 = vmatprep.subr.mxu0 0.0
    %4283 = vmatpush1.msra.mxu0 0.0
    %4284 = vmatprep.subr.mxu0 0.0
    %4285 = vmatpush1.msra.mxu0 0.0
    %4286 = vmatprep.subr.mxu0 0.0
    %4287 = vmatpush1.msra.mxu0 0.0
    %4288 = vmatprep.subr.mxu0 0.0
    %4289 = vmatpush1.msra.mxu0 0.0
    %4290 = vmatprep.subr.mxu0 0.0
    %4291 = vmatpush1.msra.mxu0 0.0
    %4292 = vmatprep.subr.mxu0 0.0
    %4293 = vmatpush1.msra.mxu0 0.0
    %4294 = vmatprep.subr.mxu0 0.0
    %4295 = vmatpush1.msra.mxu0 0.0
    %4296 = vmatprep.subr.mxu0 0.0
    %4297 = vmatpush1.msra.mxu0 0.0
    %4298 = vmatprep.subr.mxu0 0.0
    %4299 = vmatpush1.msra.mxu0 0.0
    %4300 = vmatprep.subr.mxu0 0.0
    %4301 = vmatpush1.msra.mxu0 0.0
    %4302 = vmatprep.subr.mxu0 0.0
    %4303 = vmatpush1.msra.mxu0 0.0
    %4304 = vmatprep.subr.mxu0 0.0
    %4305 = vmatpush1.msra.mxu0 %v3903
    %4306 = vmatprep.subr.mxu0 0.0
    %4307 = vmatpush2.msra.mxu0 0.0
    %4308 = vmatprep.subr.mxu0 0.0
    %4309 = vmatpush2.msra.mxu0 0.0
    %4310 = vmatprep.subr.mxu0 0.0
    %4311 = vmatpush2.msra.mxu0 0.0
    %4312 = vmatprep.subr.mxu0 0.0
    %4313 = vmatpush2.msra.mxu0 0.0
    %4314 = vmatprep.subr.mxu0 0.0
    %4315 = vmatpush2.msra.mxu0 0.0
    %4316 = vmatprep.subr.mxu0 0.0
    %4317 = vmatpush2.msra.mxu0 0.0
    %4318 = vmatprep.subr.mxu0 0.0
    %4319 = vmatpush2.msra.mxu0 0.0
    %4320 = vmatprep.subr.mxu0 0.0
    %4321 = vmatpush2.msra.mxu0 0.0
    %4322 = vmatprep.subr.mxu0 0.0
    %4323 = vmatpush2.msra.mxu0 0.0
    %4324 = vmatprep.subr.mxu0 0.0
    %4325 = vmatpush2.msra.mxu0 0.0
    %4326 = vmatprep.subr.mxu0 0.0
    %4327 = vmatpush2.msra.mxu0 0.0
    %4328 = vmatprep.subr.mxu0 0.0
    %4329 = vmatpush2.msra.mxu0 0.0
    %4330 = vmatprep.subr.mxu0 0.0
    %4331 = vmatpush2.msra.mxu0 0.0
    %4332 = vmatprep.subr.mxu0 0.0
    %4333 = vmatpush2.msra.mxu0 0.0
    %4334 = vmatprep.subr.mxu0 0.0
    %4335 = vmatpush2.msra.mxu0 0.0
    %4336 = vmatprep.subr.mxu0 0.0
    %4337 = vmatpush2.msra.mxu0 0.0
    %4338 = vmatprep.mubr.f32.mxu0 0.0
    %4339 = vmatmul.mubr.f32.gmra.mxu0 %v4272
    %v4340 = vpop.f32.mrf.mxu0
    %v4341 = vadd.f32 0.0, %v4340
    %v4342 = vpop.f32.mrf.mxu0
    %4343 = vdwg.mxu0
    %v4345 = vsel %vm2617, %v3822, 0
    %4347 = vmatprep.subr.mxu0 0.0
    %4348 = vmatpush1.msra.mxu0 0.0
    %4349 = vmatprep.subr.mxu0 0.0
    %4350 = vmatpush1.msra.mxu0 0.0
    %4351 = vmatprep.subr.mxu0 0.0
    %4352 = vmatpush1.msra.mxu0 0.0
    %4353 = vmatprep.subr.mxu0 0.0
    %4354 = vmatpush1.msra.mxu0 0.0
    %4355 = vmatprep.subr.mxu0 0.0
    %4356 = vmatpush1.msra.mxu0 0.0
    %4357 = vmatprep.subr.mxu0 0.0
    %4358 = vmatpush1.msra.mxu0 0.0
    %4359 = vmatprep.subr.mxu0 0.0
    %4360 = vmatpush1.msra.mxu0 0.0
    %4361 = vmatprep.subr.mxu0 0.0
    %4362 = vmatpush1.msra.mxu0 0.0
    %4363 = vmatprep.subr.mxu0 0.0
    %4364 = vmatpush1.msra.mxu0 0.0
    %4365 = vmatprep.subr.mxu0 0.0
    %4366 = vmatpush1.msra.mxu0 0.0
    %4367 = vmatprep.subr.mxu0 0.0
    %4368 = vmatpush1.msra.mxu0 0.0
    %4369 = vmatprep.subr.mxu0 0.0
    %4370 = vmatpush1.msra.mxu0 0.0
    %4371 = vmatprep.subr.mxu0 0.0
    %4372 = vmatpush1.msra.mxu0 0.0
    %4373 = vmatprep.subr.mxu0 0.0
    %4374 = vmatpush1.msra.mxu0 0.0
    %4375 = vmatprep.subr.mxu0 0.0
    %4376 = vmatpush1.msra.mxu0 0.0
    %4377 = vmatprep.subr.mxu0 0.0
    %4378 = vmatpush1.msra.mxu0 %v3904
    %4379 = vmatprep.subr.mxu0 0.0
    %4380 = vmatpush2.msra.mxu0 0.0
    %4381 = vmatprep.subr.mxu0 0.0
    %4382 = vmatpush2.msra.mxu0 0.0
    %4383 = vmatprep.subr.mxu0 0.0
    %4384 = vmatpush2.msra.mxu0 0.0
    %4385 = vmatprep.subr.mxu0 0.0
    %4386 = vmatpush2.msra.mxu0 0.0
    %4387 = vmatprep.subr.mxu0 0.0
    %4388 = vmatpush2.msra.mxu0 0.0
    %4389 = vmatprep.subr.mxu0 0.0
    %4390 = vmatpush2.msra.mxu0 0.0
    %4391 = vmatprep.subr.mxu0 0.0
    %4392 = vmatpush2.msra.mxu0 0.0
    %4393 = vmatprep.subr.mxu0 0.0
    %4394 = vmatpush2.msra.mxu0 0.0
    %4395 = vmatprep.subr.mxu0 0.0
    %4396 = vmatpush2.msra.mxu0 0.0
    %4397 = vmatprep.subr.mxu0 0.0
    %4398 = vmatpush2.msra.mxu0 0.0
    %4399 = vmatprep.subr.mxu0 0.0
    %4400 = vmatpush2.msra.mxu0 0.0
    %4401 = vmatprep.subr.mxu0 0.0
    %4402 = vmatpush2.msra.mxu0 0.0
    %4403 = vmatprep.subr.mxu0 0.0
    %4404 = vmatpush2.msra.mxu0 0.0
    %4405 = vmatprep.subr.mxu0 0.0
    %4406 = vmatpush2.msra.mxu0 0.0
    %4407 = vmatprep.subr.mxu0 0.0
    %4408 = vmatpush2.msra.mxu0 0.0
    %4409 = vmatprep.subr.mxu0 0.0
    %4410 = vmatpush2.msra.mxu0 0.0
    %4411 = vmatprep.mubr.f32.mxu0 0.0
    %4412 = vmatmul.mubr.f32.gmra.mxu0 %v4345
    %v4413 = vpop.f32.mrf.mxu0
    %v4414 = vadd.f32 0.0, %v4413
    %v4415 = vpop.f32.mrf.mxu0
    %4416 = vdwg.mxu0
    %v4418 = vsel %vm2617, %v3895, 0
    %4420 = vmatprep.subr.mxu0 0.0
    %4421 = vmatpush1.msra.mxu0 0.0
    %4422 = vmatprep.subr.mxu0 0.0
    %4423 = vmatpush1.msra.mxu0 0.0
    %4424 = vmatprep.subr.mxu0 0.0
    %4425 = vmatpush1.msra.mxu0 0.0
    %4426 = vmatprep.subr.mxu0 0.0
    %4427 = vmatpush1.msra.mxu0 0.0
    %4428 = vmatprep.subr.mxu0 0.0
    %4429 = vmatpush1.msra.mxu0 0.0
    %4430 = vmatprep.subr.mxu0 0.0
    %4431 = vmatpush1.msra.mxu0 0.0
    %4432 = vmatprep.subr.mxu0 0.0
    %4433 = vmatpush1.msra.mxu0 0.0
    %4434 = vmatprep.subr.mxu0 0.0
    %4435 = vmatpush1.msra.mxu0 0.0
    %4436 = vmatprep.subr.mxu0 0.0
    %4437 = vmatpush1.msra.mxu0 0.0
    %4438 = vmatprep.subr.mxu0 0.0
    %4439 = vmatpush1.msra.mxu0 0.0
    %4440 = vmatprep.subr.mxu0 0.0
    %4441 = vmatpush1.msra.mxu0 0.0
    %4442 = vmatprep.subr.mxu0 0.0
    %4443 = vmatpush1.msra.mxu0 0.0
    %4444 = vmatprep.subr.mxu0 0.0
    %4445 = vmatpush1.msra.mxu0 0.0
    %4446 = vmatprep.subr.mxu0 0.0
    %4447 = vmatpush1.msra.mxu0 0.0
    %4448 = vmatprep.subr.mxu0 0.0
    %4449 = vmatpush1.msra.mxu0 0.0
    %4450 = vmatprep.subr.mxu0 0.0
    %4451 = vmatpush1.msra.mxu0 %v3905
    %4452 = vmatprep.subr.mxu0 0.0
    %4453 = vmatpush2.msra.mxu0 0.0
    %4454 = vmatprep.subr.mxu0 0.0
    %4455 = vmatpush2.msra.mxu0 0.0
    %4456 = vmatprep.subr.mxu0 0.0
    %4457 = vmatpush2.msra.mxu0 0.0
    %4458 = vmatprep.subr.mxu0 0.0
    %4459 = vmatpush2.msra.mxu0 0.0
    %4460 = vmatprep.subr.mxu0 0.0
    %4461 = vmatpush2.msra.mxu0 0.0
    %4462 = vmatprep.subr.mxu0 0.0
    %4463 = vmatpush2.msra.mxu0 0.0
    %4464 = vmatprep.subr.mxu0 0.0
    %4465 = vmatpush2.msra.mxu0 0.0
    %4466 = vmatprep.subr.mxu0 0.0
    %4467 = vmatpush2.msra.mxu0 0.0
    %4468 = vmatprep.subr.mxu0 0.0
    %4469 = vmatpush2.msra.mxu0 0.0
    %4470 = vmatprep.subr.mxu0 0.0
    %4471 = vmatpush2.msra.mxu0 0.0
    %4472 = vmatprep.subr.mxu0 0.0
    %4473 = vmatpush2.msra.mxu0 0.0
    %4474 = vmatprep.subr.mxu0 0.0
    %4475 = vmatpush2.msra.mxu0 0.0
    %4476 = vmatprep.subr.mxu0 0.0
    %4477 = vmatpush2.msra.mxu0 0.0
    %4478 = vmatprep.subr.mxu0 0.0
    %4479 = vmatpush2.msra.mxu0 0.0
    %4480 = vmatprep.subr.mxu0 0.0
    %4481 = vmatpush2.msra.mxu0 0.0
    %4482 = vmatprep.subr.mxu0 0.0
    %4483 = vmatpush2.msra.mxu0 0.0
    %4484 = vmatprep.mubr.f32.mxu0 0.0
    %4485 = vmatmul.mubr.f32.gmra.mxu0 %v4418
    %v4486 = vpop.f32.mrf.mxu0
    %v4487 = vadd.f32 0.0, %v4486
    %v4488 = vpop.f32.mrf.mxu0
    %4489 = vdwg.mxu0
    %v4490 = vsel %vm791, %v3976, 0.0
    %v4491 = vsel %vm791, %v4049, 0.0
    %v4492 = vadd.f32 %v4490, %v4491
    %v4493 = vsel %vm791, %v4122, 0.0
    %v4494 = vadd.f32 %v4492, %v4493
    %v4495 = vsel %vm791, %v4195, 0.0
    %v4496 = vadd.f32 %v4494, %v4495
    %v4497 = vsel %vm791, %v4268, 0.0
    %v4498 = vsel %vm791, %v4341, 0.0
    %v4499 = vadd.f32 %v4497, %v4498
    %v4500 = vsel %vm791, %v4414, 0.0
    %v4501 = vadd.f32 %v4499, %v4500
    %v4502 = vsel %vm791, %v4487, 0.0
    %v4503 = vadd.f32 %v4501, %v4502
    %v4504 = vadd.f32 %v783, %v4496
    %v4505 = vadd.f32 %v786, %v4503
    %v4506 = vld [vmem:[%s9] sm:$0x1]
    %v4508 = vlaneseq
    %v4509 = vshrl.u32 %v4508, 7
    %v4510 = vsub.s32 0, %v4509
    %v4511 = vrot.slane %v4506, %v4510
    %v4513 = vadd.f32 %v4504, %v4511
    %v4514 = vadd.f32 %v4505, %v4511
    %v4515 = vld [vmem:[%s10] sm:$0x1]
    %v4516 = vld [vmem:[%s11] sm:$0x1]
    %v4517 = vsel %vm791, %v4513, 0.0
    %4518 = vadd.xlane.f32.xlu0 %v4517
    %v4519 = vpop.xlane.xlu0 %4518
    %v4520 = vsel %vm791, %v4514, 0.0
    %4521 = vadd.xlane.f32.xlu0 %v4520
    %v4522 = vpop.xlane.xlu0 %4521
    %v4523 = vmul.f32 %v4519, %v798
    %v4524 = vmul.f32 %v4522, %v798
    %v4525 = vsub.f32 %v4513, %v4523
    %v4526 = vsub.f32 %v4514, %v4524
    %v4527 = vmul.f32 %v4525, %v4525
    %v4528 = vmul.f32 %v4526, %v4526
    %v4529 = vsel %vm791, %v4527, 0.0
    %4530 = vadd.xlane.f32.xlu0 %v4529
    %v4531 = vpop.xlane.xlu0 %4530
    %v4532 = vsel %vm791, %v4528, 0.0
    %4533 = vadd.xlane.f32.xlu0 %v4532
    %v4534 = vpop.xlane.xlu0 %4533
    %v4535 = vmul.f32 %v4531, %v798
    %v4536 = vmul.f32 %v4534, %v798
    %v4537 = vadd.f32 %v4535, 1e-05
    %v4538 = vadd.f32 %v4536, 1e-05
    %v4539 = vrsqrt.pop %v4537
    %v4540 = vrsqrt.pop %v4538
    %v4541 = vmul.f32 %v4525, %v4539
    %v4542 = vmul.f32 %v4526, %v4540
    %v4544 = vlaneseq
    %v4545 = vshrl.u32 %v4544, 7
    %v4546 = vsub.s32 0, %v4545
    %v4547 = vrot.slane %v4515, %v4546
    %v4549 = vmul.f32 %v4541, %v4547
    %v4550 = vmul.f32 %v4542, %v4547
    %v4552 = vlaneseq
    %v4553 = vshrl.u32 %v4552, 7
    %v4554 = vsub.s32 0, %v4553
    %v4555 = vrot.slane %v4516, %v4554
    %v4557 = vadd.f32 %v4549, %v4555
    %v4558 = vadd.f32 %v4550, %v4555
    %v4559 = vld [vmem:[%s12] sm:$0xff]
    %v4560 = vld [vmem:[%s12 + $0x8] sm:$0xff]
    %v4561 = vld [vmem:[%s12 + $0x10] sm:$0xff]
    %v4562 = vld [vmem:[%s12 + $0x18] sm:$0xff]
    %v4563 = vld [vmem:[%s13] sm:$0x1]
    %v4565 = vlaneseq
    %v4566 = vshrl.u32 %v4565, 7
    %v4567 = vsub.s32 0, %v4566
    %v4568 = vrot.slane %v4563, %v4567
    %v4571 = vsel %vm791, %v4557, 0
    %v4574 = vsel %vm791, %v4558, 0
    %4576 = vmatprep.subr.mxu0 0.0
    %4577 = vmatpush1.msra.mxu0 0.0
    %4578 = vmatprep.subr.mxu0 0.0
    %4579 = vmatpush1.msra.mxu0 0.0
    %4580 = vmatprep.subr.mxu0 0.0
    %4581 = vmatpush1.msra.mxu0 0.0
    %4582 = vmatprep.subr.mxu0 0.0
    %4583 = vmatpush1.msra.mxu0 0.0
    %4584 = vmatprep.subr.mxu0 0.0
    %4585 = vmatpush1.msra.mxu0 0.0
    %4586 = vmatprep.subr.mxu0 0.0
    %4587 = vmatpush1.msra.mxu0 0.0
    %4588 = vmatprep.subr.mxu0 0.0
    %4589 = vmatpush1.msra.mxu0 0.0
    %4590 = vmatprep.subr.mxu0 0.0
    %4591 = vmatpush1.msra.mxu0 0.0
    %4592 = vmatprep.subr.mxu0 0.0
    %4593 = vmatpush1.msra.mxu0 0.0
    %4594 = vmatprep.subr.mxu0 0.0
    %4595 = vmatpush1.msra.mxu0 0.0
    %4596 = vmatprep.subr.mxu0 0.0
    %4597 = vmatpush1.msra.mxu0 0.0
    %4598 = vmatprep.subr.mxu0 0.0
    %4599 = vmatpush1.msra.mxu0 0.0
    %4600 = vmatprep.subr.mxu0 0.0
    %4601 = vmatpush1.msra.mxu0 %v4562
    %4602 = vmatprep.subr.mxu0 0.0
    %4603 = vmatpush1.msra.mxu0 %v4561
    %4604 = vmatprep.subr.mxu0 0.0
    %4605 = vmatpush1.msra.mxu0 %v4560
    %4606 = vmatprep.subr.mxu0 0.0
    %4607 = vmatpush1.msra.mxu0 %v4559
    %4608 = vmatprep.subr.mxu0 0.0
    %4609 = vmatpush2.msra.mxu0 0.0
    %4610 = vmatprep.subr.mxu0 0.0
    %4611 = vmatpush2.msra.mxu0 0.0
    %4612 = vmatprep.subr.mxu0 0.0
    %4613 = vmatpush2.msra.mxu0 0.0
    %4614 = vmatprep.subr.mxu0 0.0
    %4615 = vmatpush2.msra.mxu0 0.0
    %4616 = vmatprep.subr.mxu0 0.0
    %4617 = vmatpush2.msra.mxu0 0.0
    %4618 = vmatprep.subr.mxu0 0.0
    %4619 = vmatpush2.msra.mxu0 0.0
    %4620 = vmatprep.subr.mxu0 0.0
    %4621 = vmatpush2.msra.mxu0 0.0
    %4622 = vmatprep.subr.mxu0 0.0
    %4623 = vmatpush2.msra.mxu0 0.0
    %4624 = vmatprep.subr.mxu0 0.0
    %4625 = vmatpush2.msra.mxu0 0.0
    %4626 = vmatprep.subr.mxu0 0.0
    %4627 = vmatpush2.msra.mxu0 0.0
    %4628 = vmatprep.subr.mxu0 0.0
    %4629 = vmatpush2.msra.mxu0 0.0
    %4630 = vmatprep.subr.mxu0 0.0
    %4631 = vmatpush2.msra.mxu0 0.0
    %4632 = vmatprep.subr.mxu0 0.0
    %4633 = vmatpush2.msra.mxu0 0.0
    %4634 = vmatprep.subr.mxu0 0.0
    %4635 = vmatpush2.msra.mxu0 0.0
    %4636 = vmatprep.subr.mxu0 0.0
    %4637 = vmatpush2.msra.mxu0 0.0
    %4638 = vmatprep.subr.mxu0 0.0
    %4639 = vmatpush2.msra.mxu0 0.0
    %4640 = vmatprep.mubr.f32.mxu0 0.0
    %4641 = vmatmul.mubr.f32.gmra.mxu0 %v4571
    %v4642 = vpop.f32.mrf.mxu0
    %v4643 = vadd.f32 %v4568, %v4642
    %v4644 = vpop.f32.mrf.mxu0
    %4645 = vmatprep.mubr.f32.mxu0 0.0
    %4646 = vmatmul.mubr.f32.gmra.mxu0 %v4574
    %v4647 = vpop.f32.mrf.mxu0
    %v4648 = vadd.f32 %v4568, %v4647
    %v4649 = vpop.f32.mrf.mxu0
    %4650 = vdwg.mxu0
    %v4651 = vmul.f32 %v4643, 0.5
    %v4652 = vmul.f32 %v4648, 0.5
    %v4653 = vmul.f32 %v4643, 0.70710677
    %v4654 = vmul.f32 %v4648, 0.70710677
    %vm4655 = vcmp.ge.f32.partialorder %v4653, 0.0
    %vm4656 = vcmp.ge.f32.partialorder %v4654, 0.0
    %v4657 = vsel %vm4655, 1.0, -1.0
    %v4658 = vsel %vm4656, 1.0, -1.0
    %v4659 = vand.u32 2147483647, %v4653
    %v4660 = vand.u32 2147483647, %v4654
    %v4661 = vmul.f32 %v4659, 0.3275911
    %v4662 = vmul.f32 %v4660, 0.3275911
    %v4663 = vadd.f32 %v4661, 1.0
    %v4664 = vadd.f32 %v4662, 1.0
    %v4665 = vrcp.pop %v4663
    %v4666 = vmul.f32 1.0, %v4665
    %v4667 = vrcp.pop %v4664
    %v4668 = vmul.f32 1.0, %v4667
    %v4669 = vmul.f32 %v4666, 1.0614054
    %v4670 = vmul.f32 %v4668, 1.0614054
    %v4671 = vadd.f32 %v4669, -1.4531521
    %v4672 = vadd.f32 %v4670, -1.4531521
    %v4673 = vmul.f32 %v4671, %v4666
    %v4674 = vmul.f32 %v4672, %v4668
    %v4675 = vadd.f32 %v4673, 1.4214138
    %v4676 = vadd.f32 %v4674, 1.4214138
    %v4677 = vmul.f32 %v4675, %v4666
    %v4678 = vmul.f32 %v4676, %v4668
    %v4679 = vadd.f32 %v4677, -0.28449672
    %v4680 = vadd.f32 %v4678, -0.28449672
    %v4681 = vmul.f32 %v4679, %v4666
    %v4682 = vmul.f32 %v4680, %v4668
    %v4683 = vadd.f32 %v4681, 0.2548296
    %v4684 = vadd.f32 %v4682, 0.2548296
    %v4685 = vmul.f32 %v4683, %v4666
    %v4686 = vmul.f32 %v4684, %v4668
    %v4687 = vsub.f32 0.0, %v4659
    %v4688 = vsub.f32 0.0, %v4660
    %v4689 = vmul.f32 %v4687, %v4659
    %v4690 = vmul.f32 %v4688, %v4660
    %v4691 = vmul.f32 %v4689, 1.442695
    %v4692 = vpow.pop %v4691
    %v4693 = vmul.f32 %v4690, 1.442695
    %v4694 = vpow.pop %v4693
    %v4695 = vmul.f32 %v4685, %v4692
    %v4696 = vmul.f32 %v4686, %v4694
    %v4697 = vsub.f32 1.0, %v4695
    %v4698 = vsub.f32 1.0, %v4696
    %v4699 = vmul.f32 %v4657, %v4697
    %v4700 = vmul.f32 %v4658, %v4698
    %v4701 = vadd.f32 %v4699, 1.0
    %v4702 = vadd.f32 %v4700, 1.0
    %v4703 = vmul.f32 %v4651, %v4701
    %v4704 = vmul.f32 %v4652, %v4702
    %v4705 = vld [vmem:[%s14] sm:$0xff]
    %v4706 = vld [vmem:[%s14 + $0x8] sm:$0xff]
    %v4707 = vld [vmem:[%s14 + $0x10] sm:$0xff]
    %v4708 = vld [vmem:[%s14 + $0x18] sm:$0xff]
    %v4709 = vld [vmem:[%s14 + $0x20] sm:$0xff]
    %v4710 = vld [vmem:[%s14 + $0x28] sm:$0xff]
    %v4711 = vld [vmem:[%s14 + $0x30] sm:$0xff]
    %v4712 = vld [vmem:[%s14 + $0x38] sm:$0xff]
    %v4713 = vld [vmem:[%s14 + $0x40] sm:$0xff]
    %v4714 = vld [vmem:[%s14 + $0x48] sm:$0xff]
    %v4715 = vld [vmem:[%s14 + $0x50] sm:$0xff]
    %v4716 = vld [vmem:[%s14 + $0x58] sm:$0xff]
    %v4717 = vld [vmem:[%s14 + $0x60] sm:$0xff]
    %v4718 = vld [vmem:[%s14 + $0x68] sm:$0xff]
    %v4719 = vld [vmem:[%s14 + $0x70] sm:$0xff]
    %v4720 = vld [vmem:[%s14 + $0x78] sm:$0xff]
    %4721 = vmatprep.subr.mxu0 0.0
    %4722 = vmatpush1.msra.mxu0 %v4720
    %4723 = vmatprep.subr.mxu0 0.0
    %4724 = vmatpush1.msra.mxu0 %v4719
    %4725 = vmatprep.subr.mxu0 0.0
    %4726 = vmatpush1.msra.mxu0 %v4718
    %4727 = vmatprep.subr.mxu0 0.0
    %4728 = vmatpush1.msra.mxu0 %v4717
    %4729 = vmatprep.subr.mxu0 0.0
    %4730 = vmatpush1.msra.mxu0 %v4716
    %4731 = vmatprep.subr.mxu0 0.0
    %4732 = vmatpush1.msra.mxu0 %v4715
    %4733 = vmatprep.subr.mxu0 0.0
    %4734 = vmatpush1.msra.mxu0 %v4714
    %4735 = vmatprep.subr.mxu0 0.0
    %4736 = vmatpush1.msra.mxu0 %v4713
    %4737 = vmatprep.subr.mxu0 0.0
    %4738 = vmatpush1.msra.mxu0 %v4712
    %4739 = vmatprep.subr.mxu0 0.0
    %4740 = vmatpush1.msra.mxu0 %v4711
    %4741 = vmatprep.subr.mxu0 0.0
    %4742 = vmatpush1.msra.mxu0 %v4710
    %4743 = vmatprep.subr.mxu0 0.0
    %4744 = vmatpush1.msra.mxu0 %v4709
    %4745 = vmatprep.subr.mxu0 0.0
    %4746 = vmatpush1.msra.mxu0 %v4708
    %4747 = vmatprep.subr.mxu0 0.0
    %4748 = vmatpush1.msra.mxu0 %v4707
    %4749 = vmatprep.subr.mxu0 0.0
    %4750 = vmatpush1.msra.mxu0 %v4706
    %4751 = vmatprep.subr.mxu0 0.0
    %4752 = vmatpush1.msra.mxu0 %v4705
    %4753 = vmatprep.subr.mxu0 0.0
    %4754 = vmatpush2.msra.mxu0 0.0
    %4755 = vmatprep.subr.mxu0 0.0
    %4756 = vmatpush2.msra.mxu0 0.0
    %4757 = vmatprep.subr.mxu0 0.0
    %4758 = vmatpush2.msra.mxu0 0.0
    %4759 = vmatprep.subr.mxu0 0.0
    %4760 = vmatpush2.msra.mxu0 0.0
    %4761 = vmatprep.subr.mxu0 0.0
    %4762 = vmatpush2.msra.mxu0 0.0
    %4763 = vmatprep.subr.mxu0 0.0
    %4764 = vmatpush2.msra.mxu0 0.0
    %4765 = vmatprep.subr.mxu0 0.0
    %4766 = vmatpush2.msra.mxu0 0.0
    %4767 = vmatprep.subr.mxu0 0.0
    %4768 = vmatpush2.msra.mxu0 0.0
    %4769 = vmatprep.subr.mxu0 0.0
    %4770 = vmatpush2.msra.mxu0 0.0
    %4771 = vmatprep.subr.mxu0 0.0
    %4772 = vmatpush2.msra.mxu0 0.0
    %4773 = vmatprep.subr.mxu0 0.0
    %4774 = vmatpush2.msra.mxu0 0.0
    %4775 = vmatprep.subr.mxu0 0.0
    %4776 = vmatpush2.msra.mxu0 0.0
    %4777 = vmatprep.subr.mxu0 0.0
    %4778 = vmatpush2.msra.mxu0 0.0
    %4779 = vmatprep.subr.mxu0 0.0
    %4780 = vmatpush2.msra.mxu0 0.0
    %4781 = vmatprep.subr.mxu0 0.0
    %4782 = vmatpush2.msra.mxu0 0.0
    %4783 = vmatprep.subr.mxu0 0.0
    %4784 = vmatpush2.msra.mxu0 0.0
    %4785 = vmatprep.mubr.f32.mxu0 0.0
    %4786 = vmatmul.mubr.f32.gmra.mxu0 %v4703
    %v4787 = vpop.f32.mrf.mxu0
    %v4788 = vadd.f32 0.0, %v4787
    %v4789 = vpop.f32.mrf.mxu0
    %4790 = vmatprep.mubr.f32.mxu0 0.0
    %4791 = vmatmul.mubr.f32.gmra.mxu0 %v4704
    %v4792 = vpop.f32.mrf.mxu0
    %v4793 = vadd.f32 0.0, %v4792
    %v4794 = vpop.f32.mrf.mxu0
    %4795 = vdwg.mxu0
    %v4796 = vadd.f32 %v4513, %v4788
    %v4797 = vadd.f32 %v4514, %v4793
    %v4798 = vld [vmem:[%s15] sm:$0x1]
    %v4800 = vlaneseq
    %v4801 = vshrl.u32 %v4800, 7
    %v4802 = vsub.s32 0, %v4801
    %v4803 = vrot.slane %v4798, %v4802
    %v4805 = vadd.f32 %v4796, %v4803
    %v4806 = vadd.f32 %v4797, %v4803
    %4807 = vst.msk [vmem:[%s18] sm:$0xff] %vm791, %v4805
    %4808 = vst.msk [vmem:[%s18 + $0x8] sm:$0xff] %vm791, %v4806
    %s4809 = scalar_lea.vmem %s3, 1
    %v4810 = vld [vmem:[%s4809] sm:$0x1]
    %s4811 = scalar_lea.vmem %s4, 1
    %v4812 = vld [vmem:[%s4811] sm:$0x1]
    %v4813 = vsel %vm791, %v4805, 0.0
    %4814 = vadd.xlane.f32.xlu0 %v4813
    %v4815 = vpop.xlane.xlu0 %4814
    %v4816 = vsel %vm791, %v4806, 0.0
    %4817 = vadd.xlane.f32.xlu0 %v4816
    %v4818 = vpop.xlane.xlu0 %4817
    %v4819 = vmul.f32 %v4815, %v798
    %v4820 = vmul.f32 %v4818, %v798
    %v4821 = vsub.f32 %v4805, %v4819
    %v4822 = vsub.f32 %v4806, %v4820
    %v4823 = vmul.f32 %v4821, %v4821
    %v4824 = vmul.f32 %v4822, %v4822
    %v4825 = vsel %vm791, %v4823, 0.0
    %4826 = vadd.xlane.f32.xlu0 %v4825
    %v4827 = vpop.xlane.xlu0 %4826
    %v4828 = vsel %vm791, %v4824, 0.0
    %4829 = vadd.xlane.f32.xlu0 %v4828
    %v4830 = vpop.xlane.xlu0 %4829
    %v4831 = vmul.f32 %v4827, %v798
    %v4832 = vmul.f32 %v4830, %v798
    %v4833 = vadd.f32 %v4831, 1e-05
    %v4834 = vadd.f32 %v4832, 1e-05
    %v4835 = vrsqrt.pop %v4833
    %v4836 = vrsqrt.pop %v4834
    %v4837 = vmul.f32 %v4821, %v4835
    %v4838 = vmul.f32 %v4822, %v4836
    %v4840 = vlaneseq
    %v4841 = vshrl.u32 %v4840, 7
    %v4842 = vsub.s32 0, %v4841
    %v4843 = vrot.slane %v4810, %v4842
    %v4845 = vmul.f32 %v4837, %v4843
    %v4846 = vmul.f32 %v4838, %v4843
    %v4848 = vlaneseq
    %v4849 = vshrl.u32 %v4848, 7
    %v4850 = vsub.s32 0, %v4849
    %v4851 = vrot.slane %v4812, %v4850
    %v4853 = vadd.f32 %v4845, %v4851
    %v4854 = vadd.f32 %v4846, %v4851
    %s4855 = scalar_lea.vmem %s5, 256
    %v4856 = vld [vmem:[%s4855] sm:$0xff]
    %v4857 = vld [vmem:[%s4855 + $0x8] sm:$0xff]
    %v4858 = vld [vmem:[%s4855 + $0x10] sm:$0xff]
    %v4859 = vld [vmem:[%s4855 + $0x18] sm:$0xff]
    %v4860 = vld [vmem:[%s4855 + $0x20] sm:$0xff]
    %v4861 = vld [vmem:[%s4855 + $0x28] sm:$0xff]
    %v4862 = vld [vmem:[%s4855 + $0x30] sm:$0xff]
    %v4863 = vld [vmem:[%s4855 + $0x38] sm:$0xff]
    %v4864 = vld [vmem:[%s4855 + $0x40] sm:$0xff]
    %v4865 = vld [vmem:[%s4855 + $0x48] sm:$0xff]
    %v4866 = vld [vmem:[%s4855 + $0x50] sm:$0xff]
    %v4867 = vld [vmem:[%s4855 + $0x58] sm:$0xff]
    %v4868 = vld [vmem:[%s4855 + $0x60] sm:$0xff]
    %v4869 = vld [vmem:[%s4855 + $0x68] sm:$0xff]
    %v4870 = vld [vmem:[%s4855 + $0x70] sm:$0xff]
    %v4871 = vld [vmem:[%s4855 + $0x78] sm:$0xff]
    %v4872 = vld [vmem:[%s4855 + $0x80] sm:$0xff]
    %v4873 = vld [vmem:[%s4855 + $0x88] sm:$0xff]
    %v4874 = vld [vmem:[%s4855 + $0x90] sm:$0xff]
    %v4875 = vld [vmem:[%s4855 + $0x98] sm:$0xff]
    %v4876 = vld [vmem:[%s4855 + $0xa0] sm:$0xff]
    %v4877 = vld [vmem:[%s4855 + $0xa8] sm:$0xff]
    %v4878 = vld [vmem:[%s4855 + $0xb0] sm:$0xff]
    %v4879 = vld [vmem:[%s4855 + $0xb8] sm:$0xff]
    %v4880 = vld [vmem:[%s4855 + $0xc0] sm:$0xff]
    %v4881 = vld [vmem:[%s4855 + $0xc8] sm:$0xff]
    %v4882 = vld [vmem:[%s4855 + $0xd0] sm:$0xff]
    %v4883 = vld [vmem:[%s4855 + $0xd8] sm:$0xff]
    %v4884 = vld [vmem:[%s4855 + $0xe0] sm:$0xff]
    %v4885 = vld [vmem:[%s4855 + $0xe8] sm:$0xff]
    %v4886 = vld [vmem:[%s4855 + $0xf0] sm:$0xff]
    %v4887 = vld [vmem:[%s4855 + $0xf8] sm:$0xff]
    %v4889 = vsel %vm791, %v4853, 0
    %4891 = vmatprep.subr.mxu0 0.0
    %4892 = vmatpush1.msra.mxu0 0.0
    %4893 = vmatprep.subr.mxu0 0.0
    %4894 = vmatpush1.msra.mxu0 0.0
    %4895 = vmatprep.subr.mxu0 0.0
    %4896 = vmatpush1.msra.mxu0 0.0
    %4897 = vmatprep.subr.mxu0 0.0
    %4898 = vmatpush1.msra.mxu0 0.0
    %4899 = vmatprep.subr.mxu0 0.0
    %4900 = vmatpush1.msra.mxu0 0.0
    %4901 = vmatprep.subr.mxu0 0.0
    %4902 = vmatpush1.msra.mxu0 0.0
    %4903 = vmatprep.subr.mxu0 0.0
    %4904 = vmatpush1.msra.mxu0 0.0
    %4905 = vmatprep.subr.mxu0 0.0
    %4906 = vmatpush1.msra.mxu0 0.0
    %4907 = vmatprep.subr.mxu0 0.0
    %4908 = vmatpush1.msra.mxu0 0.0
    %4909 = vmatprep.subr.mxu0 0.0
    %4910 = vmatpush1.msra.mxu0 0.0
    %4911 = vmatprep.subr.mxu0 0.0
    %4912 = vmatpush1.msra.mxu0 0.0
    %4913 = vmatprep.subr.mxu0 0.0
    %4914 = vmatpush1.msra.mxu0 0.0
    %4915 = vmatprep.subr.mxu0 0.0
    %4916 = vmatpush1.msra.mxu0 %v4859
    %4917 = vmatprep.subr.mxu0 0.0
    %4918 = vmatpush1.msra.mxu0 %v4858
    %4919 = vmatprep.subr.mxu0 0.0
    %4920 = vmatpush1.msra.mxu0 %v4857
    %4921 = vmatprep.subr.mxu0 0.0
    %4922 = vmatpush1.msra.mxu0 %v4856
    %4923 = vmatprep.subr.mxu0 0.0
    %4924 = vmatpush2.msra.mxu0 0.0
    %4925 = vmatprep.subr.mxu0 0.0
    %4926 = vmatpush2.msra.mxu0 0.0
    %4927 = vmatprep.subr.mxu0 0.0
    %4928 = vmatpush2.msra.mxu0 0.0
    %4929 = vmatprep.subr.mxu0 0.0
    %4930 = vmatpush2.msra.mxu0 0.0
    %4931 = vmatprep.subr.mxu0 0.0
    %4932 = vmatpush2.msra.mxu0 0.0
    %4933 = vmatprep.subr.mxu0 0.0
    %4934 = vmatpush2.msra.mxu0 0.0
    %4935 = vmatprep.subr.mxu0 0.0
    %4936 = vmatpush2.msra.mxu0 0.0
    %4937 = vmatprep.subr.mxu0 0.0
    %4938 = vmatpush2.msra.mxu0 0.0
    %4939 = vmatprep.subr.mxu0 0.0
    %4940 = vmatpush2.msra.mxu0 0.0
    %4941 = vmatprep.subr.mxu0 0.0
    %4942 = vmatpush2.msra.mxu0 0.0
    %4943 = vmatprep.subr.mxu0 0.0
    %4944 = vmatpush2.msra.mxu0 0.0
    %4945 = vmatprep.subr.mxu0 0.0
    %4946 = vmatpush2.msra.mxu0 0.0
    %4947 = vmatprep.subr.mxu0 0.0
    %4948 = vmatpush2.msra.mxu0 0.0
    %4949 = vmatprep.subr.mxu0 0.0
    %4950 = vmatpush2.msra.mxu0 0.0
    %4951 = vmatprep.subr.mxu0 0.0
    %4952 = vmatpush2.msra.mxu0 0.0
    %4953 = vmatprep.subr.mxu0 0.0
    %4954 = vmatpush2.msra.mxu0 0.0
    %4955 = vmatprep.mubr.f32.mxu0 0.0
    %4956 = vmatmul.mubr.f32.gmra.mxu0 %v4889
    %v4957 = vpop.f32.mrf.mxu0
    %v4958 = vadd.f32 0.0, %v4957
    %v4959 = vpop.f32.mrf.mxu0
    %4960 = vdwg.mxu0
    %4961 = vmatprep.subr.mxu0 0.0
    %4962 = vmatpush1.msra.mxu0 0.0
    %4963 = vmatprep.subr.mxu0 0.0
    %4964 = vmatpush1.msra.mxu0 0.0
    %4965 = vmatprep.subr.mxu0 0.0
    %4966 = vmatpush1.msra.mxu0 0.0
    %4967 = vmatprep.subr.mxu0 0.0
    %4968 = vmatpush1.msra.mxu0 0.0
    %4969 = vmatprep.subr.mxu0 0.0
    %4970 = vmatpush1.msra.mxu0 0.0
    %4971 = vmatprep.subr.mxu0 0.0
    %4972 = vmatpush1.msra.mxu0 0.0
    %4973 = vmatprep.subr.mxu0 0.0
    %4974 = vmatpush1.msra.mxu0 0.0
    %4975 = vmatprep.subr.mxu0 0.0
    %4976 = vmatpush1.msra.mxu0 0.0
    %4977 = vmatprep.subr.mxu0 0.0
    %4978 = vmatpush1.msra.mxu0 0.0
    %4979 = vmatprep.subr.mxu0 0.0
    %4980 = vmatpush1.msra.mxu0 0.0
    %4981 = vmatprep.subr.mxu0 0.0
    %4982 = vmatpush1.msra.mxu0 0.0
    %4983 = vmatprep.subr.mxu0 0.0
    %4984 = vmatpush1.msra.mxu0 0.0
    %4985 = vmatprep.subr.mxu0 0.0
    %4986 = vmatpush1.msra.mxu0 %v4863
    %4987 = vmatprep.subr.mxu0 0.0
    %4988 = vmatpush1.msra.mxu0 %v4862
    %4989 = vmatprep.subr.mxu0 0.0
    %4990 = vmatpush1.msra.mxu0 %v4861
    %4991 = vmatprep.subr.mxu0 0.0
    %4992 = vmatpush1.msra.mxu0 %v4860
    %4993 = vmatprep.subr.mxu0 0.0
    %4994 = vmatpush2.msra.mxu0 0.0
    %4995 = vmatprep.subr.mxu0 0.0
    %4996 = vmatpush2.msra.mxu0 0.0
    %4997 = vmatprep.subr.mxu0 0.0
    %4998 = vmatpush2.msra.mxu0 0.0
    %4999 = vmatprep.subr.mxu0 0.0
    %5000 = vmatpush2.msra.mxu0 0.0
    %5001 = vmatprep.subr.mxu0 0.0
    %5002 = vmatpush2.msra.mxu0 0.0
    %5003 = vmatprep.subr.mxu0 0.0
    %5004 = vmatpush2.msra.mxu0 0.0
    %5005 = vmatprep.subr.mxu0 0.0
    %5006 = vmatpush2.msra.mxu0 0.0
    %5007 = vmatprep.subr.mxu0 0.0
    %5008 = vmatpush2.msra.mxu0 0.0
    %5009 = vmatprep.subr.mxu0 0.0
    %5010 = vmatpush2.msra.mxu0 0.0
    %5011 = vmatprep.subr.mxu0 0.0
    %5012 = vmatpush2.msra.mxu0 0.0
    %5013 = vmatprep.subr.mxu0 0.0
    %5014 = vmatpush2.msra.mxu0 0.0
    %5015 = vmatprep.subr.mxu0 0.0
    %5016 = vmatpush2.msra.mxu0 0.0
    %5017 = vmatprep.subr.mxu0 0.0
    %5018 = vmatpush2.msra.mxu0 0.0
    %5019 = vmatprep.subr.mxu0 0.0
    %5020 = vmatpush2.msra.mxu0 0.0
    %5021 = vmatprep.subr.mxu0 0.0
    %5022 = vmatpush2.msra.mxu0 0.0
    %5023 = vmatprep.subr.mxu0 0.0
    %5024 = vmatpush2.msra.mxu0 0.0
    %5025 = vmatprep.mubr.f32.mxu0 0.0
    %5026 = vmatmul.mubr.f32.gmra.mxu0 %v4889
    %v5027 = vpop.f32.mrf.mxu0
    %v5028 = vadd.f32 0.0, %v5027
    %v5029 = vpop.f32.mrf.mxu0
    %5030 = vdwg.mxu0
    %5031 = vmatprep.subr.mxu0 0.0
    %5032 = vmatpush1.msra.mxu0 0.0
    %5033 = vmatprep.subr.mxu0 0.0
    %5034 = vmatpush1.msra.mxu0 0.0
    %5035 = vmatprep.subr.mxu0 0.0
    %5036 = vmatpush1.msra.mxu0 0.0
    %5037 = vmatprep.subr.mxu0 0.0
    %5038 = vmatpush1.msra.mxu0 0.0
    %5039 = vmatprep.subr.mxu0 0.0
    %5040 = vmatpush1.msra.mxu0 0.0
    %5041 = vmatprep.subr.mxu0 0.0
    %5042 = vmatpush1.msra.mxu0 0.0
    %5043 = vmatprep.subr.mxu0 0.0
    %5044 = vmatpush1.msra.mxu0 0.0
    %5045 = vmatprep.subr.mxu0 0.0
    %5046 = vmatpush1.msra.mxu0 0.0
    %5047 = vmatprep.subr.mxu0 0.0
    %5048 = vmatpush1.msra.mxu0 0.0
    %5049 = vmatprep.subr.mxu0 0.0
    %5050 = vmatpush1.msra.mxu0 0.0
    %5051 = vmatprep.subr.mxu0 0.0
    %5052 = vmatpush1.msra.mxu0 0.0
    %5053 = vmatprep.subr.mxu0 0.0
    %5054 = vmatpush1.msra.mxu0 0.0
    %5055 = vmatprep.subr.mxu0 0.0
    %5056 = vmatpush1.msra.mxu0 %v4867
    %5057 = vmatprep.subr.mxu0 0.0
    %5058 = vmatpush1.msra.mxu0 %v4866
    %5059 = vmatprep.subr.mxu0 0.0
    %5060 = vmatpush1.msra.mxu0 %v4865
    %5061 = vmatprep.subr.mxu0 0.0
    %5062 = vmatpush1.msra.mxu0 %v4864
    %5063 = vmatprep.subr.mxu0 0.0
    %5064 = vmatpush2.msra.mxu0 0.0
    %5065 = vmatprep.subr.mxu0 0.0
    %5066 = vmatpush2.msra.mxu0 0.0
    %5067 = vmatprep.subr.mxu0 0.0
    %5068 = vmatpush2.msra.mxu0 0.0
    %5069 = vmatprep.subr.mxu0 0.0
    %5070 = vmatpush2.msra.mxu0 0.0
    %5071 = vmatprep.subr.mxu0 0.0
    %5072 = vmatpush2.msra.mxu0 0.0
    %5073 = vmatprep.subr.mxu0 0.0
    %5074 = vmatpush2.msra.mxu0 0.0
    %5075 = vmatprep.subr.mxu0 0.0
    %5076 = vmatpush2.msra.mxu0 0.0
    %5077 = vmatprep.subr.mxu0 0.0
    %5078 = vmatpush2.msra.mxu0 0.0
    %5079 = vmatprep.subr.mxu0 0.0
    %5080 = vmatpush2.msra.mxu0 0.0
    %5081 = vmatprep.subr.mxu0 0.0
    %5082 = vmatpush2.msra.mxu0 0.0
    %5083 = vmatprep.subr.mxu0 0.0
    %5084 = vmatpush2.msra.mxu0 0.0
    %5085 = vmatprep.subr.mxu0 0.0
    %5086 = vmatpush2.msra.mxu0 0.0
    %5087 = vmatprep.subr.mxu0 0.0
    %5088 = vmatpush2.msra.mxu0 0.0
    %5089 = vmatprep.subr.mxu0 0.0
    %5090 = vmatpush2.msra.mxu0 0.0
    %5091 = vmatprep.subr.mxu0 0.0
    %5092 = vmatpush2.msra.mxu0 0.0
    %5093 = vmatprep.subr.mxu0 0.0
    %5094 = vmatpush2.msra.mxu0 0.0
    %5095 = vmatprep.mubr.f32.mxu0 0.0
    %5096 = vmatmul.mubr.f32.gmra.mxu0 %v4889
    %v5097 = vpop.f32.mrf.mxu0
    %v5098 = vadd.f32 0.0, %v5097
    %v5099 = vpop.f32.mrf.mxu0
    %5100 = vdwg.mxu0
    %5101 = vmatprep.subr.mxu0 0.0
    %5102 = vmatpush1.msra.mxu0 0.0
    %5103 = vmatprep.subr.mxu0 0.0
    %5104 = vmatpush1.msra.mxu0 0.0
    %5105 = vmatprep.subr.mxu0 0.0
    %5106 = vmatpush1.msra.mxu0 0.0
    %5107 = vmatprep.subr.mxu0 0.0
    %5108 = vmatpush1.msra.mxu0 0.0
    %5109 = vmatprep.subr.mxu0 0.0
    %5110 = vmatpush1.msra.mxu0 0.0
    %5111 = vmatprep.subr.mxu0 0.0
    %5112 = vmatpush1.msra.mxu0 0.0
    %5113 = vmatprep.subr.mxu0 0.0
    %5114 = vmatpush1.msra.mxu0 0.0
    %5115 = vmatprep.subr.mxu0 0.0
    %5116 = vmatpush1.msra.mxu0 0.0
    %5117 = vmatprep.subr.mxu0 0.0
    %5118 = vmatpush1.msra.mxu0 0.0
    %5119 = vmatprep.subr.mxu0 0.0
    %5120 = vmatpush1.msra.mxu0 0.0
    %5121 = vmatprep.subr.mxu0 0.0
    %5122 = vmatpush1.msra.mxu0 0.0
    %5123 = vmatprep.subr.mxu0 0.0
    %5124 = vmatpush1.msra.mxu0 0.0
    %5125 = vmatprep.subr.mxu0 0.0
    %5126 = vmatpush1.msra.mxu0 %v4871
    %5127 = vmatprep.subr.mxu0 0.0
    %5128 = vmatpush1.msra.mxu0 %v4870
    %5129 = vmatprep.subr.mxu0 0.0
    %5130 = vmatpush1.msra.mxu0 %v4869
    %5131 = vmatprep.subr.mxu0 0.0
    %5132 = vmatpush1.msra.mxu0 %v4868
    %5133 = vmatprep.subr.mxu0 0.0
    %5134 = vmatpush2.msra.mxu0 0.0
    %5135 = vmatprep.subr.mxu0 0.0
    %5136 = vmatpush2.msra.mxu0 0.0
    %5137 = vmatprep.subr.mxu0 0.0
    %5138 = vmatpush2.msra.mxu0 0.0
    %5139 = vmatprep.subr.mxu0 0.0
    %5140 = vmatpush2.msra.mxu0 0.0
    %5141 = vmatprep.subr.mxu0 0.0
    %5142 = vmatpush2.msra.mxu0 0.0
    %5143 = vmatprep.subr.mxu0 0.0
    %5144 = vmatpush2.msra.mxu0 0.0
    %5145 = vmatprep.subr.mxu0 0.0
    %5146 = vmatpush2.msra.mxu0 0.0
    %5147 = vmatprep.subr.mxu0 0.0
    %5148 = vmatpush2.msra.mxu0 0.0
    %5149 = vmatprep.subr.mxu0 0.0
    %5150 = vmatpush2.msra.mxu0 0.0
    %5151 = vmatprep.subr.mxu0 0.0
    %5152 = vmatpush2.msra.mxu0 0.0
    %5153 = vmatprep.subr.mxu0 0.0
    %5154 = vmatpush2.msra.mxu0 0.0
    %5155 = vmatprep.subr.mxu0 0.0
    %5156 = vmatpush2.msra.mxu0 0.0
    %5157 = vmatprep.subr.mxu0 0.0
    %5158 = vmatpush2.msra.mxu0 0.0
    %5159 = vmatprep.subr.mxu0 0.0
    %5160 = vmatpush2.msra.mxu0 0.0
    %5161 = vmatprep.subr.mxu0 0.0
    %5162 = vmatpush2.msra.mxu0 0.0
    %5163 = vmatprep.subr.mxu0 0.0
    %5164 = vmatpush2.msra.mxu0 0.0
    %5165 = vmatprep.mubr.f32.mxu0 0.0
    %5166 = vmatmul.mubr.f32.gmra.mxu0 %v4889
    %v5167 = vpop.f32.mrf.mxu0
    %v5168 = vadd.f32 0.0, %v5167
    %v5169 = vpop.f32.mrf.mxu0
    %5170 = vdwg.mxu0
    %v5172 = vsel %vm791, %v4854, 0
    %5174 = vmatprep.subr.mxu0 0.0
    %5175 = vmatpush1.msra.mxu0 0.0
    %5176 = vmatprep.subr.mxu0 0.0
    %5177 = vmatpush1.msra.mxu0 0.0
    %5178 = vmatprep.subr.mxu0 0.0
    %5179 = vmatpush1.msra.mxu0 0.0
    %5180 = vmatprep.subr.mxu0 0.0
    %5181 = vmatpush1.msra.mxu0 0.0
    %5182 = vmatprep.subr.mxu0 0.0
    %5183 = vmatpush1.msra.mxu0 0.0
    %5184 = vmatprep.subr.mxu0 0.0
    %5185 = vmatpush1.msra.mxu0 0.0
    %5186 = vmatprep.subr.mxu0 0.0
    %5187 = vmatpush1.msra.mxu0 0.0
    %5188 = vmatprep.subr.mxu0 0.0
    %5189 = vmatpush1.msra.mxu0 0.0
    %5190 = vmatprep.subr.mxu0 0.0
    %5191 = vmatpush1.msra.mxu0 0.0
    %5192 = vmatprep.subr.mxu0 0.0
    %5193 = vmatpush1.msra.mxu0 0.0
    %5194 = vmatprep.subr.mxu0 0.0
    %5195 = vmatpush1.msra.mxu0 0.0
    %5196 = vmatprep.subr.mxu0 0.0
    %5197 = vmatpush1.msra.mxu0 0.0
    %5198 = vmatprep.subr.mxu0 0.0
    %5199 = vmatpush1.msra.mxu0 %v4875
    %5200 = vmatprep.subr.mxu0 0.0
    %5201 = vmatpush1.msra.mxu0 %v4874
    %5202 = vmatprep.subr.mxu0 0.0
    %5203 = vmatpush1.msra.mxu0 %v4873
    %5204 = vmatprep.subr.mxu0 0.0
    %5205 = vmatpush1.msra.mxu0 %v4872
    %5206 = vmatprep.subr.mxu0 0.0
    %5207 = vmatpush2.msra.mxu0 0.0
    %5208 = vmatprep.subr.mxu0 0.0
    %5209 = vmatpush2.msra.mxu0 0.0
    %5210 = vmatprep.subr.mxu0 0.0
    %5211 = vmatpush2.msra.mxu0 0.0
    %5212 = vmatprep.subr.mxu0 0.0
    %5213 = vmatpush2.msra.mxu0 0.0
    %5214 = vmatprep.subr.mxu0 0.0
    %5215 = vmatpush2.msra.mxu0 0.0
    %5216 = vmatprep.subr.mxu0 0.0
    %5217 = vmatpush2.msra.mxu0 0.0
    %5218 = vmatprep.subr.mxu0 0.0
    %5219 = vmatpush2.msra.mxu0 0.0
    %5220 = vmatprep.subr.mxu0 0.0
    %5221 = vmatpush2.msra.mxu0 0.0
    %5222 = vmatprep.subr.mxu0 0.0
    %5223 = vmatpush2.msra.mxu0 0.0
    %5224 = vmatprep.subr.mxu0 0.0
    %5225 = vmatpush2.msra.mxu0 0.0
    %5226 = vmatprep.subr.mxu0 0.0
    %5227 = vmatpush2.msra.mxu0 0.0
    %5228 = vmatprep.subr.mxu0 0.0
    %5229 = vmatpush2.msra.mxu0 0.0
    %5230 = vmatprep.subr.mxu0 0.0
    %5231 = vmatpush2.msra.mxu0 0.0
    %5232 = vmatprep.subr.mxu0 0.0
    %5233 = vmatpush2.msra.mxu0 0.0
    %5234 = vmatprep.subr.mxu0 0.0
    %5235 = vmatpush2.msra.mxu0 0.0
    %5236 = vmatprep.subr.mxu0 0.0
    %5237 = vmatpush2.msra.mxu0 0.0
    %5238 = vmatprep.mubr.f32.mxu0 0.0
    %5239 = vmatmul.mubr.f32.gmra.mxu0 %v5172
    %v5240 = vpop.f32.mrf.mxu0
    %v5241 = vadd.f32 0.0, %v5240
    %v5242 = vpop.f32.mrf.mxu0
    %5243 = vdwg.mxu0
    %5244 = vmatprep.subr.mxu0 0.0
    %5245 = vmatpush1.msra.mxu0 0.0
    %5246 = vmatprep.subr.mxu0 0.0
    %5247 = vmatpush1.msra.mxu0 0.0
    %5248 = vmatprep.subr.mxu0 0.0
    %5249 = vmatpush1.msra.mxu0 0.0
    %5250 = vmatprep.subr.mxu0 0.0
    %5251 = vmatpush1.msra.mxu0 0.0
    %5252 = vmatprep.subr.mxu0 0.0
    %5253 = vmatpush1.msra.mxu0 0.0
    %5254 = vmatprep.subr.mxu0 0.0
    %5255 = vmatpush1.msra.mxu0 0.0
    %5256 = vmatprep.subr.mxu0 0.0
    %5257 = vmatpush1.msra.mxu0 0.0
    %5258 = vmatprep.subr.mxu0 0.0
    %5259 = vmatpush1.msra.mxu0 0.0
    %5260 = vmatprep.subr.mxu0 0.0
    %5261 = vmatpush1.msra.mxu0 0.0
    %5262 = vmatprep.subr.mxu0 0.0
    %5263 = vmatpush1.msra.mxu0 0.0
    %5264 = vmatprep.subr.mxu0 0.0
    %5265 = vmatpush1.msra.mxu0 0.0
    %5266 = vmatprep.subr.mxu0 0.0
    %5267 = vmatpush1.msra.mxu0 0.0
    %5268 = vmatprep.subr.mxu0 0.0
    %5269 = vmatpush1.msra.mxu0 %v4879
    %5270 = vmatprep.subr.mxu0 0.0
    %5271 = vmatpush1.msra.mxu0 %v4878
    %5272 = vmatprep.subr.mxu0 0.0
    %5273 = vmatpush1.msra.mxu0 %v4877
    %5274 = vmatprep.subr.mxu0 0.0
    %5275 = vmatpush1.msra.mxu0 %v4876
    %5276 = vmatprep.subr.mxu0 0.0
    %5277 = vmatpush2.msra.mxu0 0.0
    %5278 = vmatprep.subr.mxu0 0.0
    %5279 = vmatpush2.msra.mxu0 0.0
    %5280 = vmatprep.subr.mxu0 0.0
    %5281 = vmatpush2.msra.mxu0 0.0
    %5282 = vmatprep.subr.mxu0 0.0
    %5283 = vmatpush2.msra.mxu0 0.0
    %5284 = vmatprep.subr.mxu0 0.0
    %5285 = vmatpush2.msra.mxu0 0.0
    %5286 = vmatprep.subr.mxu0 0.0
    %5287 = vmatpush2.msra.mxu0 0.0
    %5288 = vmatprep.subr.mxu0 0.0
    %5289 = vmatpush2.msra.mxu0 0.0
    %5290 = vmatprep.subr.mxu0 0.0
    %5291 = vmatpush2.msra.mxu0 0.0
    %5292 = vmatprep.subr.mxu0 0.0
    %5293 = vmatpush2.msra.mxu0 0.0
    %5294 = vmatprep.subr.mxu0 0.0
    %5295 = vmatpush2.msra.mxu0 0.0
    %5296 = vmatprep.subr.mxu0 0.0
    %5297 = vmatpush2.msra.mxu0 0.0
    %5298 = vmatprep.subr.mxu0 0.0
    %5299 = vmatpush2.msra.mxu0 0.0
    %5300 = vmatprep.subr.mxu0 0.0
    %5301 = vmatpush2.msra.mxu0 0.0
    %5302 = vmatprep.subr.mxu0 0.0
    %5303 = vmatpush2.msra.mxu0 0.0
    %5304 = vmatprep.subr.mxu0 0.0
    %5305 = vmatpush2.msra.mxu0 0.0
    %5306 = vmatprep.subr.mxu0 0.0
    %5307 = vmatpush2.msra.mxu0 0.0
    %5308 = vmatprep.mubr.f32.mxu0 0.0
    %5309 = vmatmul.mubr.f32.gmra.mxu0 %v5172
    %v5310 = vpop.f32.mrf.mxu0
    %v5311 = vadd.f32 0.0, %v5310
    %v5312 = vpop.f32.mrf.mxu0
    %5313 = vdwg.mxu0
    %5314 = vmatprep.subr.mxu0 0.0
    %5315 = vmatpush1.msra.mxu0 0.0
    %5316 = vmatprep.subr.mxu0 0.0
    %5317 = vmatpush1.msra.mxu0 0.0
    %5318 = vmatprep.subr.mxu0 0.0
    %5319 = vmatpush1.msra.mxu0 0.0
    %5320 = vmatprep.subr.mxu0 0.0
    %5321 = vmatpush1.msra.mxu0 0.0
    %5322 = vmatprep.subr.mxu0 0.0
    %5323 = vmatpush1.msra.mxu0 0.0
    %5324 = vmatprep.subr.mxu0 0.0
    %5325 = vmatpush1.msra.mxu0 0.0
    %5326 = vmatprep.subr.mxu0 0.0
    %5327 = vmatpush1.msra.mxu0 0.0
    %5328 = vmatprep.subr.mxu0 0.0
    %5329 = vmatpush1.msra.mxu0 0.0
    %5330 = vmatprep.subr.mxu0 0.0
    %5331 = vmatpush1.msra.mxu0 0.0
    %5332 = vmatprep.subr.mxu0 0.0
    %5333 = vmatpush1.msra.mxu0 0.0
    %5334 = vmatprep.subr.mxu0 0.0
    %5335 = vmatpush1.msra.mxu0 0.0
    %5336 = vmatprep.subr.mxu0 0.0
    %5337 = vmatpush1.msra.mxu0 0.0
    %5338 = vmatprep.subr.mxu0 0.0
    %5339 = vmatpush1.msra.mxu0 %v4883
    %5340 = vmatprep.subr.mxu0 0.0
    %5341 = vmatpush1.msra.mxu0 %v4882
    %5342 = vmatprep.subr.mxu0 0.0
    %5343 = vmatpush1.msra.mxu0 %v4881
    %5344 = vmatprep.subr.mxu0 0.0
    %5345 = vmatpush1.msra.mxu0 %v4880
    %5346 = vmatprep.subr.mxu0 0.0
    %5347 = vmatpush2.msra.mxu0 0.0
    %5348 = vmatprep.subr.mxu0 0.0
    %5349 = vmatpush2.msra.mxu0 0.0
    %5350 = vmatprep.subr.mxu0 0.0
    %5351 = vmatpush2.msra.mxu0 0.0
    %5352 = vmatprep.subr.mxu0 0.0
    %5353 = vmatpush2.msra.mxu0 0.0
    %5354 = vmatprep.subr.mxu0 0.0
    %5355 = vmatpush2.msra.mxu0 0.0
    %5356 = vmatprep.subr.mxu0 0.0
    %5357 = vmatpush2.msra.mxu0 0.0
    %5358 = vmatprep.subr.mxu0 0.0
    %5359 = vmatpush2.msra.mxu0 0.0
    %5360 = vmatprep.subr.mxu0 0.0
    %5361 = vmatpush2.msra.mxu0 0.0
    %5362 = vmatprep.subr.mxu0 0.0
    %5363 = vmatpush2.msra.mxu0 0.0
    %5364 = vmatprep.subr.mxu0 0.0
    %5365 = vmatpush2.msra.mxu0 0.0
    %5366 = vmatprep.subr.mxu0 0.0
    %5367 = vmatpush2.msra.mxu0 0.0
    %5368 = vmatprep.subr.mxu0 0.0
    %5369 = vmatpush2.msra.mxu0 0.0
    %5370 = vmatprep.subr.mxu0 0.0
    %5371 = vmatpush2.msra.mxu0 0.0
    %5372 = vmatprep.subr.mxu0 0.0
    %5373 = vmatpush2.msra.mxu0 0.0
    %5374 = vmatprep.subr.mxu0 0.0
    %5375 = vmatpush2.msra.mxu0 0.0
    %5376 = vmatprep.subr.mxu0 0.0
    %5377 = vmatpush2.msra.mxu0 0.0
    %5378 = vmatprep.mubr.f32.mxu0 0.0
    %5379 = vmatmul.mubr.f32.gmra.mxu0 %v5172
    %v5380 = vpop.f32.mrf.mxu0
    %v5381 = vadd.f32 0.0, %v5380
    %v5382 = vpop.f32.mrf.mxu0
    %5383 = vdwg.mxu0
    %5384 = vmatprep.subr.mxu0 0.0
    %5385 = vmatpush1.msra.mxu0 0.0
    %5386 = vmatprep.subr.mxu0 0.0
    %5387 = vmatpush1.msra.mxu0 0.0
    %5388 = vmatprep.subr.mxu0 0.0
    %5389 = vmatpush1.msra.mxu0 0.0
    %5390 = vmatprep.subr.mxu0 0.0
    %5391 = vmatpush1.msra.mxu0 0.0
    %5392 = vmatprep.subr.mxu0 0.0
    %5393 = vmatpush1.msra.mxu0 0.0
    %5394 = vmatprep.subr.mxu0 0.0
    %5395 = vmatpush1.msra.mxu0 0.0
    %5396 = vmatprep.subr.mxu0 0.0
    %5397 = vmatpush1.msra.mxu0 0.0
    %5398 = vmatprep.subr.mxu0 0.0
    %5399 = vmatpush1.msra.mxu0 0.0
    %5400 = vmatprep.subr.mxu0 0.0
    %5401 = vmatpush1.msra.mxu0 0.0
    %5402 = vmatprep.subr.mxu0 0.0
    %5403 = vmatpush1.msra.mxu0 0.0
    %5404 = vmatprep.subr.mxu0 0.0
    %5405 = vmatpush1.msra.mxu0 0.0
    %5406 = vmatprep.subr.mxu0 0.0
    %5407 = vmatpush1.msra.mxu0 0.0
    %5408 = vmatprep.subr.mxu0 0.0
    %5409 = vmatpush1.msra.mxu0 %v4887
    %5410 = vmatprep.subr.mxu0 0.0
    %5411 = vmatpush1.msra.mxu0 %v4886
    %5412 = vmatprep.subr.mxu0 0.0
    %5413 = vmatpush1.msra.mxu0 %v4885
    %5414 = vmatprep.subr.mxu0 0.0
    %5415 = vmatpush1.msra.mxu0 %v4884
    %5416 = vmatprep.subr.mxu0 0.0
    %5417 = vmatpush2.msra.mxu0 0.0
    %5418 = vmatprep.subr.mxu0 0.0
    %5419 = vmatpush2.msra.mxu0 0.0
    %5420 = vmatprep.subr.mxu0 0.0
    %5421 = vmatpush2.msra.mxu0 0.0
    %5422 = vmatprep.subr.mxu0 0.0
    %5423 = vmatpush2.msra.mxu0 0.0
    %5424 = vmatprep.subr.mxu0 0.0
    %5425 = vmatpush2.msra.mxu0 0.0
    %5426 = vmatprep.subr.mxu0 0.0
    %5427 = vmatpush2.msra.mxu0 0.0
    %5428 = vmatprep.subr.mxu0 0.0
    %5429 = vmatpush2.msra.mxu0 0.0
    %5430 = vmatprep.subr.mxu0 0.0
    %5431 = vmatpush2.msra.mxu0 0.0
    %5432 = vmatprep.subr.mxu0 0.0
    %5433 = vmatpush2.msra.mxu0 0.0
    %5434 = vmatprep.subr.mxu0 0.0
    %5435 = vmatpush2.msra.mxu0 0.0
    %5436 = vmatprep.subr.mxu0 0.0
    %5437 = vmatpush2.msra.mxu0 0.0
    %5438 = vmatprep.subr.mxu0 0.0
    %5439 = vmatpush2.msra.mxu0 0.0
    %5440 = vmatprep.subr.mxu0 0.0
    %5441 = vmatpush2.msra.mxu0 0.0
    %5442 = vmatprep.subr.mxu0 0.0
    %5443 = vmatpush2.msra.mxu0 0.0
    %5444 = vmatprep.subr.mxu0 0.0
    %5445 = vmatpush2.msra.mxu0 0.0
    %5446 = vmatprep.subr.mxu0 0.0
    %5447 = vmatpush2.msra.mxu0 0.0
    %5448 = vmatprep.mubr.f32.mxu0 0.0
    %5449 = vmatmul.mubr.f32.gmra.mxu0 %v5172
    %v5450 = vpop.f32.mrf.mxu0
    %v5451 = vadd.f32 0.0, %v5450
    %v5452 = vpop.f32.mrf.mxu0
    %5453 = vdwg.mxu0
    %s5454 = scalar_lea.vmem %s6, 256
    %v5455 = vld [vmem:[%s5454] sm:$0xff]
    %v5456 = vld [vmem:[%s5454 + $0x8] sm:$0xff]
    %v5457 = vld [vmem:[%s5454 + $0x10] sm:$0xff]
    %v5458 = vld [vmem:[%s5454 + $0x18] sm:$0xff]
    %v5459 = vld [vmem:[%s5454 + $0x20] sm:$0xff]
    %v5460 = vld [vmem:[%s5454 + $0x28] sm:$0xff]
    %v5461 = vld [vmem:[%s5454 + $0x30] sm:$0xff]
    %v5462 = vld [vmem:[%s5454 + $0x38] sm:$0xff]
    %v5463 = vld [vmem:[%s5454 + $0x40] sm:$0xff]
    %v5464 = vld [vmem:[%s5454 + $0x48] sm:$0xff]
    %v5465 = vld [vmem:[%s5454 + $0x50] sm:$0xff]
    %v5466 = vld [vmem:[%s5454 + $0x58] sm:$0xff]
    %v5467 = vld [vmem:[%s5454 + $0x60] sm:$0xff]
    %v5468 = vld [vmem:[%s5454 + $0x68] sm:$0xff]
    %v5469 = vld [vmem:[%s5454 + $0x70] sm:$0xff]
    %v5470 = vld [vmem:[%s5454 + $0x78] sm:$0xff]
    %v5471 = vld [vmem:[%s5454 + $0x80] sm:$0xff]
    %v5472 = vld [vmem:[%s5454 + $0x88] sm:$0xff]
    %v5473 = vld [vmem:[%s5454 + $0x90] sm:$0xff]
    %v5474 = vld [vmem:[%s5454 + $0x98] sm:$0xff]
    %v5475 = vld [vmem:[%s5454 + $0xa0] sm:$0xff]
    %v5476 = vld [vmem:[%s5454 + $0xa8] sm:$0xff]
    %v5477 = vld [vmem:[%s5454 + $0xb0] sm:$0xff]
    %v5478 = vld [vmem:[%s5454 + $0xb8] sm:$0xff]
    %v5479 = vld [vmem:[%s5454 + $0xc0] sm:$0xff]
    %v5480 = vld [vmem:[%s5454 + $0xc8] sm:$0xff]
    %v5481 = vld [vmem:[%s5454 + $0xd0] sm:$0xff]
    %v5482 = vld [vmem:[%s5454 + $0xd8] sm:$0xff]
    %v5483 = vld [vmem:[%s5454 + $0xe0] sm:$0xff]
    %v5484 = vld [vmem:[%s5454 + $0xe8] sm:$0xff]
    %v5485 = vld [vmem:[%s5454 + $0xf0] sm:$0xff]
    %v5486 = vld [vmem:[%s5454 + $0xf8] sm:$0xff]
    %5487 = vmatprep.subr.mxu0 0.0
    %5488 = vmatpush1.msra.mxu0 0.0
    %5489 = vmatprep.subr.mxu0 0.0
    %5490 = vmatpush1.msra.mxu0 0.0
    %5491 = vmatprep.subr.mxu0 0.0
    %5492 = vmatpush1.msra.mxu0 0.0
    %5493 = vmatprep.subr.mxu0 0.0
    %5494 = vmatpush1.msra.mxu0 0.0
    %5495 = vmatprep.subr.mxu0 0.0
    %5496 = vmatpush1.msra.mxu0 0.0
    %5497 = vmatprep.subr.mxu0 0.0
    %5498 = vmatpush1.msra.mxu0 0.0
    %5499 = vmatprep.subr.mxu0 0.0
    %5500 = vmatpush1.msra.mxu0 0.0
    %5501 = vmatprep.subr.mxu0 0.0
    %5502 = vmatpush1.msra.mxu0 0.0
    %5503 = vmatprep.subr.mxu0 0.0
    %5504 = vmatpush1.msra.mxu0 0.0
    %5505 = vmatprep.subr.mxu0 0.0
    %5506 = vmatpush1.msra.mxu0 0.0
    %5507 = vmatprep.subr.mxu0 0.0
    %5508 = vmatpush1.msra.mxu0 0.0
    %5509 = vmatprep.subr.mxu0 0.0
    %5510 = vmatpush1.msra.mxu0 0.0
    %5511 = vmatprep.subr.mxu0 0.0
    %5512 = vmatpush1.msra.mxu0 %v5458
    %5513 = vmatprep.subr.mxu0 0.0
    %5514 = vmatpush1.msra.mxu0 %v5457
    %5515 = vmatprep.subr.mxu0 0.0
    %5516 = vmatpush1.msra.mxu0 %v5456
    %5517 = vmatprep.subr.mxu0 0.0
    %5518 = vmatpush1.msra.mxu0 %v5455
    %5519 = vmatprep.subr.mxu0 0.0
    %5520 = vmatpush2.msra.mxu0 0.0
    %5521 = vmatprep.subr.mxu0 0.0
    %5522 = vmatpush2.msra.mxu0 0.0
    %5523 = vmatprep.subr.mxu0 0.0
    %5524 = vmatpush2.msra.mxu0 0.0
    %5525 = vmatprep.subr.mxu0 0.0
    %5526 = vmatpush2.msra.mxu0 0.0
    %5527 = vmatprep.subr.mxu0 0.0
    %5528 = vmatpush2.msra.mxu0 0.0
    %5529 = vmatprep.subr.mxu0 0.0
    %5530 = vmatpush2.msra.mxu0 0.0
    %5531 = vmatprep.subr.mxu0 0.0
    %5532 = vmatpush2.msra.mxu0 0.0
    %5533 = vmatprep.subr.mxu0 0.0
    %5534 = vmatpush2.msra.mxu0 0.0
    %5535 = vmatprep.subr.mxu0 0.0
    %5536 = vmatpush2.msra.mxu0 0.0
    %5537 = vmatprep.subr.mxu0 0.0
    %5538 = vmatpush2.msra.mxu0 0.0
    %5539 = vmatprep.subr.mxu0 0.0
    %5540 = vmatpush2.msra.mxu0 0.0
    %5541 = vmatprep.subr.mxu0 0.0
    %5542 = vmatpush2.msra.mxu0 0.0
    %5543 = vmatprep.subr.mxu0 0.0
    %5544 = vmatpush2.msra.mxu0 0.0
    %5545 = vmatprep.subr.mxu0 0.0
    %5546 = vmatpush2.msra.mxu0 0.0
    %5547 = vmatprep.subr.mxu0 0.0
    %5548 = vmatpush2.msra.mxu0 0.0
    %5549 = vmatprep.subr.mxu0 0.0
    %5550 = vmatpush2.msra.mxu0 0.0
    %5551 = vmatprep.mubr.f32.mxu0 0.0
    %5552 = vmatmul.mubr.f32.gmra.mxu0 %v4889
    %v5553 = vpop.f32.mrf.mxu0
    %v5554 = vadd.f32 0.0, %v5553
    %v5555 = vpop.f32.mrf.mxu0
    %5556 = vdwg.mxu0
    %5557 = vmatprep.subr.mxu0 0.0
    %5558 = vmatpush1.msra.mxu0 0.0
    %5559 = vmatprep.subr.mxu0 0.0
    %5560 = vmatpush1.msra.mxu0 0.0
    %5561 = vmatprep.subr.mxu0 0.0
    %5562 = vmatpush1.msra.mxu0 0.0
    %5563 = vmatprep.subr.mxu0 0.0
    %5564 = vmatpush1.msra.mxu0 0.0
    %5565 = vmatprep.subr.mxu0 0.0
    %5566 = vmatpush1.msra.mxu0 0.0
    %5567 = vmatprep.subr.mxu0 0.0
    %5568 = vmatpush1.msra.mxu0 0.0
    %5569 = vmatprep.subr.mxu0 0.0
    %5570 = vmatpush1.msra.mxu0 0.0
    %5571 = vmatprep.subr.mxu0 0.0
    %5572 = vmatpush1.msra.mxu0 0.0
    %5573 = vmatprep.subr.mxu0 0.0
    %5574 = vmatpush1.msra.mxu0 0.0
    %5575 = vmatprep.subr.mxu0 0.0
    %5576 = vmatpush1.msra.mxu0 0.0
    %5577 = vmatprep.subr.mxu0 0.0
    %5578 = vmatpush1.msra.mxu0 0.0
    %5579 = vmatprep.subr.mxu0 0.0
    %5580 = vmatpush1.msra.mxu0 0.0
    %5581 = vmatprep.subr.mxu0 0.0
    %5582 = vmatpush1.msra.mxu0 %v5462
    %5583 = vmatprep.subr.mxu0 0.0
    %5584 = vmatpush1.msra.mxu0 %v5461
    %5585 = vmatprep.subr.mxu0 0.0
    %5586 = vmatpush1.msra.mxu0 %v5460
    %5587 = vmatprep.subr.mxu0 0.0
    %5588 = vmatpush1.msra.mxu0 %v5459
    %5589 = vmatprep.subr.mxu0 0.0
    %5590 = vmatpush2.msra.mxu0 0.0
    %5591 = vmatprep.subr.mxu0 0.0
    %5592 = vmatpush2.msra.mxu0 0.0
    %5593 = vmatprep.subr.mxu0 0.0
    %5594 = vmatpush2.msra.mxu0 0.0
    %5595 = vmatprep.subr.mxu0 0.0
    %5596 = vmatpush2.msra.mxu0 0.0
    %5597 = vmatprep.subr.mxu0 0.0
    %5598 = vmatpush2.msra.mxu0 0.0
    %5599 = vmatprep.subr.mxu0 0.0
    %5600 = vmatpush2.msra.mxu0 0.0
    %5601 = vmatprep.subr.mxu0 0.0
    %5602 = vmatpush2.msra.mxu0 0.0
    %5603 = vmatprep.subr.mxu0 0.0
    %5604 = vmatpush2.msra.mxu0 0.0
    %5605 = vmatprep.subr.mxu0 0.0
    %5606 = vmatpush2.msra.mxu0 0.0
    %5607 = vmatprep.subr.mxu0 0.0
    %5608 = vmatpush2.msra.mxu0 0.0
    %5609 = vmatprep.subr.mxu0 0.0
    %5610 = vmatpush2.msra.mxu0 0.0
    %5611 = vmatprep.subr.mxu0 0.0
    %5612 = vmatpush2.msra.mxu0 0.0
    %5613 = vmatprep.subr.mxu0 0.0
    %5614 = vmatpush2.msra.mxu0 0.0
    %5615 = vmatprep.subr.mxu0 0.0
    %5616 = vmatpush2.msra.mxu0 0.0
    %5617 = vmatprep.subr.mxu0 0.0
    %5618 = vmatpush2.msra.mxu0 0.0
    %5619 = vmatprep.subr.mxu0 0.0
    %5620 = vmatpush2.msra.mxu0 0.0
    %5621 = vmatprep.mubr.f32.mxu0 0.0
    %5622 = vmatmul.mubr.f32.gmra.mxu0 %v4889
    %v5623 = vpop.f32.mrf.mxu0
    %v5624 = vadd.f32 0.0, %v5623
    %v5625 = vpop.f32.mrf.mxu0
    %5626 = vdwg.mxu0
    %5627 = vmatprep.subr.mxu0 0.0
    %5628 = vmatpush1.msra.mxu0 0.0
    %5629 = vmatprep.subr.mxu0 0.0
    %5630 = vmatpush1.msra.mxu0 0.0
    %5631 = vmatprep.subr.mxu0 0.0
    %5632 = vmatpush1.msra.mxu0 0.0
    %5633 = vmatprep.subr.mxu0 0.0
    %5634 = vmatpush1.msra.mxu0 0.0
    %5635 = vmatprep.subr.mxu0 0.0
    %5636 = vmatpush1.msra.mxu0 0.0
    %5637 = vmatprep.subr.mxu0 0.0
    %5638 = vmatpush1.msra.mxu0 0.0
    %5639 = vmatprep.subr.mxu0 0.0
    %5640 = vmatpush1.msra.mxu0 0.0
    %5641 = vmatprep.subr.mxu0 0.0
    %5642 = vmatpush1.msra.mxu0 0.0
    %5643 = vmatprep.subr.mxu0 0.0
    %5644 = vmatpush1.msra.mxu0 0.0
    %5645 = vmatprep.subr.mxu0 0.0
    %5646 = vmatpush1.msra.mxu0 0.0
    %5647 = vmatprep.subr.mxu0 0.0
    %5648 = vmatpush1.msra.mxu0 0.0
    %5649 = vmatprep.subr.mxu0 0.0
    %5650 = vmatpush1.msra.mxu0 0.0
    %5651 = vmatprep.subr.mxu0 0.0
    %5652 = vmatpush1.msra.mxu0 %v5466
    %5653 = vmatprep.subr.mxu0 0.0
    %5654 = vmatpush1.msra.mxu0 %v5465
    %5655 = vmatprep.subr.mxu0 0.0
    %5656 = vmatpush1.msra.mxu0 %v5464
    %5657 = vmatprep.subr.mxu0 0.0
    %5658 = vmatpush1.msra.mxu0 %v5463
    %5659 = vmatprep.subr.mxu0 0.0
    %5660 = vmatpush2.msra.mxu0 0.0
    %5661 = vmatprep.subr.mxu0 0.0
    %5662 = vmatpush2.msra.mxu0 0.0
    %5663 = vmatprep.subr.mxu0 0.0
    %5664 = vmatpush2.msra.mxu0 0.0
    %5665 = vmatprep.subr.mxu0 0.0
    %5666 = vmatpush2.msra.mxu0 0.0
    %5667 = vmatprep.subr.mxu0 0.0
    %5668 = vmatpush2.msra.mxu0 0.0
    %5669 = vmatprep.subr.mxu0 0.0
    %5670 = vmatpush2.msra.mxu0 0.0
    %5671 = vmatprep.subr.mxu0 0.0
    %5672 = vmatpush2.msra.mxu0 0.0
    %5673 = vmatprep.subr.mxu0 0.0
    %5674 = vmatpush2.msra.mxu0 0.0
    %5675 = vmatprep.subr.mxu0 0.0
    %5676 = vmatpush2.msra.mxu0 0.0
    %5677 = vmatprep.subr.mxu0 0.0
    %5678 = vmatpush2.msra.mxu0 0.0
    %5679 = vmatprep.subr.mxu0 0.0
    %5680 = vmatpush2.msra.mxu0 0.0
    %5681 = vmatprep.subr.mxu0 0.0
    %5682 = vmatpush2.msra.mxu0 0.0
    %5683 = vmatprep.subr.mxu0 0.0
    %5684 = vmatpush2.msra.mxu0 0.0
    %5685 = vmatprep.subr.mxu0 0.0
    %5686 = vmatpush2.msra.mxu0 0.0
    %5687 = vmatprep.subr.mxu0 0.0
    %5688 = vmatpush2.msra.mxu0 0.0
    %5689 = vmatprep.subr.mxu0 0.0
    %5690 = vmatpush2.msra.mxu0 0.0
    %5691 = vmatprep.mubr.f32.mxu0 0.0
    %5692 = vmatmul.mubr.f32.gmra.mxu0 %v4889
    %v5693 = vpop.f32.mrf.mxu0
    %v5694 = vadd.f32 0.0, %v5693
    %v5695 = vpop.f32.mrf.mxu0
    %5696 = vdwg.mxu0
    %5697 = vmatprep.subr.mxu0 0.0
    %5698 = vmatpush1.msra.mxu0 0.0
    %5699 = vmatprep.subr.mxu0 0.0
    %5700 = vmatpush1.msra.mxu0 0.0
    %5701 = vmatprep.subr.mxu0 0.0
    %5702 = vmatpush1.msra.mxu0 0.0
    %5703 = vmatprep.subr.mxu0 0.0
    %5704 = vmatpush1.msra.mxu0 0.0
    %5705 = vmatprep.subr.mxu0 0.0
    %5706 = vmatpush1.msra.mxu0 0.0
    %5707 = vmatprep.subr.mxu0 0.0
    %5708 = vmatpush1.msra.mxu0 0.0
    %5709 = vmatprep.subr.mxu0 0.0
    %5710 = vmatpush1.msra.mxu0 0.0
    %5711 = vmatprep.subr.mxu0 0.0
    %5712 = vmatpush1.msra.mxu0 0.0
    %5713 = vmatprep.subr.mxu0 0.0
    %5714 = vmatpush1.msra.mxu0 0.0
    %5715 = vmatprep.subr.mxu0 0.0
    %5716 = vmatpush1.msra.mxu0 0.0
    %5717 = vmatprep.subr.mxu0 0.0
    %5718 = vmatpush1.msra.mxu0 0.0
    %5719 = vmatprep.subr.mxu0 0.0
    %5720 = vmatpush1.msra.mxu0 0.0
    %5721 = vmatprep.subr.mxu0 0.0
    %5722 = vmatpush1.msra.mxu0 %v5470
    %5723 = vmatprep.subr.mxu0 0.0
    %5724 = vmatpush1.msra.mxu0 %v5469
    %5725 = vmatprep.subr.mxu0 0.0
    %5726 = vmatpush1.msra.mxu0 %v5468
    %5727 = vmatprep.subr.mxu0 0.0
    %5728 = vmatpush1.msra.mxu0 %v5467
    %5729 = vmatprep.subr.mxu0 0.0
    %5730 = vmatpush2.msra.mxu0 0.0
    %5731 = vmatprep.subr.mxu0 0.0
    %5732 = vmatpush2.msra.mxu0 0.0
    %5733 = vmatprep.subr.mxu0 0.0
    %5734 = vmatpush2.msra.mxu0 0.0
    %5735 = vmatprep.subr.mxu0 0.0
    %5736 = vmatpush2.msra.mxu0 0.0
    %5737 = vmatprep.subr.mxu0 0.0
    %5738 = vmatpush2.msra.mxu0 0.0
    %5739 = vmatprep.subr.mxu0 0.0
    %5740 = vmatpush2.msra.mxu0 0.0
    %5741 = vmatprep.subr.mxu0 0.0
    %5742 = vmatpush2.msra.mxu0 0.0
    %5743 = vmatprep.subr.mxu0 0.0
    %5744 = vmatpush2.msra.mxu0 0.0
    %5745 = vmatprep.subr.mxu0 0.0
    %5746 = vmatpush2.msra.mxu0 0.0
    %5747 = vmatprep.subr.mxu0 0.0
    %5748 = vmatpush2.msra.mxu0 0.0
    %5749 = vmatprep.subr.mxu0 0.0
    %5750 = vmatpush2.msra.mxu0 0.0
    %5751 = vmatprep.subr.mxu0 0.0
    %5752 = vmatpush2.msra.mxu0 0.0
    %5753 = vmatprep.subr.mxu0 0.0
    %5754 = vmatpush2.msra.mxu0 0.0
    %5755 = vmatprep.subr.mxu0 0.0
    %5756 = vmatpush2.msra.mxu0 0.0
    %5757 = vmatprep.subr.mxu0 0.0
    %5758 = vmatpush2.msra.mxu0 0.0
    %5759 = vmatprep.subr.mxu0 0.0
    %5760 = vmatpush2.msra.mxu0 0.0
    %5761 = vmatprep.mubr.f32.mxu0 0.0
    %5762 = vmatmul.mubr.f32.gmra.mxu0 %v4889
    %v5763 = vpop.f32.mrf.mxu0
    %v5764 = vadd.f32 0.0, %v5763
    %v5765 = vpop.f32.mrf.mxu0
    %5766 = vdwg.mxu0
    %5767 = vmatprep.subr.mxu0 0.0
    %5768 = vmatpush1.msra.mxu0 0.0
    %5769 = vmatprep.subr.mxu0 0.0
    %5770 = vmatpush1.msra.mxu0 0.0
    %5771 = vmatprep.subr.mxu0 0.0
    %5772 = vmatpush1.msra.mxu0 0.0
    %5773 = vmatprep.subr.mxu0 0.0
    %5774 = vmatpush1.msra.mxu0 0.0
    %5775 = vmatprep.subr.mxu0 0.0
    %5776 = vmatpush1.msra.mxu0 0.0
    %5777 = vmatprep.subr.mxu0 0.0
    %5778 = vmatpush1.msra.mxu0 0.0
    %5779 = vmatprep.subr.mxu0 0.0
    %5780 = vmatpush1.msra.mxu0 0.0
    %5781 = vmatprep.subr.mxu0 0.0
    %5782 = vmatpush1.msra.mxu0 0.0
    %5783 = vmatprep.subr.mxu0 0.0
    %5784 = vmatpush1.msra.mxu0 0.0
    %5785 = vmatprep.subr.mxu0 0.0
    %5786 = vmatpush1.msra.mxu0 0.0
    %5787 = vmatprep.subr.mxu0 0.0
    %5788 = vmatpush1.msra.mxu0 0.0
    %5789 = vmatprep.subr.mxu0 0.0
    %5790 = vmatpush1.msra.mxu0 0.0
    %5791 = vmatprep.subr.mxu0 0.0
    %5792 = vmatpush1.msra.mxu0 %v5474
    %5793 = vmatprep.subr.mxu0 0.0
    %5794 = vmatpush1.msra.mxu0 %v5473
    %5795 = vmatprep.subr.mxu0 0.0
    %5796 = vmatpush1.msra.mxu0 %v5472
    %5797 = vmatprep.subr.mxu0 0.0
    %5798 = vmatpush1.msra.mxu0 %v5471
    %5799 = vmatprep.subr.mxu0 0.0
    %5800 = vmatpush2.msra.mxu0 0.0
    %5801 = vmatprep.subr.mxu0 0.0
    %5802 = vmatpush2.msra.mxu0 0.0
    %5803 = vmatprep.subr.mxu0 0.0
    %5804 = vmatpush2.msra.mxu0 0.0
    %5805 = vmatprep.subr.mxu0 0.0
    %5806 = vmatpush2.msra.mxu0 0.0
    %5807 = vmatprep.subr.mxu0 0.0
    %5808 = vmatpush2.msra.mxu0 0.0
    %5809 = vmatprep.subr.mxu0 0.0
    %5810 = vmatpush2.msra.mxu0 0.0
    %5811 = vmatprep.subr.mxu0 0.0
    %5812 = vmatpush2.msra.mxu0 0.0
    %5813 = vmatprep.subr.mxu0 0.0
    %5814 = vmatpush2.msra.mxu0 0.0
    %5815 = vmatprep.subr.mxu0 0.0
    %5816 = vmatpush2.msra.mxu0 0.0
    %5817 = vmatprep.subr.mxu0 0.0
    %5818 = vmatpush2.msra.mxu0 0.0
    %5819 = vmatprep.subr.mxu0 0.0
    %5820 = vmatpush2.msra.mxu0 0.0
    %5821 = vmatprep.subr.mxu0 0.0
    %5822 = vmatpush2.msra.mxu0 0.0
    %5823 = vmatprep.subr.mxu0 0.0
    %5824 = vmatpush2.msra.mxu0 0.0
    %5825 = vmatprep.subr.mxu0 0.0
    %5826 = vmatpush2.msra.mxu0 0.0
    %5827 = vmatprep.subr.mxu0 0.0
    %5828 = vmatpush2.msra.mxu0 0.0
    %5829 = vmatprep.subr.mxu0 0.0
    %5830 = vmatpush2.msra.mxu0 0.0
    %5831 = vmatprep.mubr.f32.mxu0 0.0
    %5832 = vmatmul.mubr.f32.gmra.mxu0 %v5172
    %v5833 = vpop.f32.mrf.mxu0
    %v5834 = vadd.f32 0.0, %v5833
    %v5835 = vpop.f32.mrf.mxu0
    %5836 = vdwg.mxu0
    %5837 = vmatprep.subr.mxu0 0.0
    %5838 = vmatpush1.msra.mxu0 0.0
    %5839 = vmatprep.subr.mxu0 0.0
    %5840 = vmatpush1.msra.mxu0 0.0
    %5841 = vmatprep.subr.mxu0 0.0
    %5842 = vmatpush1.msra.mxu0 0.0
    %5843 = vmatprep.subr.mxu0 0.0
    %5844 = vmatpush1.msra.mxu0 0.0
    %5845 = vmatprep.subr.mxu0 0.0
    %5846 = vmatpush1.msra.mxu0 0.0
    %5847 = vmatprep.subr.mxu0 0.0
    %5848 = vmatpush1.msra.mxu0 0.0
    %5849 = vmatprep.subr.mxu0 0.0
    %5850 = vmatpush1.msra.mxu0 0.0
    %5851 = vmatprep.subr.mxu0 0.0
    %5852 = vmatpush1.msra.mxu0 0.0
    %5853 = vmatprep.subr.mxu0 0.0
    %5854 = vmatpush1.msra.mxu0 0.0
    %5855 = vmatprep.subr.mxu0 0.0
    %5856 = vmatpush1.msra.mxu0 0.0
    %5857 = vmatprep.subr.mxu0 0.0
    %5858 = vmatpush1.msra.mxu0 0.0
    %5859 = vmatprep.subr.mxu0 0.0
    %5860 = vmatpush1.msra.mxu0 0.0
    %5861 = vmatprep.subr.mxu0 0.0
    %5862 = vmatpush1.msra.mxu0 %v5478
    %5863 = vmatprep.subr.mxu0 0.0
    %5864 = vmatpush1.msra.mxu0 %v5477
    %5865 = vmatprep.subr.mxu0 0.0
    %5866 = vmatpush1.msra.mxu0 %v5476
    %5867 = vmatprep.subr.mxu0 0.0
    %5868 = vmatpush1.msra.mxu0 %v5475
    %5869 = vmatprep.subr.mxu0 0.0
    %5870 = vmatpush2.msra.mxu0 0.0
    %5871 = vmatprep.subr.mxu0 0.0
    %5872 = vmatpush2.msra.mxu0 0.0
    %5873 = vmatprep.subr.mxu0 0.0
    %5874 = vmatpush2.msra.mxu0 0.0
    %5875 = vmatprep.subr.mxu0 0.0
    %5876 = vmatpush2.msra.mxu0 0.0
    %5877 = vmatprep.subr.mxu0 0.0
    %5878 = vmatpush2.msra.mxu0 0.0
    %5879 = vmatprep.subr.mxu0 0.0
    %5880 = vmatpush2.msra.mxu0 0.0
    %5881 = vmatprep.subr.mxu0 0.0
    %5882 = vmatpush2.msra.mxu0 0.0
    %5883 = vmatprep.subr.mxu0 0.0
    %5884 = vmatpush2.msra.mxu0 0.0
    %5885 = vmatprep.subr.mxu0 0.0
    %5886 = vmatpush2.msra.mxu0 0.0
    %5887 = vmatprep.subr.mxu0 0.0
    %5888 = vmatpush2.msra.mxu0 0.0
    %5889 = vmatprep.subr.mxu0 0.0
    %5890 = vmatpush2.msra.mxu0 0.0
    %5891 = vmatprep.subr.mxu0 0.0
    %5892 = vmatpush2.msra.mxu0 0.0
    %5893 = vmatprep.subr.mxu0 0.0
    %5894 = vmatpush2.msra.mxu0 0.0
    %5895 = vmatprep.subr.mxu0 0.0
    %5896 = vmatpush2.msra.mxu0 0.0
    %5897 = vmatprep.subr.mxu0 0.0
    %5898 = vmatpush2.msra.mxu0 0.0
    %5899 = vmatprep.subr.mxu0 0.0
    %5900 = vmatpush2.msra.mxu0 0.0
    %5901 = vmatprep.mubr.f32.mxu0 0.0
    %5902 = vmatmul.mubr.f32.gmra.mxu0 %v5172
    %v5903 = vpop.f32.mrf.mxu0
    %v5904 = vadd.f32 0.0, %v5903
    %v5905 = vpop.f32.mrf.mxu0
    %5906 = vdwg.mxu0
    %5907 = vmatprep.subr.mxu0 0.0
    %5908 = vmatpush1.msra.mxu0 0.0
    %5909 = vmatprep.subr.mxu0 0.0
    %5910 = vmatpush1.msra.mxu0 0.0
    %5911 = vmatprep.subr.mxu0 0.0
    %5912 = vmatpush1.msra.mxu0 0.0
    %5913 = vmatprep.subr.mxu0 0.0
    %5914 = vmatpush1.msra.mxu0 0.0
    %5915 = vmatprep.subr.mxu0 0.0
    %5916 = vmatpush1.msra.mxu0 0.0
    %5917 = vmatprep.subr.mxu0 0.0
    %5918 = vmatpush1.msra.mxu0 0.0
    %5919 = vmatprep.subr.mxu0 0.0
    %5920 = vmatpush1.msra.mxu0 0.0
    %5921 = vmatprep.subr.mxu0 0.0
    %5922 = vmatpush1.msra.mxu0 0.0
    %5923 = vmatprep.subr.mxu0 0.0
    %5924 = vmatpush1.msra.mxu0 0.0
    %5925 = vmatprep.subr.mxu0 0.0
    %5926 = vmatpush1.msra.mxu0 0.0
    %5927 = vmatprep.subr.mxu0 0.0
    %5928 = vmatpush1.msra.mxu0 0.0
    %5929 = vmatprep.subr.mxu0 0.0
    %5930 = vmatpush1.msra.mxu0 0.0
    %5931 = vmatprep.subr.mxu0 0.0
    %5932 = vmatpush1.msra.mxu0 %v5482
    %5933 = vmatprep.subr.mxu0 0.0
    %5934 = vmatpush1.msra.mxu0 %v5481
    %5935 = vmatprep.subr.mxu0 0.0
    %5936 = vmatpush1.msra.mxu0 %v5480
    %5937 = vmatprep.subr.mxu0 0.0
    %5938 = vmatpush1.msra.mxu0 %v5479
    %5939 = vmatprep.subr.mxu0 0.0
    %5940 = vmatpush2.msra.mxu0 0.0
    %5941 = vmatprep.subr.mxu0 0.0
    %5942 = vmatpush2.msra.mxu0 0.0
    %5943 = vmatprep.subr.mxu0 0.0
    %5944 = vmatpush2.msra.mxu0 0.0
    %5945 = vmatprep.subr.mxu0 0.0
    %5946 = vmatpush2.msra.mxu0 0.0
    %5947 = vmatprep.subr.mxu0 0.0
    %5948 = vmatpush2.msra.mxu0 0.0
    %5949 = vmatprep.subr.mxu0 0.0
    %5950 = vmatpush2.msra.mxu0 0.0
    %5951 = vmatprep.subr.mxu0 0.0
    %5952 = vmatpush2.msra.mxu0 0.0
    %5953 = vmatprep.subr.mxu0 0.0
    %5954 = vmatpush2.msra.mxu0 0.0
    %5955 = vmatprep.subr.mxu0 0.0
    %5956 = vmatpush2.msra.mxu0 0.0
    %5957 = vmatprep.subr.mxu0 0.0
    %5958 = vmatpush2.msra.mxu0 0.0
    %5959 = vmatprep.subr.mxu0 0.0
    %5960 = vmatpush2.msra.mxu0 0.0
    %5961 = vmatprep.subr.mxu0 0.0
    %5962 = vmatpush2.msra.mxu0 0.0
    %5963 = vmatprep.subr.mxu0 0.0
    %5964 = vmatpush2.msra.mxu0 0.0
    %5965 = vmatprep.subr.mxu0 0.0
    %5966 = vmatpush2.msra.mxu0 0.0
    %5967 = vmatprep.subr.mxu0 0.0
    %5968 = vmatpush2.msra.mxu0 0.0
    %5969 = vmatprep.subr.mxu0 0.0
    %5970 = vmatpush2.msra.mxu0 0.0
    %5971 = vmatprep.mubr.f32.mxu0 0.0
    %5972 = vmatmul.mubr.f32.gmra.mxu0 %v5172
    %v5973 = vpop.f32.mrf.mxu0
    %v5974 = vadd.f32 0.0, %v5973
    %v5975 = vpop.f32.mrf.mxu0
    %5976 = vdwg.mxu0
    %5977 = vmatprep.subr.mxu0 0.0
    %5978 = vmatpush1.msra.mxu0 0.0
    %5979 = vmatprep.subr.mxu0 0.0
    %5980 = vmatpush1.msra.mxu0 0.0
    %5981 = vmatprep.subr.mxu0 0.0
    %5982 = vmatpush1.msra.mxu0 0.0
    %5983 = vmatprep.subr.mxu0 0.0
    %5984 = vmatpush1.msra.mxu0 0.0
    %5985 = vmatprep.subr.mxu0 0.0
    %5986 = vmatpush1.msra.mxu0 0.0
    %5987 = vmatprep.subr.mxu0 0.0
    %5988 = vmatpush1.msra.mxu0 0.0
    %5989 = vmatprep.subr.mxu0 0.0
    %5990 = vmatpush1.msra.mxu0 0.0
    %5991 = vmatprep.subr.mxu0 0.0
    %5992 = vmatpush1.msra.mxu0 0.0
    %5993 = vmatprep.subr.mxu0 0.0
    %5994 = vmatpush1.msra.mxu0 0.0
    %5995 = vmatprep.subr.mxu0 0.0
    %5996 = vmatpush1.msra.mxu0 0.0
    %5997 = vmatprep.subr.mxu0 0.0
    %5998 = vmatpush1.msra.mxu0 0.0
    %5999 = vmatprep.subr.mxu0 0.0
    %6000 = vmatpush1.msra.mxu0 0.0
    %6001 = vmatprep.subr.mxu0 0.0
    %6002 = vmatpush1.msra.mxu0 %v5486
    %6003 = vmatprep.subr.mxu0 0.0
    %6004 = vmatpush1.msra.mxu0 %v5485
    %6005 = vmatprep.subr.mxu0 0.0
    %6006 = vmatpush1.msra.mxu0 %v5484
    %6007 = vmatprep.subr.mxu0 0.0
    %6008 = vmatpush1.msra.mxu0 %v5483
    %6009 = vmatprep.subr.mxu0 0.0
    %6010 = vmatpush2.msra.mxu0 0.0
    %6011 = vmatprep.subr.mxu0 0.0
    %6012 = vmatpush2.msra.mxu0 0.0
    %6013 = vmatprep.subr.mxu0 0.0
    %6014 = vmatpush2.msra.mxu0 0.0
    %6015 = vmatprep.subr.mxu0 0.0
    %6016 = vmatpush2.msra.mxu0 0.0
    %6017 = vmatprep.subr.mxu0 0.0
    %6018 = vmatpush2.msra.mxu0 0.0
    %6019 = vmatprep.subr.mxu0 0.0
    %6020 = vmatpush2.msra.mxu0 0.0
    %6021 = vmatprep.subr.mxu0 0.0
    %6022 = vmatpush2.msra.mxu0 0.0
    %6023 = vmatprep.subr.mxu0 0.0
    %6024 = vmatpush2.msra.mxu0 0.0
    %6025 = vmatprep.subr.mxu0 0.0
    %6026 = vmatpush2.msra.mxu0 0.0
    %6027 = vmatprep.subr.mxu0 0.0
    %6028 = vmatpush2.msra.mxu0 0.0
    %6029 = vmatprep.subr.mxu0 0.0
    %6030 = vmatpush2.msra.mxu0 0.0
    %6031 = vmatprep.subr.mxu0 0.0
    %6032 = vmatpush2.msra.mxu0 0.0
    %6033 = vmatprep.subr.mxu0 0.0
    %6034 = vmatpush2.msra.mxu0 0.0
    %6035 = vmatprep.subr.mxu0 0.0
    %6036 = vmatpush2.msra.mxu0 0.0
    %6037 = vmatprep.subr.mxu0 0.0
    %6038 = vmatpush2.msra.mxu0 0.0
    %6039 = vmatprep.subr.mxu0 0.0
    %6040 = vmatpush2.msra.mxu0 0.0
    %6041 = vmatprep.mubr.f32.mxu0 0.0
    %6042 = vmatmul.mubr.f32.gmra.mxu0 %v5172
    %v6043 = vpop.f32.mrf.mxu0
    %v6044 = vadd.f32 0.0, %v6043
    %v6045 = vpop.f32.mrf.mxu0
    %6046 = vdwg.mxu0
    %s6047 = scalar_lea.vmem %s7, 256
    %v6048 = vld [vmem:[%s6047] sm:$0xff]
    %v6049 = vld [vmem:[%s6047 + $0x8] sm:$0xff]
    %v6050 = vld [vmem:[%s6047 + $0x10] sm:$0xff]
    %v6051 = vld [vmem:[%s6047 + $0x18] sm:$0xff]
    %v6052 = vld [vmem:[%s6047 + $0x20] sm:$0xff]
    %v6053 = vld [vmem:[%s6047 + $0x28] sm:$0xff]
    %v6054 = vld [vmem:[%s6047 + $0x30] sm:$0xff]
    %v6055 = vld [vmem:[%s6047 + $0x38] sm:$0xff]
    %v6056 = vld [vmem:[%s6047 + $0x40] sm:$0xff]
    %v6057 = vld [vmem:[%s6047 + $0x48] sm:$0xff]
    %v6058 = vld [vmem:[%s6047 + $0x50] sm:$0xff]
    %v6059 = vld [vmem:[%s6047 + $0x58] sm:$0xff]
    %v6060 = vld [vmem:[%s6047 + $0x60] sm:$0xff]
    %v6061 = vld [vmem:[%s6047 + $0x68] sm:$0xff]
    %v6062 = vld [vmem:[%s6047 + $0x70] sm:$0xff]
    %v6063 = vld [vmem:[%s6047 + $0x78] sm:$0xff]
    %v6064 = vld [vmem:[%s6047 + $0x80] sm:$0xff]
    %v6065 = vld [vmem:[%s6047 + $0x88] sm:$0xff]
    %v6066 = vld [vmem:[%s6047 + $0x90] sm:$0xff]
    %v6067 = vld [vmem:[%s6047 + $0x98] sm:$0xff]
    %v6068 = vld [vmem:[%s6047 + $0xa0] sm:$0xff]
    %v6069 = vld [vmem:[%s6047 + $0xa8] sm:$0xff]
    %v6070 = vld [vmem:[%s6047 + $0xb0] sm:$0xff]
    %v6071 = vld [vmem:[%s6047 + $0xb8] sm:$0xff]
    %v6072 = vld [vmem:[%s6047 + $0xc0] sm:$0xff]
    %v6073 = vld [vmem:[%s6047 + $0xc8] sm:$0xff]
    %v6074 = vld [vmem:[%s6047 + $0xd0] sm:$0xff]
    %v6075 = vld [vmem:[%s6047 + $0xd8] sm:$0xff]
    %v6076 = vld [vmem:[%s6047 + $0xe0] sm:$0xff]
    %v6077 = vld [vmem:[%s6047 + $0xe8] sm:$0xff]
    %v6078 = vld [vmem:[%s6047 + $0xf0] sm:$0xff]
    %v6079 = vld [vmem:[%s6047 + $0xf8] sm:$0xff]
    %6080 = vmatprep.subr.mxu0 0.0
    %6081 = vmatpush1.msra.mxu0 0.0
    %6082 = vmatprep.subr.mxu0 0.0
    %6083 = vmatpush1.msra.mxu0 0.0
    %6084 = vmatprep.subr.mxu0 0.0
    %6085 = vmatpush1.msra.mxu0 0.0
    %6086 = vmatprep.subr.mxu0 0.0
    %6087 = vmatpush1.msra.mxu0 0.0
    %6088 = vmatprep.subr.mxu0 0.0
    %6089 = vmatpush1.msra.mxu0 0.0
    %6090 = vmatprep.subr.mxu0 0.0
    %6091 = vmatpush1.msra.mxu0 0.0
    %6092 = vmatprep.subr.mxu0 0.0
    %6093 = vmatpush1.msra.mxu0 0.0
    %6094 = vmatprep.subr.mxu0 0.0
    %6095 = vmatpush1.msra.mxu0 0.0
    %6096 = vmatprep.subr.mxu0 0.0
    %6097 = vmatpush1.msra.mxu0 0.0
    %6098 = vmatprep.subr.mxu0 0.0
    %6099 = vmatpush1.msra.mxu0 0.0
    %6100 = vmatprep.subr.mxu0 0.0
    %6101 = vmatpush1.msra.mxu0 0.0
    %6102 = vmatprep.subr.mxu0 0.0
    %6103 = vmatpush1.msra.mxu0 0.0
    %6104 = vmatprep.subr.mxu0 0.0
    %6105 = vmatpush1.msra.mxu0 %v6051
    %6106 = vmatprep.subr.mxu0 0.0
    %6107 = vmatpush1.msra.mxu0 %v6050
    %6108 = vmatprep.subr.mxu0 0.0
    %6109 = vmatpush1.msra.mxu0 %v6049
    %6110 = vmatprep.subr.mxu0 0.0
    %6111 = vmatpush1.msra.mxu0 %v6048
    %6112 = vmatprep.subr.mxu0 0.0
    %6113 = vmatpush2.msra.mxu0 0.0
    %6114 = vmatprep.subr.mxu0 0.0
    %6115 = vmatpush2.msra.mxu0 0.0
    %6116 = vmatprep.subr.mxu0 0.0
    %6117 = vmatpush2.msra.mxu0 0.0
    %6118 = vmatprep.subr.mxu0 0.0
    %6119 = vmatpush2.msra.mxu0 0.0
    %6120 = vmatprep.subr.mxu0 0.0
    %6121 = vmatpush2.msra.mxu0 0.0
    %6122 = vmatprep.subr.mxu0 0.0
    %6123 = vmatpush2.msra.mxu0 0.0
    %6124 = vmatprep.subr.mxu0 0.0
    %6125 = vmatpush2.msra.mxu0 0.0
    %6126 = vmatprep.subr.mxu0 0.0
    %6127 = vmatpush2.msra.mxu0 0.0
    %6128 = vmatprep.subr.mxu0 0.0
    %6129 = vmatpush2.msra.mxu0 0.0
    %6130 = vmatprep.subr.mxu0 0.0
    %6131 = vmatpush2.msra.mxu0 0.0
    %6132 = vmatprep.subr.mxu0 0.0
    %6133 = vmatpush2.msra.mxu0 0.0
    %6134 = vmatprep.subr.mxu0 0.0
    %6135 = vmatpush2.msra.mxu0 0.0
    %6136 = vmatprep.subr.mxu0 0.0
    %6137 = vmatpush2.msra.mxu0 0.0
    %6138 = vmatprep.subr.mxu0 0.0
    %6139 = vmatpush2.msra.mxu0 0.0
    %6140 = vmatprep.subr.mxu0 0.0
    %6141 = vmatpush2.msra.mxu0 0.0
    %6142 = vmatprep.subr.mxu0 0.0
    %6143 = vmatpush2.msra.mxu0 0.0
    %6144 = vmatprep.mubr.f32.mxu0 0.0
    %6145 = vmatmul.mubr.f32.gmra.mxu0 %v4889
    %v6146 = vpop.f32.mrf.mxu0
    %v6147 = vadd.f32 0.0, %v6146
    %v6148 = vpop.f32.mrf.mxu0
    %6149 = vdwg.mxu0
    %6150 = vmatprep.subr.mxu0 0.0
    %6151 = vmatpush1.msra.mxu0 0.0
    %6152 = vmatprep.subr.mxu0 0.0
    %6153 = vmatpush1.msra.mxu0 0.0
    %6154 = vmatprep.subr.mxu0 0.0
    %6155 = vmatpush1.msra.mxu0 0.0
    %6156 = vmatprep.subr.mxu0 0.0
    %6157 = vmatpush1.msra.mxu0 0.0
    %6158 = vmatprep.subr.mxu0 0.0
    %6159 = vmatpush1.msra.mxu0 0.0
    %6160 = vmatprep.subr.mxu0 0.0
    %6161 = vmatpush1.msra.mxu0 0.0
    %6162 = vmatprep.subr.mxu0 0.0
    %6163 = vmatpush1.msra.mxu0 0.0
    %6164 = vmatprep.subr.mxu0 0.0
    %6165 = vmatpush1.msra.mxu0 0.0
    %6166 = vmatprep.subr.mxu0 0.0
    %6167 = vmatpush1.msra.mxu0 0.0
    %6168 = vmatprep.subr.mxu0 0.0
    %6169 = vmatpush1.msra.mxu0 0.0
    %6170 = vmatprep.subr.mxu0 0.0
    %6171 = vmatpush1.msra.mxu0 0.0
    %6172 = vmatprep.subr.mxu0 0.0
    %6173 = vmatpush1.msra.mxu0 0.0
    %6174 = vmatprep.subr.mxu0 0.0
    %6175 = vmatpush1.msra.mxu0 %v6055
    %6176 = vmatprep.subr.mxu0 0.0
    %6177 = vmatpush1.msra.mxu0 %v6054
    %6178 = vmatprep.subr.mxu0 0.0
    %6179 = vmatpush1.msra.mxu0 %v6053
    %6180 = vmatprep.subr.mxu0 0.0
    %6181 = vmatpush1.msra.mxu0 %v6052
    %6182 = vmatprep.subr.mxu0 0.0
    %6183 = vmatpush2.msra.mxu0 0.0
    %6184 = vmatprep.subr.mxu0 0.0
    %6185 = vmatpush2.msra.mxu0 0.0
    %6186 = vmatprep.subr.mxu0 0.0
    %6187 = vmatpush2.msra.mxu0 0.0
    %6188 = vmatprep.subr.mxu0 0.0
    %6189 = vmatpush2.msra.mxu0 0.0
    %6190 = vmatprep.subr.mxu0 0.0
    %6191 = vmatpush2.msra.mxu0 0.0
    %6192 = vmatprep.subr.mxu0 0.0
    %6193 = vmatpush2.msra.mxu0 0.0
    %6194 = vmatprep.subr.mxu0 0.0
    %6195 = vmatpush2.msra.mxu0 0.0
    %6196 = vmatprep.subr.mxu0 0.0
    %6197 = vmatpush2.msra.mxu0 0.0
    %6198 = vmatprep.subr.mxu0 0.0
    %6199 = vmatpush2.msra.mxu0 0.0
    %6200 = vmatprep.subr.mxu0 0.0
    %6201 = vmatpush2.msra.mxu0 0.0
    %6202 = vmatprep.subr.mxu0 0.0
    %6203 = vmatpush2.msra.mxu0 0.0
    %6204 = vmatprep.subr.mxu0 0.0
    %6205 = vmatpush2.msra.mxu0 0.0
    %6206 = vmatprep.subr.mxu0 0.0
    %6207 = vmatpush2.msra.mxu0 0.0
    %6208 = vmatprep.subr.mxu0 0.0
    %6209 = vmatpush2.msra.mxu0 0.0
    %6210 = vmatprep.subr.mxu0 0.0
    %6211 = vmatpush2.msra.mxu0 0.0
    %6212 = vmatprep.subr.mxu0 0.0
    %6213 = vmatpush2.msra.mxu0 0.0
    %6214 = vmatprep.mubr.f32.mxu0 0.0
    %6215 = vmatmul.mubr.f32.gmra.mxu0 %v4889
    %v6216 = vpop.f32.mrf.mxu0
    %v6217 = vadd.f32 0.0, %v6216
    %v6218 = vpop.f32.mrf.mxu0
    %6219 = vdwg.mxu0
    %6220 = vmatprep.subr.mxu0 0.0
    %6221 = vmatpush1.msra.mxu0 0.0
    %6222 = vmatprep.subr.mxu0 0.0
    %6223 = vmatpush1.msra.mxu0 0.0
    %6224 = vmatprep.subr.mxu0 0.0
    %6225 = vmatpush1.msra.mxu0 0.0
    %6226 = vmatprep.subr.mxu0 0.0
    %6227 = vmatpush1.msra.mxu0 0.0
    %6228 = vmatprep.subr.mxu0 0.0
    %6229 = vmatpush1.msra.mxu0 0.0
    %6230 = vmatprep.subr.mxu0 0.0
    %6231 = vmatpush1.msra.mxu0 0.0
    %6232 = vmatprep.subr.mxu0 0.0
    %6233 = vmatpush1.msra.mxu0 0.0
    %6234 = vmatprep.subr.mxu0 0.0
    %6235 = vmatpush1.msra.mxu0 0.0
    %6236 = vmatprep.subr.mxu0 0.0
    %6237 = vmatpush1.msra.mxu0 0.0
    %6238 = vmatprep.subr.mxu0 0.0
    %6239 = vmatpush1.msra.mxu0 0.0
    %6240 = vmatprep.subr.mxu0 0.0
    %6241 = vmatpush1.msra.mxu0 0.0
    %6242 = vmatprep.subr.mxu0 0.0
    %6243 = vmatpush1.msra.mxu0 0.0
    %6244 = vmatprep.subr.mxu0 0.0
    %6245 = vmatpush1.msra.mxu0 %v6059
    %6246 = vmatprep.subr.mxu0 0.0
    %6247 = vmatpush1.msra.mxu0 %v6058
    %6248 = vmatprep.subr.mxu0 0.0
    %6249 = vmatpush1.msra.mxu0 %v6057
    %6250 = vmatprep.subr.mxu0 0.0
    %6251 = vmatpush1.msra.mxu0 %v6056
    %6252 = vmatprep.subr.mxu0 0.0
    %6253 = vmatpush2.msra.mxu0 0.0
    %6254 = vmatprep.subr.mxu0 0.0
    %6255 = vmatpush2.msra.mxu0 0.0
    %6256 = vmatprep.subr.mxu0 0.0
    %6257 = vmatpush2.msra.mxu0 0.0
    %6258 = vmatprep.subr.mxu0 0.0
    %6259 = vmatpush2.msra.mxu0 0.0
    %6260 = vmatprep.subr.mxu0 0.0
    %6261 = vmatpush2.msra.mxu0 0.0
    %6262 = vmatprep.subr.mxu0 0.0
    %6263 = vmatpush2.msra.mxu0 0.0
    %6264 = vmatprep.subr.mxu0 0.0
    %6265 = vmatpush2.msra.mxu0 0.0
    %6266 = vmatprep.subr.mxu0 0.0
    %6267 = vmatpush2.msra.mxu0 0.0
    %6268 = vmatprep.subr.mxu0 0.0
    %6269 = vmatpush2.msra.mxu0 0.0
    %6270 = vmatprep.subr.mxu0 0.0
    %6271 = vmatpush2.msra.mxu0 0.0
    %6272 = vmatprep.subr.mxu0 0.0
    %6273 = vmatpush2.msra.mxu0 0.0
    %6274 = vmatprep.subr.mxu0 0.0
    %6275 = vmatpush2.msra.mxu0 0.0
    %6276 = vmatprep.subr.mxu0 0.0
    %6277 = vmatpush2.msra.mxu0 0.0
    %6278 = vmatprep.subr.mxu0 0.0
    %6279 = vmatpush2.msra.mxu0 0.0
    %6280 = vmatprep.subr.mxu0 0.0
    %6281 = vmatpush2.msra.mxu0 0.0
    %6282 = vmatprep.subr.mxu0 0.0
    %6283 = vmatpush2.msra.mxu0 0.0
    %6284 = vmatprep.mubr.f32.mxu0 0.0
    %6285 = vmatmul.mubr.f32.gmra.mxu0 %v4889
    %v6286 = vpop.f32.mrf.mxu0
    %v6287 = vadd.f32 0.0, %v6286
    %v6288 = vpop.f32.mrf.mxu0
    %6289 = vdwg.mxu0
    %6290 = vmatprep.subr.mxu0 0.0
    %6291 = vmatpush1.msra.mxu0 0.0
    %6292 = vmatprep.subr.mxu0 0.0
    %6293 = vmatpush1.msra.mxu0 0.0
    %6294 = vmatprep.subr.mxu0 0.0
    %6295 = vmatpush1.msra.mxu0 0.0
    %6296 = vmatprep.subr.mxu0 0.0
    %6297 = vmatpush1.msra.mxu0 0.0
    %6298 = vmatprep.subr.mxu0 0.0
    %6299 = vmatpush1.msra.mxu0 0.0
    %6300 = vmatprep.subr.mxu0 0.0
    %6301 = vmatpush1.msra.mxu0 0.0
    %6302 = vmatprep.subr.mxu0 0.0
    %6303 = vmatpush1.msra.mxu0 0.0
    %6304 = vmatprep.subr.mxu0 0.0
    %6305 = vmatpush1.msra.mxu0 0.0
    %6306 = vmatprep.subr.mxu0 0.0
    %6307 = vmatpush1.msra.mxu0 0.0
    %6308 = vmatprep.subr.mxu0 0.0
    %6309 = vmatpush1.msra.mxu0 0.0
    %6310 = vmatprep.subr.mxu0 0.0
    %6311 = vmatpush1.msra.mxu0 0.0
    %6312 = vmatprep.subr.mxu0 0.0
    %6313 = vmatpush1.msra.mxu0 0.0
    %6314 = vmatprep.subr.mxu0 0.0
    %6315 = vmatpush1.msra.mxu0 %v6063
    %6316 = vmatprep.subr.mxu0 0.0
    %6317 = vmatpush1.msra.mxu0 %v6062
    %6318 = vmatprep.subr.mxu0 0.0
    %6319 = vmatpush1.msra.mxu0 %v6061
    %6320 = vmatprep.subr.mxu0 0.0
    %6321 = vmatpush1.msra.mxu0 %v6060
    %6322 = vmatprep.subr.mxu0 0.0
    %6323 = vmatpush2.msra.mxu0 0.0
    %6324 = vmatprep.subr.mxu0 0.0
    %6325 = vmatpush2.msra.mxu0 0.0
    %6326 = vmatprep.subr.mxu0 0.0
    %6327 = vmatpush2.msra.mxu0 0.0
    %6328 = vmatprep.subr.mxu0 0.0
    %6329 = vmatpush2.msra.mxu0 0.0
    %6330 = vmatprep.subr.mxu0 0.0
    %6331 = vmatpush2.msra.mxu0 0.0
    %6332 = vmatprep.subr.mxu0 0.0
    %6333 = vmatpush2.msra.mxu0 0.0
    %6334 = vmatprep.subr.mxu0 0.0
    %6335 = vmatpush2.msra.mxu0 0.0
    %6336 = vmatprep.subr.mxu0 0.0
    %6337 = vmatpush2.msra.mxu0 0.0
    %6338 = vmatprep.subr.mxu0 0.0
    %6339 = vmatpush2.msra.mxu0 0.0
    %6340 = vmatprep.subr.mxu0 0.0
    %6341 = vmatpush2.msra.mxu0 0.0
    %6342 = vmatprep.subr.mxu0 0.0
    %6343 = vmatpush2.msra.mxu0 0.0
    %6344 = vmatprep.subr.mxu0 0.0
    %6345 = vmatpush2.msra.mxu0 0.0
    %6346 = vmatprep.subr.mxu0 0.0
    %6347 = vmatpush2.msra.mxu0 0.0
    %6348 = vmatprep.subr.mxu0 0.0
    %6349 = vmatpush2.msra.mxu0 0.0
    %6350 = vmatprep.subr.mxu0 0.0
    %6351 = vmatpush2.msra.mxu0 0.0
    %6352 = vmatprep.subr.mxu0 0.0
    %6353 = vmatpush2.msra.mxu0 0.0
    %6354 = vmatprep.mubr.f32.mxu0 0.0
    %6355 = vmatmul.mubr.f32.gmra.mxu0 %v4889
    %v6356 = vpop.f32.mrf.mxu0
    %v6357 = vadd.f32 0.0, %v6356
    %v6358 = vpop.f32.mrf.mxu0
    %6359 = vdwg.mxu0
    %6360 = vmatprep.subr.mxu0 0.0
    %6361 = vmatpush1.msra.mxu0 0.0
    %6362 = vmatprep.subr.mxu0 0.0
    %6363 = vmatpush1.msra.mxu0 0.0
    %6364 = vmatprep.subr.mxu0 0.0
    %6365 = vmatpush1.msra.mxu0 0.0
    %6366 = vmatprep.subr.mxu0 0.0
    %6367 = vmatpush1.msra.mxu0 0.0
    %6368 = vmatprep.subr.mxu0 0.0
    %6369 = vmatpush1.msra.mxu0 0.0
    %6370 = vmatprep.subr.mxu0 0.0
    %6371 = vmatpush1.msra.mxu0 0.0
    %6372 = vmatprep.subr.mxu0 0.0
    %6373 = vmatpush1.msra.mxu0 0.0
    %6374 = vmatprep.subr.mxu0 0.0
    %6375 = vmatpush1.msra.mxu0 0.0
    %6376 = vmatprep.subr.mxu0 0.0
    %6377 = vmatpush1.msra.mxu0 0.0
    %6378 = vmatprep.subr.mxu0 0.0
    %6379 = vmatpush1.msra.mxu0 0.0
    %6380 = vmatprep.subr.mxu0 0.0
    %6381 = vmatpush1.msra.mxu0 0.0
    %6382 = vmatprep.subr.mxu0 0.0
    %6383 = vmatpush1.msra.mxu0 0.0
    %6384 = vmatprep.subr.mxu0 0.0
    %6385 = vmatpush1.msra.mxu0 %v6067
    %6386 = vmatprep.subr.mxu0 0.0
    %6387 = vmatpush1.msra.mxu0 %v6066
    %6388 = vmatprep.subr.mxu0 0.0
    %6389 = vmatpush1.msra.mxu0 %v6065
    %6390 = vmatprep.subr.mxu0 0.0
    %6391 = vmatpush1.msra.mxu0 %v6064
    %6392 = vmatprep.subr.mxu0 0.0
    %6393 = vmatpush2.msra.mxu0 0.0
    %6394 = vmatprep.subr.mxu0 0.0
    %6395 = vmatpush2.msra.mxu0 0.0
    %6396 = vmatprep.subr.mxu0 0.0
    %6397 = vmatpush2.msra.mxu0 0.0
    %6398 = vmatprep.subr.mxu0 0.0
    %6399 = vmatpush2.msra.mxu0 0.0
    %6400 = vmatprep.subr.mxu0 0.0
    %6401 = vmatpush2.msra.mxu0 0.0
    %6402 = vmatprep.subr.mxu0 0.0
    %6403 = vmatpush2.msra.mxu0 0.0
    %6404 = vmatprep.subr.mxu0 0.0
    %6405 = vmatpush2.msra.mxu0 0.0
    %6406 = vmatprep.subr.mxu0 0.0
    %6407 = vmatpush2.msra.mxu0 0.0
    %6408 = vmatprep.subr.mxu0 0.0
    %6409 = vmatpush2.msra.mxu0 0.0
    %6410 = vmatprep.subr.mxu0 0.0
    %6411 = vmatpush2.msra.mxu0 0.0
    %6412 = vmatprep.subr.mxu0 0.0
    %6413 = vmatpush2.msra.mxu0 0.0
    %6414 = vmatprep.subr.mxu0 0.0
    %6415 = vmatpush2.msra.mxu0 0.0
    %6416 = vmatprep.subr.mxu0 0.0
    %6417 = vmatpush2.msra.mxu0 0.0
    %6418 = vmatprep.subr.mxu0 0.0
    %6419 = vmatpush2.msra.mxu0 0.0
    %6420 = vmatprep.subr.mxu0 0.0
    %6421 = vmatpush2.msra.mxu0 0.0
    %6422 = vmatprep.subr.mxu0 0.0
    %6423 = vmatpush2.msra.mxu0 0.0
    %6424 = vmatprep.mubr.f32.mxu0 0.0
    %6425 = vmatmul.mubr.f32.gmra.mxu0 %v5172
    %v6426 = vpop.f32.mrf.mxu0
    %v6427 = vadd.f32 0.0, %v6426
    %v6428 = vpop.f32.mrf.mxu0
    %6429 = vdwg.mxu0
    %6430 = vmatprep.subr.mxu0 0.0
    %6431 = vmatpush1.msra.mxu0 0.0
    %6432 = vmatprep.subr.mxu0 0.0
    %6433 = vmatpush1.msra.mxu0 0.0
    %6434 = vmatprep.subr.mxu0 0.0
    %6435 = vmatpush1.msra.mxu0 0.0
    %6436 = vmatprep.subr.mxu0 0.0
    %6437 = vmatpush1.msra.mxu0 0.0
    %6438 = vmatprep.subr.mxu0 0.0
    %6439 = vmatpush1.msra.mxu0 0.0
    %6440 = vmatprep.subr.mxu0 0.0
    %6441 = vmatpush1.msra.mxu0 0.0
    %6442 = vmatprep.subr.mxu0 0.0
    %6443 = vmatpush1.msra.mxu0 0.0
    %6444 = vmatprep.subr.mxu0 0.0
    %6445 = vmatpush1.msra.mxu0 0.0
    %6446 = vmatprep.subr.mxu0 0.0
    %6447 = vmatpush1.msra.mxu0 0.0
    %6448 = vmatprep.subr.mxu0 0.0
    %6449 = vmatpush1.msra.mxu0 0.0
    %6450 = vmatprep.subr.mxu0 0.0
    %6451 = vmatpush1.msra.mxu0 0.0
    %6452 = vmatprep.subr.mxu0 0.0
    %6453 = vmatpush1.msra.mxu0 0.0
    %6454 = vmatprep.subr.mxu0 0.0
    %6455 = vmatpush1.msra.mxu0 %v6071
    %6456 = vmatprep.subr.mxu0 0.0
    %6457 = vmatpush1.msra.mxu0 %v6070
    %6458 = vmatprep.subr.mxu0 0.0
    %6459 = vmatpush1.msra.mxu0 %v6069
    %6460 = vmatprep.subr.mxu0 0.0
    %6461 = vmatpush1.msra.mxu0 %v6068
    %6462 = vmatprep.subr.mxu0 0.0
    %6463 = vmatpush2.msra.mxu0 0.0
    %6464 = vmatprep.subr.mxu0 0.0
    %6465 = vmatpush2.msra.mxu0 0.0
    %6466 = vmatprep.subr.mxu0 0.0
    %6467 = vmatpush2.msra.mxu0 0.0
    %6468 = vmatprep.subr.mxu0 0.0
    %6469 = vmatpush2.msra.mxu0 0.0
    %6470 = vmatprep.subr.mxu0 0.0
    %6471 = vmatpush2.msra.mxu0 0.0
    %6472 = vmatprep.subr.mxu0 0.0
    %6473 = vmatpush2.msra.mxu0 0.0
    %6474 = vmatprep.subr.mxu0 0.0
    %6475 = vmatpush2.msra.mxu0 0.0
    %6476 = vmatprep.subr.mxu0 0.0
    %6477 = vmatpush2.msra.mxu0 0.0
    %6478 = vmatprep.subr.mxu0 0.0
    %6479 = vmatpush2.msra.mxu0 0.0
    %6480 = vmatprep.subr.mxu0 0.0
    %6481 = vmatpush2.msra.mxu0 0.0
    %6482 = vmatprep.subr.mxu0 0.0
    %6483 = vmatpush2.msra.mxu0 0.0
    %6484 = vmatprep.subr.mxu0 0.0
    %6485 = vmatpush2.msra.mxu0 0.0
    %6486 = vmatprep.subr.mxu0 0.0
    %6487 = vmatpush2.msra.mxu0 0.0
    %6488 = vmatprep.subr.mxu0 0.0
    %6489 = vmatpush2.msra.mxu0 0.0
    %6490 = vmatprep.subr.mxu0 0.0
    %6491 = vmatpush2.msra.mxu0 0.0
    %6492 = vmatprep.subr.mxu0 0.0
    %6493 = vmatpush2.msra.mxu0 0.0
    %6494 = vmatprep.mubr.f32.mxu0 0.0
    %6495 = vmatmul.mubr.f32.gmra.mxu0 %v5172
    %v6496 = vpop.f32.mrf.mxu0
    %v6497 = vadd.f32 0.0, %v6496
    %v6498 = vpop.f32.mrf.mxu0
    %6499 = vdwg.mxu0
    %6500 = vmatprep.subr.mxu0 0.0
    %6501 = vmatpush1.msra.mxu0 0.0
    %6502 = vmatprep.subr.mxu0 0.0
    %6503 = vmatpush1.msra.mxu0 0.0
    %6504 = vmatprep.subr.mxu0 0.0
    %6505 = vmatpush1.msra.mxu0 0.0
    %6506 = vmatprep.subr.mxu0 0.0
    %6507 = vmatpush1.msra.mxu0 0.0
    %6508 = vmatprep.subr.mxu0 0.0
    %6509 = vmatpush1.msra.mxu0 0.0
    %6510 = vmatprep.subr.mxu0 0.0
    %6511 = vmatpush1.msra.mxu0 0.0
    %6512 = vmatprep.subr.mxu0 0.0
    %6513 = vmatpush1.msra.mxu0 0.0
    %6514 = vmatprep.subr.mxu0 0.0
    %6515 = vmatpush1.msra.mxu0 0.0
    %6516 = vmatprep.subr.mxu0 0.0
    %6517 = vmatpush1.msra.mxu0 0.0
    %6518 = vmatprep.subr.mxu0 0.0
    %6519 = vmatpush1.msra.mxu0 0.0
    %6520 = vmatprep.subr.mxu0 0.0
    %6521 = vmatpush1.msra.mxu0 0.0
    %6522 = vmatprep.subr.mxu0 0.0
    %6523 = vmatpush1.msra.mxu0 0.0
    %6524 = vmatprep.subr.mxu0 0.0
    %6525 = vmatpush1.msra.mxu0 %v6075
    %6526 = vmatprep.subr.mxu0 0.0
    %6527 = vmatpush1.msra.mxu0 %v6074
    %6528 = vmatprep.subr.mxu0 0.0
    %6529 = vmatpush1.msra.mxu0 %v6073
    %6530 = vmatprep.subr.mxu0 0.0
    %6531 = vmatpush1.msra.mxu0 %v6072
    %6532 = vmatprep.subr.mxu0 0.0
    %6533 = vmatpush2.msra.mxu0 0.0
    %6534 = vmatprep.subr.mxu0 0.0
    %6535 = vmatpush2.msra.mxu0 0.0
    %6536 = vmatprep.subr.mxu0 0.0
    %6537 = vmatpush2.msra.mxu0 0.0
    %6538 = vmatprep.subr.mxu0 0.0
    %6539 = vmatpush2.msra.mxu0 0.0
    %6540 = vmatprep.subr.mxu0 0.0
    %6541 = vmatpush2.msra.mxu0 0.0
    %6542 = vmatprep.subr.mxu0 0.0
    %6543 = vmatpush2.msra.mxu0 0.0
    %6544 = vmatprep.subr.mxu0 0.0
    %6545 = vmatpush2.msra.mxu0 0.0
    %6546 = vmatprep.subr.mxu0 0.0
    %6547 = vmatpush2.msra.mxu0 0.0
    %6548 = vmatprep.subr.mxu0 0.0
    %6549 = vmatpush2.msra.mxu0 0.0
    %6550 = vmatprep.subr.mxu0 0.0
    %6551 = vmatpush2.msra.mxu0 0.0
    %6552 = vmatprep.subr.mxu0 0.0
    %6553 = vmatpush2.msra.mxu0 0.0
    %6554 = vmatprep.subr.mxu0 0.0
    %6555 = vmatpush2.msra.mxu0 0.0
    %6556 = vmatprep.subr.mxu0 0.0
    %6557 = vmatpush2.msra.mxu0 0.0
    %6558 = vmatprep.subr.mxu0 0.0
    %6559 = vmatpush2.msra.mxu0 0.0
    %6560 = vmatprep.subr.mxu0 0.0
    %6561 = vmatpush2.msra.mxu0 0.0
    %6562 = vmatprep.subr.mxu0 0.0
    %6563 = vmatpush2.msra.mxu0 0.0
    %6564 = vmatprep.mubr.f32.mxu0 0.0
    %6565 = vmatmul.mubr.f32.gmra.mxu0 %v5172
    %v6566 = vpop.f32.mrf.mxu0
    %v6567 = vadd.f32 0.0, %v6566
    %v6568 = vpop.f32.mrf.mxu0
    %6569 = vdwg.mxu0
    %6570 = vmatprep.subr.mxu0 0.0
    %6571 = vmatpush1.msra.mxu0 0.0
    %6572 = vmatprep.subr.mxu0 0.0
    %6573 = vmatpush1.msra.mxu0 0.0
    %6574 = vmatprep.subr.mxu0 0.0
    %6575 = vmatpush1.msra.mxu0 0.0
    %6576 = vmatprep.subr.mxu0 0.0
    %6577 = vmatpush1.msra.mxu0 0.0
    %6578 = vmatprep.subr.mxu0 0.0
    %6579 = vmatpush1.msra.mxu0 0.0
    %6580 = vmatprep.subr.mxu0 0.0
    %6581 = vmatpush1.msra.mxu0 0.0
    %6582 = vmatprep.subr.mxu0 0.0
    %6583 = vmatpush1.msra.mxu0 0.0
    %6584 = vmatprep.subr.mxu0 0.0
    %6585 = vmatpush1.msra.mxu0 0.0
    %6586 = vmatprep.subr.mxu0 0.0
    %6587 = vmatpush1.msra.mxu0 0.0
    %6588 = vmatprep.subr.mxu0 0.0
    %6589 = vmatpush1.msra.mxu0 0.0
    %6590 = vmatprep.subr.mxu0 0.0
    %6591 = vmatpush1.msra.mxu0 0.0
    %6592 = vmatprep.subr.mxu0 0.0
    %6593 = vmatpush1.msra.mxu0 0.0
    %6594 = vmatprep.subr.mxu0 0.0
    %6595 = vmatpush1.msra.mxu0 %v6079
    %6596 = vmatprep.subr.mxu0 0.0
    %6597 = vmatpush1.msra.mxu0 %v6078
    %6598 = vmatprep.subr.mxu0 0.0
    %6599 = vmatpush1.msra.mxu0 %v6077
    %6600 = vmatprep.subr.mxu0 0.0
    %6601 = vmatpush1.msra.mxu0 %v6076
    %6602 = vmatprep.subr.mxu0 0.0
    %6603 = vmatpush2.msra.mxu0 0.0
    %6604 = vmatprep.subr.mxu0 0.0
    %6605 = vmatpush2.msra.mxu0 0.0
    %6606 = vmatprep.subr.mxu0 0.0
    %6607 = vmatpush2.msra.mxu0 0.0
    %6608 = vmatprep.subr.mxu0 0.0
    %6609 = vmatpush2.msra.mxu0 0.0
    %6610 = vmatprep.subr.mxu0 0.0
    %6611 = vmatpush2.msra.mxu0 0.0
    %6612 = vmatprep.subr.mxu0 0.0
    %6613 = vmatpush2.msra.mxu0 0.0
    %6614 = vmatprep.subr.mxu0 0.0
    %6615 = vmatpush2.msra.mxu0 0.0
    %6616 = vmatprep.subr.mxu0 0.0
    %6617 = vmatpush2.msra.mxu0 0.0
    %6618 = vmatprep.subr.mxu0 0.0
    %6619 = vmatpush2.msra.mxu0 0.0
    %6620 = vmatprep.subr.mxu0 0.0
    %6621 = vmatpush2.msra.mxu0 0.0
    %6622 = vmatprep.subr.mxu0 0.0
    %6623 = vmatpush2.msra.mxu0 0.0
    %6624 = vmatprep.subr.mxu0 0.0
    %6625 = vmatpush2.msra.mxu0 0.0
    %6626 = vmatprep.subr.mxu0 0.0
    %6627 = vmatpush2.msra.mxu0 0.0
    %6628 = vmatprep.subr.mxu0 0.0
    %6629 = vmatpush2.msra.mxu0 0.0
    %6630 = vmatprep.subr.mxu0 0.0
    %6631 = vmatpush2.msra.mxu0 0.0
    %6632 = vmatprep.subr.mxu0 0.0
    %6633 = vmatpush2.msra.mxu0 0.0
    %6634 = vmatprep.mubr.f32.mxu0 0.0
    %6635 = vmatmul.mubr.f32.gmra.mxu0 %v5172
    %v6636 = vpop.f32.mrf.mxu0
    %v6637 = vadd.f32 0.0, %v6636
    %v6638 = vpop.f32.mrf.mxu0
    %6639 = vdwg.mxu0
    %v6641 = vsel %vm2617, %v4958, 0
    %v6644 = vsel %vm2617, %v5554, 0
    %6646 = vmatprep.subr.mxu0 0.0
    %6647 = vmatpush1.xpose.msra.mxu0 0.0
    %6648 = vmatprep.subr.mxu0 0.0
    %6649 = vmatpush1.xpose.msra.mxu0 0.0
    %6650 = vmatprep.subr.mxu0 0.0
    %6651 = vmatpush1.xpose.msra.mxu0 0.0
    %6652 = vmatprep.subr.mxu0 0.0
    %6653 = vmatpush1.xpose.msra.mxu0 0.0
    %6654 = vmatprep.subr.mxu0 0.0
    %6655 = vmatpush1.xpose.msra.mxu0 0.0
    %6656 = vmatprep.subr.mxu0 0.0
    %6657 = vmatpush1.xpose.msra.mxu0 0.0
    %6658 = vmatprep.subr.mxu0 0.0
    %6659 = vmatpush1.xpose.msra.mxu0 0.0
    %6660 = vmatprep.subr.mxu0 0.0
    %6661 = vmatpush1.xpose.msra.mxu0 0.0
    %6662 = vmatprep.subr.mxu0 0.0
    %6663 = vmatpush1.xpose.msra.mxu0 0.0
    %6664 = vmatprep.subr.mxu0 0.0
    %6665 = vmatpush1.xpose.msra.mxu0 0.0
    %6666 = vmatprep.subr.mxu0 0.0
    %6667 = vmatpush1.xpose.msra.mxu0 0.0
    %6668 = vmatprep.subr.mxu0 0.0
    %6669 = vmatpush1.xpose.msra.mxu0 0.0
    %6670 = vmatprep.subr.mxu0 0.0
    %6671 = vmatpush1.xpose.msra.mxu0 0.0
    %6672 = vmatprep.subr.mxu0 0.0
    %6673 = vmatpush1.xpose.msra.mxu0 0.0
    %6674 = vmatprep.subr.mxu0 0.0
    %6675 = vmatpush1.xpose.msra.mxu0 0.0
    %6676 = vmatprep.subr.mxu0 0.0
    %6677 = vmatpush1.xpose.msra.mxu0 %v6644
    %6678 = vmatprep.subr.mxu0 0.0
    %6679 = vmatpush2.xpose.msra.mxu0 0.0
    %6680 = vmatprep.subr.mxu0 0.0
    %6681 = vmatpush2.xpose.msra.mxu0 0.0
    %6682 = vmatprep.subr.mxu0 0.0
    %6683 = vmatpush2.xpose.msra.mxu0 0.0
    %6684 = vmatprep.subr.mxu0 0.0
    %6685 = vmatpush2.xpose.msra.mxu0 0.0
    %6686 = vmatprep.subr.mxu0 0.0
    %6687 = vmatpush2.xpose.msra.mxu0 0.0
    %6688 = vmatprep.subr.mxu0 0.0
    %6689 = vmatpush2.xpose.msra.mxu0 0.0
    %6690 = vmatprep.subr.mxu0 0.0
    %6691 = vmatpush2.xpose.msra.mxu0 0.0
    %6692 = vmatprep.subr.mxu0 0.0
    %6693 = vmatpush2.xpose.msra.mxu0 0.0
    %6694 = vmatprep.subr.mxu0 0.0
    %6695 = vmatpush2.xpose.msra.mxu0 0.0
    %6696 = vmatprep.subr.mxu0 0.0
    %6697 = vmatpush2.xpose.msra.mxu0 0.0
    %6698 = vmatprep.subr.mxu0 0.0
    %6699 = vmatpush2.xpose.msra.mxu0 0.0
    %6700 = vmatprep.subr.mxu0 0.0
    %6701 = vmatpush2.xpose.msra.mxu0 0.0
    %6702 = vmatprep.subr.mxu0 0.0
    %6703 = vmatpush2.xpose.msra.mxu0 0.0
    %6704 = vmatprep.subr.mxu0 0.0
    %6705 = vmatpush2.xpose.msra.mxu0 0.0
    %6706 = vmatprep.subr.mxu0 0.0
    %6707 = vmatpush2.xpose.msra.mxu0 0.0
    %6708 = vmatprep.subr.mxu0 0.0
    %6709 = vmatpush2.xpose.msra.mxu0 0.0
    %6710 = vmatprep.mubr.f32.mxu0 0.0
    %6711 = vmatmul.mubr.f32.gmra.mxu0 %v6641
    %v6712 = vpop.f32.mrf.mxu0
    %v6713 = vadd.f32 0.0, %v6712
    %v6714 = vpop.f32.mrf.mxu0
    %6715 = vdwg.mxu0
    %v6717 = vsel %vm2617, %v5028, 0
    %v6720 = vsel %vm2617, %v5624, 0
    %6722 = vmatprep.subr.mxu0 0.0
    %6723 = vmatpush1.xpose.msra.mxu0 0.0
    %6724 = vmatprep.subr.mxu0 0.0
    %6725 = vmatpush1.xpose.msra.mxu0 0.0
    %6726 = vmatprep.subr.mxu0 0.0
    %6727 = vmatpush1.xpose.msra.mxu0 0.0
    %6728 = vmatprep.subr.mxu0 0.0
    %6729 = vmatpush1.xpose.msra.mxu0 0.0
    %6730 = vmatprep.subr.mxu0 0.0
    %6731 = vmatpush1.xpose.msra.mxu0 0.0
    %6732 = vmatprep.subr.mxu0 0.0
    %6733 = vmatpush1.xpose.msra.mxu0 0.0
    %6734 = vmatprep.subr.mxu0 0.0
    %6735 = vmatpush1.xpose.msra.mxu0 0.0
    %6736 = vmatprep.subr.mxu0 0.0
    %6737 = vmatpush1.xpose.msra.mxu0 0.0
    %6738 = vmatprep.subr.mxu0 0.0
    %6739 = vmatpush1.xpose.msra.mxu0 0.0
    %6740 = vmatprep.subr.mxu0 0.0
    %6741 = vmatpush1.xpose.msra.mxu0 0.0
    %6742 = vmatprep.subr.mxu0 0.0
    %6743 = vmatpush1.xpose.msra.mxu0 0.0
    %6744 = vmatprep.subr.mxu0 0.0
    %6745 = vmatpush1.xpose.msra.mxu0 0.0
    %6746 = vmatprep.subr.mxu0 0.0
    %6747 = vmatpush1.xpose.msra.mxu0 0.0
    %6748 = vmatprep.subr.mxu0 0.0
    %6749 = vmatpush1.xpose.msra.mxu0 0.0
    %6750 = vmatprep.subr.mxu0 0.0
    %6751 = vmatpush1.xpose.msra.mxu0 0.0
    %6752 = vmatprep.subr.mxu0 0.0
    %6753 = vmatpush1.xpose.msra.mxu0 %v6720
    %6754 = vmatprep.subr.mxu0 0.0
    %6755 = vmatpush2.xpose.msra.mxu0 0.0
    %6756 = vmatprep.subr.mxu0 0.0
    %6757 = vmatpush2.xpose.msra.mxu0 0.0
    %6758 = vmatprep.subr.mxu0 0.0
    %6759 = vmatpush2.xpose.msra.mxu0 0.0
    %6760 = vmatprep.subr.mxu0 0.0
    %6761 = vmatpush2.xpose.msra.mxu0 0.0
    %6762 = vmatprep.subr.mxu0 0.0
    %6763 = vmatpush2.xpose.msra.mxu0 0.0
    %6764 = vmatprep.subr.mxu0 0.0
    %6765 = vmatpush2.xpose.msra.mxu0 0.0
    %6766 = vmatprep.subr.mxu0 0.0
    %6767 = vmatpush2.xpose.msra.mxu0 0.0
    %6768 = vmatprep.subr.mxu0 0.0
    %6769 = vmatpush2.xpose.msra.mxu0 0.0
    %6770 = vmatprep.subr.mxu0 0.0
    %6771 = vmatpush2.xpose.msra.mxu0 0.0
    %6772 = vmatprep.subr.mxu0 0.0
    %6773 = vmatpush2.xpose.msra.mxu0 0.0
    %6774 = vmatprep.subr.mxu0 0.0
    %6775 = vmatpush2.xpose.msra.mxu0 0.0
    %6776 = vmatprep.subr.mxu0 0.0
    %6777 = vmatpush2.xpose.msra.mxu0 0.0
    %6778 = vmatprep.subr.mxu0 0.0
    %6779 = vmatpush2.xpose.msra.mxu0 0.0
    %6780 = vmatprep.subr.mxu0 0.0
    %6781 = vmatpush2.xpose.msra.mxu0 0.0
    %6782 = vmatprep.subr.mxu0 0.0
    %6783 = vmatpush2.xpose.msra.mxu0 0.0
    %6784 = vmatprep.subr.mxu0 0.0
    %6785 = vmatpush2.xpose.msra.mxu0 0.0
    %6786 = vmatprep.mubr.f32.mxu0 0.0
    %6787 = vmatmul.mubr.f32.gmra.mxu0 %v6717
    %v6788 = vpop.f32.mrf.mxu0
    %v6789 = vadd.f32 0.0, %v6788
    %v6790 = vpop.f32.mrf.mxu0
    %6791 = vdwg.mxu0
    %v6793 = vsel %vm2617, %v5098, 0
    %v6796 = vsel %vm2617, %v5694, 0
    %6798 = vmatprep.subr.mxu0 0.0
    %6799 = vmatpush1.xpose.msra.mxu0 0.0
    %6800 = vmatprep.subr.mxu0 0.0
    %6801 = vmatpush1.xpose.msra.mxu0 0.0
    %6802 = vmatprep.subr.mxu0 0.0
    %6803 = vmatpush1.xpose.msra.mxu0 0.0
    %6804 = vmatprep.subr.mxu0 0.0
    %6805 = vmatpush1.xpose.msra.mxu0 0.0
    %6806 = vmatprep.subr.mxu0 0.0
    %6807 = vmatpush1.xpose.msra.mxu0 0.0
    %6808 = vmatprep.subr.mxu0 0.0
    %6809 = vmatpush1.xpose.msra.mxu0 0.0
    %6810 = vmatprep.subr.mxu0 0.0
    %6811 = vmatpush1.xpose.msra.mxu0 0.0
    %6812 = vmatprep.subr.mxu0 0.0
    %6813 = vmatpush1.xpose.msra.mxu0 0.0
    %6814 = vmatprep.subr.mxu0 0.0
    %6815 = vmatpush1.xpose.msra.mxu0 0.0
    %6816 = vmatprep.subr.mxu0 0.0
    %6817 = vmatpush1.xpose.msra.mxu0 0.0
    %6818 = vmatprep.subr.mxu0 0.0
    %6819 = vmatpush1.xpose.msra.mxu0 0.0
    %6820 = vmatprep.subr.mxu0 0.0
    %6821 = vmatpush1.xpose.msra.mxu0 0.0
    %6822 = vmatprep.subr.mxu0 0.0
    %6823 = vmatpush1.xpose.msra.mxu0 0.0
    %6824 = vmatprep.subr.mxu0 0.0
    %6825 = vmatpush1.xpose.msra.mxu0 0.0
    %6826 = vmatprep.subr.mxu0 0.0
    %6827 = vmatpush1.xpose.msra.mxu0 0.0
    %6828 = vmatprep.subr.mxu0 0.0
    %6829 = vmatpush1.xpose.msra.mxu0 %v6796
    %6830 = vmatprep.subr.mxu0 0.0
    %6831 = vmatpush2.xpose.msra.mxu0 0.0
    %6832 = vmatprep.subr.mxu0 0.0
    %6833 = vmatpush2.xpose.msra.mxu0 0.0
    %6834 = vmatprep.subr.mxu0 0.0
    %6835 = vmatpush2.xpose.msra.mxu0 0.0
    %6836 = vmatprep.subr.mxu0 0.0
    %6837 = vmatpush2.xpose.msra.mxu0 0.0
    %6838 = vmatprep.subr.mxu0 0.0
    %6839 = vmatpush2.xpose.msra.mxu0 0.0
    %6840 = vmatprep.subr.mxu0 0.0
    %6841 = vmatpush2.xpose.msra.mxu0 0.0
    %6842 = vmatprep.subr.mxu0 0.0
    %6843 = vmatpush2.xpose.msra.mxu0 0.0
    %6844 = vmatprep.subr.mxu0 0.0
    %6845 = vmatpush2.xpose.msra.mxu0 0.0
    %6846 = vmatprep.subr.mxu0 0.0
    %6847 = vmatpush2.xpose.msra.mxu0 0.0
    %6848 = vmatprep.subr.mxu0 0.0
    %6849 = vmatpush2.xpose.msra.mxu0 0.0
    %6850 = vmatprep.subr.mxu0 0.0
    %6851 = vmatpush2.xpose.msra.mxu0 0.0
    %6852 = vmatprep.subr.mxu0 0.0
    %6853 = vmatpush2.xpose.msra.mxu0 0.0
    %6854 = vmatprep.subr.mxu0 0.0
    %6855 = vmatpush2.xpose.msra.mxu0 0.0
    %6856 = vmatprep.subr.mxu0 0.0
    %6857 = vmatpush2.xpose.msra.mxu0 0.0
    %6858 = vmatprep.subr.mxu0 0.0
    %6859 = vmatpush2.xpose.msra.mxu0 0.0
    %6860 = vmatprep.subr.mxu0 0.0
    %6861 = vmatpush2.xpose.msra.mxu0 0.0
    %6862 = vmatprep.mubr.f32.mxu0 0.0
    %6863 = vmatmul.mubr.f32.gmra.mxu0 %v6793
    %v6864 = vpop.f32.mrf.mxu0
    %v6865 = vadd.f32 0.0, %v6864
    %v6866 = vpop.f32.mrf.mxu0
    %6867 = vdwg.mxu0
    %v6869 = vsel %vm2617, %v5168, 0
    %v6872 = vsel %vm2617, %v5764, 0
    %6874 = vmatprep.subr.mxu0 0.0
    %6875 = vmatpush1.xpose.msra.mxu0 0.0
    %6876 = vmatprep.subr.mxu0 0.0
    %6877 = vmatpush1.xpose.msra.mxu0 0.0
    %6878 = vmatprep.subr.mxu0 0.0
    %6879 = vmatpush1.xpose.msra.mxu0 0.0
    %6880 = vmatprep.subr.mxu0 0.0
    %6881 = vmatpush1.xpose.msra.mxu0 0.0
    %6882 = vmatprep.subr.mxu0 0.0
    %6883 = vmatpush1.xpose.msra.mxu0 0.0
    %6884 = vmatprep.subr.mxu0 0.0
    %6885 = vmatpush1.xpose.msra.mxu0 0.0
    %6886 = vmatprep.subr.mxu0 0.0
    %6887 = vmatpush1.xpose.msra.mxu0 0.0
    %6888 = vmatprep.subr.mxu0 0.0
    %6889 = vmatpush1.xpose.msra.mxu0 0.0
    %6890 = vmatprep.subr.mxu0 0.0
    %6891 = vmatpush1.xpose.msra.mxu0 0.0
    %6892 = vmatprep.subr.mxu0 0.0
    %6893 = vmatpush1.xpose.msra.mxu0 0.0
    %6894 = vmatprep.subr.mxu0 0.0
    %6895 = vmatpush1.xpose.msra.mxu0 0.0
    %6896 = vmatprep.subr.mxu0 0.0
    %6897 = vmatpush1.xpose.msra.mxu0 0.0
    %6898 = vmatprep.subr.mxu0 0.0
    %6899 = vmatpush1.xpose.msra.mxu0 0.0
    %6900 = vmatprep.subr.mxu0 0.0
    %6901 = vmatpush1.xpose.msra.mxu0 0.0
    %6902 = vmatprep.subr.mxu0 0.0
    %6903 = vmatpush1.xpose.msra.mxu0 0.0
    %6904 = vmatprep.subr.mxu0 0.0
    %6905 = vmatpush1.xpose.msra.mxu0 %v6872
    %6906 = vmatprep.subr.mxu0 0.0
    %6907 = vmatpush2.xpose.msra.mxu0 0.0
    %6908 = vmatprep.subr.mxu0 0.0
    %6909 = vmatpush2.xpose.msra.mxu0 0.0
    %6910 = vmatprep.subr.mxu0 0.0
    %6911 = vmatpush2.xpose.msra.mxu0 0.0
    %6912 = vmatprep.subr.mxu0 0.0
    %6913 = vmatpush2.xpose.msra.mxu0 0.0
    %6914 = vmatprep.subr.mxu0 0.0
    %6915 = vmatpush2.xpose.msra.mxu0 0.0
    %6916 = vmatprep.subr.mxu0 0.0
    %6917 = vmatpush2.xpose.msra.mxu0 0.0
    %6918 = vmatprep.subr.mxu0 0.0
    %6919 = vmatpush2.xpose.msra.mxu0 0.0
    %6920 = vmatprep.subr.mxu0 0.0
    %6921 = vmatpush2.xpose.msra.mxu0 0.0
    %6922 = vmatprep.subr.mxu0 0.0
    %6923 = vmatpush2.xpose.msra.mxu0 0.0
    %6924 = vmatprep.subr.mxu0 0.0
    %6925 = vmatpush2.xpose.msra.mxu0 0.0
    %6926 = vmatprep.subr.mxu0 0.0
    %6927 = vmatpush2.xpose.msra.mxu0 0.0
    %6928 = vmatprep.subr.mxu0 0.0
    %6929 = vmatpush2.xpose.msra.mxu0 0.0
    %6930 = vmatprep.subr.mxu0 0.0
    %6931 = vmatpush2.xpose.msra.mxu0 0.0
    %6932 = vmatprep.subr.mxu0 0.0
    %6933 = vmatpush2.xpose.msra.mxu0 0.0
    %6934 = vmatprep.subr.mxu0 0.0
    %6935 = vmatpush2.xpose.msra.mxu0 0.0
    %6936 = vmatprep.subr.mxu0 0.0
    %6937 = vmatpush2.xpose.msra.mxu0 0.0
    %6938 = vmatprep.mubr.f32.mxu0 0.0
    %6939 = vmatmul.mubr.f32.gmra.mxu0 %v6869
    %v6940 = vpop.f32.mrf.mxu0
    %v6941 = vadd.f32 0.0, %v6940
    %v6942 = vpop.f32.mrf.mxu0
    %6943 = vdwg.mxu0
    %v6945 = vsel %vm2617, %v5241, 0
    %v6948 = vsel %vm2617, %v5834, 0
    %6950 = vmatprep.subr.mxu0 0.0
    %6951 = vmatpush1.xpose.msra.mxu0 0.0
    %6952 = vmatprep.subr.mxu0 0.0
    %6953 = vmatpush1.xpose.msra.mxu0 0.0
    %6954 = vmatprep.subr.mxu0 0.0
    %6955 = vmatpush1.xpose.msra.mxu0 0.0
    %6956 = vmatprep.subr.mxu0 0.0
    %6957 = vmatpush1.xpose.msra.mxu0 0.0
    %6958 = vmatprep.subr.mxu0 0.0
    %6959 = vmatpush1.xpose.msra.mxu0 0.0
    %6960 = vmatprep.subr.mxu0 0.0
    %6961 = vmatpush1.xpose.msra.mxu0 0.0
    %6962 = vmatprep.subr.mxu0 0.0
    %6963 = vmatpush1.xpose.msra.mxu0 0.0
    %6964 = vmatprep.subr.mxu0 0.0
    %6965 = vmatpush1.xpose.msra.mxu0 0.0
    %6966 = vmatprep.subr.mxu0 0.0
    %6967 = vmatpush1.xpose.msra.mxu0 0.0
    %6968 = vmatprep.subr.mxu0 0.0
    %6969 = vmatpush1.xpose.msra.mxu0 0.0
    %6970 = vmatprep.subr.mxu0 0.0
    %6971 = vmatpush1.xpose.msra.mxu0 0.0
    %6972 = vmatprep.subr.mxu0 0.0
    %6973 = vmatpush1.xpose.msra.mxu0 0.0
    %6974 = vmatprep.subr.mxu0 0.0
    %6975 = vmatpush1.xpose.msra.mxu0 0.0
    %6976 = vmatprep.subr.mxu0 0.0
    %6977 = vmatpush1.xpose.msra.mxu0 0.0
    %6978 = vmatprep.subr.mxu0 0.0
    %6979 = vmatpush1.xpose.msra.mxu0 0.0
    %6980 = vmatprep.subr.mxu0 0.0
    %6981 = vmatpush1.xpose.msra.mxu0 %v6948
    %6982 = vmatprep.subr.mxu0 0.0
    %6983 = vmatpush2.xpose.msra.mxu0 0.0
    %6984 = vmatprep.subr.mxu0 0.0
    %6985 = vmatpush2.xpose.msra.mxu0 0.0
    %6986 = vmatprep.subr.mxu0 0.0
    %6987 = vmatpush2.xpose.msra.mxu0 0.0
    %6988 = vmatprep.subr.mxu0 0.0
    %6989 = vmatpush2.xpose.msra.mxu0 0.0
    %6990 = vmatprep.subr.mxu0 0.0
    %6991 = vmatpush2.xpose.msra.mxu0 0.0
    %6992 = vmatprep.subr.mxu0 0.0
    %6993 = vmatpush2.xpose.msra.mxu0 0.0
    %6994 = vmatprep.subr.mxu0 0.0
    %6995 = vmatpush2.xpose.msra.mxu0 0.0
    %6996 = vmatprep.subr.mxu0 0.0
    %6997 = vmatpush2.xpose.msra.mxu0 0.0
    %6998 = vmatprep.subr.mxu0 0.0
    %6999 = vmatpush2.xpose.msra.mxu0 0.0
    %7000 = vmatprep.subr.mxu0 0.0
    %7001 = vmatpush2.xpose.msra.mxu0 0.0
    %7002 = vmatprep.subr.mxu0 0.0
    %7003 = vmatpush2.xpose.msra.mxu0 0.0
    %7004 = vmatprep.subr.mxu0 0.0
    %7005 = vmatpush2.xpose.msra.mxu0 0.0
    %7006 = vmatprep.subr.mxu0 0.0
    %7007 = vmatpush2.xpose.msra.mxu0 0.0
    %7008 = vmatprep.subr.mxu0 0.0
    %7009 = vmatpush2.xpose.msra.mxu0 0.0
    %7010 = vmatprep.subr.mxu0 0.0
    %7011 = vmatpush2.xpose.msra.mxu0 0.0
    %7012 = vmatprep.subr.mxu0 0.0
    %7013 = vmatpush2.xpose.msra.mxu0 0.0
    %7014 = vmatprep.mubr.f32.mxu0 0.0
    %7015 = vmatmul.mubr.f32.gmra.mxu0 %v6945
    %v7016 = vpop.f32.mrf.mxu0
    %v7017 = vadd.f32 0.0, %v7016
    %v7018 = vpop.f32.mrf.mxu0
    %7019 = vdwg.mxu0
    %v7021 = vsel %vm2617, %v5311, 0
    %v7024 = vsel %vm2617, %v5904, 0
    %7026 = vmatprep.subr.mxu0 0.0
    %7027 = vmatpush1.xpose.msra.mxu0 0.0
    %7028 = vmatprep.subr.mxu0 0.0
    %7029 = vmatpush1.xpose.msra.mxu0 0.0
    %7030 = vmatprep.subr.mxu0 0.0
    %7031 = vmatpush1.xpose.msra.mxu0 0.0
    %7032 = vmatprep.subr.mxu0 0.0
    %7033 = vmatpush1.xpose.msra.mxu0 0.0
    %7034 = vmatprep.subr.mxu0 0.0
    %7035 = vmatpush1.xpose.msra.mxu0 0.0
    %7036 = vmatprep.subr.mxu0 0.0
    %7037 = vmatpush1.xpose.msra.mxu0 0.0
    %7038 = vmatprep.subr.mxu0 0.0
    %7039 = vmatpush1.xpose.msra.mxu0 0.0
    %7040 = vmatprep.subr.mxu0 0.0
    %7041 = vmatpush1.xpose.msra.mxu0 0.0
    %7042 = vmatprep.subr.mxu0 0.0
    %7043 = vmatpush1.xpose.msra.mxu0 0.0
    %7044 = vmatprep.subr.mxu0 0.0
    %7045 = vmatpush1.xpose.msra.mxu0 0.0
    %7046 = vmatprep.subr.mxu0 0.0
    %7047 = vmatpush1.xpose.msra.mxu0 0.0
    %7048 = vmatprep.subr.mxu0 0.0
    %7049 = vmatpush1.xpose.msra.mxu0 0.0
    %7050 = vmatprep.subr.mxu0 0.0
    %7051 = vmatpush1.xpose.msra.mxu0 0.0
    %7052 = vmatprep.subr.mxu0 0.0
    %7053 = vmatpush1.xpose.msra.mxu0 0.0
    %7054 = vmatprep.subr.mxu0 0.0
    %7055 = vmatpush1.xpose.msra.mxu0 0.0
    %7056 = vmatprep.subr.mxu0 0.0
    %7057 = vmatpush1.xpose.msra.mxu0 %v7024
    %7058 = vmatprep.subr.mxu0 0.0
    %7059 = vmatpush2.xpose.msra.mxu0 0.0
    %7060 = vmatprep.subr.mxu0 0.0
    %7061 = vmatpush2.xpose.msra.mxu0 0.0
    %7062 = vmatprep.subr.mxu0 0.0
    %7063 = vmatpush2.xpose.msra.mxu0 0.0
    %7064 = vmatprep.subr.mxu0 0.0
    %7065 = vmatpush2.xpose.msra.mxu0 0.0
    %7066 = vmatprep.subr.mxu0 0.0
    %7067 = vmatpush2.xpose.msra.mxu0 0.0
    %7068 = vmatprep.subr.mxu0 0.0
    %7069 = vmatpush2.xpose.msra.mxu0 0.0
    %7070 = vmatprep.subr.mxu0 0.0
    %7071 = vmatpush2.xpose.msra.mxu0 0.0
    %7072 = vmatprep.subr.mxu0 0.0
    %7073 = vmatpush2.xpose.msra.mxu0 0.0
    %7074 = vmatprep.subr.mxu0 0.0
    %7075 = vmatpush2.xpose.msra.mxu0 0.0
    %7076 = vmatprep.subr.mxu0 0.0
    %7077 = vmatpush2.xpose.msra.mxu0 0.0
    %7078 = vmatprep.subr.mxu0 0.0
    %7079 = vmatpush2.xpose.msra.mxu0 0.0
    %7080 = vmatprep.subr.mxu0 0.0
    %7081 = vmatpush2.xpose.msra.mxu0 0.0
    %7082 = vmatprep.subr.mxu0 0.0
    %7083 = vmatpush2.xpose.msra.mxu0 0.0
    %7084 = vmatprep.subr.mxu0 0.0
    %7085 = vmatpush2.xpose.msra.mxu0 0.0
    %7086 = vmatprep.subr.mxu0 0.0
    %7087 = vmatpush2.xpose.msra.mxu0 0.0
    %7088 = vmatprep.subr.mxu0 0.0
    %7089 = vmatpush2.xpose.msra.mxu0 0.0
    %7090 = vmatprep.mubr.f32.mxu0 0.0
    %7091 = vmatmul.mubr.f32.gmra.mxu0 %v7021
    %v7092 = vpop.f32.mrf.mxu0
    %v7093 = vadd.f32 0.0, %v7092
    %v7094 = vpop.f32.mrf.mxu0
    %7095 = vdwg.mxu0
    %v7097 = vsel %vm2617, %v5381, 0
    %v7100 = vsel %vm2617, %v5974, 0
    %7102 = vmatprep.subr.mxu0 0.0
    %7103 = vmatpush1.xpose.msra.mxu0 0.0
    %7104 = vmatprep.subr.mxu0 0.0
    %7105 = vmatpush1.xpose.msra.mxu0 0.0
    %7106 = vmatprep.subr.mxu0 0.0
    %7107 = vmatpush1.xpose.msra.mxu0 0.0
    %7108 = vmatprep.subr.mxu0 0.0
    %7109 = vmatpush1.xpose.msra.mxu0 0.0
    %7110 = vmatprep.subr.mxu0 0.0
    %7111 = vmatpush1.xpose.msra.mxu0 0.0
    %7112 = vmatprep.subr.mxu0 0.0
    %7113 = vmatpush1.xpose.msra.mxu0 0.0
    %7114 = vmatprep.subr.mxu0 0.0
    %7115 = vmatpush1.xpose.msra.mxu0 0.0
    %7116 = vmatprep.subr.mxu0 0.0
    %7117 = vmatpush1.xpose.msra.mxu0 0.0
    %7118 = vmatprep.subr.mxu0 0.0
    %7119 = vmatpush1.xpose.msra.mxu0 0.0
    %7120 = vmatprep.subr.mxu0 0.0
    %7121 = vmatpush1.xpose.msra.mxu0 0.0
    %7122 = vmatprep.subr.mxu0 0.0
    %7123 = vmatpush1.xpose.msra.mxu0 0.0
    %7124 = vmatprep.subr.mxu0 0.0
    %7125 = vmatpush1.xpose.msra.mxu0 0.0
    %7126 = vmatprep.subr.mxu0 0.0
    %7127 = vmatpush1.xpose.msra.mxu0 0.0
    %7128 = vmatprep.subr.mxu0 0.0
    %7129 = vmatpush1.xpose.msra.mxu0 0.0
    %7130 = vmatprep.subr.mxu0 0.0
    %7131 = vmatpush1.xpose.msra.mxu0 0.0
    %7132 = vmatprep.subr.mxu0 0.0
    %7133 = vmatpush1.xpose.msra.mxu0 %v7100
    %7134 = vmatprep.subr.mxu0 0.0
    %7135 = vmatpush2.xpose.msra.mxu0 0.0
    %7136 = vmatprep.subr.mxu0 0.0
    %7137 = vmatpush2.xpose.msra.mxu0 0.0
    %7138 = vmatprep.subr.mxu0 0.0
    %7139 = vmatpush2.xpose.msra.mxu0 0.0
    %7140 = vmatprep.subr.mxu0 0.0
    %7141 = vmatpush2.xpose.msra.mxu0 0.0
    %7142 = vmatprep.subr.mxu0 0.0
    %7143 = vmatpush2.xpose.msra.mxu0 0.0
    %7144 = vmatprep.subr.mxu0 0.0
    %7145 = vmatpush2.xpose.msra.mxu0 0.0
    %7146 = vmatprep.subr.mxu0 0.0
    %7147 = vmatpush2.xpose.msra.mxu0 0.0
    %7148 = vmatprep.subr.mxu0 0.0
    %7149 = vmatpush2.xpose.msra.mxu0 0.0
    %7150 = vmatprep.subr.mxu0 0.0
    %7151 = vmatpush2.xpose.msra.mxu0 0.0
    %7152 = vmatprep.subr.mxu0 0.0
    %7153 = vmatpush2.xpose.msra.mxu0 0.0
    %7154 = vmatprep.subr.mxu0 0.0
    %7155 = vmatpush2.xpose.msra.mxu0 0.0
    %7156 = vmatprep.subr.mxu0 0.0
    %7157 = vmatpush2.xpose.msra.mxu0 0.0
    %7158 = vmatprep.subr.mxu0 0.0
    %7159 = vmatpush2.xpose.msra.mxu0 0.0
    %7160 = vmatprep.subr.mxu0 0.0
    %7161 = vmatpush2.xpose.msra.mxu0 0.0
    %7162 = vmatprep.subr.mxu0 0.0
    %7163 = vmatpush2.xpose.msra.mxu0 0.0
    %7164 = vmatprep.subr.mxu0 0.0
    %7165 = vmatpush2.xpose.msra.mxu0 0.0
    %7166 = vmatprep.mubr.f32.mxu0 0.0
    %7167 = vmatmul.mubr.f32.gmra.mxu0 %v7097
    %v7168 = vpop.f32.mrf.mxu0
    %v7169 = vadd.f32 0.0, %v7168
    %v7170 = vpop.f32.mrf.mxu0
    %7171 = vdwg.mxu0
    %v7173 = vsel %vm2617, %v5451, 0
    %v7176 = vsel %vm2617, %v6044, 0
    %7178 = vmatprep.subr.mxu0 0.0
    %7179 = vmatpush1.xpose.msra.mxu0 0.0
    %7180 = vmatprep.subr.mxu0 0.0
    %7181 = vmatpush1.xpose.msra.mxu0 0.0
    %7182 = vmatprep.subr.mxu0 0.0
    %7183 = vmatpush1.xpose.msra.mxu0 0.0
    %7184 = vmatprep.subr.mxu0 0.0
    %7185 = vmatpush1.xpose.msra.mxu0 0.0
    %7186 = vmatprep.subr.mxu0 0.0
    %7187 = vmatpush1.xpose.msra.mxu0 0.0
    %7188 = vmatprep.subr.mxu0 0.0
    %7189 = vmatpush1.xpose.msra.mxu0 0.0
    %7190 = vmatprep.subr.mxu0 0.0
    %7191 = vmatpush1.xpose.msra.mxu0 0.0
    %7192 = vmatprep.subr.mxu0 0.0
    %7193 = vmatpush1.xpose.msra.mxu0 0.0
    %7194 = vmatprep.subr.mxu0 0.0
    %7195 = vmatpush1.xpose.msra.mxu0 0.0
    %7196 = vmatprep.subr.mxu0 0.0
    %7197 = vmatpush1.xpose.msra.mxu0 0.0
    %7198 = vmatprep.subr.mxu0 0.0
    %7199 = vmatpush1.xpose.msra.mxu0 0.0
    %7200 = vmatprep.subr.mxu0 0.0
    %7201 = vmatpush1.xpose.msra.mxu0 0.0
    %7202 = vmatprep.subr.mxu0 0.0
    %7203 = vmatpush1.xpose.msra.mxu0 0.0
    %7204 = vmatprep.subr.mxu0 0.0
    %7205 = vmatpush1.xpose.msra.mxu0 0.0
    %7206 = vmatprep.subr.mxu0 0.0
    %7207 = vmatpush1.xpose.msra.mxu0 0.0
    %7208 = vmatprep.subr.mxu0 0.0
    %7209 = vmatpush1.xpose.msra.mxu0 %v7176
    %7210 = vmatprep.subr.mxu0 0.0
    %7211 = vmatpush2.xpose.msra.mxu0 0.0
    %7212 = vmatprep.subr.mxu0 0.0
    %7213 = vmatpush2.xpose.msra.mxu0 0.0
    %7214 = vmatprep.subr.mxu0 0.0
    %7215 = vmatpush2.xpose.msra.mxu0 0.0
    %7216 = vmatprep.subr.mxu0 0.0
    %7217 = vmatpush2.xpose.msra.mxu0 0.0
    %7218 = vmatprep.subr.mxu0 0.0
    %7219 = vmatpush2.xpose.msra.mxu0 0.0
    %7220 = vmatprep.subr.mxu0 0.0
    %7221 = vmatpush2.xpose.msra.mxu0 0.0
    %7222 = vmatprep.subr.mxu0 0.0
    %7223 = vmatpush2.xpose.msra.mxu0 0.0
    %7224 = vmatprep.subr.mxu0 0.0
    %7225 = vmatpush2.xpose.msra.mxu0 0.0
    %7226 = vmatprep.subr.mxu0 0.0
    %7227 = vmatpush2.xpose.msra.mxu0 0.0
    %7228 = vmatprep.subr.mxu0 0.0
    %7229 = vmatpush2.xpose.msra.mxu0 0.0
    %7230 = vmatprep.subr.mxu0 0.0
    %7231 = vmatpush2.xpose.msra.mxu0 0.0
    %7232 = vmatprep.subr.mxu0 0.0
    %7233 = vmatpush2.xpose.msra.mxu0 0.0
    %7234 = vmatprep.subr.mxu0 0.0
    %7235 = vmatpush2.xpose.msra.mxu0 0.0
    %7236 = vmatprep.subr.mxu0 0.0
    %7237 = vmatpush2.xpose.msra.mxu0 0.0
    %7238 = vmatprep.subr.mxu0 0.0
    %7239 = vmatpush2.xpose.msra.mxu0 0.0
    %7240 = vmatprep.subr.mxu0 0.0
    %7241 = vmatpush2.xpose.msra.mxu0 0.0
    %7242 = vmatprep.mubr.f32.mxu0 0.0
    %7243 = vmatmul.mubr.f32.gmra.mxu0 %v7173
    %v7244 = vpop.f32.mrf.mxu0
    %v7245 = vadd.f32 0.0, %v7244
    %v7246 = vpop.f32.mrf.mxu0
    %7247 = vdwg.mxu0
    %v7248 = vsel %vm2617, %v6713, -inf
    %7249 = vmax.xlane.f32.xlu0 %v7248
    %v7250 = vpop.xlane.xlu0 %7249
    %v7251 = vsel %vm2617, %v6789, -inf
    %7252 = vmax.xlane.f32.xlu0 %v7251
    %v7253 = vpop.xlane.xlu0 %7252
    %v7254 = vsel %vm2617, %v6865, -inf
    %7255 = vmax.xlane.f32.xlu0 %v7254
    %v7256 = vpop.xlane.xlu0 %7255
    %v7257 = vsel %vm2617, %v6941, -inf
    %7258 = vmax.xlane.f32.xlu0 %v7257
    %v7259 = vpop.xlane.xlu0 %7258
    %v7260 = vsel %vm2617, %v7017, -inf
    %7261 = vmax.xlane.f32.xlu0 %v7260
    %v7262 = vpop.xlane.xlu0 %7261
    %v7263 = vsel %vm2617, %v7093, -inf
    %7264 = vmax.xlane.f32.xlu0 %v7263
    %v7265 = vpop.xlane.xlu0 %7264
    %v7266 = vsel %vm2617, %v7169, -inf
    %7267 = vmax.xlane.f32.xlu0 %v7266
    %v7268 = vpop.xlane.xlu0 %7267
    %v7269 = vsel %vm2617, %v7245, -inf
    %7270 = vmax.xlane.f32.xlu0 %v7269
    %v7271 = vpop.xlane.xlu0 %7270
    %v7272 = vsub.f32 %v6713, %v7250
    %v7273 = vsub.f32 %v6789, %v7253
    %v7274 = vsub.f32 %v6865, %v7256
    %v7275 = vsub.f32 %v6941, %v7259
    %v7276 = vsub.f32 %v7017, %v7262
    %v7277 = vsub.f32 %v7093, %v7265
    %v7278 = vsub.f32 %v7169, %v7268
    %v7279 = vsub.f32 %v7245, %v7271
    %v7280 = vmul.f32 %v7272, 1.442695
    %v7281 = vpow.pop %v7280
    %v7282 = vmul.f32 %v7273, 1.442695
    %v7283 = vpow.pop %v7282
    %v7284 = vmul.f32 %v7274, 1.442695
    %v7285 = vpow.pop %v7284
    %v7286 = vmul.f32 %v7275, 1.442695
    %v7287 = vpow.pop %v7286
    %v7288 = vmul.f32 %v7276, 1.442695
    %v7289 = vpow.pop %v7288
    %v7290 = vmul.f32 %v7277, 1.442695
    %v7291 = vpow.pop %v7290
    %v7292 = vmul.f32 %v7278, 1.442695
    %v7293 = vpow.pop %v7292
    %v7294 = vmul.f32 %v7279, 1.442695
    %v7295 = vpow.pop %v7294
    %v7296 = vsel %vm2617, %v7281, 0.0
    %7297 = vadd.xlane.f32.xlu0 %v7296
    %v7298 = vpop.xlane.xlu0 %7297
    %v7299 = vsel %vm2617, %v7283, 0.0
    %7300 = vadd.xlane.f32.xlu0 %v7299
    %v7301 = vpop.xlane.xlu0 %7300
    %v7302 = vsel %vm2617, %v7285, 0.0
    %7303 = vadd.xlane.f32.xlu0 %v7302
    %v7304 = vpop.xlane.xlu0 %7303
    %v7305 = vsel %vm2617, %v7287, 0.0
    %7306 = vadd.xlane.f32.xlu0 %v7305
    %v7307 = vpop.xlane.xlu0 %7306
    %v7308 = vsel %vm2617, %v7289, 0.0
    %7309 = vadd.xlane.f32.xlu0 %v7308
    %v7310 = vpop.xlane.xlu0 %7309
    %v7311 = vsel %vm2617, %v7291, 0.0
    %7312 = vadd.xlane.f32.xlu0 %v7311
    %v7313 = vpop.xlane.xlu0 %7312
    %v7314 = vsel %vm2617, %v7293, 0.0
    %7315 = vadd.xlane.f32.xlu0 %v7314
    %v7316 = vpop.xlane.xlu0 %7315
    %v7317 = vsel %vm2617, %v7295, 0.0
    %7318 = vadd.xlane.f32.xlu0 %v7317
    %v7319 = vpop.xlane.xlu0 %7318
    %v7320 = vrcp.pop %v7298
    %v7321 = vrcp.pop %v7301
    %v7322 = vrcp.pop %v7304
    %v7323 = vrcp.pop %v7307
    %v7324 = vrcp.pop %v7310
    %v7325 = vrcp.pop %v7313
    %v7326 = vrcp.pop %v7316
    %v7327 = vrcp.pop %v7319
    %v7328 = vmul.f32 %v7281, %v7320
    %v7329 = vmul.f32 %v7283, %v7321
    %v7330 = vmul.f32 %v7285, %v7322
    %v7331 = vmul.f32 %v7287, %v7323
    %v7332 = vmul.f32 %v7289, %v7324
    %v7333 = vmul.f32 %v7291, %v7325
    %v7334 = vmul.f32 %v7293, %v7326
    %v7335 = vmul.f32 %v7295, %v7327
    %v7337 = vsel %vm2617, %v7328, 0
    %7339 = vmatprep.subr.mxu0 0.0
    %7340 = vmatpush1.msra.mxu0 0.0
    %7341 = vmatprep.subr.mxu0 0.0
    %7342 = vmatpush1.msra.mxu0 0.0
    %7343 = vmatprep.subr.mxu0 0.0
    %7344 = vmatpush1.msra.mxu0 0.0
    %7345 = vmatprep.subr.mxu0 0.0
    %7346 = vmatpush1.msra.mxu0 0.0
    %7347 = vmatprep.subr.mxu0 0.0
    %7348 = vmatpush1.msra.mxu0 0.0
    %7349 = vmatprep.subr.mxu0 0.0
    %7350 = vmatpush1.msra.mxu0 0.0
    %7351 = vmatprep.subr.mxu0 0.0
    %7352 = vmatpush1.msra.mxu0 0.0
    %7353 = vmatprep.subr.mxu0 0.0
    %7354 = vmatpush1.msra.mxu0 0.0
    %7355 = vmatprep.subr.mxu0 0.0
    %7356 = vmatpush1.msra.mxu0 0.0
    %7357 = vmatprep.subr.mxu0 0.0
    %7358 = vmatpush1.msra.mxu0 0.0
    %7359 = vmatprep.subr.mxu0 0.0
    %7360 = vmatpush1.msra.mxu0 0.0
    %7361 = vmatprep.subr.mxu0 0.0
    %7362 = vmatpush1.msra.mxu0 0.0
    %7363 = vmatprep.subr.mxu0 0.0
    %7364 = vmatpush1.msra.mxu0 0.0
    %7365 = vmatprep.subr.mxu0 0.0
    %7366 = vmatpush1.msra.mxu0 0.0
    %7367 = vmatprep.subr.mxu0 0.0
    %7368 = vmatpush1.msra.mxu0 0.0
    %7369 = vmatprep.subr.mxu0 0.0
    %7370 = vmatpush1.msra.mxu0 %v6147
    %7371 = vmatprep.subr.mxu0 0.0
    %7372 = vmatpush2.msra.mxu0 0.0
    %7373 = vmatprep.subr.mxu0 0.0
    %7374 = vmatpush2.msra.mxu0 0.0
    %7375 = vmatprep.subr.mxu0 0.0
    %7376 = vmatpush2.msra.mxu0 0.0
    %7377 = vmatprep.subr.mxu0 0.0
    %7378 = vmatpush2.msra.mxu0 0.0
    %7379 = vmatprep.subr.mxu0 0.0
    %7380 = vmatpush2.msra.mxu0 0.0
    %7381 = vmatprep.subr.mxu0 0.0
    %7382 = vmatpush2.msra.mxu0 0.0
    %7383 = vmatprep.subr.mxu0 0.0
    %7384 = vmatpush2.msra.mxu0 0.0
    %7385 = vmatprep.subr.mxu0 0.0
    %7386 = vmatpush2.msra.mxu0 0.0
    %7387 = vmatprep.subr.mxu0 0.0
    %7388 = vmatpush2.msra.mxu0 0.0
    %7389 = vmatprep.subr.mxu0 0.0
    %7390 = vmatpush2.msra.mxu0 0.0
    %7391 = vmatprep.subr.mxu0 0.0
    %7392 = vmatpush2.msra.mxu0 0.0
    %7393 = vmatprep.subr.mxu0 0.0
    %7394 = vmatpush2.msra.mxu0 0.0
    %7395 = vmatprep.subr.mxu0 0.0
    %7396 = vmatpush2.msra.mxu0 0.0
    %7397 = vmatprep.subr.mxu0 0.0
    %7398 = vmatpush2.msra.mxu0 0.0
    %7399 = vmatprep.subr.mxu0 0.0
    %7400 = vmatpush2.msra.mxu0 0.0
    %7401 = vmatprep.subr.mxu0 0.0
    %7402 = vmatpush2.msra.mxu0 0.0
    %7403 = vmatprep.mubr.f32.mxu0 0.0
    %7404 = vmatmul.mubr.f32.gmra.mxu0 %v7337
    %v7405 = vpop.f32.mrf.mxu0
    %v7406 = vadd.f32 0.0, %v7405
    %v7407 = vpop.f32.mrf.mxu0
    %7408 = vdwg.mxu0
    %v7410 = vsel %vm2617, %v7329, 0
    %7412 = vmatprep.subr.mxu0 0.0
    %7413 = vmatpush1.msra.mxu0 0.0
    %7414 = vmatprep.subr.mxu0 0.0
    %7415 = vmatpush1.msra.mxu0 0.0
    %7416 = vmatprep.subr.mxu0 0.0
    %7417 = vmatpush1.msra.mxu0 0.0
    %7418 = vmatprep.subr.mxu0 0.0
    %7419 = vmatpush1.msra.mxu0 0.0
    %7420 = vmatprep.subr.mxu0 0.0
    %7421 = vmatpush1.msra.mxu0 0.0
    %7422 = vmatprep.subr.mxu0 0.0
    %7423 = vmatpush1.msra.mxu0 0.0
    %7424 = vmatprep.subr.mxu0 0.0
    %7425 = vmatpush1.msra.mxu0 0.0
    %7426 = vmatprep.subr.mxu0 0.0
    %7427 = vmatpush1.msra.mxu0 0.0
    %7428 = vmatprep.subr.mxu0 0.0
    %7429 = vmatpush1.msra.mxu0 0.0
    %7430 = vmatprep.subr.mxu0 0.0
    %7431 = vmatpush1.msra.mxu0 0.0
    %7432 = vmatprep.subr.mxu0 0.0
    %7433 = vmatpush1.msra.mxu0 0.0
    %7434 = vmatprep.subr.mxu0 0.0
    %7435 = vmatpush1.msra.mxu0 0.0
    %7436 = vmatprep.subr.mxu0 0.0
    %7437 = vmatpush1.msra.mxu0 0.0
    %7438 = vmatprep.subr.mxu0 0.0
    %7439 = vmatpush1.msra.mxu0 0.0
    %7440 = vmatprep.subr.mxu0 0.0
    %7441 = vmatpush1.msra.mxu0 0.0
    %7442 = vmatprep.subr.mxu0 0.0
    %7443 = vmatpush1.msra.mxu0 %v6217
    %7444 = vmatprep.subr.mxu0 0.0
    %7445 = vmatpush2.msra.mxu0 0.0
    %7446 = vmatprep.subr.mxu0 0.0
    %7447 = vmatpush2.msra.mxu0 0.0
    %7448 = vmatprep.subr.mxu0 0.0
    %7449 = vmatpush2.msra.mxu0 0.0
    %7450 = vmatprep.subr.mxu0 0.0
    %7451 = vmatpush2.msra.mxu0 0.0
    %7452 = vmatprep.subr.mxu0 0.0
    %7453 = vmatpush2.msra.mxu0 0.0
    %7454 = vmatprep.subr.mxu0 0.0
    %7455 = vmatpush2.msra.mxu0 0.0
    %7456 = vmatprep.subr.mxu0 0.0
    %7457 = vmatpush2.msra.mxu0 0.0
    %7458 = vmatprep.subr.mxu0 0.0
    %7459 = vmatpush2.msra.mxu0 0.0
    %7460 = vmatprep.subr.mxu0 0.0
    %7461 = vmatpush2.msra.mxu0 0.0
    %7462 = vmatprep.subr.mxu0 0.0
    %7463 = vmatpush2.msra.mxu0 0.0
    %7464 = vmatprep.subr.mxu0 0.0
    %7465 = vmatpush2.msra.mxu0 0.0
    %7466 = vmatprep.subr.mxu0 0.0
    %7467 = vmatpush2.msra.mxu0 0.0
    %7468 = vmatprep.subr.mxu0 0.0
    %7469 = vmatpush2.msra.mxu0 0.0
    %7470 = vmatprep.subr.mxu0 0.0
    %7471 = vmatpush2.msra.mxu0 0.0
    %7472 = vmatprep.subr.mxu0 0.0
    %7473 = vmatpush2.msra.mxu0 0.0
    %7474 = vmatprep.subr.mxu0 0.0
    %7475 = vmatpush2.msra.mxu0 0.0
    %7476 = vmatprep.mubr.f32.mxu0 0.0
    %7477 = vmatmul.mubr.f32.gmra.mxu0 %v7410
    %v7478 = vpop.f32.mrf.mxu0
    %v7479 = vadd.f32 0.0, %v7478
    %v7480 = vpop.f32.mrf.mxu0
    %7481 = vdwg.mxu0
    %v7483 = vsel %vm2617, %v7330, 0
    %7485 = vmatprep.subr.mxu0 0.0
    %7486 = vmatpush1.msra.mxu0 0.0
    %7487 = vmatprep.subr.mxu0 0.0
    %7488 = vmatpush1.msra.mxu0 0.0
    %7489 = vmatprep.subr.mxu0 0.0
    %7490 = vmatpush1.msra.mxu0 0.0
    %7491 = vmatprep.subr.mxu0 0.0
    %7492 = vmatpush1.msra.mxu0 0.0
    %7493 = vmatprep.subr.mxu0 0.0
    %7494 = vmatpush1.msra.mxu0 0.0
    %7495 = vmatprep.subr.mxu0 0.0
    %7496 = vmatpush1.msra.mxu0 0.0
    %7497 = vmatprep.subr.mxu0 0.0
    %7498 = vmatpush1.msra.mxu0 0.0
    %7499 = vmatprep.subr.mxu0 0.0
    %7500 = vmatpush1.msra.mxu0 0.0
    %7501 = vmatprep.subr.mxu0 0.0
    %7502 = vmatpush1.msra.mxu0 0.0
    %7503 = vmatprep.subr.mxu0 0.0
    %7504 = vmatpush1.msra.mxu0 0.0
    %7505 = vmatprep.subr.mxu0 0.0
    %7506 = vmatpush1.msra.mxu0 0.0
    %7507 = vmatprep.subr.mxu0 0.0
    %7508 = vmatpush1.msra.mxu0 0.0
    %7509 = vmatprep.subr.mxu0 0.0
    %7510 = vmatpush1.msra.mxu0 0.0
    %7511 = vmatprep.subr.mxu0 0.0
    %7512 = vmatpush1.msra.mxu0 0.0
    %7513 = vmatprep.subr.mxu0 0.0
    %7514 = vmatpush1.msra.mxu0 0.0
    %7515 = vmatprep.subr.mxu0 0.0
    %7516 = vmatpush1.msra.mxu0 %v6287
    %7517 = vmatprep.subr.mxu0 0.0
    %7518 = vmatpush2.msra.mxu0 0.0
    %7519 = vmatprep.subr.mxu0 0.0
    %7520 = vmatpush2.msra.mxu0 0.0
    %7521 = vmatprep.subr.mxu0 0.0
    %7522 = vmatpush2.msra.mxu0 0.0
    %7523 = vmatprep.subr.mxu0 0.0
    %7524 = vmatpush2.msra.mxu0 0.0
    %7525 = vmatprep.subr.mxu0 0.0
    %7526 = vmatpush2.msra.mxu0 0.0
    %7527 = vmatprep.subr.mxu0 0.0
    %7528 = vmatpush2.msra.mxu0 0.0
    %7529 = vmatprep.subr.mxu0 0.0
    %7530 = vmatpush2.msra.mxu0 0.0
    %7531 = vmatprep.subr.mxu0 0.0
    %7532 = vmatpush2.msra.mxu0 0.0
    %7533 = vmatprep.subr.mxu0 0.0
    %7534 = vmatpush2.msra.mxu0 0.0
    %7535 = vmatprep.subr.mxu0 0.0
    %7536 = vmatpush2.msra.mxu0 0.0
    %7537 = vmatprep.subr.mxu0 0.0
    %7538 = vmatpush2.msra.mxu0 0.0
    %7539 = vmatprep.subr.mxu0 0.0
    %7540 = vmatpush2.msra.mxu0 0.0
    %7541 = vmatprep.subr.mxu0 0.0
    %7542 = vmatpush2.msra.mxu0 0.0
    %7543 = vmatprep.subr.mxu0 0.0
    %7544 = vmatpush2.msra.mxu0 0.0
    %7545 = vmatprep.subr.mxu0 0.0
    %7546 = vmatpush2.msra.mxu0 0.0
    %7547 = vmatprep.subr.mxu0 0.0
    %7548 = vmatpush2.msra.mxu0 0.0
    %7549 = vmatprep.mubr.f32.mxu0 0.0
    %7550 = vmatmul.mubr.f32.gmra.mxu0 %v7483
    %v7551 = vpop.f32.mrf.mxu0
    %v7552 = vadd.f32 0.0, %v7551
    %v7553 = vpop.f32.mrf.mxu0
    %7554 = vdwg.mxu0
    %v7556 = vsel %vm2617, %v7331, 0
    %7558 = vmatprep.subr.mxu0 0.0
    %7559 = vmatpush1.msra.mxu0 0.0
    %7560 = vmatprep.subr.mxu0 0.0
    %7561 = vmatpush1.msra.mxu0 0.0
    %7562 = vmatprep.subr.mxu0 0.0
    %7563 = vmatpush1.msra.mxu0 0.0
    %7564 = vmatprep.subr.mxu0 0.0
    %7565 = vmatpush1.msra.mxu0 0.0
    %7566 = vmatprep.subr.mxu0 0.0
    %7567 = vmatpush1.msra.mxu0 0.0
    %7568 = vmatprep.subr.mxu0 0.0
    %7569 = vmatpush1.msra.mxu0 0.0
    %7570 = vmatprep.subr.mxu0 0.0
    %7571 = vmatpush1.msra.mxu0 0.0
    %7572 = vmatprep.subr.mxu0 0.0
    %7573 = vmatpush1.msra.mxu0 0.0
    %7574 = vmatprep.subr.mxu0 0.0
    %7575 = vmatpush1.msra.mxu0 0.0
    %7576 = vmatprep.subr.mxu0 0.0
    %7577 = vmatpush1.msra.mxu0 0.0
    %7578 = vmatprep.subr.mxu0 0.0
    %7579 = vmatpush1.msra.mxu0 0.0
    %7580 = vmatprep.subr.mxu0 0.0
    %7581 = vmatpush1.msra.mxu0 0.0
    %7582 = vmatprep.subr.mxu0 0.0
    %7583 = vmatpush1.msra.mxu0 0.0
    %7584 = vmatprep.subr.mxu0 0.0
    %7585 = vmatpush1.msra.mxu0 0.0
    %7586 = vmatprep.subr.mxu0 0.0
    %7587 = vmatpush1.msra.mxu0 0.0
    %7588 = vmatprep.subr.mxu0 0.0
    %7589 = vmatpush1.msra.mxu0 %v6357
    %7590 = vmatprep.subr.mxu0 0.0
    %7591 = vmatpush2.msra.mxu0 0.0
    %7592 = vmatprep.subr.mxu0 0.0
    %7593 = vmatpush2.msra.mxu0 0.0
    %7594 = vmatprep.subr.mxu0 0.0
    %7595 = vmatpush2.msra.mxu0 0.0
    %7596 = vmatprep.subr.mxu0 0.0
    %7597 = vmatpush2.msra.mxu0 0.0
    %7598 = vmatprep.subr.mxu0 0.0
    %7599 = vmatpush2.msra.mxu0 0.0
    %7600 = vmatprep.subr.mxu0 0.0
    %7601 = vmatpush2.msra.mxu0 0.0
    %7602 = vmatprep.subr.mxu0 0.0
    %7603 = vmatpush2.msra.mxu0 0.0
    %7604 = vmatprep.subr.mxu0 0.0
    %7605 = vmatpush2.msra.mxu0 0.0
    %7606 = vmatprep.subr.mxu0 0.0
    %7607 = vmatpush2.msra.mxu0 0.0
    %7608 = vmatprep.subr.mxu0 0.0
    %7609 = vmatpush2.msra.mxu0 0.0
    %7610 = vmatprep.subr.mxu0 0.0
    %7611 = vmatpush2.msra.mxu0 0.0
    %7612 = vmatprep.subr.mxu0 0.0
    %7613 = vmatpush2.msra.mxu0 0.0
    %7614 = vmatprep.subr.mxu0 0.0
    %7615 = vmatpush2.msra.mxu0 0.0
    %7616 = vmatprep.subr.mxu0 0.0
    %7617 = vmatpush2.msra.mxu0 0.0
    %7618 = vmatprep.subr.mxu0 0.0
    %7619 = vmatpush2.msra.mxu0 0.0
    %7620 = vmatprep.subr.mxu0 0.0
    %7621 = vmatpush2.msra.mxu0 0.0
    %7622 = vmatprep.mubr.f32.mxu0 0.0
    %7623 = vmatmul.mubr.f32.gmra.mxu0 %v7556
    %v7624 = vpop.f32.mrf.mxu0
    %v7625 = vadd.f32 0.0, %v7624
    %v7626 = vpop.f32.mrf.mxu0
    %7627 = vdwg.mxu0
    %v7629 = vsel %vm2617, %v7332, 0
    %7631 = vmatprep.subr.mxu0 0.0
    %7632 = vmatpush1.msra.mxu0 0.0
    %7633 = vmatprep.subr.mxu0 0.0
    %7634 = vmatpush1.msra.mxu0 0.0
    %7635 = vmatprep.subr.mxu0 0.0
    %7636 = vmatpush1.msra.mxu0 0.0
    %7637 = vmatprep.subr.mxu0 0.0
    %7638 = vmatpush1.msra.mxu0 0.0
    %7639 = vmatprep.subr.mxu0 0.0
    %7640 = vmatpush1.msra.mxu0 0.0
    %7641 = vmatprep.subr.mxu0 0.0
    %7642 = vmatpush1.msra.mxu0 0.0
    %7643 = vmatprep.subr.mxu0 0.0
    %7644 = vmatpush1.msra.mxu0 0.0
    %7645 = vmatprep.subr.mxu0 0.0
    %7646 = vmatpush1.msra.mxu0 0.0
    %7647 = vmatprep.subr.mxu0 0.0
    %7648 = vmatpush1.msra.mxu0 0.0
    %7649 = vmatprep.subr.mxu0 0.0
    %7650 = vmatpush1.msra.mxu0 0.0
    %7651 = vmatprep.subr.mxu0 0.0
    %7652 = vmatpush1.msra.mxu0 0.0
    %7653 = vmatprep.subr.mxu0 0.0
    %7654 = vmatpush1.msra.mxu0 0.0
    %7655 = vmatprep.subr.mxu0 0.0
    %7656 = vmatpush1.msra.mxu0 0.0
    %7657 = vmatprep.subr.mxu0 0.0
    %7658 = vmatpush1.msra.mxu0 0.0
    %7659 = vmatprep.subr.mxu0 0.0
    %7660 = vmatpush1.msra.mxu0 0.0
    %7661 = vmatprep.subr.mxu0 0.0
    %7662 = vmatpush1.msra.mxu0 %v6427
    %7663 = vmatprep.subr.mxu0 0.0
    %7664 = vmatpush2.msra.mxu0 0.0
    %7665 = vmatprep.subr.mxu0 0.0
    %7666 = vmatpush2.msra.mxu0 0.0
    %7667 = vmatprep.subr.mxu0 0.0
    %7668 = vmatpush2.msra.mxu0 0.0
    %7669 = vmatprep.subr.mxu0 0.0
    %7670 = vmatpush2.msra.mxu0 0.0
    %7671 = vmatprep.subr.mxu0 0.0
    %7672 = vmatpush2.msra.mxu0 0.0
    %7673 = vmatprep.subr.mxu0 0.0
    %7674 = vmatpush2.msra.mxu0 0.0
    %7675 = vmatprep.subr.mxu0 0.0
    %7676 = vmatpush2.msra.mxu0 0.0
    %7677 = vmatprep.subr.mxu0 0.0
    %7678 = vmatpush2.msra.mxu0 0.0
    %7679 = vmatprep.subr.mxu0 0.0
    %7680 = vmatpush2.msra.mxu0 0.0
    %7681 = vmatprep.subr.mxu0 0.0
    %7682 = vmatpush2.msra.mxu0 0.0
    %7683 = vmatprep.subr.mxu0 0.0
    %7684 = vmatpush2.msra.mxu0 0.0
    %7685 = vmatprep.subr.mxu0 0.0
    %7686 = vmatpush2.msra.mxu0 0.0
    %7687 = vmatprep.subr.mxu0 0.0
    %7688 = vmatpush2.msra.mxu0 0.0
    %7689 = vmatprep.subr.mxu0 0.0
    %7690 = vmatpush2.msra.mxu0 0.0
    %7691 = vmatprep.subr.mxu0 0.0
    %7692 = vmatpush2.msra.mxu0 0.0
    %7693 = vmatprep.subr.mxu0 0.0
    %7694 = vmatpush2.msra.mxu0 0.0
    %7695 = vmatprep.mubr.f32.mxu0 0.0
    %7696 = vmatmul.mubr.f32.gmra.mxu0 %v7629
    %v7697 = vpop.f32.mrf.mxu0
    %v7698 = vadd.f32 0.0, %v7697
    %v7699 = vpop.f32.mrf.mxu0
    %7700 = vdwg.mxu0
    %v7702 = vsel %vm2617, %v7333, 0
    %7704 = vmatprep.subr.mxu0 0.0
    %7705 = vmatpush1.msra.mxu0 0.0
    %7706 = vmatprep.subr.mxu0 0.0
    %7707 = vmatpush1.msra.mxu0 0.0
    %7708 = vmatprep.subr.mxu0 0.0
    %7709 = vmatpush1.msra.mxu0 0.0
    %7710 = vmatprep.subr.mxu0 0.0
    %7711 = vmatpush1.msra.mxu0 0.0
    %7712 = vmatprep.subr.mxu0 0.0
    %7713 = vmatpush1.msra.mxu0 0.0
    %7714 = vmatprep.subr.mxu0 0.0
    %7715 = vmatpush1.msra.mxu0 0.0
    %7716 = vmatprep.subr.mxu0 0.0
    %7717 = vmatpush1.msra.mxu0 0.0
    %7718 = vmatprep.subr.mxu0 0.0
    %7719 = vmatpush1.msra.mxu0 0.0
    %7720 = vmatprep.subr.mxu0 0.0
    %7721 = vmatpush1.msra.mxu0 0.0
    %7722 = vmatprep.subr.mxu0 0.0
    %7723 = vmatpush1.msra.mxu0 0.0
    %7724 = vmatprep.subr.mxu0 0.0
    %7725 = vmatpush1.msra.mxu0 0.0
    %7726 = vmatprep.subr.mxu0 0.0
    %7727 = vmatpush1.msra.mxu0 0.0
    %7728 = vmatprep.subr.mxu0 0.0
    %7729 = vmatpush1.msra.mxu0 0.0
    %7730 = vmatprep.subr.mxu0 0.0
    %7731 = vmatpush1.msra.mxu0 0.0
    %7732 = vmatprep.subr.mxu0 0.0
    %7733 = vmatpush1.msra.mxu0 0.0
    %7734 = vmatprep.subr.mxu0 0.0
    %7735 = vmatpush1.msra.mxu0 %v6497
    %7736 = vmatprep.subr.mxu0 0.0
    %7737 = vmatpush2.msra.mxu0 0.0
    %7738 = vmatprep.subr.mxu0 0.0
    %7739 = vmatpush2.msra.mxu0 0.0
    %7740 = vmatprep.subr.mxu0 0.0
    %7741 = vmatpush2.msra.mxu0 0.0
    %7742 = vmatprep.subr.mxu0 0.0
    %7743 = vmatpush2.msra.mxu0 0.0
    %7744 = vmatprep.subr.mxu0 0.0
    %7745 = vmatpush2.msra.mxu0 0.0
    %7746 = vmatprep.subr.mxu0 0.0
    %7747 = vmatpush2.msra.mxu0 0.0
    %7748 = vmatprep.subr.mxu0 0.0
    %7749 = vmatpush2.msra.mxu0 0.0
    %7750 = vmatprep.subr.mxu0 0.0
    %7751 = vmatpush2.msra.mxu0 0.0
    %7752 = vmatprep.subr.mxu0 0.0
    %7753 = vmatpush2.msra.mxu0 0.0
    %7754 = vmatprep.subr.mxu0 0.0
    %7755 = vmatpush2.msra.mxu0 0.0
    %7756 = vmatprep.subr.mxu0 0.0
    %7757 = vmatpush2.msra.mxu0 0.0
    %7758 = vmatprep.subr.mxu0 0.0
    %7759 = vmatpush2.msra.mxu0 0.0
    %7760 = vmatprep.subr.mxu0 0.0
    %7761 = vmatpush2.msra.mxu0 0.0
    %7762 = vmatprep.subr.mxu0 0.0
    %7763 = vmatpush2.msra.mxu0 0.0
    %7764 = vmatprep.subr.mxu0 0.0
    %7765 = vmatpush2.msra.mxu0 0.0
    %7766 = vmatprep.subr.mxu0 0.0
    %7767 = vmatpush2.msra.mxu0 0.0
    %7768 = vmatprep.mubr.f32.mxu0 0.0
    %7769 = vmatmul.mubr.f32.gmra.mxu0 %v7702
    %v7770 = vpop.f32.mrf.mxu0
    %v7771 = vadd.f32 0.0, %v7770
    %v7772 = vpop.f32.mrf.mxu0
    %7773 = vdwg.mxu0
    %v7775 = vsel %vm2617, %v7334, 0
    %7777 = vmatprep.subr.mxu0 0.0
    %7778 = vmatpush1.msra.mxu0 0.0
    %7779 = vmatprep.subr.mxu0 0.0
    %7780 = vmatpush1.msra.mxu0 0.0
    %7781 = vmatprep.subr.mxu0 0.0
    %7782 = vmatpush1.msra.mxu0 0.0
    %7783 = vmatprep.subr.mxu0 0.0
    %7784 = vmatpush1.msra.mxu0 0.0
    %7785 = vmatprep.subr.mxu0 0.0
    %7786 = vmatpush1.msra.mxu0 0.0
    %7787 = vmatprep.subr.mxu0 0.0
    %7788 = vmatpush1.msra.mxu0 0.0
    %7789 = vmatprep.subr.mxu0 0.0
    %7790 = vmatpush1.msra.mxu0 0.0
    %7791 = vmatprep.subr.mxu0 0.0
    %7792 = vmatpush1.msra.mxu0 0.0
    %7793 = vmatprep.subr.mxu0 0.0
    %7794 = vmatpush1.msra.mxu0 0.0
    %7795 = vmatprep.subr.mxu0 0.0
    %7796 = vmatpush1.msra.mxu0 0.0
    %7797 = vmatprep.subr.mxu0 0.0
    %7798 = vmatpush1.msra.mxu0 0.0
    %7799 = vmatprep.subr.mxu0 0.0
    %7800 = vmatpush1.msra.mxu0 0.0
    %7801 = vmatprep.subr.mxu0 0.0
    %7802 = vmatpush1.msra.mxu0 0.0
    %7803 = vmatprep.subr.mxu0 0.0
    %7804 = vmatpush1.msra.mxu0 0.0
    %7805 = vmatprep.subr.mxu0 0.0
    %7806 = vmatpush1.msra.mxu0 0.0
    %7807 = vmatprep.subr.mxu0 0.0
    %7808 = vmatpush1.msra.mxu0 %v6567
    %7809 = vmatprep.subr.mxu0 0.0
    %7810 = vmatpush2.msra.mxu0 0.0
    %7811 = vmatprep.subr.mxu0 0.0
    %7812 = vmatpush2.msra.mxu0 0.0
    %7813 = vmatprep.subr.mxu0 0.0
    %7814 = vmatpush2.msra.mxu0 0.0
    %7815 = vmatprep.subr.mxu0 0.0
    %7816 = vmatpush2.msra.mxu0 0.0
    %7817 = vmatprep.subr.mxu0 0.0
    %7818 = vmatpush2.msra.mxu0 0.0
    %7819 = vmatprep.subr.mxu0 0.0
    %7820 = vmatpush2.msra.mxu0 0.0
    %7821 = vmatprep.subr.mxu0 0.0
    %7822 = vmatpush2.msra.mxu0 0.0
    %7823 = vmatprep.subr.mxu0 0.0
    %7824 = vmatpush2.msra.mxu0 0.0
    %7825 = vmatprep.subr.mxu0 0.0
    %7826 = vmatpush2.msra.mxu0 0.0
    %7827 = vmatprep.subr.mxu0 0.0
    %7828 = vmatpush2.msra.mxu0 0.0
    %7829 = vmatprep.subr.mxu0 0.0
    %7830 = vmatpush2.msra.mxu0 0.0
    %7831 = vmatprep.subr.mxu0 0.0
    %7832 = vmatpush2.msra.mxu0 0.0
    %7833 = vmatprep.subr.mxu0 0.0
    %7834 = vmatpush2.msra.mxu0 0.0
    %7835 = vmatprep.subr.mxu0 0.0
    %7836 = vmatpush2.msra.mxu0 0.0
    %7837 = vmatprep.subr.mxu0 0.0
    %7838 = vmatpush2.msra.mxu0 0.0
    %7839 = vmatprep.subr.mxu0 0.0
    %7840 = vmatpush2.msra.mxu0 0.0
    %7841 = vmatprep.mubr.f32.mxu0 0.0
    %7842 = vmatmul.mubr.f32.gmra.mxu0 %v7775
    %v7843 = vpop.f32.mrf.mxu0
    %v7844 = vadd.f32 0.0, %v7843
    %v7845 = vpop.f32.mrf.mxu0
    %7846 = vdwg.mxu0
    %v7848 = vsel %vm2617, %v7335, 0
    %7850 = vmatprep.subr.mxu0 0.0
    %7851 = vmatpush1.msra.mxu0 0.0
    %7852 = vmatprep.subr.mxu0 0.0
    %7853 = vmatpush1.msra.mxu0 0.0
    %7854 = vmatprep.subr.mxu0 0.0
    %7855 = vmatpush1.msra.mxu0 0.0
    %7856 = vmatprep.subr.mxu0 0.0
    %7857 = vmatpush1.msra.mxu0 0.0
    %7858 = vmatprep.subr.mxu0 0.0
    %7859 = vmatpush1.msra.mxu0 0.0
    %7860 = vmatprep.subr.mxu0 0.0
    %7861 = vmatpush1.msra.mxu0 0.0
    %7862 = vmatprep.subr.mxu0 0.0
    %7863 = vmatpush1.msra.mxu0 0.0
    %7864 = vmatprep.subr.mxu0 0.0
    %7865 = vmatpush1.msra.mxu0 0.0
    %7866 = vmatprep.subr.mxu0 0.0
    %7867 = vmatpush1.msra.mxu0 0.0
    %7868 = vmatprep.subr.mxu0 0.0
    %7869 = vmatpush1.msra.mxu0 0.0
    %7870 = vmatprep.subr.mxu0 0.0
    %7871 = vmatpush1.msra.mxu0 0.0
    %7872 = vmatprep.subr.mxu0 0.0
    %7873 = vmatpush1.msra.mxu0 0.0
    %7874 = vmatprep.subr.mxu0 0.0
    %7875 = vmatpush1.msra.mxu0 0.0
    %7876 = vmatprep.subr.mxu0 0.0
    %7877 = vmatpush1.msra.mxu0 0.0
    %7878 = vmatprep.subr.mxu0 0.0
    %7879 = vmatpush1.msra.mxu0 0.0
    %7880 = vmatprep.subr.mxu0 0.0
    %7881 = vmatpush1.msra.mxu0 %v6637
    %7882 = vmatprep.subr.mxu0 0.0
    %7883 = vmatpush2.msra.mxu0 0.0
    %7884 = vmatprep.subr.mxu0 0.0
    %7885 = vmatpush2.msra.mxu0 0.0
    %7886 = vmatprep.subr.mxu0 0.0
    %7887 = vmatpush2.msra.mxu0 0.0
    %7888 = vmatprep.subr.mxu0 0.0
    %7889 = vmatpush2.msra.mxu0 0.0
    %7890 = vmatprep.subr.mxu0 0.0
    %7891 = vmatpush2.msra.mxu0 0.0
    %7892 = vmatprep.subr.mxu0 0.0
    %7893 = vmatpush2.msra.mxu0 0.0
    %7894 = vmatprep.subr.mxu0 0.0
    %7895 = vmatpush2.msra.mxu0 0.0
    %7896 = vmatprep.subr.mxu0 0.0
    %7897 = vmatpush2.msra.mxu0 0.0
    %7898 = vmatprep.subr.mxu0 0.0
    %7899 = vmatpush2.msra.mxu0 0.0
    %7900 = vmatprep.subr.mxu0 0.0
    %7901 = vmatpush2.msra.mxu0 0.0
    %7902 = vmatprep.subr.mxu0 0.0
    %7903 = vmatpush2.msra.mxu0 0.0
    %7904 = vmatprep.subr.mxu0 0.0
    %7905 = vmatpush2.msra.mxu0 0.0
    %7906 = vmatprep.subr.mxu0 0.0
    %7907 = vmatpush2.msra.mxu0 0.0
    %7908 = vmatprep.subr.mxu0 0.0
    %7909 = vmatpush2.msra.mxu0 0.0
    %7910 = vmatprep.subr.mxu0 0.0
    %7911 = vmatpush2.msra.mxu0 0.0
    %7912 = vmatprep.subr.mxu0 0.0
    %7913 = vmatpush2.msra.mxu0 0.0
    %7914 = vmatprep.mubr.f32.mxu0 0.0
    %7915 = vmatmul.mubr.f32.gmra.mxu0 %v7848
    %v7916 = vpop.f32.mrf.mxu0
    %v7917 = vadd.f32 0.0, %v7916
    %v7918 = vpop.f32.mrf.mxu0
    %7919 = vdwg.mxu0
    %s7920 = scalar_lea.vmem %s8, 64
    %v7921 = vld [vmem:[%s7920] sm:$0xff]
    %v7922 = vld [vmem:[%s7920 + $0x8] sm:$0xff]
    %v7923 = vld [vmem:[%s7920 + $0x10] sm:$0xff]
    %v7924 = vld [vmem:[%s7920 + $0x18] sm:$0xff]
    %v7925 = vld [vmem:[%s7920 + $0x20] sm:$0xff]
    %v7926 = vld [vmem:[%s7920 + $0x28] sm:$0xff]
    %v7927 = vld [vmem:[%s7920 + $0x30] sm:$0xff]
    %v7928 = vld [vmem:[%s7920 + $0x38] sm:$0xff]
    %v7930 = vsel %vm2617, %v7406, 0
    %7932 = vmatprep.subr.mxu0 0.0
    %7933 = vmatpush1.msra.mxu0 0.0
    %7934 = vmatprep.subr.mxu0 0.0
    %7935 = vmatpush1.msra.mxu0 0.0
    %7936 = vmatprep.subr.mxu0 0.0
    %7937 = vmatpush1.msra.mxu0 0.0
    %7938 = vmatprep.subr.mxu0 0.0
    %7939 = vmatpush1.msra.mxu0 0.0
    %7940 = vmatprep.subr.mxu0 0.0
    %7941 = vmatpush1.msra.mxu0 0.0
    %7942 = vmatprep.subr.mxu0 0.0
    %7943 = vmatpush1.msra.mxu0 0.0
    %7944 = vmatprep.subr.mxu0 0.0
    %7945 = vmatpush1.msra.mxu0 0.0
    %7946 = vmatprep.subr.mxu0 0.0
    %7947 = vmatpush1.msra.mxu0 0.0
    %7948 = vmatprep.subr.mxu0 0.0
    %7949 = vmatpush1.msra.mxu0 0.0
    %7950 = vmatprep.subr.mxu0 0.0
    %7951 = vmatpush1.msra.mxu0 0.0
    %7952 = vmatprep.subr.mxu0 0.0
    %7953 = vmatpush1.msra.mxu0 0.0
    %7954 = vmatprep.subr.mxu0 0.0
    %7955 = vmatpush1.msra.mxu0 0.0
    %7956 = vmatprep.subr.mxu0 0.0
    %7957 = vmatpush1.msra.mxu0 0.0
    %7958 = vmatprep.subr.mxu0 0.0
    %7959 = vmatpush1.msra.mxu0 0.0
    %7960 = vmatprep.subr.mxu0 0.0
    %7961 = vmatpush1.msra.mxu0 0.0
    %7962 = vmatprep.subr.mxu0 0.0
    %7963 = vmatpush1.msra.mxu0 %v7921
    %7964 = vmatprep.subr.mxu0 0.0
    %7965 = vmatpush2.msra.mxu0 0.0
    %7966 = vmatprep.subr.mxu0 0.0
    %7967 = vmatpush2.msra.mxu0 0.0
    %7968 = vmatprep.subr.mxu0 0.0
    %7969 = vmatpush2.msra.mxu0 0.0
    %7970 = vmatprep.subr.mxu0 0.0
    %7971 = vmatpush2.msra.mxu0 0.0
    %7972 = vmatprep.subr.mxu0 0.0
    %7973 = vmatpush2.msra.mxu0 0.0
    %7974 = vmatprep.subr.mxu0 0.0
    %7975 = vmatpush2.msra.mxu0 0.0
    %7976 = vmatprep.subr.mxu0 0.0
    %7977 = vmatpush2.msra.mxu0 0.0
    %7978 = vmatprep.subr.mxu0 0.0
    %7979 = vmatpush2.msra.mxu0 0.0
    %7980 = vmatprep.subr.mxu0 0.0
    %7981 = vmatpush2.msra.mxu0 0.0
    %7982 = vmatprep.subr.mxu0 0.0
    %7983 = vmatpush2.msra.mxu0 0.0
    %7984 = vmatprep.subr.mxu0 0.0
    %7985 = vmatpush2.msra.mxu0 0.0
    %7986 = vmatprep.subr.mxu0 0.0
    %7987 = vmatpush2.msra.mxu0 0.0
    %7988 = vmatprep.subr.mxu0 0.0
    %7989 = vmatpush2.msra.mxu0 0.0
    %7990 = vmatprep.subr.mxu0 0.0
    %7991 = vmatpush2.msra.mxu0 0.0
    %7992 = vmatprep.subr.mxu0 0.0
    %7993 = vmatpush2.msra.mxu0 0.0
    %7994 = vmatprep.subr.mxu0 0.0
    %7995 = vmatpush2.msra.mxu0 0.0
    %7996 = vmatprep.mubr.f32.mxu0 0.0
    %7997 = vmatmul.mubr.f32.gmra.mxu0 %v7930
    %v7998 = vpop.f32.mrf.mxu0
    %v7999 = vadd.f32 0.0, %v7998
    %v8000 = vpop.f32.mrf.mxu0
    %8001 = vdwg.mxu0
    %v8003 = vsel %vm2617, %v7479, 0
    %8005 = vmatprep.subr.mxu0 0.0
    %8006 = vmatpush1.msra.mxu0 0.0
    %8007 = vmatprep.subr.mxu0 0.0
    %8008 = vmatpush1.msra.mxu0 0.0
    %8009 = vmatprep.subr.mxu0 0.0
    %8010 = vmatpush1.msra.mxu0 0.0
    %8011 = vmatprep.subr.mxu0 0.0
    %8012 = vmatpush1.msra.mxu0 0.0
    %8013 = vmatprep.subr.mxu0 0.0
    %8014 = vmatpush1.msra.mxu0 0.0
    %8015 = vmatprep.subr.mxu0 0.0
    %8016 = vmatpush1.msra.mxu0 0.0
    %8017 = vmatprep.subr.mxu0 0.0
    %8018 = vmatpush1.msra.mxu0 0.0
    %8019 = vmatprep.subr.mxu0 0.0
    %8020 = vmatpush1.msra.mxu0 0.0
    %8021 = vmatprep.subr.mxu0 0.0
    %8022 = vmatpush1.msra.mxu0 0.0
    %8023 = vmatprep.subr.mxu0 0.0
    %8024 = vmatpush1.msra.mxu0 0.0
    %8025 = vmatprep.subr.mxu0 0.0
    %8026 = vmatpush1.msra.mxu0 0.0
    %8027 = vmatprep.subr.mxu0 0.0
    %8028 = vmatpush1.msra.mxu0 0.0
    %8029 = vmatprep.subr.mxu0 0.0
    %8030 = vmatpush1.msra.mxu0 0.0
    %8031 = vmatprep.subr.mxu0 0.0
    %8032 = vmatpush1.msra.mxu0 0.0
    %8033 = vmatprep.subr.mxu0 0.0
    %8034 = vmatpush1.msra.mxu0 0.0
    %8035 = vmatprep.subr.mxu0 0.0
    %8036 = vmatpush1.msra.mxu0 %v7922
    %8037 = vmatprep.subr.mxu0 0.0
    %8038 = vmatpush2.msra.mxu0 0.0
    %8039 = vmatprep.subr.mxu0 0.0
    %8040 = vmatpush2.msra.mxu0 0.0
    %8041 = vmatprep.subr.mxu0 0.0
    %8042 = vmatpush2.msra.mxu0 0.0
    %8043 = vmatprep.subr.mxu0 0.0
    %8044 = vmatpush2.msra.mxu0 0.0
    %8045 = vmatprep.subr.mxu0 0.0
    %8046 = vmatpush2.msra.mxu0 0.0
    %8047 = vmatprep.subr.mxu0 0.0
    %8048 = vmatpush2.msra.mxu0 0.0
    %8049 = vmatprep.subr.mxu0 0.0
    %8050 = vmatpush2.msra.mxu0 0.0
    %8051 = vmatprep.subr.mxu0 0.0
    %8052 = vmatpush2.msra.mxu0 0.0
    %8053 = vmatprep.subr.mxu0 0.0
    %8054 = vmatpush2.msra.mxu0 0.0
    %8055 = vmatprep.subr.mxu0 0.0
    %8056 = vmatpush2.msra.mxu0 0.0
    %8057 = vmatprep.subr.mxu0 0.0
    %8058 = vmatpush2.msra.mxu0 0.0
    %8059 = vmatprep.subr.mxu0 0.0
    %8060 = vmatpush2.msra.mxu0 0.0
    %8061 = vmatprep.subr.mxu0 0.0
    %8062 = vmatpush2.msra.mxu0 0.0
    %8063 = vmatprep.subr.mxu0 0.0
    %8064 = vmatpush2.msra.mxu0 0.0
    %8065 = vmatprep.subr.mxu0 0.0
    %8066 = vmatpush2.msra.mxu0 0.0
    %8067 = vmatprep.subr.mxu0 0.0
    %8068 = vmatpush2.msra.mxu0 0.0
    %8069 = vmatprep.mubr.f32.mxu0 0.0
    %8070 = vmatmul.mubr.f32.gmra.mxu0 %v8003
    %v8071 = vpop.f32.mrf.mxu0
    %v8072 = vadd.f32 0.0, %v8071
    %v8073 = vpop.f32.mrf.mxu0
    %8074 = vdwg.mxu0
    %v8076 = vsel %vm2617, %v7552, 0
    %8078 = vmatprep.subr.mxu0 0.0
    %8079 = vmatpush1.msra.mxu0 0.0
    %8080 = vmatprep.subr.mxu0 0.0
    %8081 = vmatpush1.msra.mxu0 0.0
    %8082 = vmatprep.subr.mxu0 0.0
    %8083 = vmatpush1.msra.mxu0 0.0
    %8084 = vmatprep.subr.mxu0 0.0
    %8085 = vmatpush1.msra.mxu0 0.0
    %8086 = vmatprep.subr.mxu0 0.0
    %8087 = vmatpush1.msra.mxu0 0.0
    %8088 = vmatprep.subr.mxu0 0.0
    %8089 = vmatpush1.msra.mxu0 0.0
    %8090 = vmatprep.subr.mxu0 0.0
    %8091 = vmatpush1.msra.mxu0 0.0
    %8092 = vmatprep.subr.mxu0 0.0
    %8093 = vmatpush1.msra.mxu0 0.0
    %8094 = vmatprep.subr.mxu0 0.0
    %8095 = vmatpush1.msra.mxu0 0.0
    %8096 = vmatprep.subr.mxu0 0.0
    %8097 = vmatpush1.msra.mxu0 0.0
    %8098 = vmatprep.subr.mxu0 0.0
    %8099 = vmatpush1.msra.mxu0 0.0
    %8100 = vmatprep.subr.mxu0 0.0
    %8101 = vmatpush1.msra.mxu0 0.0
    %8102 = vmatprep.subr.mxu0 0.0
    %8103 = vmatpush1.msra.mxu0 0.0
    %8104 = vmatprep.subr.mxu0 0.0
    %8105 = vmatpush1.msra.mxu0 0.0
    %8106 = vmatprep.subr.mxu0 0.0
    %8107 = vmatpush1.msra.mxu0 0.0
    %8108 = vmatprep.subr.mxu0 0.0
    %8109 = vmatpush1.msra.mxu0 %v7923
    %8110 = vmatprep.subr.mxu0 0.0
    %8111 = vmatpush2.msra.mxu0 0.0
    %8112 = vmatprep.subr.mxu0 0.0
    %8113 = vmatpush2.msra.mxu0 0.0
    %8114 = vmatprep.subr.mxu0 0.0
    %8115 = vmatpush2.msra.mxu0 0.0
    %8116 = vmatprep.subr.mxu0 0.0
    %8117 = vmatpush2.msra.mxu0 0.0
    %8118 = vmatprep.subr.mxu0 0.0
    %8119 = vmatpush2.msra.mxu0 0.0
    %8120 = vmatprep.subr.mxu0 0.0
    %8121 = vmatpush2.msra.mxu0 0.0
    %8122 = vmatprep.subr.mxu0 0.0
    %8123 = vmatpush2.msra.mxu0 0.0
    %8124 = vmatprep.subr.mxu0 0.0
    %8125 = vmatpush2.msra.mxu0 0.0
    %8126 = vmatprep.subr.mxu0 0.0
    %8127 = vmatpush2.msra.mxu0 0.0
    %8128 = vmatprep.subr.mxu0 0.0
    %8129 = vmatpush2.msra.mxu0 0.0
    %8130 = vmatprep.subr.mxu0 0.0
    %8131 = vmatpush2.msra.mxu0 0.0
    %8132 = vmatprep.subr.mxu0 0.0
    %8133 = vmatpush2.msra.mxu0 0.0
    %8134 = vmatprep.subr.mxu0 0.0
    %8135 = vmatpush2.msra.mxu0 0.0
    %8136 = vmatprep.subr.mxu0 0.0
    %8137 = vmatpush2.msra.mxu0 0.0
    %8138 = vmatprep.subr.mxu0 0.0
    %8139 = vmatpush2.msra.mxu0 0.0
    %8140 = vmatprep.subr.mxu0 0.0
    %8141 = vmatpush2.msra.mxu0 0.0
    %8142 = vmatprep.mubr.f32.mxu0 0.0
    %8143 = vmatmul.mubr.f32.gmra.mxu0 %v8076
    %v8144 = vpop.f32.mrf.mxu0
    %v8145 = vadd.f32 0.0, %v8144
    %v8146 = vpop.f32.mrf.mxu0
    %8147 = vdwg.mxu0
    %v8149 = vsel %vm2617, %v7625, 0
    %8151 = vmatprep.subr.mxu0 0.0
    %8152 = vmatpush1.msra.mxu0 0.0
    %8153 = vmatprep.subr.mxu0 0.0
    %8154 = vmatpush1.msra.mxu0 0.0
    %8155 = vmatprep.subr.mxu0 0.0
    %8156 = vmatpush1.msra.mxu0 0.0
    %8157 = vmatprep.subr.mxu0 0.0
    %8158 = vmatpush1.msra.mxu0 0.0
    %8159 = vmatprep.subr.mxu0 0.0
    %8160 = vmatpush1.msra.mxu0 0.0
    %8161 = vmatprep.subr.mxu0 0.0
    %8162 = vmatpush1.msra.mxu0 0.0
    %8163 = vmatprep.subr.mxu0 0.0
    %8164 = vmatpush1.msra.mxu0 0.0
    %8165 = vmatprep.subr.mxu0 0.0
    %8166 = vmatpush1.msra.mxu0 0.0
    %8167 = vmatprep.subr.mxu0 0.0
    %8168 = vmatpush1.msra.mxu0 0.0
    %8169 = vmatprep.subr.mxu0 0.0
    %8170 = vmatpush1.msra.mxu0 0.0
    %8171 = vmatprep.subr.mxu0 0.0
    %8172 = vmatpush1.msra.mxu0 0.0
    %8173 = vmatprep.subr.mxu0 0.0
    %8174 = vmatpush1.msra.mxu0 0.0
    %8175 = vmatprep.subr.mxu0 0.0
    %8176 = vmatpush1.msra.mxu0 0.0
    %8177 = vmatprep.subr.mxu0 0.0
    %8178 = vmatpush1.msra.mxu0 0.0
    %8179 = vmatprep.subr.mxu0 0.0
    %8180 = vmatpush1.msra.mxu0 0.0
    %8181 = vmatprep.subr.mxu0 0.0
    %8182 = vmatpush1.msra.mxu0 %v7924
    %8183 = vmatprep.subr.mxu0 0.0
    %8184 = vmatpush2.msra.mxu0 0.0
    %8185 = vmatprep.subr.mxu0 0.0
    %8186 = vmatpush2.msra.mxu0 0.0
    %8187 = vmatprep.subr.mxu0 0.0
    %8188 = vmatpush2.msra.mxu0 0.0
    %8189 = vmatprep.subr.mxu0 0.0
    %8190 = vmatpush2.msra.mxu0 0.0
    %8191 = vmatprep.subr.mxu0 0.0
    %8192 = vmatpush2.msra.mxu0 0.0
    %8193 = vmatprep.subr.mxu0 0.0
    %8194 = vmatpush2.msra.mxu0 0.0
    %8195 = vmatprep.subr.mxu0 0.0
    %8196 = vmatpush2.msra.mxu0 0.0
    %8197 = vmatprep.subr.mxu0 0.0
    %8198 = vmatpush2.msra.mxu0 0.0
    %8199 = vmatprep.subr.mxu0 0.0
    %8200 = vmatpush2.msra.mxu0 0.0
    %8201 = vmatprep.subr.mxu0 0.0
    %8202 = vmatpush2.msra.mxu0 0.0
    %8203 = vmatprep.subr.mxu0 0.0
    %8204 = vmatpush2.msra.mxu0 0.0
    %8205 = vmatprep.subr.mxu0 0.0
    %8206 = vmatpush2.msra.mxu0 0.0
    %8207 = vmatprep.subr.mxu0 0.0
    %8208 = vmatpush2.msra.mxu0 0.0
    %8209 = vmatprep.subr.mxu0 0.0
    %8210 = vmatpush2.msra.mxu0 0.0
    %8211 = vmatprep.subr.mxu0 0.0
    %8212 = vmatpush2.msra.mxu0 0.0
    %8213 = vmatprep.subr.mxu0 0.0
    %8214 = vmatpush2.msra.mxu0 0.0
    %8215 = vmatprep.mubr.f32.mxu0 0.0
    %8216 = vmatmul.mubr.f32.gmra.mxu0 %v8149
    %v8217 = vpop.f32.mrf.mxu0
    %v8218 = vadd.f32 0.0, %v8217
    %v8219 = vpop.f32.mrf.mxu0
    %8220 = vdwg.mxu0
    %v8222 = vsel %vm2617, %v7698, 0
    %8224 = vmatprep.subr.mxu0 0.0
    %8225 = vmatpush1.msra.mxu0 0.0
    %8226 = vmatprep.subr.mxu0 0.0
    %8227 = vmatpush1.msra.mxu0 0.0
    %8228 = vmatprep.subr.mxu0 0.0
    %8229 = vmatpush1.msra.mxu0 0.0
    %8230 = vmatprep.subr.mxu0 0.0
    %8231 = vmatpush1.msra.mxu0 0.0
    %8232 = vmatprep.subr.mxu0 0.0
    %8233 = vmatpush1.msra.mxu0 0.0
    %8234 = vmatprep.subr.mxu0 0.0
    %8235 = vmatpush1.msra.mxu0 0.0
    %8236 = vmatprep.subr.mxu0 0.0
    %8237 = vmatpush1.msra.mxu0 0.0
    %8238 = vmatprep.subr.mxu0 0.0
    %8239 = vmatpush1.msra.mxu0 0.0
    %8240 = vmatprep.subr.mxu0 0.0
    %8241 = vmatpush1.msra.mxu0 0.0
    %8242 = vmatprep.subr.mxu0 0.0
    %8243 = vmatpush1.msra.mxu0 0.0
    %8244 = vmatprep.subr.mxu0 0.0
    %8245 = vmatpush1.msra.mxu0 0.0
    %8246 = vmatprep.subr.mxu0 0.0
    %8247 = vmatpush1.msra.mxu0 0.0
    %8248 = vmatprep.subr.mxu0 0.0
    %8249 = vmatpush1.msra.mxu0 0.0
    %8250 = vmatprep.subr.mxu0 0.0
    %8251 = vmatpush1.msra.mxu0 0.0
    %8252 = vmatprep.subr.mxu0 0.0
    %8253 = vmatpush1.msra.mxu0 0.0
    %8254 = vmatprep.subr.mxu0 0.0
    %8255 = vmatpush1.msra.mxu0 %v7925
    %8256 = vmatprep.subr.mxu0 0.0
    %8257 = vmatpush2.msra.mxu0 0.0
    %8258 = vmatprep.subr.mxu0 0.0
    %8259 = vmatpush2.msra.mxu0 0.0
    %8260 = vmatprep.subr.mxu0 0.0
    %8261 = vmatpush2.msra.mxu0 0.0
    %8262 = vmatprep.subr.mxu0 0.0
    %8263 = vmatpush2.msra.mxu0 0.0
    %8264 = vmatprep.subr.mxu0 0.0
    %8265 = vmatpush2.msra.mxu0 0.0
    %8266 = vmatprep.subr.mxu0 0.0
    %8267 = vmatpush2.msra.mxu0 0.0
    %8268 = vmatprep.subr.mxu0 0.0
    %8269 = vmatpush2.msra.mxu0 0.0
    %8270 = vmatprep.subr.mxu0 0.0
    %8271 = vmatpush2.msra.mxu0 0.0
    %8272 = vmatprep.subr.mxu0 0.0
    %8273 = vmatpush2.msra.mxu0 0.0
    %8274 = vmatprep.subr.mxu0 0.0
    %8275 = vmatpush2.msra.mxu0 0.0
    %8276 = vmatprep.subr.mxu0 0.0
    %8277 = vmatpush2.msra.mxu0 0.0
    %8278 = vmatprep.subr.mxu0 0.0
    %8279 = vmatpush2.msra.mxu0 0.0
    %8280 = vmatprep.subr.mxu0 0.0
    %8281 = vmatpush2.msra.mxu0 0.0
    %8282 = vmatprep.subr.mxu0 0.0
    %8283 = vmatpush2.msra.mxu0 0.0
    %8284 = vmatprep.subr.mxu0 0.0
    %8285 = vmatpush2.msra.mxu0 0.0
    %8286 = vmatprep.subr.mxu0 0.0
    %8287 = vmatpush2.msra.mxu0 0.0
    %8288 = vmatprep.mubr.f32.mxu0 0.0
    %8289 = vmatmul.mubr.f32.gmra.mxu0 %v8222
    %v8290 = vpop.f32.mrf.mxu0
    %v8291 = vadd.f32 0.0, %v8290
    %v8292 = vpop.f32.mrf.mxu0
    %8293 = vdwg.mxu0
    %v8295 = vsel %vm2617, %v7771, 0
    %8297 = vmatprep.subr.mxu0 0.0
    %8298 = vmatpush1.msra.mxu0 0.0
    %8299 = vmatprep.subr.mxu0 0.0
    %8300 = vmatpush1.msra.mxu0 0.0
    %8301 = vmatprep.subr.mxu0 0.0
    %8302 = vmatpush1.msra.mxu0 0.0
    %8303 = vmatprep.subr.mxu0 0.0
    %8304 = vmatpush1.msra.mxu0 0.0
    %8305 = vmatprep.subr.mxu0 0.0
    %8306 = vmatpush1.msra.mxu0 0.0
    %8307 = vmatprep.subr.mxu0 0.0
    %8308 = vmatpush1.msra.mxu0 0.0
    %8309 = vmatprep.subr.mxu0 0.0
    %8310 = vmatpush1.msra.mxu0 0.0
    %8311 = vmatprep.subr.mxu0 0.0
    %8312 = vmatpush1.msra.mxu0 0.0
    %8313 = vmatprep.subr.mxu0 0.0
    %8314 = vmatpush1.msra.mxu0 0.0
    %8315 = vmatprep.subr.mxu0 0.0
    %8316 = vmatpush1.msra.mxu0 0.0
    %8317 = vmatprep.subr.mxu0 0.0
    %8318 = vmatpush1.msra.mxu0 0.0
    %8319 = vmatprep.subr.mxu0 0.0
    %8320 = vmatpush1.msra.mxu0 0.0
    %8321 = vmatprep.subr.mxu0 0.0
    %8322 = vmatpush1.msra.mxu0 0.0
    %8323 = vmatprep.subr.mxu0 0.0
    %8324 = vmatpush1.msra.mxu0 0.0
    %8325 = vmatprep.subr.mxu0 0.0
    %8326 = vmatpush1.msra.mxu0 0.0
    %8327 = vmatprep.subr.mxu0 0.0
    %8328 = vmatpush1.msra.mxu0 %v7926
    %8329 = vmatprep.subr.mxu0 0.0
    %8330 = vmatpush2.msra.mxu0 0.0
    %8331 = vmatprep.subr.mxu0 0.0
    %8332 = vmatpush2.msra.mxu0 0.0
    %8333 = vmatprep.subr.mxu0 0.0
    %8334 = vmatpush2.msra.mxu0 0.0
    %8335 = vmatprep.subr.mxu0 0.0
    %8336 = vmatpush2.msra.mxu0 0.0
    %8337 = vmatprep.subr.mxu0 0.0
    %8338 = vmatpush2.msra.mxu0 0.0
    %8339 = vmatprep.subr.mxu0 0.0
    %8340 = vmatpush2.msra.mxu0 0.0
    %8341 = vmatprep.subr.mxu0 0.0
    %8342 = vmatpush2.msra.mxu0 0.0
    %8343 = vmatprep.subr.mxu0 0.0
    %8344 = vmatpush2.msra.mxu0 0.0
    %8345 = vmatprep.subr.mxu0 0.0
    %8346 = vmatpush2.msra.mxu0 0.0
    %8347 = vmatprep.subr.mxu0 0.0
    %8348 = vmatpush2.msra.mxu0 0.0
    %8349 = vmatprep.subr.mxu0 0.0
    %8350 = vmatpush2.msra.mxu0 0.0
    %8351 = vmatprep.subr.mxu0 0.0
    %8352 = vmatpush2.msra.mxu0 0.0
    %8353 = vmatprep.subr.mxu0 0.0
    %8354 = vmatpush2.msra.mxu0 0.0
    %8355 = vmatprep.subr.mxu0 0.0
    %8356 = vmatpush2.msra.mxu0 0.0
    %8357 = vmatprep.subr.mxu0 0.0
    %8358 = vmatpush2.msra.mxu0 0.0
    %8359 = vmatprep.subr.mxu0 0.0
    %8360 = vmatpush2.msra.mxu0 0.0
    %8361 = vmatprep.mubr.f32.mxu0 0.0
    %8362 = vmatmul.mubr.f32.gmra.mxu0 %v8295
    %v8363 = vpop.f32.mrf.mxu0
    %v8364 = vadd.f32 0.0, %v8363
    %v8365 = vpop.f32.mrf.mxu0
    %8366 = vdwg.mxu0
    %v8368 = vsel %vm2617, %v7844, 0
    %8370 = vmatprep.subr.mxu0 0.0
    %8371 = vmatpush1.msra.mxu0 0.0
    %8372 = vmatprep.subr.mxu0 0.0
    %8373 = vmatpush1.msra.mxu0 0.0
    %8374 = vmatprep.subr.mxu0 0.0
    %8375 = vmatpush1.msra.mxu0 0.0
    %8376 = vmatprep.subr.mxu0 0.0
    %8377 = vmatpush1.msra.mxu0 0.0
    %8378 = vmatprep.subr.mxu0 0.0
    %8379 = vmatpush1.msra.mxu0 0.0
    %8380 = vmatprep.subr.mxu0 0.0
    %8381 = vmatpush1.msra.mxu0 0.0
    %8382 = vmatprep.subr.mxu0 0.0
    %8383 = vmatpush1.msra.mxu0 0.0
    %8384 = vmatprep.subr.mxu0 0.0
    %8385 = vmatpush1.msra.mxu0 0.0
    %8386 = vmatprep.subr.mxu0 0.0
    %8387 = vmatpush1.msra.mxu0 0.0
    %8388 = vmatprep.subr.mxu0 0.0
    %8389 = vmatpush1.msra.mxu0 0.0
    %8390 = vmatprep.subr.mxu0 0.0
    %8391 = vmatpush1.msra.mxu0 0.0
    %8392 = vmatprep.subr.mxu0 0.0
    %8393 = vmatpush1.msra.mxu0 0.0
    %8394 = vmatprep.subr.mxu0 0.0
    %8395 = vmatpush1.msra.mxu0 0.0
    %8396 = vmatprep.subr.mxu0 0.0
    %8397 = vmatpush1.msra.mxu0 0.0
    %8398 = vmatprep.subr.mxu0 0.0
    %8399 = vmatpush1.msra.mxu0 0.0
    %8400 = vmatprep.subr.mxu0 0.0
    %8401 = vmatpush1.msra.mxu0 %v7927
    %8402 = vmatprep.subr.mxu0 0.0
    %8403 = vmatpush2.msra.mxu0 0.0
    %8404 = vmatprep.subr.mxu0 0.0
    %8405 = vmatpush2.msra.mxu0 0.0
    %8406 = vmatprep.subr.mxu0 0.0
    %8407 = vmatpush2.msra.mxu0 0.0
    %8408 = vmatprep.subr.mxu0 0.0
    %8409 = vmatpush2.msra.mxu0 0.0
    %8410 = vmatprep.subr.mxu0 0.0
    %8411 = vmatpush2.msra.mxu0 0.0
    %8412 = vmatprep.subr.mxu0 0.0
    %8413 = vmatpush2.msra.mxu0 0.0
    %8414 = vmatprep.subr.mxu0 0.0
    %8415 = vmatpush2.msra.mxu0 0.0
    %8416 = vmatprep.subr.mxu0 0.0
    %8417 = vmatpush2.msra.mxu0 0.0
    %8418 = vmatprep.subr.mxu0 0.0
    %8419 = vmatpush2.msra.mxu0 0.0
    %8420 = vmatprep.subr.mxu0 0.0
    %8421 = vmatpush2.msra.mxu0 0.0
    %8422 = vmatprep.subr.mxu0 0.0
    %8423 = vmatpush2.msra.mxu0 0.0
    %8424 = vmatprep.subr.mxu0 0.0
    %8425 = vmatpush2.msra.mxu0 0.0
    %8426 = vmatprep.subr.mxu0 0.0
    %8427 = vmatpush2.msra.mxu0 0.0
    %8428 = vmatprep.subr.mxu0 0.0
    %8429 = vmatpush2.msra.mxu0 0.0
    %8430 = vmatprep.subr.mxu0 0.0
    %8431 = vmatpush2.msra.mxu0 0.0
    %8432 = vmatprep.subr.mxu0 0.0
    %8433 = vmatpush2.msra.mxu0 0.0
    %8434 = vmatprep.mubr.f32.mxu0 0.0
    %8435 = vmatmul.mubr.f32.gmra.mxu0 %v8368
    %v8436 = vpop.f32.mrf.mxu0
    %v8437 = vadd.f32 0.0, %v8436
    %v8438 = vpop.f32.mrf.mxu0
    %8439 = vdwg.mxu0
    %v8441 = vsel %vm2617, %v7917, 0
    %8443 = vmatprep.subr.mxu0 0.0
    %8444 = vmatpush1.msra.mxu0 0.0
    %8445 = vmatprep.subr.mxu0 0.0
    %8446 = vmatpush1.msra.mxu0 0.0
    %8447 = vmatprep.subr.mxu0 0.0
    %8448 = vmatpush1.msra.mxu0 0.0
    %8449 = vmatprep.subr.mxu0 0.0
    %8450 = vmatpush1.msra.mxu0 0.0
    %8451 = vmatprep.subr.mxu0 0.0
    %8452 = vmatpush1.msra.mxu0 0.0
    %8453 = vmatprep.subr.mxu0 0.0
    %8454 = vmatpush1.msra.mxu0 0.0
    %8455 = vmatprep.subr.mxu0 0.0
    %8456 = vmatpush1.msra.mxu0 0.0
    %8457 = vmatprep.subr.mxu0 0.0
    %8458 = vmatpush1.msra.mxu0 0.0
    %8459 = vmatprep.subr.mxu0 0.0
    %8460 = vmatpush1.msra.mxu0 0.0
    %8461 = vmatprep.subr.mxu0 0.0
    %8462 = vmatpush1.msra.mxu0 0.0
    %8463 = vmatprep.subr.mxu0 0.0
    %8464 = vmatpush1.msra.mxu0 0.0
    %8465 = vmatprep.subr.mxu0 0.0
    %8466 = vmatpush1.msra.mxu0 0.0
    %8467 = vmatprep.subr.mxu0 0.0
    %8468 = vmatpush1.msra.mxu0 0.0
    %8469 = vmatprep.subr.mxu0 0.0
    %8470 = vmatpush1.msra.mxu0 0.0
    %8471 = vmatprep.subr.mxu0 0.0
    %8472 = vmatpush1.msra.mxu0 0.0
    %8473 = vmatprep.subr.mxu0 0.0
    %8474 = vmatpush1.msra.mxu0 %v7928
    %8475 = vmatprep.subr.mxu0 0.0
    %8476 = vmatpush2.msra.mxu0 0.0
    %8477 = vmatprep.subr.mxu0 0.0
    %8478 = vmatpush2.msra.mxu0 0.0
    %8479 = vmatprep.subr.mxu0 0.0
    %8480 = vmatpush2.msra.mxu0 0.0
    %8481 = vmatprep.subr.mxu0 0.0
    %8482 = vmatpush2.msra.mxu0 0.0
    %8483 = vmatprep.subr.mxu0 0.0
    %8484 = vmatpush2.msra.mxu0 0.0
    %8485 = vmatprep.subr.mxu0 0.0
    %8486 = vmatpush2.msra.mxu0 0.0
    %8487 = vmatprep.subr.mxu0 0.0
    %8488 = vmatpush2.msra.mxu0 0.0
    %8489 = vmatprep.subr.mxu0 0.0
    %8490 = vmatpush2.msra.mxu0 0.0
    %8491 = vmatprep.subr.mxu0 0.0
    %8492 = vmatpush2.msra.mxu0 0.0
    %8493 = vmatprep.subr.mxu0 0.0
    %8494 = vmatpush2.msra.mxu0 0.0
    %8495 = vmatprep.subr.mxu0 0.0
    %8496 = vmatpush2.msra.mxu0 0.0
    %8497 = vmatprep.subr.mxu0 0.0
    %8498 = vmatpush2.msra.mxu0 0.0
    %8499 = vmatprep.subr.mxu0 0.0
    %8500 = vmatpush2.msra.mxu0 0.0
    %8501 = vmatprep.subr.mxu0 0.0
    %8502 = vmatpush2.msra.mxu0 0.0
    %8503 = vmatprep.subr.mxu0 0.0
    %8504 = vmatpush2.msra.mxu0 0.0
    %8505 = vmatprep.subr.mxu0 0.0
    %8506 = vmatpush2.msra.mxu0 0.0
    %8507 = vmatprep.mubr.f32.mxu0 0.0
    %8508 = vmatmul.mubr.f32.gmra.mxu0 %v8441
    %v8509 = vpop.f32.mrf.mxu0
    %v8510 = vadd.f32 0.0, %v8509
    %v8511 = vpop.f32.mrf.mxu0
    %8512 = vdwg.mxu0
    %v8513 = vsel %vm791, %v7999, 0.0
    %v8514 = vsel %vm791, %v8072, 0.0
    %v8515 = vadd.f32 %v8513, %v8514
    %v8516 = vsel %vm791, %v8145, 0.0
    %v8517 = vadd.f32 %v8515, %v8516
    %v8518 = vsel %vm791, %v8218, 0.0
    %v8519 = vadd.f32 %v8517, %v8518
    %v8520 = vsel %vm791, %v8291, 0.0
    %v8521 = vsel %vm791, %v8364, 0.0
    %v8522 = vadd.f32 %v8520, %v8521
    %v8523 = vsel %vm791, %v8437, 0.0
    %v8524 = vadd.f32 %v8522, %v8523
    %v8525 = vsel %vm791, %v8510, 0.0
    %v8526 = vadd.f32 %v8524, %v8525
    %v8527 = vadd.f32 %v4805, %v8519
    %v8528 = vadd.f32 %v4806, %v8526
    %s8529 = scalar_lea.vmem %s9, 1
    %v8530 = vld [vmem:[%s8529] sm:$0x1]
    %v8532 = vlaneseq
    %v8533 = vshrl.u32 %v8532, 7
    %v8534 = vsub.s32 0, %v8533
    %v8535 = vrot.slane %v8530, %v8534
    %v8537 = vadd.f32 %v8527, %v8535
    %v8538 = vadd.f32 %v8528, %v8535
    %s8539 = scalar_lea.vmem %s10, 1
    %v8540 = vld [vmem:[%s8539] sm:$0x1]
    %s8541 = scalar_lea.vmem %s11, 1
    %v8542 = vld [vmem:[%s8541] sm:$0x1]
    %v8543 = vsel %vm791, %v8537, 0.0
    %8544 = vadd.xlane.f32.xlu0 %v8543
    %v8545 = vpop.xlane.xlu0 %8544
    %v8546 = vsel %vm791, %v8538, 0.0
    %8547 = vadd.xlane.f32.xlu0 %v8546
    %v8548 = vpop.xlane.xlu0 %8547
    %v8549 = vmul.f32 %v8545, %v798
    %v8550 = vmul.f32 %v8548, %v798
    %v8551 = vsub.f32 %v8537, %v8549
    %v8552 = vsub.f32 %v8538, %v8550
    %v8553 = vmul.f32 %v8551, %v8551
    %v8554 = vmul.f32 %v8552, %v8552
    %v8555 = vsel %vm791, %v8553, 0.0
    %8556 = vadd.xlane.f32.xlu0 %v8555
    %v8557 = vpop.xlane.xlu0 %8556
    %v8558 = vsel %vm791, %v8554, 0.0
    %8559 = vadd.xlane.f32.xlu0 %v8558
    %v8560 = vpop.xlane.xlu0 %8559
    %v8561 = vmul.f32 %v8557, %v798
    %v8562 = vmul.f32 %v8560, %v798
    %v8563 = vadd.f32 %v8561, 1e-05
    %v8564 = vadd.f32 %v8562, 1e-05
    %v8565 = vrsqrt.pop %v8563
    %v8566 = vrsqrt.pop %v8564
    %v8567 = vmul.f32 %v8551, %v8565
    %v8568 = vmul.f32 %v8552, %v8566
    %v8570 = vlaneseq
    %v8571 = vshrl.u32 %v8570, 7
    %v8572 = vsub.s32 0, %v8571
    %v8573 = vrot.slane %v8540, %v8572
    %v8575 = vmul.f32 %v8567, %v8573
    %v8576 = vmul.f32 %v8568, %v8573
    %v8578 = vlaneseq
    %v8579 = vshrl.u32 %v8578, 7
    %v8580 = vsub.s32 0, %v8579
    %v8581 = vrot.slane %v8542, %v8580
    %v8583 = vadd.f32 %v8575, %v8581
    %v8584 = vadd.f32 %v8576, %v8581
    %s8585 = scalar_lea.vmem %s12, 32
    %v8586 = vld [vmem:[%s8585] sm:$0xff]
    %v8587 = vld [vmem:[%s8585 + $0x8] sm:$0xff]
    %v8588 = vld [vmem:[%s8585 + $0x10] sm:$0xff]
    %v8589 = vld [vmem:[%s8585 + $0x18] sm:$0xff]
    %s8590 = scalar_lea.vmem %s13, 1
    %v8591 = vld [vmem:[%s8590] sm:$0x1]
    %v8593 = vlaneseq
    %v8594 = vshrl.u32 %v8593, 7
    %v8595 = vsub.s32 0, %v8594
    %v8596 = vrot.slane %v8591, %v8595
    %v8599 = vsel %vm791, %v8583, 0
    %v8602 = vsel %vm791, %v8584, 0
    %8604 = vmatprep.subr.mxu0 0.0
    %8605 = vmatpush1.msra.mxu0 0.0
    %8606 = vmatprep.subr.mxu0 0.0
    %8607 = vmatpush1.msra.mxu0 0.0
    %8608 = vmatprep.subr.mxu0 0.0
    %8609 = vmatpush1.msra.mxu0 0.0
    %8610 = vmatprep.subr.mxu0 0.0
    %8611 = vmatpush1.msra.mxu0 0.0
    %8612 = vmatprep.subr.mxu0 0.0
    %8613 = vmatpush1.msra.mxu0 0.0
    %8614 = vmatprep.subr.mxu0 0.0
    %8615 = vmatpush1.msra.mxu0 0.0
    %8616 = vmatprep.subr.mxu0 0.0
    %8617 = vmatpush1.msra.mxu0 0.0
    %8618 = vmatprep.subr.mxu0 0.0
    %8619 = vmatpush1.msra.mxu0 0.0
    %8620 = vmatprep.subr.mxu0 0.0
    %8621 = vmatpush1.msra.mxu0 0.0
    %8622 = vmatprep.subr.mxu0 0.0
    %8623 = vmatpush1.msra.mxu0 0.0
    %8624 = vmatprep.subr.mxu0 0.0
    %8625 = vmatpush1.msra.mxu0 0.0
    %8626 = vmatprep.subr.mxu0 0.0
    %8627 = vmatpush1.msra.mxu0 0.0
    %8628 = vmatprep.subr.mxu0 0.0
    %8629 = vmatpush1.msra.mxu0 %v8589
    %8630 = vmatprep.subr.mxu0 0.0
    %8631 = vmatpush1.msra.mxu0 %v8588
    %8632 = vmatprep.subr.mxu0 0.0
    %8633 = vmatpush1.msra.mxu0 %v8587
    %8634 = vmatprep.subr.mxu0 0.0
    %8635 = vmatpush1.msra.mxu0 %v8586
    %8636 = vmatprep.subr.mxu0 0.0
    %8637 = vmatpush2.msra.mxu0 0.0
    %8638 = vmatprep.subr.mxu0 0.0
    %8639 = vmatpush2.msra.mxu0 0.0
    %8640 = vmatprep.subr.mxu0 0.0
    %8641 = vmatpush2.msra.mxu0 0.0
    %8642 = vmatprep.subr.mxu0 0.0
    %8643 = vmatpush2.msra.mxu0 0.0
    %8644 = vmatprep.subr.mxu0 0.0
    %8645 = vmatpush2.msra.mxu0 0.0
    %8646 = vmatprep.subr.mxu0 0.0
    %8647 = vmatpush2.msra.mxu0 0.0
    %8648 = vmatprep.subr.mxu0 0.0
    %8649 = vmatpush2.msra.mxu0 0.0
    %8650 = vmatprep.subr.mxu0 0.0
    %8651 = vmatpush2.msra.mxu0 0.0
    %8652 = vmatprep.subr.mxu0 0.0
    %8653 = vmatpush2.msra.mxu0 0.0
    %8654 = vmatprep.subr.mxu0 0.0
    %8655 = vmatpush2.msra.mxu0 0.0
    %8656 = vmatprep.subr.mxu0 0.0
    %8657 = vmatpush2.msra.mxu0 0.0
    %8658 = vmatprep.subr.mxu0 0.0
    %8659 = vmatpush2.msra.mxu0 0.0
    %8660 = vmatprep.subr.mxu0 0.0
    %8661 = vmatpush2.msra.mxu0 0.0
    %8662 = vmatprep.subr.mxu0 0.0
    %8663 = vmatpush2.msra.mxu0 0.0
    %8664 = vmatprep.subr.mxu0 0.0
    %8665 = vmatpush2.msra.mxu0 0.0
    %8666 = vmatprep.subr.mxu0 0.0
    %8667 = vmatpush2.msra.mxu0 0.0
    %8668 = vmatprep.mubr.f32.mxu0 0.0
    %8669 = vmatmul.mubr.f32.gmra.mxu0 %v8599
    %v8670 = vpop.f32.mrf.mxu0
    %v8671 = vadd.f32 %v8596, %v8670
    %v8672 = vpop.f32.mrf.mxu0
    %8673 = vmatprep.mubr.f32.mxu0 0.0
    %8674 = vmatmul.mubr.f32.gmra.mxu0 %v8602
    %v8675 = vpop.f32.mrf.mxu0
    %v8676 = vadd.f32 %v8596, %v8675
    %v8677 = vpop.f32.mrf.mxu0
    %8678 = vdwg.mxu0
    %v8679 = vmul.f32 %v8671, 0.5
    %v8680 = vmul.f32 %v8676, 0.5
    %v8681 = vmul.f32 %v8671, 0.70710677
    %v8682 = vmul.f32 %v8676, 0.70710677
    %vm8683 = vcmp.ge.f32.partialorder %v8681, 0.0
    %vm8684 = vcmp.ge.f32.partialorder %v8682, 0.0
    %v8685 = vsel %vm8683, 1.0, -1.0
    %v8686 = vsel %vm8684, 1.0, -1.0
    %v8687 = vand.u32 2147483647, %v8681
    %v8688 = vand.u32 2147483647, %v8682
    %v8689 = vmul.f32 %v8687, 0.3275911
    %v8690 = vmul.f32 %v8688, 0.3275911
    %v8691 = vadd.f32 %v8689, 1.0
    %v8692 = vadd.f32 %v8690, 1.0
    %v8693 = vrcp.pop %v8691
    %v8694 = vmul.f32 1.0, %v8693
    %v8695 = vrcp.pop %v8692
    %v8696 = vmul.f32 1.0, %v8695
    %v8697 = vmul.f32 %v8694, 1.0614054
    %v8698 = vmul.f32 %v8696, 1.0614054
    %v8699 = vadd.f32 %v8697, -1.4531521
    %v8700 = vadd.f32 %v8698, -1.4531521
    %v8701 = vmul.f32 %v8699, %v8694
    %v8702 = vmul.f32 %v8700, %v8696
    %v8703 = vadd.f32 %v8701, 1.4214138
    %v8704 = vadd.f32 %v8702, 1.4214138
    %v8705 = vmul.f32 %v8703, %v8694
    %v8706 = vmul.f32 %v8704, %v8696
    %v8707 = vadd.f32 %v8705, -0.28449672
    %v8708 = vadd.f32 %v8706, -0.28449672
    %v8709 = vmul.f32 %v8707, %v8694
    %v8710 = vmul.f32 %v8708, %v8696
    %v8711 = vadd.f32 %v8709, 0.2548296
    %v8712 = vadd.f32 %v8710, 0.2548296
    %v8713 = vmul.f32 %v8711, %v8694
    %v8714 = vmul.f32 %v8712, %v8696
    %v8715 = vsub.f32 0.0, %v8687
    %v8716 = vsub.f32 0.0, %v8688
    %v8717 = vmul.f32 %v8715, %v8687
    %v8718 = vmul.f32 %v8716, %v8688
    %v8719 = vmul.f32 %v8717, 1.442695
    %v8720 = vpow.pop %v8719
    %v8721 = vmul.f32 %v8718, 1.442695
    %v8722 = vpow.pop %v8721
    %v8723 = vmul.f32 %v8713, %v8720
    %v8724 = vmul.f32 %v8714, %v8722
    %v8725 = vsub.f32 1.0, %v8723
    %v8726 = vsub.f32 1.0, %v8724
    %v8727 = vmul.f32 %v8685, %v8725
    %v8728 = vmul.f32 %v8686, %v8726
    %v8729 = vadd.f32 %v8727, 1.0
    %v8730 = vadd.f32 %v8728, 1.0
    %v8731 = vmul.f32 %v8679, %v8729
    %v8732 = vmul.f32 %v8680, %v8730
    %s8733 = scalar_lea.vmem %s14, 128
    %v8734 = vld [vmem:[%s8733] sm:$0xff]
    %v8735 = vld [vmem:[%s8733 + $0x8] sm:$0xff]
    %v8736 = vld [vmem:[%s8733 + $0x10] sm:$0xff]
    %v8737 = vld [vmem:[%s8733 + $0x18] sm:$0xff]
    %v8738 = vld [vmem:[%s8733 + $0x20] sm:$0xff]
    %v8739 = vld [vmem:[%s8733 + $0x28] sm:$0xff]
    %v8740 = vld [vmem:[%s8733 + $0x30] sm:$0xff]
    %v8741 = vld [vmem:[%s8733 + $0x38] sm:$0xff]
    %v8742 = vld [vmem:[%s8733 + $0x40] sm:$0xff]
    %v8743 = vld [vmem:[%s8733 + $0x48] sm:$0xff]
    %v8744 = vld [vmem:[%s8733 + $0x50] sm:$0xff]
    %v8745 = vld [vmem:[%s8733 + $0x58] sm:$0xff]
    %v8746 = vld [vmem:[%s8733 + $0x60] sm:$0xff]
    %v8747 = vld [vmem:[%s8733 + $0x68] sm:$0xff]
    %v8748 = vld [vmem:[%s8733 + $0x70] sm:$0xff]
    %v8749 = vld [vmem:[%s8733 + $0x78] sm:$0xff]
    %8750 = vmatprep.subr.mxu0 0.0
    %8751 = vmatpush1.msra.mxu0 %v8749
    %8752 = vmatprep.subr.mxu0 0.0
    %8753 = vmatpush1.msra.mxu0 %v8748
    %8754 = vmatprep.subr.mxu0 0.0
    %8755 = vmatpush1.msra.mxu0 %v8747
    %8756 = vmatprep.subr.mxu0 0.0
    %8757 = vmatpush1.msra.mxu0 %v8746
    %8758 = vmatprep.subr.mxu0 0.0
    %8759 = vmatpush1.msra.mxu0 %v8745
    %8760 = vmatprep.subr.mxu0 0.0
    %8761 = vmatpush1.msra.mxu0 %v8744
    %8762 = vmatprep.subr.mxu0 0.0
    %8763 = vmatpush1.msra.mxu0 %v8743
    %8764 = vmatprep.subr.mxu0 0.0
    %8765 = vmatpush1.msra.mxu0 %v8742
    %8766 = vmatprep.subr.mxu0 0.0
    %8767 = vmatpush1.msra.mxu0 %v8741
    %8768 = vmatprep.subr.mxu0 0.0
    %8769 = vmatpush1.msra.mxu0 %v8740
    %8770 = vmatprep.subr.mxu0 0.0
    %8771 = vmatpush1.msra.mxu0 %v8739
    %8772 = vmatprep.subr.mxu0 0.0
    %8773 = vmatpush1.msra.mxu0 %v8738
    %8774 = vmatprep.subr.mxu0 0.0
    %8775 = vmatpush1.msra.mxu0 %v8737
    %8776 = vmatprep.subr.mxu0 0.0
    %8777 = vmatpush1.msra.mxu0 %v8736
    %8778 = vmatprep.subr.mxu0 0.0
    %8779 = vmatpush1.msra.mxu0 %v8735
    %8780 = vmatprep.subr.mxu0 0.0
    %8781 = vmatpush1.msra.mxu0 %v8734
    %8782 = vmatprep.subr.mxu0 0.0
    %8783 = vmatpush2.msra.mxu0 0.0
    %8784 = vmatprep.subr.mxu0 0.0
    %8785 = vmatpush2.msra.mxu0 0.0
    %8786 = vmatprep.subr.mxu0 0.0
    %8787 = vmatpush2.msra.mxu0 0.0
    %8788 = vmatprep.subr.mxu0 0.0
    %8789 = vmatpush2.msra.mxu0 0.0
    %8790 = vmatprep.subr.mxu0 0.0
    %8791 = vmatpush2.msra.mxu0 0.0
    %8792 = vmatprep.subr.mxu0 0.0
    %8793 = vmatpush2.msra.mxu0 0.0
    %8794 = vmatprep.subr.mxu0 0.0
    %8795 = vmatpush2.msra.mxu0 0.0
    %8796 = vmatprep.subr.mxu0 0.0
    %8797 = vmatpush2.msra.mxu0 0.0
    %8798 = vmatprep.subr.mxu0 0.0
    %8799 = vmatpush2.msra.mxu0 0.0
    %8800 = vmatprep.subr.mxu0 0.0
    %8801 = vmatpush2.msra.mxu0 0.0
    %8802 = vmatprep.subr.mxu0 0.0
    %8803 = vmatpush2.msra.mxu0 0.0
    %8804 = vmatprep.subr.mxu0 0.0
    %8805 = vmatpush2.msra.mxu0 0.0
    %8806 = vmatprep.subr.mxu0 0.0
    %8807 = vmatpush2.msra.mxu0 0.0
    %8808 = vmatprep.subr.mxu0 0.0
    %8809 = vmatpush2.msra.mxu0 0.0
    %8810 = vmatprep.subr.mxu0 0.0
    %8811 = vmatpush2.msra.mxu0 0.0
    %8812 = vmatprep.subr.mxu0 0.0
    %8813 = vmatpush2.msra.mxu0 0.0
    %8814 = vmatprep.mubr.f32.mxu0 0.0
    %8815 = vmatmul.mubr.f32.gmra.mxu0 %v8731
    %v8816 = vpop.f32.mrf.mxu0
    %v8817 = vadd.f32 0.0, %v8816
    %v8818 = vpop.f32.mrf.mxu0
    %8819 = vmatprep.mubr.f32.mxu0 0.0
    %8820 = vmatmul.mubr.f32.gmra.mxu0 %v8732
    %v8821 = vpop.f32.mrf.mxu0
    %v8822 = vadd.f32 0.0, %v8821
    %v8823 = vpop.f32.mrf.mxu0
    %8824 = vdwg.mxu0
    %v8825 = vadd.f32 %v8537, %v8817
    %v8826 = vadd.f32 %v8538, %v8822
    %s8827 = scalar_lea.vmem %s15, 1
    %v8828 = vld [vmem:[%s8827] sm:$0x1]
    %v8830 = vlaneseq
    %v8831 = vshrl.u32 %v8830, 7
    %v8832 = vsub.s32 0, %v8831
    %v8833 = vrot.slane %v8828, %v8832
    %v8835 = vadd.f32 %v8825, %v8833
    %v8836 = vadd.f32 %v8826, %v8833
    %s8837 = scalar_lea.vmem %s18, 16
    %8838 = vst.msk [vmem:[%s8837] sm:$0xff] %vm791, %v8835
    %8839 = vst.msk [vmem:[%s8837 + $0x8] sm:$0xff] %vm791, %v8836
    %v8840 = vld [vmem:[%s16] sm:$0xff]
    %v8841 = vld [vmem:[%s16 + $0x8] sm:$0xff]
    %v8842 = vld [vmem:[%s16 + $0x10] sm:$0xff]
    %v8843 = vld [vmem:[%s16 + $0x18] sm:$0xff]
    %v8844 = vld [vmem:[%s17] sm:$0x1]
    %v8846 = vlaneseq
    %v8847 = vshrl.u32 %v8846, 7
    %v8848 = vsub.s32 0, %v8847
    %v8849 = vrot.slane %v8844, %v8848
    %v8852 = vsel %vm791, %v783, 0
    %v8855 = vsel %vm791, %v786, 0
    %8857 = vmatprep.subr.mxu0 0.0
    %8858 = vmatpush1.msra.mxu0 0.0
    %8859 = vmatprep.subr.mxu0 0.0
    %8860 = vmatpush1.msra.mxu0 0.0
    %8861 = vmatprep.subr.mxu0 0.0
    %8862 = vmatpush1.msra.mxu0 0.0
    %8863 = vmatprep.subr.mxu0 0.0
    %8864 = vmatpush1.msra.mxu0 0.0
    %8865 = vmatprep.subr.mxu0 0.0
    %8866 = vmatpush1.msra.mxu0 0.0
    %8867 = vmatprep.subr.mxu0 0.0
    %8868 = vmatpush1.msra.mxu0 0.0
    %8869 = vmatprep.subr.mxu0 0.0
    %8870 = vmatpush1.msra.mxu0 0.0
    %8871 = vmatprep.subr.mxu0 0.0
    %8872 = vmatpush1.msra.mxu0 0.0
    %8873 = vmatprep.subr.mxu0 0.0
    %8874 = vmatpush1.msra.mxu0 0.0
    %8875 = vmatprep.subr.mxu0 0.0
    %8876 = vmatpush1.msra.mxu0 0.0
    %8877 = vmatprep.subr.mxu0 0.0
    %8878 = vmatpush1.msra.mxu0 0.0
    %8879 = vmatprep.subr.mxu0 0.0
    %8880 = vmatpush1.msra.mxu0 0.0
    %8881 = vmatprep.subr.mxu0 0.0
    %8882 = vmatpush1.msra.mxu0 %v8843
    %8883 = vmatprep.subr.mxu0 0.0
    %8884 = vmatpush1.msra.mxu0 %v8842
    %8885 = vmatprep.subr.mxu0 0.0
    %8886 = vmatpush1.msra.mxu0 %v8841
    %8887 = vmatprep.subr.mxu0 0.0
    %8888 = vmatpush1.msra.mxu0 %v8840
    %8889 = vmatprep.subr.mxu0 0.0
    %8890 = vmatpush2.msra.mxu0 0.0
    %8891 = vmatprep.subr.mxu0 0.0
    %8892 = vmatpush2.msra.mxu0 0.0
    %8893 = vmatprep.subr.mxu0 0.0
    %8894 = vmatpush2.msra.mxu0 0.0
    %8895 = vmatprep.subr.mxu0 0.0
    %8896 = vmatpush2.msra.mxu0 0.0
    %8897 = vmatprep.subr.mxu0 0.0
    %8898 = vmatpush2.msra.mxu0 0.0
    %8899 = vmatprep.subr.mxu0 0.0
    %8900 = vmatpush2.msra.mxu0 0.0
    %8901 = vmatprep.subr.mxu0 0.0
    %8902 = vmatpush2.msra.mxu0 0.0
    %8903 = vmatprep.subr.mxu0 0.0
    %8904 = vmatpush2.msra.mxu0 0.0
    %8905 = vmatprep.subr.mxu0 0.0
    %8906 = vmatpush2.msra.mxu0 0.0
    %8907 = vmatprep.subr.mxu0 0.0
    %8908 = vmatpush2.msra.mxu0 0.0
    %8909 = vmatprep.subr.mxu0 0.0
    %8910 = vmatpush2.msra.mxu0 0.0
    %8911 = vmatprep.subr.mxu0 0.0
    %8912 = vmatpush2.msra.mxu0 0.0
    %8913 = vmatprep.subr.mxu0 0.0
    %8914 = vmatpush2.msra.mxu0 0.0
    %8915 = vmatprep.subr.mxu0 0.0
    %8916 = vmatpush2.msra.mxu0 0.0
    %8917 = vmatprep.subr.mxu0 0.0
    %8918 = vmatpush2.msra.mxu0 0.0
    %8919 = vmatprep.subr.mxu0 0.0
    %8920 = vmatpush2.msra.mxu0 0.0
    %8921 = vmatprep.mubr.f32.mxu0 0.0
    %8922 = vmatmul.mubr.f32.gmra.mxu0 %v8852
    %v8923 = vpop.f32.mrf.mxu0
    %v8924 = vadd.f32 %v8849, %v8923
    %v8925 = vpop.f32.mrf.mxu0
    %8926 = vmatprep.mubr.f32.mxu0 0.0
    %8927 = vmatmul.mubr.f32.gmra.mxu0 %v8855
    %v8928 = vpop.f32.mrf.mxu0
    %v8929 = vadd.f32 %v8849, %v8928
    %v8930 = vpop.f32.mrf.mxu0
    %8931 = vdwg.mxu0
    %vm8932 = vcmask 130048
    %8933 = vst.msk [vmem:[#allocation2] sm:$0xff] %vm8932, %v8924
    %8934 = vst.msk [vmem:[#allocation2 + $0x8] sm:$0xff] %vm8932, %v8929
    // Predicated region
    $region74: #{vit_forward.1} parent=1 // pred_check
      _
    $region75: #{vit_forward.1} parent=1 // pred_check_branch
      %8936 = sbr.rel (0) target = $region77
    $region76: #{vit_forward.1} parent=1 // pred_region
      _
    $region77: #{vit_forward.1} parent=1 // pred_fallthru
      _
    // Predicated region
    $region78: #{vit_forward.1} parent=1 // pred_check
      _
    $region79: #{vit_forward.1} parent=1 // pred_check_branch
      %8938 = sbr.rel (0) target = $region81
    $region80: #{vit_forward.1} parent=1 // pred_region
      %s8940 = ssub.s32 256, 256
      %8941 = vsyncadd [#allocation3], %s8940
      %s8942 = sshll.u32 [#allocation2], 4
      %s8943 = int_to_ptr.vmem [resolvable:$true] %s8942
      %8948 = dma.vmem_to_hbm [thread:$0]  %s8943, 256, %s19, [#allocation3], 128, 128, 8
    $region81: #{vit_forward.1} parent=1 // pred_fallthru
      _
    // Predicated region
    $region82: #{vit_forward.1} parent=1 // pred_check
      _
    $region83: #{vit_forward.1} parent=1 // pred_check_branch
      %8950 = sbr.rel (0) target = $region85
    $region84: #{vit_forward.1} parent=1 // pred_region
      _
    $region85: #{vit_forward.1} parent=1 // pred_fallthru
      _
    // Predicated region
    $region86: #{vit_forward.1} parent=1 // pred_check
      _
    $region87: #{vit_forward.1} parent=1 // pred_check_branch
      %8952 = sbr.rel (0) target = $region89
    $region88: #{vit_forward.1} parent=1 // pred_region
      %8953 = dma.done [#allocation3], 256
    $region89: #{vit_forward.1} parent=1 // pred_fallthru
      _
    %8954 = vsyncpa [#allocation3], 1

</llo_original>
